<compile_context>
chip_gen: v7x
topology: tpu7x:2x2x1
jax: 0.10.0
libtpu: 0.0.40
codegen_flags: <defaults>
</compile_context>

<pallas_src>
import math

import jax
import jax.numpy as jnp
from jax.experimental import pallas as pl
from jax.experimental.pallas import tpu as pltpu

HIDDEN = 200        # nn.LSTM(embedding_dim, 200, bidirectional=True)
H_PAD = 256         # lane-dense hidden size (multiple of 128, matches MXU tile)
NUM_CLASSES = 104   # nn.Linear(2 * 200, 104)
C_PAD = 128         # lane-dense class count
NEG_BIG = -1e30     # bias for padded class lanes -> exp() underflows to 0


def _bilstm_head_kernel(x_ref, wih_ref, bih_ref, whh_f_ref, whh_b_ref,
                        wfc_f_ref, wfc_b_ref, bfc_ref, out_ref, gp_ref):
    """Whole forward pass: bi-LSTM recurrence, final-hidden concat, fc, softmax.

    x_ref     : (T*B, E)    bf16, time-major flattened inputs (row = t*B + b)
    wih_ref   : (E, 8*Hp)   bf16, [fwd | bwd] x [i,f,g,o] input->hidden weights
    bih_ref   : (1, 8*Hp)   f32,  combined (b_ih + b_hh) biases, same layout
    whh_*_ref : (Hp, 4*Hp)  bf16, gate-stacked hidden->hidden weights
    wfc_*_ref : (Hp, Cp)    bf16, fc weight split into fwd / bwd hidden halves
    bfc_ref   : (1, Cp)     f32,  fc bias; padded class lanes hold -1e30
    out_ref   : (B, Cp)     f32,  softmax probabilities (padded lanes ~ 0)
    gp_ref    : (T*B, 8*Hp) f32 VMEM scratch: precomputed x @ Wih + bias
    """
    TB, _ = x_ref.shape
    B, _ = out_ref.shape
    T = TB // B
    Hp = whh_f_ref.shape[0]
    G = 4 * Hp

    # (1) Hoisted input projection: one MXU matmul for all steps & directions,
    # biases folded in, result parked in VMEM scratch off the critical path.
    gp_ref[...] = (jnp.dot(x_ref[...], wih_ref[...],
                           preferred_element_type=jnp.float32)
                   + bih_ref[...])

    whh_f = whh_f_ref[...]
    whh_b = whh_b_ref[...]

    def cell(s, c):
        i_g = jax.nn.sigmoid(s[:, 0 * Hp:1 * Hp])
        f_g = jax.nn.sigmoid(s[:, 1 * Hp:2 * Hp])
        g_g = jnp.tanh(s[:, 2 * Hp:3 * Hp])
        o_g = jax.nn.sigmoid(s[:, 3 * Hp:4 * Hp])
        c_new = f_g * c + i_g * g_g
        h_new = o_g * jnp.tanh(c_new)
        return h_new, c_new

    h_f = jnp.zeros((B, Hp), jnp.float32)
    c_f = jnp.zeros((B, Hp), jnp.float32)
    h_b = jnp.zeros((B, Hp), jnp.float32)
    c_b = jnp.zeros((B, Hp), jnp.float32)

    # (2) Recurrence: one fused 4-gate matmul per direction per step, both
    # directions interleaved, fully unrolled (T is small and static) so the
    # LLO scheduler can overlap the two independent dependence chains.
    for t in range(T):
        pre_f = gp_ref[pl.ds(t * B, B), pl.ds(0, G)]
        pre_b = gp_ref[pl.ds((T - 1 - t) * B, B), pl.ds(G, G)]
        s_f = jnp.dot(h_f.astype(jnp.bfloat16), whh_f,
                      preferred_element_type=jnp.float32) + pre_f
        s_b = jnp.dot(h_b.astype(jnp.bfloat16), whh_b,
                      preferred_element_type=jnp.float32) + pre_b
        h_f, c_f = cell(s_f, c_f)
        h_b, c_b = cell(s_b, c_b)

    # (3) fc(concat(h_f, h_b)) as two lane-aligned matmuls, then softmax over
    # 128 lanes (padded class lanes have -1e30 bias -> contribute exactly 0).
    logits = (jnp.dot(h_f.astype(jnp.bfloat16), wfc_f_ref[...],
                      preferred_element_type=jnp.float32)
              + jnp.dot(h_b.astype(jnp.bfloat16), wfc_b_ref[...],
                        preferred_element_type=jnp.float32)
              + bfc_ref[...])
    m = jnp.max(logits, axis=-1, keepdims=True)
    e = jnp.exp(logits - m)
    denom = jnp.sum(e, axis=-1, keepdims=True)
    out_ref[...] = e * pl.reciprocal(denom, approx=True)


def lstm_model_forward(x, params):
    """x: (B, T, E) float -> (B, 104) softmax probabilities."""
    B, T, E = x.shape
    # Time-major flatten (row = t*B + b); trivial XLA op outside the kernel.
    x2d = jnp.transpose(x, (1, 0, 2)).reshape(T * B, E).astype(jnp.bfloat16)

    vmem = pl.BlockSpec(memory_space=pltpu.MemorySpace.VMEM)
    out_padded = pl.pallas_call(
        _bilstm_head_kernel,
        out_shape=jax.ShapeDtypeStruct((B, C_PAD), jnp.float32),
        in_specs=[vmem] * 8,
        out_specs=vmem,
        scratch_shapes=[pltpu.VMEM((T * B, 8 * H_PAD), jnp.float32)],
        compiler_params=pltpu.CompilerParams(
            vmem_limit_bytes=32 * 1024 * 1024),
    )(x2d,
      params["wih"], params["bih"],
      params["whh_f"], params["whh_b"],
      params["wfc_f"], params["wfc_b"], params["bfc"])
    # TODO(synk): for very large T/B/E, stream x via a grid + BlockSpec instead
    # of keeping it fully resident (v7x VMEM is 64 MiB).
    return out_padded[:, :NUM_CLASSES]


def init_params(key, embedding_dim, hidden=HIDDEN, hp=H_PAD,
                num_classes=NUM_CLASSES, cp=C_PAD):
    """Deterministic synthetic parameters.

    Returns (packed, raw):
      packed : lane-dense, gate-stacked, bf16 tensors in the kernel's layout
      raw    : unpadded f32 tensors for the pure-JAX reference
    Equivalent PyTorch tensors:
      weight_ih_l0[_reverse]  (4H, E)  -> (E, 4*Hp) gate blocks, fwd|bwd concat
      weight_hh_l0[_reverse]  (4H, H)  -> (Hp, 4*Hp) gate blocks
      bias_ih + bias_hh       (4H,)    -> (1, 4*Hp) combined, fwd|bwd concat
      fc.weight               (C, 2H)  -> two (Hp, Cp) halves ; fc.bias -> (1, Cp)
    """
    ks = jax.random.split(key, 9)
    s_lstm = 1.0 / math.sqrt(hidden)
    s_fc = 1.0 / math.sqrt(2 * hidden)

    def u(k, shape, scale):
        return jax.random.uniform(k, shape, jnp.float32, -scale, scale)

    raw = {
        "wih_f": u(ks[0], (4, embedding_dim, hidden), s_lstm),
        "whh_f": u(ks[1], (4, hidden, hidden), s_lstm),
        "b_f":   u(ks[2], (4, hidden), s_lstm),
        "wih_b": u(ks[3], (4, embedding_dim, hidden), s_lstm),
        "whh_b": u(ks[4], (4, hidden, hidden), s_lstm),
        "b_b":   u(ks[5], (4, hidden), s_lstm),
        "wfc_f": u(ks[6], (hidden, num_classes), s_fc),
        "wfc_b": u(ks[7], (hidden, num_classes), s_fc),
        "bfc":   u(ks[8], (num_classes,), s_fc),
    }

    def stack_ih(w):   # (4, E, H) -> (E, 4*Hp), zero-padded per gate block
        out = jnp.zeros((embedding_dim, 4 * hp), jnp.float32)
        for g in range(4):
            out = out.at[:, g * hp:g * hp + hidden].set(w[g])
        return out

    def stack_hh(w):   # (4, H, H) -> (Hp, 4*Hp), zero-padded rows and cols
        out = jnp.zeros((hp, 4 * hp), jnp.float32)
        for g in range(4):
            out = out.at[:hidden, g * hp:g * hp + hidden].set(w[g])
        return out

    def stack_b(b):    # (4, H) -> (1, 4*Hp)
        out = jnp.zeros((1, 4 * hp), jnp.float32)
        for g in range(4):
            out = out.at[0, g * hp:g * hp + hidden].set(b[g])
        return out

    def pad_fc(w):     # (H, C) -> (Hp, Cp), zero-padded
        return jnp.zeros((hp, cp), jnp.float32).at[:hidden, :num_classes].set(w)

    packed = {
        "wih": jnp.concatenate(
            [stack_ih(raw["wih_f"]), stack_ih(raw["wih_b"])],
            axis=1).astype(jnp.bfloat16),
        "bih": jnp.concatenate(
            [stack_b(raw["b_f"]), stack_b(raw["b_b"])], axis=1),
        "whh_f": stack_hh(raw["whh_f"]).astype(jnp.bfloat16),
        "whh_b": stack_hh(raw["whh_b"]).astype(jnp.bfloat16),
        "wfc_f": pad_fc(raw["wfc_f"]).astype(jnp.bfloat16),
        "wfc_b": pad_fc(raw["wfc_b"]).astype(jnp.bfloat16),
        "bfc": jnp.full((1, cp), NEG_BIG, jnp.float32)
                  .at[0, :num_classes].set(raw["bfc"]),
    }
    return packed, raw


def reference_forward(x, raw):
    """Pure-JAX reference with the same bf16 weight quantization, f32 math."""
    def q(a):
        return a.astype(jnp.bfloat16).astype(jnp.float32)

    B, T, _ = x.shape
    xq = q(x)

    def run(wih, whh, b, reverse):
        h = jnp.zeros((B, HIDDEN), jnp.float32)
        c = jnp.zeros((B, HIDDEN), jnp.float32)
        for t in range(T):
            idx = T - 1 - t if reverse else t
            xt = xq[:, idx, :]
            s = [xt @ q(wih[g]) + h @ q(whh[g]) + b[g][None, :] for g in range(4)]
            i_g = jax.nn.sigmoid(s[0])
            f_g = jax.nn.sigmoid(s[1])
            g_g = jnp.tanh(s[2])
            o_g = jax.nn.sigmoid(s[3])
            c = f_g * c + i_g * g_g
            h = o_g * jnp.tanh(c)
        return h

    h_f = run(raw["wih_f"], raw["whh_f"], raw["b_f"], reverse=False)
    h_b = run(raw["wih_b"], raw["whh_b"], raw["b_b"], reverse=True)
    logits = h_f @ q(raw["wfc_f"]) + h_b @ q(raw["wfc_b"]) + raw["bfc"][None, :]
    return jax.nn.softmax(logits, axis=-1)


if __name__ == "__main__":
    key = jax.random.PRNGKey(0)
    kx, kp = jax.random.split(key)

    B, T, E = 2, 8, 32   # batch, seq len, embedding_dim
    x = jax.random.normal(kx, (B, T, E), dtype=jnp.float32)
    params, raw = init_params(kp, E)

    out = jax.block_until_ready(lstm_model_forward(x, params))

    assert out.shape == (B, NUM_CLASSES), out.shape
    assert out.dtype == jnp.float32
    # softmax rows sum to ~1 (approx-reciprocal tolerance)
    assert bool(jnp.allclose(jnp.sum(out, axis=-1), 1.0, atol=5e-3))
    # matches the pure-JAX reference (bf16 weights, f32 recurrence)
    ref = reference_forward(x, raw)
    max_err = float(jnp.max(jnp.abs(out - ref)))
    assert max_err < 3e-3, max_err

    print("KERNEL_OK")
</pallas_src>

<mosaic_0001>
module attributes {stable_mosaic.version = 11 : i64} {
  func.func @_bilstm_head_kernel(%arg0: memref<16x32xbf16, #tpu.memory_space<vmem>>, %arg1: memref<32x2048xbf16, #tpu.memory_space<vmem>>, %arg2: memref<1x2048xf32, #tpu.memory_space<vmem>>, %arg3: memref<256x1024xbf16, #tpu.memory_space<vmem>>, %arg4: memref<256x1024xbf16, #tpu.memory_space<vmem>>, %arg5: memref<256x128xbf16, #tpu.memory_space<vmem>>, %arg6: memref<256x128xbf16, #tpu.memory_space<vmem>>, %arg7: memref<1x128xf32, #tpu.memory_space<vmem>>, %arg8: memref<2x128xf32, #tpu.memory_space<vmem>>, %arg9: memref<16x2048xf32, #tpu.memory_space<vmem>>) attributes {dimension_semantics = [], scalar_prefetch = 0 : i64, scratch_operands = 1 : i64, tpu.core_type = #tpu.core_type<tc>} {
    %c0 = arith.constant 0 : index
    %c0_0 = arith.constant 0 : index
    %0 = vector.load %arg0[%c0, %c0_0] : memref<16x32xbf16, #tpu.memory_space<vmem>>, vector<16x32xbf16>
    %c0_1 = arith.constant 0 : index
    %c0_2 = arith.constant 0 : index
    %1 = vector.load %arg1[%c0_1, %c0_2] : memref<32x2048xbf16, #tpu.memory_space<vmem>>, vector<32x2048xbf16>
    %cst = arith.constant dense<0.000000e+00> : vector<16x2048xf32>
    %2 = tpu.matmul %0, %1, %cst {dimension_numbers = #tpu.dot_dimension_numbers<[1], [0], [0], [1], [0, 0, 1, 1], [], []>} : vector<16x32xbf16>, vector<32x2048xbf16>, vector<16x2048xf32> -> vector<16x2048xf32>
    %c0_3 = arith.constant 0 : index
    %c0_4 = arith.constant 0 : index
    %3 = vector.load %arg2[%c0_3, %c0_4] : memref<1x2048xf32, #tpu.memory_space<vmem>>, vector<1x2048xf32>
    %4 = vector.broadcast %3 : vector<1x2048xf32> to vector<16x2048xf32>
    %5 = arith.addf %2, %4 : vector<16x2048xf32>
    %c0_5 = arith.constant 0 : index
    %c0_6 = arith.constant 0 : index
    %6 = vector.load %arg9[%c0_5, %c0_6] : memref<16x2048xf32, #tpu.memory_space<vmem>>, vector<16x2048xf32>
    tpu.vector_store %arg9[%c0_5, %c0_6], %5 {strides = array<i32>} : memref<16x2048xf32, #tpu.memory_space<vmem>>, vector<16x2048xf32>,
    %c0_7 = arith.constant 0 : index
    %c0_8 = arith.constant 0 : index
    %7 = vector.load %arg3[%c0_7, %c0_8] : memref<256x1024xbf16, #tpu.memory_space<vmem>>, vector<256x1024xbf16>
    %c0_9 = arith.constant 0 : index
    %c0_10 = arith.constant 0 : index
    %8 = vector.load %arg4[%c0_9, %c0_10] : memref<256x1024xbf16, #tpu.memory_space<vmem>>, vector<256x1024xbf16>
    %cst_11 = arith.constant 0.000000e+00 : f32
    %9 = vector.broadcast %cst_11 : f32 to vector<2x256xf32>
    %cst_12 = arith.constant 0.000000e+00 : f32
    %10 = vector.broadcast %cst_12 : f32 to vector<2x256xf32>
    %cst_13 = arith.constant 0.000000e+00 : f32
    %11 = vector.broadcast %cst_13 : f32 to vector<2x256xf32>
    %cst_14 = arith.constant 0.000000e+00 : f32
    %12 = vector.broadcast %cst_14 : f32 to vector<2x256xf32>
    %c0_15 = arith.constant 0 : index
    %c0_16 = arith.constant 0 : index
    %13 = vector.load %arg9[%c0_15, %c0_16] : memref<16x2048xf32, #tpu.memory_space<vmem>>, vector<2x1024xf32>
    %c14 = arith.constant 14 : index
    %c1024 = arith.constant 1024 : index
    %14 = vector.load %arg9[%c14, %c1024] : memref<16x2048xf32, #tpu.memory_space<vmem>>, vector<2x1024xf32>
    %15 = arith.truncf %9 : vector<2x256xf32> to vector<2x256xbf16>
    %cst_17 = arith.constant dense<0.000000e+00> : vector<2x1024xf32>
    %16 = tpu.matmul %15, %7, %cst_17 {dimension_numbers = #tpu.dot_dimension_numbers<[1], [0], [0], [1], [0, 0, 1, 1], [], []>} : vector<2x256xbf16>, vector<256x1024xbf16>, vector<2x1024xf32> -> vector<2x1024xf32>
    %17 = arith.addf %16, %13 : vector<2x1024xf32>
    %18 = arith.truncf %11 : vector<2x256xf32> to vector<2x256xbf16>
    %cst_18 = arith.constant dense<0.000000e+00> : vector<2x1024xf32>
    %19 = tpu.matmul %18, %8, %cst_18 {dimension_numbers = #tpu.dot_dimension_numbers<[1], [0], [0], [1], [0, 0, 1, 1], [], []>} : vector<2x256xbf16>, vector<256x1024xbf16>, vector<2x1024xf32> -> vector<2x1024xf32>
    %20 = arith.addf %19, %14 : vector<2x1024xf32>
    %21 = vector.extract_strided_slice %17 {offsets = [0, 0], sizes = [2, 256], strides = [1, 1]} : vector<2x1024xf32> to vector<2x256xf32>
    %22 = arith.negf %21 : vector<2x256xf32>
    %23 = math.exp %22 : vector<2x256xf32>
    %cst_19 = arith.constant 1.000000e+00 : f32
    %24 = vector.broadcast %cst_19 : f32 to vector<2x256xf32>
    %25 = arith.addf %24, %23 : vector<2x256xf32>
    %26 = arith.divf %24, %25 : vector<2x256xf32>
    %27 = vector.extract_strided_slice %17 {offsets = [0, 256], sizes = [2, 256], strides = [1, 1]} : vector<2x1024xf32> to vector<2x256xf32>
    %28 = arith.negf %27 : vector<2x256xf32>
    %29 = math.exp %28 : vector<2x256xf32>
    %cst_20 = arith.constant 1.000000e+00 : f32
    %30 = vector.broadcast %cst_20 : f32 to vector<2x256xf32>
    %31 = arith.addf %30, %29 : vector<2x256xf32>
    %32 = arith.divf %30, %31 : vector<2x256xf32>
    %33 = vector.extract_strided_slice %17 {offsets = [0, 512], sizes = [2, 256], strides = [1, 1]} : vector<2x1024xf32> to vector<2x256xf32>
    %34 = math.tanh %33 : vector<2x256xf32>
    %35 = vector.extract_strided_slice %17 {offsets = [0, 768], sizes = [2, 256], strides = [1, 1]} : vector<2x1024xf32> to vector<2x256xf32>
    %36 = arith.negf %35 : vector<2x256xf32>
    %37 = math.exp %36 : vector<2x256xf32>
    %cst_21 = arith.constant 1.000000e+00 : f32
    %38 = vector.broadcast %cst_21 : f32 to vector<2x256xf32>
    %39 = arith.addf %38, %37 : vector<2x256xf32>
    %40 = arith.divf %38, %39 : vector<2x256xf32>
    %41 = arith.mulf %32, %10 : vector<2x256xf32>
    %42 = arith.mulf %26, %34 : vector<2x256xf32>
    %43 = arith.addf %41, %42 : vector<2x256xf32>
    %44 = math.tanh %43 : vector<2x256xf32>
    %45 = arith.mulf %40, %44 : vector<2x256xf32>
    %46 = vector.extract_strided_slice %20 {offsets = [0, 0], sizes = [2, 256], strides = [1, 1]} : vector<2x1024xf32> to vector<2x256xf32>
    %47 = arith.negf %46 : vector<2x256xf32>
    %48 = math.exp %47 : vector<2x256xf32>
    %cst_22 = arith.constant 1.000000e+00 : f32
    %49 = vector.broadcast %cst_22 : f32 to vector<2x256xf32>
    %50 = arith.addf %49, %48 : vector<2x256xf32>
    %51 = arith.divf %49, %50 : vector<2x256xf32>
    %52 = vector.extract_strided_slice %20 {offsets = [0, 256], sizes = [2, 256], strides = [1, 1]} : vector<2x1024xf32> to vector<2x256xf32>
    %53 = arith.negf %52 : vector<2x256xf32>
    %54 = math.exp %53 : vector<2x256xf32>
    %cst_23 = arith.constant 1.000000e+00 : f32
    %55 = vector.broadcast %cst_23 : f32 to vector<2x256xf32>
    %56 = arith.addf %55, %54 : vector<2x256xf32>
    %57 = arith.divf %55, %56 : vector<2x256xf32>
    %58 = vector.extract_strided_slice %20 {offsets = [0, 512], sizes = [2, 256], strides = [1, 1]} : vector<2x1024xf32> to vector<2x256xf32>
    %59 = math.tanh %58 : vector<2x256xf32>
    %60 = vector.extract_strided_slice %20 {offsets = [0, 768], sizes = [2, 256], strides = [1, 1]} : vector<2x1024xf32> to vector<2x256xf32>
    %61 = arith.negf %60 : vector<2x256xf32>
    %62 = math.exp %61 : vector<2x256xf32>
    %cst_24 = arith.constant 1.000000e+00 : f32
    %63 = vector.broadcast %cst_24 : f32 to vector<2x256xf32>
    %64 = arith.addf %63, %62 : vector<2x256xf32>
    %65 = arith.divf %63, %64 : vector<2x256xf32>
    %66 = arith.mulf %57, %12 : vector<2x256xf32>
    %67 = arith.mulf %51, %59 : vector<2x256xf32>
    %68 = arith.addf %66, %67 : vector<2x256xf32>
    %69 = math.tanh %68 : vector<2x256xf32>
    %70 = arith.mulf %65, %69 : vector<2x256xf32>
    %c2 = arith.constant 2 : index
    %c0_25 = arith.constant 0 : index
    %71 = vector.load %arg9[%c2, %c0_25] : memref<16x2048xf32, #tpu.memory_space<vmem>>, vector<2x1024xf32>
    %c12 = arith.constant 12 : index
    %c1024_26 = arith.constant 1024 : index
    %72 = vector.load %arg9[%c12, %c1024_26] : memref<16x2048xf32, #tpu.memory_space<vmem>>, vector<2x1024xf32>
    %73 = arith.truncf %45 : vector<2x256xf32> to vector<2x256xbf16>
    %cst_27 = arith.constant dense<0.000000e+00> : vector<2x1024xf32>
    %74 = tpu.matmul %73, %7, %cst_27 {dimension_numbers = #tpu.dot_dimension_numbers<[1], [0], [0], [1], [0, 0, 1, 1], [], []>} : vector<2x256xbf16>, vector<256x1024xbf16>, vector<2x1024xf32> -> vector<2x1024xf32>
    %75 = arith.addf %74, %71 : vector<2x1024xf32>
    %76 = arith.truncf %70 : vector<2x256xf32> to vector<2x256xbf16>
    %cst_28 = arith.constant dense<0.000000e+00> : vector<2x1024xf32>
    %77 = tpu.matmul %76, %8, %cst_28 {dimension_numbers = #tpu.dot_dimension_numbers<[1], [0], [0], [1], [0, 0, 1, 1], [], []>} : vector<2x256xbf16>, vector<256x1024xbf16>, vector<2x1024xf32> -> vector<2x1024xf32>
    %78 = arith.addf %77, %72 : vector<2x1024xf32>
    %79 = vector.extract_strided_slice %75 {offsets = [0, 0], sizes = [2, 256], strides = [1, 1]} : vector<2x1024xf32> to vector<2x256xf32>
    %80 = arith.negf %79 : vector<2x256xf32>
    %81 = math.exp %80 : vector<2x256xf32>
    %cst_29 = arith.constant 1.000000e+00 : f32
    %82 = vector.broadcast %cst_29 : f32 to vector<2x256xf32>
    %83 = arith.addf %82, %81 : vector<2x256xf32>
    %84 = arith.divf %82, %83 : vector<2x256xf32>
    %85 = vector.extract_strided_slice %75 {offsets = [0, 256], sizes = [2, 256], strides = [1, 1]} : vector<2x1024xf32> to vector<2x256xf32>
    %86 = arith.negf %85 : vector<2x256xf32>
    %87 = math.exp %86 : vector<2x256xf32>
    %cst_30 = arith.constant 1.000000e+00 : f32
    %88 = vector.broadcast %cst_30 : f32 to vector<2x256xf32>
    %89 = arith.addf %88, %87 : vector<2x256xf32>
    %90 = arith.divf %88, %89 : vector<2x256xf32>
    %91 = vector.extract_strided_slice %75 {offsets = [0, 512], sizes = [2, 256], strides = [1, 1]} : vector<2x1024xf32> to vector<2x256xf32>
    %92 = math.tanh %91 : vector<2x256xf32>
    %93 = vector.extract_strided_slice %75 {offsets = [0, 768], sizes = [2, 256], strides = [1, 1]} : vector<2x1024xf32> to vector<2x256xf32>
    %94 = arith.negf %93 : vector<2x256xf32>
    %95 = math.exp %94 : vector<2x256xf32>
    %cst_31 = arith.constant 1.000000e+00 : f32
    %96 = vector.broadcast %cst_31 : f32 to vector<2x256xf32>
    %97 = arith.addf %96, %95 : vector<2x256xf32>
    %98 = arith.divf %96, %97 : vector<2x256xf32>
    %99 = arith.mulf %90, %43 : vector<2x256xf32>
    %100 = arith.mulf %84, %92 : vector<2x256xf32>
    %101 = arith.addf %99, %100 : vector<2x256xf32>
    %102 = math.tanh %101 : vector<2x256xf32>
    %103 = arith.mulf %98, %102 : vector<2x256xf32>
    %104 = vector.extract_strided_slice %78 {offsets = [0, 0], sizes = [2, 256], strides = [1, 1]} : vector<2x1024xf32> to vector<2x256xf32>
    %105 = arith.negf %104 : vector<2x256xf32>
    %106 = math.exp %105 : vector<2x256xf32>
    %cst_32 = arith.constant 1.000000e+00 : f32
    %107 = vector.broadcast %cst_32 : f32 to vector<2x256xf32>
    %108 = arith.addf %107, %106 : vector<2x256xf32>
    %109 = arith.divf %107, %108 : vector<2x256xf32>
    %110 = vector.extract_strided_slice %78 {offsets = [0, 256], sizes = [2, 256], strides = [1, 1]} : vector<2x1024xf32> to vector<2x256xf32>
    %111 = arith.negf %110 : vector<2x256xf32>
    %112 = math.exp %111 : vector<2x256xf32>
    %cst_33 = arith.constant 1.000000e+00 : f32
    %113 = vector.broadcast %cst_33 : f32 to vector<2x256xf32>
    %114 = arith.addf %113, %112 : vector<2x256xf32>
    %115 = arith.divf %113, %114 : vector<2x256xf32>
    %116 = vector.extract_strided_slice %78 {offsets = [0, 512], sizes = [2, 256], strides = [1, 1]} : vector<2x1024xf32> to vector<2x256xf32>
    %117 = math.tanh %116 : vector<2x256xf32>
    %118 = vector.extract_strided_slice %78 {offsets = [0, 768], sizes = [2, 256], strides = [1, 1]} : vector<2x1024xf32> to vector<2x256xf32>
    %119 = arith.negf %118 : vector<2x256xf32>
    %120 = math.exp %119 : vector<2x256xf32>
    %cst_34 = arith.constant 1.000000e+00 : f32
    %121 = vector.broadcast %cst_34 : f32 to vector<2x256xf32>
    %122 = arith.addf %121, %120 : vector<2x256xf32>
    %123 = arith.divf %121, %122 : vector<2x256xf32>
    %124 = arith.mulf %115, %68 : vector<2x256xf32>
    %125 = arith.mulf %109, %117 : vector<2x256xf32>
    %126 = arith.addf %124, %125 : vector<2x256xf32>
    %127 = math.tanh %126 : vector<2x256xf32>
    %128 = arith.mulf %123, %127 : vector<2x256xf32>
    %c4 = arith.constant 4 : index
    %c0_35 = arith.constant 0 : index
    %129 = vector.load %arg9[%c4, %c0_35] : memref<16x2048xf32, #tpu.memory_space<vmem>>, vector<2x1024xf32>
    %c10 = arith.constant 10 : index
    %c1024_36 = arith.constant 1024 : index
    %130 = vector.load %arg9[%c10, %c1024_36] : memref<16x2048xf32, #tpu.memory_space<vmem>>, vector<2x1024xf32>
    %131 = arith.truncf %103 : vector<2x256xf32> to vector<2x256xbf16>
    %cst_37 = arith.constant dense<0.000000e+00> : vector<2x1024xf32>
    %132 = tpu.matmul %131, %7, %cst_37 {dimension_numbers = #tpu.dot_dimension_numbers<[1], [0], [0], [1], [0, 0, 1, 1], [], []>} : vector<2x256xbf16>, vector<256x1024xbf16>, vector<2x1024xf32> -> vector<2x1024xf32>
    %133 = arith.addf %132, %129 : vector<2x1024xf32>
    %134 = arith.truncf %128 : vector<2x256xf32> to vector<2x256xbf16>
    %cst_38 = arith.constant dense<0.000000e+00> : vector<2x1024xf32>
    %135 = tpu.matmul %134, %8, %cst_38 {dimension_numbers = #tpu.dot_dimension_numbers<[1], [0], [0], [1], [0, 0, 1, 1], [], []>} : vector<2x256xbf16>, vector<256x1024xbf16>, vector<2x1024xf32> -> vector<2x1024xf32>
    %136 = arith.addf %135, %130 : vector<2x1024xf32>
    %137 = vector.extract_strided_slice %133 {offsets = [0, 0], sizes = [2, 256], strides = [1, 1]} : vector<2x1024xf32> to vector<2x256xf32>
    %138 = arith.negf %137 : vector<2x256xf32>
    %139 = math.exp %138 : vector<2x256xf32>
    %cst_39 = arith.constant 1.000000e+00 : f32
    %140 = vector.broadcast %cst_39 : f32 to vector<2x256xf32>
    %141 = arith.addf %140, %139 : vector<2x256xf32>
    %142 = arith.divf %140, %141 : vector<2x256xf32>
    %143 = vector.extract_strided_slice %133 {offsets = [0, 256], sizes = [2, 256], strides = [1, 1]} : vector<2x1024xf32> to vector<2x256xf32>
    %144 = arith.negf %143 : vector<2x256xf32>
    %145 = math.exp %144 : vector<2x256xf32>
    %cst_40 = arith.constant 1.000000e+00 : f32
    %146 = vector.broadcast %cst_40 : f32 to vector<2x256xf32>
    %147 = arith.addf %146, %145 : vector<2x256xf32>
    %148 = arith.divf %146, %147 : vector<2x256xf32>
    %149 = vector.extract_strided_slice %133 {offsets = [0, 512], sizes = [2, 256], strides = [1, 1]} : vector<2x1024xf32> to vector<2x256xf32>
    %150 = math.tanh %149 : vector<2x256xf32>
    %151 = vector.extract_strided_slice %133 {offsets = [0, 768], sizes = [2, 256], strides = [1, 1]} : vector<2x1024xf32> to vector<2x256xf32>
    %152 = arith.negf %151 : vector<2x256xf32>
    %153 = math.exp %152 : vector<2x256xf32>
    %cst_41 = arith.constant 1.000000e+00 : f32
    %154 = vector.broadcast %cst_41 : f32 to vector<2x256xf32>
    %155 = arith.addf %154, %153 : vector<2x256xf32>
    %156 = arith.divf %154, %155 : vector<2x256xf32>
    %157 = arith.mulf %148, %101 : vector<2x256xf32>
    %158 = arith.mulf %142, %150 : vector<2x256xf32>
    %159 = arith.addf %157, %158 : vector<2x256xf32>
    %160 = math.tanh %159 : vector<2x256xf32>
    %161 = arith.mulf %156, %160 : vector<2x256xf32>
    %162 = vector.extract_strided_slice %136 {offsets = [0, 0], sizes = [2, 256], strides = [1, 1]} : vector<2x1024xf32> to vector<2x256xf32>
    %163 = arith.negf %162 : vector<2x256xf32>
    %164 = math.exp %163 : vector<2x256xf32>
    %cst_42 = arith.constant 1.000000e+00 : f32
    %165 = vector.broadcast %cst_42 : f32 to vector<2x256xf32>
    %166 = arith.addf %165, %164 : vector<2x256xf32>
    %167 = arith.divf %165, %166 : vector<2x256xf32>
    %168 = vector.extract_strided_slice %136 {offsets = [0, 256], sizes = [2, 256], strides = [1, 1]} : vector<2x1024xf32> to vector<2x256xf32>
    %169 = arith.negf %168 : vector<2x256xf32>
    %170 = math.exp %169 : vector<2x256xf32>
    %cst_43 = arith.constant 1.000000e+00 : f32
    %171 = vector.broadcast %cst_43 : f32 to vector<2x256xf32>
    %172 = arith.addf %171, %170 : vector<2x256xf32>
    %173 = arith.divf %171, %172 : vector<2x256xf32>
    %174 = vector.extract_strided_slice %136 {offsets = [0, 512], sizes = [2, 256], strides = [1, 1]} : vector<2x1024xf32> to vector<2x256xf32>
    %175 = math.tanh %174 : vector<2x256xf32>
    %176 = vector.extract_strided_slice %136 {offsets = [0, 768], sizes = [2, 256], strides = [1, 1]} : vector<2x1024xf32> to vector<2x256xf32>
    %177 = arith.negf %176 : vector<2x256xf32>
    %178 = math.exp %177 : vector<2x256xf32>
    %cst_44 = arith.constant 1.000000e+00 : f32
    %179 = vector.broadcast %cst_44 : f32 to vector<2x256xf32>
    %180 = arith.addf %179, %178 : vector<2x256xf32>
    %181 = arith.divf %179, %180 : vector<2x256xf32>
    %182 = arith.mulf %173, %126 : vector<2x256xf32>
    %183 = arith.mulf %167, %175 : vector<2x256xf32>
    %184 = arith.addf %182, %183 : vector<2x256xf32>
    %185 = math.tanh %184 : vector<2x256xf32>
    %186 = arith.mulf %181, %185 : vector<2x256xf32>
    %c6 = arith.constant 6 : index
    %c0_45 = arith.constant 0 : index
    %187 = vector.load %arg9[%c6, %c0_45] : memref<16x2048xf32, #tpu.memory_space<vmem>>, vector<2x1024xf32>
    %c8 = arith.constant 8 : index
    %c1024_46 = arith.constant 1024 : index
    %188 = vector.load %arg9[%c8, %c1024_46] : memref<16x2048xf32, #tpu.memory_space<vmem>>, vector<2x1024xf32>
    %189 = arith.truncf %161 : vector<2x256xf32> to vector<2x256xbf16>
    %cst_47 = arith.constant dense<0.000000e+00> : vector<2x1024xf32>
    %190 = tpu.matmul %189, %7, %cst_47 {dimension_numbers = #tpu.dot_dimension_numbers<[1], [0], [0], [1], [0, 0, 1, 1], [], []>} : vector<2x256xbf16>, vector<256x1024xbf16>, vector<2x1024xf32> -> vector<2x1024xf32>
    %191 = arith.addf %190, %187 : vector<2x1024xf32>
    %192 = arith.truncf %186 : vector<2x256xf32> to vector<2x256xbf16>
    %cst_48 = arith.constant dense<0.000000e+00> : vector<2x1024xf32>
    %193 = tpu.matmul %192, %8, %cst_48 {dimension_numbers = #tpu.dot_dimension_numbers<[1], [0], [0], [1], [0, 0, 1, 1], [], []>} : vector<2x256xbf16>, vector<256x1024xbf16>, vector<2x1024xf32> -> vector<2x1024xf32>
    %194 = arith.addf %193, %188 : vector<2x1024xf32>
    %195 = vector.extract_strided_slice %191 {offsets = [0, 0], sizes = [2, 256], strides = [1, 1]} : vector<2x1024xf32> to vector<2x256xf32>
    %196 = arith.negf %195 : vector<2x256xf32>
    %197 = math.exp %196 : vector<2x256xf32>
    %cst_49 = arith.constant 1.000000e+00 : f32
    %198 = vector.broadcast %cst_49 : f32 to vector<2x256xf32>
    %199 = arith.addf %198, %197 : vector<2x256xf32>
    %200 = arith.divf %198, %199 : vector<2x256xf32>
    %201 = vector.extract_strided_slice %191 {offsets = [0, 256], sizes = [2, 256], strides = [1, 1]} : vector<2x1024xf32> to vector<2x256xf32>
    %202 = arith.negf %201 : vector<2x256xf32>
    %203 = math.exp %202 : vector<2x256xf32>
    %cst_50 = arith.constant 1.000000e+00 : f32
    %204 = vector.broadcast %cst_50 : f32 to vector<2x256xf32>
    %205 = arith.addf %204, %203 : vector<2x256xf32>
    %206 = arith.divf %204, %205 : vector<2x256xf32>
    %207 = vector.extract_strided_slice %191 {offsets = [0, 512], sizes = [2, 256], strides = [1, 1]} : vector<2x1024xf32> to vector<2x256xf32>
    %208 = math.tanh %207 : vector<2x256xf32>
    %209 = vector.extract_strided_slice %191 {offsets = [0, 768], sizes = [2, 256], strides = [1, 1]} : vector<2x1024xf32> to vector<2x256xf32>
    %210 = arith.negf %209 : vector<2x256xf32>
    %211 = math.exp %210 : vector<2x256xf32>
    %cst_51 = arith.constant 1.000000e+00 : f32
    %212 = vector.broadcast %cst_51 : f32 to vector<2x256xf32>
    %213 = arith.addf %212, %211 : vector<2x256xf32>
    %214 = arith.divf %212, %213 : vector<2x256xf32>
    %215 = arith.mulf %206, %159 : vector<2x256xf32>
    %216 = arith.mulf %200, %208 : vector<2x256xf32>
    %217 = arith.addf %215, %216 : vector<2x256xf32>
    %218 = math.tanh %217 : vector<2x256xf32>
    %219 = arith.mulf %214, %218 : vector<2x256xf32>
    %220 = vector.extract_strided_slice %194 {offsets = [0, 0], sizes = [2, 256], strides = [1, 1]} : vector<2x1024xf32> to vector<2x256xf32>
    %221 = arith.negf %220 : vector<2x256xf32>
    %222 = math.exp %221 : vector<2x256xf32>
    %cst_52 = arith.constant 1.000000e+00 : f32
    %223 = vector.broadcast %cst_52 : f32 to vector<2x256xf32>
    %224 = arith.addf %223, %222 : vector<2x256xf32>
    %225 = arith.divf %223, %224 : vector<2x256xf32>
    %226 = vector.extract_strided_slice %194 {offsets = [0, 256], sizes = [2, 256], strides = [1, 1]} : vector<2x1024xf32> to vector<2x256xf32>
    %227 = arith.negf %226 : vector<2x256xf32>
    %228 = math.exp %227 : vector<2x256xf32>
    %cst_53 = arith.constant 1.000000e+00 : f32
    %229 = vector.broadcast %cst_53 : f32 to vector<2x256xf32>
    %230 = arith.addf %229, %228 : vector<2x256xf32>
    %231 = arith.divf %229, %230 : vector<2x256xf32>
    %232 = vector.extract_strided_slice %194 {offsets = [0, 512], sizes = [2, 256], strides = [1, 1]} : vector<2x1024xf32> to vector<2x256xf32>
    %233 = math.tanh %232 : vector<2x256xf32>
    %234 = vector.extract_strided_slice %194 {offsets = [0, 768], sizes = [2, 256], strides = [1, 1]} : vector<2x1024xf32> to vector<2x256xf32>
    %235 = arith.negf %234 : vector<2x256xf32>
    %236 = math.exp %235 : vector<2x256xf32>
    %cst_54 = arith.constant 1.000000e+00 : f32
    %237 = vector.broadcast %cst_54 : f32 to vector<2x256xf32>
    %238 = arith.addf %237, %236 : vector<2x256xf32>
    %239 = arith.divf %237, %238 : vector<2x256xf32>
    %240 = arith.mulf %231, %184 : vector<2x256xf32>
    %241 = arith.mulf %225, %233 : vector<2x256xf32>
    %242 = arith.addf %240, %241 : vector<2x256xf32>
    %243 = math.tanh %242 : vector<2x256xf32>
    %244 = arith.mulf %239, %243 : vector<2x256xf32>
    %c8_55 = arith.constant 8 : index
    %c0_56 = arith.constant 0 : index
    %245 = vector.load %arg9[%c8_55, %c0_56] : memref<16x2048xf32, #tpu.memory_space<vmem>>, vector<2x1024xf32>
    %c6_57 = arith.constant 6 : index
    %c1024_58 = arith.constant 1024 : index
    %246 = vector.load %arg9[%c6_57, %c1024_58] : memref<16x2048xf32, #tpu.memory_space<vmem>>, vector<2x1024xf32>
    %247 = arith.truncf %219 : vector<2x256xf32> to vector<2x256xbf16>
    %cst_59 = arith.constant dense<0.000000e+00> : vector<2x1024xf32>
    %248 = tpu.matmul %247, %7, %cst_59 {dimension_numbers = #tpu.dot_dimension_numbers<[1], [0], [0], [1], [0, 0, 1, 1], [], []>} : vector<2x256xbf16>, vector<256x1024xbf16>, vector<2x1024xf32> -> vector<2x1024xf32>
    %249 = arith.addf %248, %245 : vector<2x1024xf32>
    %250 = arith.truncf %244 : vector<2x256xf32> to vector<2x256xbf16>
    %cst_60 = arith.constant dense<0.000000e+00> : vector<2x1024xf32>
    %251 = tpu.matmul %250, %8, %cst_60 {dimension_numbers = #tpu.dot_dimension_numbers<[1], [0], [0], [1], [0, 0, 1, 1], [], []>} : vector<2x256xbf16>, vector<256x1024xbf16>, vector<2x1024xf32> -> vector<2x1024xf32>
    %252 = arith.addf %251, %246 : vector<2x1024xf32>
    %253 = vector.extract_strided_slice %249 {offsets = [0, 0], sizes = [2, 256], strides = [1, 1]} : vector<2x1024xf32> to vector<2x256xf32>
    %254 = arith.negf %253 : vector<2x256xf32>
    %255 = math.exp %254 : vector<2x256xf32>
    %cst_61 = arith.constant 1.000000e+00 : f32
    %256 = vector.broadcast %cst_61 : f32 to vector<2x256xf32>
    %257 = arith.addf %256, %255 : vector<2x256xf32>
    %258 = arith.divf %256, %257 : vector<2x256xf32>
    %259 = vector.extract_strided_slice %249 {offsets = [0, 256], sizes = [2, 256], strides = [1, 1]} : vector<2x1024xf32> to vector<2x256xf32>
    %260 = arith.negf %259 : vector<2x256xf32>
    %261 = math.exp %260 : vector<2x256xf32>
    %cst_62 = arith.constant 1.000000e+00 : f32
    %262 = vector.broadcast %cst_62 : f32 to vector<2x256xf32>
    %263 = arith.addf %262, %261 : vector<2x256xf32>
    %264 = arith.divf %262, %263 : vector<2x256xf32>
    %265 = vector.extract_strided_slice %249 {offsets = [0, 512], sizes = [2, 256], strides = [1, 1]} : vector<2x1024xf32> to vector<2x256xf32>
    %266 = math.tanh %265 : vector<2x256xf32>
    %267 = vector.extract_strided_slice %249 {offsets = [0, 768], sizes = [2, 256], strides = [1, 1]} : vector<2x1024xf32> to vector<2x256xf32>
    %268 = arith.negf %267 : vector<2x256xf32>
    %269 = math.exp %268 : vector<2x256xf32>
    %cst_63 = arith.constant 1.000000e+00 : f32
    %270 = vector.broadcast %cst_63 : f32 to vector<2x256xf32>
    %271 = arith.addf %270, %269 : vector<2x256xf32>
    %272 = arith.divf %270, %271 : vector<2x256xf32>
    %273 = arith.mulf %264, %217 : vector<2x256xf32>
    %274 = arith.mulf %258, %266 : vector<2x256xf32>
    %275 = arith.addf %273, %274 : vector<2x256xf32>
    %276 = math.tanh %275 : vector<2x256xf32>
    %277 = arith.mulf %272, %276 : vector<2x256xf32>
    %278 = vector.extract_strided_slice %252 {offsets = [0, 0], sizes = [2, 256], strides = [1, 1]} : vector<2x1024xf32> to vector<2x256xf32>
    %279 = arith.negf %278 : vector<2x256xf32>
    %280 = math.exp %279 : vector<2x256xf32>
    %cst_64 = arith.constant 1.000000e+00 : f32
    %281 = vector.broadcast %cst_64 : f32 to vector<2x256xf32>
    %282 = arith.addf %281, %280 : vector<2x256xf32>
    %283 = arith.divf %281, %282 : vector<2x256xf32>
    %284 = vector.extract_strided_slice %252 {offsets = [0, 256], sizes = [2, 256], strides = [1, 1]} : vector<2x1024xf32> to vector<2x256xf32>
    %285 = arith.negf %284 : vector<2x256xf32>
    %286 = math.exp %285 : vector<2x256xf32>
    %cst_65 = arith.constant 1.000000e+00 : f32
    %287 = vector.broadcast %cst_65 : f32 to vector<2x256xf32>
    %288 = arith.addf %287, %286 : vector<2x256xf32>
    %289 = arith.divf %287, %288 : vector<2x256xf32>
    %290 = vector.extract_strided_slice %252 {offsets = [0, 512], sizes = [2, 256], strides = [1, 1]} : vector<2x1024xf32> to vector<2x256xf32>
    %291 = math.tanh %290 : vector<2x256xf32>
    %292 = vector.extract_strided_slice %252 {offsets = [0, 768], sizes = [2, 256], strides = [1, 1]} : vector<2x1024xf32> to vector<2x256xf32>
    %293 = arith.negf %292 : vector<2x256xf32>
    %294 = math.exp %293 : vector<2x256xf32>
    %cst_66 = arith.constant 1.000000e+00 : f32
    %295 = vector.broadcast %cst_66 : f32 to vector<2x256xf32>
    %296 = arith.addf %295, %294 : vector<2x256xf32>
    %297 = arith.divf %295, %296 : vector<2x256xf32>
    %298 = arith.mulf %289, %242 : vector<2x256xf32>
    %299 = arith.mulf %283, %291 : vector<2x256xf32>
    %300 = arith.addf %298, %299 : vector<2x256xf32>
    %301 = math.tanh %300 : vector<2x256xf32>
    %302 = arith.mulf %297, %301 : vector<2x256xf32>
    %c10_67 = arith.constant 10 : index
    %c0_68 = arith.constant 0 : index
    %303 = vector.load %arg9[%c10_67, %c0_68] : memref<16x2048xf32, #tpu.memory_space<vmem>>, vector<2x1024xf32>
    %c4_69 = arith.constant 4 : index
    %c1024_70 = arith.constant 1024 : index
    %304 = vector.load %arg9[%c4_69, %c1024_70] : memref<16x2048xf32, #tpu.memory_space<vmem>>, vector<2x1024xf32>
    %305 = arith.truncf %277 : vector<2x256xf32> to vector<2x256xbf16>
    %cst_71 = arith.constant dense<0.000000e+00> : vector<2x1024xf32>
    %306 = tpu.matmul %305, %7, %cst_71 {dimension_numbers = #tpu.dot_dimension_numbers<[1], [0], [0], [1], [0, 0, 1, 1], [], []>} : vector<2x256xbf16>, vector<256x1024xbf16>, vector<2x1024xf32> -> vector<2x1024xf32>
    %307 = arith.addf %306, %303 : vector<2x1024xf32>
    %308 = arith.truncf %302 : vector<2x256xf32> to vector<2x256xbf16>
    %cst_72 = arith.constant dense<0.000000e+00> : vector<2x1024xf32>
    %309 = tpu.matmul %308, %8, %cst_72 {dimension_numbers = #tpu.dot_dimension_numbers<[1], [0], [0], [1], [0, 0, 1, 1], [], []>} : vector<2x256xbf16>, vector<256x1024xbf16>, vector<2x1024xf32> -> vector<2x1024xf32>
    %310 = arith.addf %309, %304 : vector<2x1024xf32>
    %311 = vector.extract_strided_slice %307 {offsets = [0, 0], sizes = [2, 256], strides = [1, 1]} : vector<2x1024xf32> to vector<2x256xf32>
    %312 = arith.negf %311 : vector<2x256xf32>
    %313 = math.exp %312 : vector<2x256xf32>
    %cst_73 = arith.constant 1.000000e+00 : f32
    %314 = vector.broadcast %cst_73 : f32 to vector<2x256xf32>
    %315 = arith.addf %314, %313 : vector<2x256xf32>
    %316 = arith.divf %314, %315 : vector<2x256xf32>
    %317 = vector.extract_strided_slice %307 {offsets = [0, 256], sizes = [2, 256], strides = [1, 1]} : vector<2x1024xf32> to vector<2x256xf32>
    %318 = arith.negf %317 : vector<2x256xf32>
    %319 = math.exp %318 : vector<2x256xf32>
    %cst_74 = arith.constant 1.000000e+00 : f32
    %320 = vector.broadcast %cst_74 : f32 to vector<2x256xf32>
    %321 = arith.addf %320, %319 : vector<2x256xf32>
    %322 = arith.divf %320, %321 : vector<2x256xf32>
    %323 = vector.extract_strided_slice %307 {offsets = [0, 512], sizes = [2, 256], strides = [1, 1]} : vector<2x1024xf32> to vector<2x256xf32>
    %324 = math.tanh %323 : vector<2x256xf32>
    %325 = vector.extract_strided_slice %307 {offsets = [0, 768], sizes = [2, 256], strides = [1, 1]} : vector<2x1024xf32> to vector<2x256xf32>
    %326 = arith.negf %325 : vector<2x256xf32>
    %327 = math.exp %326 : vector<2x256xf32>
    %cst_75 = arith.constant 1.000000e+00 : f32
    %328 = vector.broadcast %cst_75 : f32 to vector<2x256xf32>
    %329 = arith.addf %328, %327 : vector<2x256xf32>
    %330 = arith.divf %328, %329 : vector<2x256xf32>
    %331 = arith.mulf %322, %275 : vector<2x256xf32>
    %332 = arith.mulf %316, %324 : vector<2x256xf32>
    %333 = arith.addf %331, %332 : vector<2x256xf32>
    %334 = math.tanh %333 : vector<2x256xf32>
    %335 = arith.mulf %330, %334 : vector<2x256xf32>
    %336 = vector.extract_strided_slice %310 {offsets = [0, 0], sizes = [2, 256], strides = [1, 1]} : vector<2x1024xf32> to vector<2x256xf32>
    %337 = arith.negf %336 : vector<2x256xf32>
    %338 = math.exp %337 : vector<2x256xf32>
    %cst_76 = arith.constant 1.000000e+00 : f32
    %339 = vector.broadcast %cst_76 : f32 to vector<2x256xf32>
    %340 = arith.addf %339, %338 : vector<2x256xf32>
    %341 = arith.divf %339, %340 : vector<2x256xf32>
    %342 = vector.extract_strided_slice %310 {offsets = [0, 256], sizes = [2, 256], strides = [1, 1]} : vector<2x1024xf32> to vector<2x256xf32>
    %343 = arith.negf %342 : vector<2x256xf32>
    %344 = math.exp %343 : vector<2x256xf32>
    %cst_77 = arith.constant 1.000000e+00 : f32
    %345 = vector.broadcast %cst_77 : f32 to vector<2x256xf32>
    %346 = arith.addf %345, %344 : vector<2x256xf32>
    %347 = arith.divf %345, %346 : vector<2x256xf32>
    %348 = vector.extract_strided_slice %310 {offsets = [0, 512], sizes = [2, 256], strides = [1, 1]} : vector<2x1024xf32> to vector<2x256xf32>
    %349 = math.tanh %348 : vector<2x256xf32>
    %350 = vector.extract_strided_slice %310 {offsets = [0, 768], sizes = [2, 256], strides = [1, 1]} : vector<2x1024xf32> to vector<2x256xf32>
    %351 = arith.negf %350 : vector<2x256xf32>
    %352 = math.exp %351 : vector<2x256xf32>
    %cst_78 = arith.constant 1.000000e+00 : f32
    %353 = vector.broadcast %cst_78 : f32 to vector<2x256xf32>
    %354 = arith.addf %353, %352 : vector<2x256xf32>
    %355 = arith.divf %353, %354 : vector<2x256xf32>
    %356 = arith.mulf %347, %300 : vector<2x256xf32>
    %357 = arith.mulf %341, %349 : vector<2x256xf32>
    %358 = arith.addf %356, %357 : vector<2x256xf32>
    %359 = math.tanh %358 : vector<2x256xf32>
    %360 = arith.mulf %355, %359 : vector<2x256xf32>
    %c12_79 = arith.constant 12 : index
    %c0_80 = arith.constant 0 : index
    %361 = vector.load %arg9[%c12_79, %c0_80] : memref<16x2048xf32, #tpu.memory_space<vmem>>, vector<2x1024xf32>
    %c2_81 = arith.constant 2 : index
    %c1024_82 = arith.constant 1024 : index
    %362 = vector.load %arg9[%c2_81, %c1024_82] : memref<16x2048xf32, #tpu.memory_space<vmem>>, vector<2x1024xf32>
    %363 = arith.truncf %335 : vector<2x256xf32> to vector<2x256xbf16>
    %cst_83 = arith.constant dense<0.000000e+00> : vector<2x1024xf32>
    %364 = tpu.matmul %363, %7, %cst_83 {dimension_numbers = #tpu.dot_dimension_numbers<[1], [0], [0], [1], [0, 0, 1, 1], [], []>} : vector<2x256xbf16>, vector<256x1024xbf16>, vector<2x1024xf32> -> vector<2x1024xf32>
    %365 = arith.addf %364, %361 : vector<2x1024xf32>
    %366 = arith.truncf %360 : vector<2x256xf32> to vector<2x256xbf16>
    %cst_84 = arith.constant dense<0.000000e+00> : vector<2x1024xf32>
    %367 = tpu.matmul %366, %8, %cst_84 {dimension_numbers = #tpu.dot_dimension_numbers<[1], [0], [0], [1], [0, 0, 1, 1], [], []>} : vector<2x256xbf16>, vector<256x1024xbf16>, vector<2x1024xf32> -> vector<2x1024xf32>
    %368 = arith.addf %367, %362 : vector<2x1024xf32>
    %369 = vector.extract_strided_slice %365 {offsets = [0, 0], sizes = [2, 256], strides = [1, 1]} : vector<2x1024xf32> to vector<2x256xf32>
    %370 = arith.negf %369 : vector<2x256xf32>
    %371 = math.exp %370 : vector<2x256xf32>
    %cst_85 = arith.constant 1.000000e+00 : f32
    %372 = vector.broadcast %cst_85 : f32 to vector<2x256xf32>
    %373 = arith.addf %372, %371 : vector<2x256xf32>
    %374 = arith.divf %372, %373 : vector<2x256xf32>
    %375 = vector.extract_strided_slice %365 {offsets = [0, 256], sizes = [2, 256], strides = [1, 1]} : vector<2x1024xf32> to vector<2x256xf32>
    %376 = arith.negf %375 : vector<2x256xf32>
    %377 = math.exp %376 : vector<2x256xf32>
    %cst_86 = arith.constant 1.000000e+00 : f32
    %378 = vector.broadcast %cst_86 : f32 to vector<2x256xf32>
    %379 = arith.addf %378, %377 : vector<2x256xf32>
    %380 = arith.divf %378, %379 : vector<2x256xf32>
    %381 = vector.extract_strided_slice %365 {offsets = [0, 512], sizes = [2, 256], strides = [1, 1]} : vector<2x1024xf32> to vector<2x256xf32>
    %382 = math.tanh %381 : vector<2x256xf32>
    %383 = vector.extract_strided_slice %365 {offsets = [0, 768], sizes = [2, 256], strides = [1, 1]} : vector<2x1024xf32> to vector<2x256xf32>
    %384 = arith.negf %383 : vector<2x256xf32>
    %385 = math.exp %384 : vector<2x256xf32>
    %cst_87 = arith.constant 1.000000e+00 : f32
    %386 = vector.broadcast %cst_87 : f32 to vector<2x256xf32>
    %387 = arith.addf %386, %385 : vector<2x256xf32>
    %388 = arith.divf %386, %387 : vector<2x256xf32>
    %389 = arith.mulf %380, %333 : vector<2x256xf32>
    %390 = arith.mulf %374, %382 : vector<2x256xf32>
    %391 = arith.addf %389, %390 : vector<2x256xf32>
    %392 = math.tanh %391 : vector<2x256xf32>
    %393 = arith.mulf %388, %392 : vector<2x256xf32>
    %394 = vector.extract_strided_slice %368 {offsets = [0, 0], sizes = [2, 256], strides = [1, 1]} : vector<2x1024xf32> to vector<2x256xf32>
    %395 = arith.negf %394 : vector<2x256xf32>
    %396 = math.exp %395 : vector<2x256xf32>
    %cst_88 = arith.constant 1.000000e+00 : f32
    %397 = vector.broadcast %cst_88 : f32 to vector<2x256xf32>
    %398 = arith.addf %397, %396 : vector<2x256xf32>
    %399 = arith.divf %397, %398 : vector<2x256xf32>
    %400 = vector.extract_strided_slice %368 {offsets = [0, 256], sizes = [2, 256], strides = [1, 1]} : vector<2x1024xf32> to vector<2x256xf32>
    %401 = arith.negf %400 : vector<2x256xf32>
    %402 = math.exp %401 : vector<2x256xf32>
    %cst_89 = arith.constant 1.000000e+00 : f32
    %403 = vector.broadcast %cst_89 : f32 to vector<2x256xf32>
    %404 = arith.addf %403, %402 : vector<2x256xf32>
    %405 = arith.divf %403, %404 : vector<2x256xf32>
    %406 = vector.extract_strided_slice %368 {offsets = [0, 512], sizes = [2, 256], strides = [1, 1]} : vector<2x1024xf32> to vector<2x256xf32>
    %407 = math.tanh %406 : vector<2x256xf32>
    %408 = vector.extract_strided_slice %368 {offsets = [0, 768], sizes = [2, 256], strides = [1, 1]} : vector<2x1024xf32> to vector<2x256xf32>
    %409 = arith.negf %408 : vector<2x256xf32>
    %410 = math.exp %409 : vector<2x256xf32>
    %cst_90 = arith.constant 1.000000e+00 : f32
    %411 = vector.broadcast %cst_90 : f32 to vector<2x256xf32>
    %412 = arith.addf %411, %410 : vector<2x256xf32>
    %413 = arith.divf %411, %412 : vector<2x256xf32>
    %414 = arith.mulf %405, %358 : vector<2x256xf32>
    %415 = arith.mulf %399, %407 : vector<2x256xf32>
    %416 = arith.addf %414, %415 : vector<2x256xf32>
    %417 = math.tanh %416 : vector<2x256xf32>
    %418 = arith.mulf %413, %417 : vector<2x256xf32>
    %c14_91 = arith.constant 14 : index
    %c0_92 = arith.constant 0 : index
    %419 = vector.load %arg9[%c14_91, %c0_92] : memref<16x2048xf32, #tpu.memory_space<vmem>>, vector<2x1024xf32>
    %c0_93 = arith.constant 0 : index
    %c1024_94 = arith.constant 1024 : index
    %420 = vector.load %arg9[%c0_93, %c1024_94] : memref<16x2048xf32, #tpu.memory_space<vmem>>, vector<2x1024xf32>
    %421 = arith.truncf %393 : vector<2x256xf32> to vector<2x256xbf16>
    %cst_95 = arith.constant dense<0.000000e+00> : vector<2x1024xf32>
    %422 = tpu.matmul %421, %7, %cst_95 {dimension_numbers = #tpu.dot_dimension_numbers<[1], [0], [0], [1], [0, 0, 1, 1], [], []>} : vector<2x256xbf16>, vector<256x1024xbf16>, vector<2x1024xf32> -> vector<2x1024xf32>
    %423 = arith.addf %422, %419 : vector<2x1024xf32>
    %424 = arith.truncf %418 : vector<2x256xf32> to vector<2x256xbf16>
    %cst_96 = arith.constant dense<0.000000e+00> : vector<2x1024xf32>
    %425 = tpu.matmul %424, %8, %cst_96 {dimension_numbers = #tpu.dot_dimension_numbers<[1], [0], [0], [1], [0, 0, 1, 1], [], []>} : vector<2x256xbf16>, vector<256x1024xbf16>, vector<2x1024xf32> -> vector<2x1024xf32>
    %426 = arith.addf %425, %420 : vector<2x1024xf32>
    %427 = vector.extract_strided_slice %423 {offsets = [0, 0], sizes = [2, 256], strides = [1, 1]} : vector<2x1024xf32> to vector<2x256xf32>
    %428 = arith.negf %427 : vector<2x256xf32>
    %429 = math.exp %428 : vector<2x256xf32>
    %cst_97 = arith.constant 1.000000e+00 : f32
    %430 = vector.broadcast %cst_97 : f32 to vector<2x256xf32>
    %431 = arith.addf %430, %429 : vector<2x256xf32>
    %432 = arith.divf %430, %431 : vector<2x256xf32>
    %433 = vector.extract_strided_slice %423 {offsets = [0, 256], sizes = [2, 256], strides = [1, 1]} : vector<2x1024xf32> to vector<2x256xf32>
    %434 = arith.negf %433 : vector<2x256xf32>
    %435 = math.exp %434 : vector<2x256xf32>
    %cst_98 = arith.constant 1.000000e+00 : f32
    %436 = vector.broadcast %cst_98 : f32 to vector<2x256xf32>
    %437 = arith.addf %436, %435 : vector<2x256xf32>
    %438 = arith.divf %436, %437 : vector<2x256xf32>
    %439 = vector.extract_strided_slice %423 {offsets = [0, 512], sizes = [2, 256], strides = [1, 1]} : vector<2x1024xf32> to vector<2x256xf32>
    %440 = math.tanh %439 : vector<2x256xf32>
    %441 = vector.extract_strided_slice %423 {offsets = [0, 768], sizes = [2, 256], strides = [1, 1]} : vector<2x1024xf32> to vector<2x256xf32>
    %442 = arith.negf %441 : vector<2x256xf32>
    %443 = math.exp %442 : vector<2x256xf32>
    %cst_99 = arith.constant 1.000000e+00 : f32
    %444 = vector.broadcast %cst_99 : f32 to vector<2x256xf32>
    %445 = arith.addf %444, %443 : vector<2x256xf32>
    %446 = arith.divf %444, %445 : vector<2x256xf32>
    %447 = arith.mulf %438, %391 : vector<2x256xf32>
    %448 = arith.mulf %432, %440 : vector<2x256xf32>
    %449 = arith.addf %447, %448 : vector<2x256xf32>
    %450 = math.tanh %449 : vector<2x256xf32>
    %451 = arith.mulf %446, %450 : vector<2x256xf32>
    %452 = vector.extract_strided_slice %426 {offsets = [0, 0], sizes = [2, 256], strides = [1, 1]} : vector<2x1024xf32> to vector<2x256xf32>
    %453 = arith.negf %452 : vector<2x256xf32>
    %454 = math.exp %453 : vector<2x256xf32>
    %cst_100 = arith.constant 1.000000e+00 : f32
    %455 = vector.broadcast %cst_100 : f32 to vector<2x256xf32>
    %456 = arith.addf %455, %454 : vector<2x256xf32>
    %457 = arith.divf %455, %456 : vector<2x256xf32>
    %458 = vector.extract_strided_slice %426 {offsets = [0, 256], sizes = [2, 256], strides = [1, 1]} : vector<2x1024xf32> to vector<2x256xf32>
    %459 = arith.negf %458 : vector<2x256xf32>
    %460 = math.exp %459 : vector<2x256xf32>
    %cst_101 = arith.constant 1.000000e+00 : f32
    %461 = vector.broadcast %cst_101 : f32 to vector<2x256xf32>
    %462 = arith.addf %461, %460 : vector<2x256xf32>
    %463 = arith.divf %461, %462 : vector<2x256xf32>
    %464 = vector.extract_strided_slice %426 {offsets = [0, 512], sizes = [2, 256], strides = [1, 1]} : vector<2x1024xf32> to vector<2x256xf32>
    %465 = math.tanh %464 : vector<2x256xf32>
    %466 = vector.extract_strided_slice %426 {offsets = [0, 768], sizes = [2, 256], strides = [1, 1]} : vector<2x1024xf32> to vector<2x256xf32>
    %467 = arith.negf %466 : vector<2x256xf32>
    %468 = math.exp %467 : vector<2x256xf32>
    %cst_102 = arith.constant 1.000000e+00 : f32
    %469 = vector.broadcast %cst_102 : f32 to vector<2x256xf32>
    %470 = arith.addf %469, %468 : vector<2x256xf32>
    %471 = arith.divf %469, %470 : vector<2x256xf32>
    %472 = arith.mulf %463, %416 : vector<2x256xf32>
    %473 = arith.mulf %457, %465 : vector<2x256xf32>
    %474 = arith.addf %472, %473 : vector<2x256xf32>
    %475 = math.tanh %474 : vector<2x256xf32>
    %476 = arith.mulf %471, %475 : vector<2x256xf32>
    %477 = arith.truncf %451 : vector<2x256xf32> to vector<2x256xbf16>
    %c0_103 = arith.constant 0 : index
    %c0_104 = arith.constant 0 : index
    %478 = vector.load %arg5[%c0_103, %c0_104] : memref<256x128xbf16, #tpu.memory_space<vmem>>, vector<256x128xbf16>
    %cst_105 = arith.constant dense<0.000000e+00> : vector<2x128xf32>
    %479 = tpu.matmul %477, %478, %cst_105 {dimension_numbers = #tpu.dot_dimension_numbers<[1], [0], [0], [1], [0, 0, 1, 1], [], []>} : vector<2x256xbf16>, vector<256x128xbf16>, vector<2x128xf32> -> vector<2x128xf32>
    %480 = arith.truncf %476 : vector<2x256xf32> to vector<2x256xbf16>
    %c0_106 = arith.constant 0 : index
    %c0_107 = arith.constant 0 : index
    %481 = vector.load %arg6[%c0_106, %c0_107] : memref<256x128xbf16, #tpu.memory_space<vmem>>, vector<256x128xbf16>
    %cst_108 = arith.constant dense<0.000000e+00> : vector<2x128xf32>
    %482 = tpu.matmul %480, %481, %cst_108 {dimension_numbers = #tpu.dot_dimension_numbers<[1], [0], [0], [1], [0, 0, 1, 1], [], []>} : vector<2x256xbf16>, vector<256x128xbf16>, vector<2x128xf32> -> vector<2x128xf32>
    %483 = arith.addf %479, %482 : vector<2x128xf32>
    %c0_109 = arith.constant 0 : index
    %c0_110 = arith.constant 0 : index
    %484 = vector.load %arg7[%c0_109, %c0_110] : memref<1x128xf32, #tpu.memory_space<vmem>>, vector<1x128xf32>
    %485 = vector.broadcast %484 : vector<1x128xf32> to vector<2x128xf32>
    %486 = arith.addf %483, %485 : vector<2x128xf32>
    %cst_111 = arith.constant dense<0xFF800000> : vector<2xf32>
    %487 = vector.multi_reduction <maximumf>, %486, %cst_111 [1] : vector<2x128xf32> to vector<2xf32>
    %488 = vector.shape_cast %487 : vector<2xf32> to vector<2x1xf32>
    %489 = vector.broadcast %488 : vector<2x1xf32> to vector<2x128xf32>
    %490 = arith.subf %486, %489 : vector<2x128xf32>
    %491 = math.exp %490 : vector<2x128xf32>
    %cst_112 = arith.constant dense<0.000000e+00> : vector<2xf32>
    %492 = vector.multi_reduction <add>, %491, %cst_112 [1] : vector<2x128xf32> to vector<2xf32>
    %493 = vector.shape_cast %492 : vector<2xf32> to vector<2x1xf32>
    %494 = tpu.reciprocal %493 {approx = true} : vector<2x1xf32> -> vector<2x1xf32>
    %495 = vector.broadcast %494 : vector<2x1xf32> to vector<2x128xf32>
    %496 = arith.mulf %491, %495 : vector<2x128xf32>
    %c0_113 = arith.constant 0 : index
    %c0_114 = arith.constant 0 : index
    %497 = vector.load %arg8[%c0_113, %c0_114] : memref<2x128xf32, #tpu.memory_space<vmem>>, vector<2x128xf32>
    tpu.vector_store %arg8[%c0_113, %c0_114], %496 {strides = array<i32>} : memref<2x128xf32, #tpu.memory_space<vmem>>, vector<2x128xf32>,
    return
  }
}

</mosaic_0001>

<llo_original>
// kernel: tpu_custom_call.1
$region0: #{tpu_custom_call.1}
  #allocation0 [shape = 'u32[]', space=smem, size = 0x4, offset = 0x4, fixed_abs, tag = 'smem constant byte address 0x4 - core index']
  #allocation1 [shape = 'u32[144,128]{1,0:T(1,128)}', space=vmem, size = 0x12000, scoped, tag = 'internal scratch']
  #allocation2 [shape = 'f32[16,2048]{1,0:T(8,128)}', space=vmem, size = 0x20000, scoped, tag = 'scratch operand']
  %s0 = inlined_call_operand.hbm [shape: bf16[16,32], index: 0, kind: input, shape index: {}]
  %s1 = inlined_call_operand.hbm [shape: bf16[32,2048], index: 1, kind: input, shape index: {}]
  %s2 = inlined_call_operand.hbm [shape: f32[1,2048], index: 2, kind: input, shape index: {}]
  %s3 = inlined_call_operand.hbm [shape: bf16[256,1024], index: 3, kind: input, shape index: {}]
  %s4 = inlined_call_operand.hbm [shape: bf16[256,1024], index: 4, kind: input, shape index: {}]
  %s5 = inlined_call_operand.hbm [shape: bf16[256,128], index: 5, kind: input, shape index: {}]
  %s6 = inlined_call_operand.hbm [shape: bf16[256,128], index: 6, kind: input, shape index: {}]
  %s7 = inlined_call_operand.vmem [shape: f32[1,128], index: 7, kind: input, shape index: {}]
  %s8 = inlined_call_operand.hbm [shape: f32[2,128], index: 8, kind: output, shape index: {}]
  %s9 = sld [smem:[#allocation0]]
  $region70: #{tpu_custom_call.1} parent=0
    _
  %s11 = ssub.s32 1, %s9
  %s12 = scalar_select 0, %s11, %s9
  $region1: #{tpu_custom_call.1} parent=0
    #allocation3 [shape = 'u8[4096]{0}', space=vmem, size = 0x1000, scoped, tag = 'input window, operand 0, single buffered']
    #allocation4 [shape = 's32[1]{0}', space=sflag, size = 0x4, scoped, tag = 'scoped memory for tpu_custom_call.1']
    #allocation5 [shape = 's32[1]{0}', space=sflag, size = 0x4, scoped, tag = 'scoped memory for tpu_custom_call.1']
    #allocation6 [shape = 'u8[131072]{0}', space=vmem, size = 0x20000, scoped, tag = 'input window, operand 1, single buffered']
    #allocation7 [shape = 's32[1]{0}', space=sflag, size = 0x4, scoped, tag = 'scoped memory for tpu_custom_call.1']
    #allocation8 [shape = 'u8[8192]{0}', space=vmem, size = 0x2000, scoped, tag = 'input window, operand 2, single buffered']
    #allocation9 [shape = 'u8[524288]{0}', space=vmem, size = 0x80000, scoped, tag = 'input window, operand 3, single buffered']
    #allocation10 [shape = 's32[1]{0}', space=sflag, size = 0x4, scoped, tag = 'scoped memory for tpu_custom_call.1']
    #allocation11 [shape = 'u8[524288]{0}', space=vmem, size = 0x80000, scoped, tag = 'input window, operand 4, single buffered']
    #allocation12 [shape = 'u8[65536]{0}', space=vmem, size = 0x10000, scoped, tag = 'input window, operand 5, single buffered']
    #allocation13 [shape = 's32[1]{0}', space=sflag, size = 0x4, scoped, tag = 'scoped memory for tpu_custom_call.1']
    #allocation14 [shape = 'u8[65536]{0}', space=vmem, size = 0x10000, scoped, tag = 'input window, operand 6, single buffered']
    #allocation15 [shape = 'u8[1024]{0}', space=vmem, size = 0x400, scoped, tag = 'output window, operand 0, single buffered']
    %13 = vsyncpa [#allocation4], 0
    %14 = vsyncpa [#allocation7], 0
    %15 = vsyncpa [#allocation10], 0
    %16 = vsyncpa [#allocation13], 0
    %17 = vsyncpa [#allocation5], 0
    // Predicated region
    $region2: #{tpu_custom_call.1} parent=1 // pred_check
      _
    $region3: #{tpu_custom_call.1} parent=1 // pred_check_branch
      %19 = sbr.rel (0) target = $region5
    $region4: #{tpu_custom_call.1} parent=1 // pred_region
      %s21 = ssub.s32 128, 128
      %22 = vsyncadd [#allocation4], %s21
      %s23 = sshll.u32 [#allocation3], 4
      %s24 = int_to_ptr.vmem [resolvable:$true] %s23
      %29 = dma.hbm_to_vmem [thread:$0]  %s0, 128, %s24, [#allocation4], 64, 64, 4
    $region5: #{tpu_custom_call.1} parent=1 // pred_fallthru
      _
    // Predicated region
    $region6: #{tpu_custom_call.1} parent=1 // pred_check
      _
    $region7: #{tpu_custom_call.1} parent=1 // pred_check_branch
      %31 = sbr.rel (0) target = $region9
    $region8: #{tpu_custom_call.1} parent=1 // pred_region
      %s33 = ssub.s32 4096, 4096
      %34 = vsyncadd [#allocation7], %s33
      %s35 = sshll.u32 [#allocation6], 4
      %s36 = int_to_ptr.vmem [resolvable:$true] %s35
      %41 = dma.hbm_to_vmem [thread:$0]  %s1, 4096, %s36, [#allocation7], 1024, 1024, 64
    $region9: #{tpu_custom_call.1} parent=1 // pred_fallthru
      _
    // Predicated region
    $region10: #{tpu_custom_call.1} parent=1 // pred_check
      _
    $region11: #{tpu_custom_call.1} parent=1 // pred_check_branch
      %43 = sbr.rel (0) target = $region13
    $region12: #{tpu_custom_call.1} parent=1 // pred_region
      %s45 = ssub.s32 256, 256
      %46 = vsyncadd [#allocation7], %s45
      %s48 = sshll.u32 [#allocation8], 4
      %s49 = int_to_ptr.vmem [resolvable:$true] %s48
      %51 = dma.hbm_to_vmem [thread:$0]  %s2, 256, %s49, [#allocation7]
    $region13: #{tpu_custom_call.1} parent=1 // pred_fallthru
      _
    // Predicated region
    $region14: #{tpu_custom_call.1} parent=1 // pred_check
      _
    $region15: #{tpu_custom_call.1} parent=1 // pred_check_branch
      %53 = sbr.rel (0) target = $region17
    $region16: #{tpu_custom_call.1} parent=1 // pred_region
      %s55 = ssub.s32 16384, 16384
      %56 = vsyncadd [#allocation10], %s55
      %s57 = sshll.u32 [#allocation9], 4
      %s58 = int_to_ptr.vmem [resolvable:$true] %s57
      %63 = dma.hbm_to_vmem [thread:$0]  %s3, 16384, %s58, [#allocation10], 512, 512, 32
    $region17: #{tpu_custom_call.1} parent=1 // pred_fallthru
      _
    // Predicated region
    $region18: #{tpu_custom_call.1} parent=1 // pred_check
      _
    $region19: #{tpu_custom_call.1} parent=1 // pred_check_branch
      %65 = sbr.rel (0) target = $region21
    $region20: #{tpu_custom_call.1} parent=1 // pred_region
      %s67 = ssub.s32 16384, 16384
      %68 = vsyncadd [#allocation10], %s67
      %s69 = sshll.u32 [#allocation11], 4
      %s70 = int_to_ptr.vmem [resolvable:$true] %s69
      %75 = dma.hbm_to_vmem [thread:$0]  %s4, 16384, %s70, [#allocation10], 512, 512, 32
    $region21: #{tpu_custom_call.1} parent=1 // pred_fallthru
      _
    // Predicated region
    $region22: #{tpu_custom_call.1} parent=1 // pred_check
      _
    $region23: #{tpu_custom_call.1} parent=1 // pred_check_branch
      %77 = sbr.rel (0) target = $region25
    $region24: #{tpu_custom_call.1} parent=1 // pred_region
      %s79 = ssub.s32 2048, 2048
      %80 = vsyncadd [#allocation13], %s79
      %s81 = sshll.u32 [#allocation12], 4
      %s82 = int_to_ptr.vmem [resolvable:$true] %s81
      %87 = dma.hbm_to_vmem [thread:$0]  %s5, 2048, %s82, [#allocation13], 64, 64, 4
    $region25: #{tpu_custom_call.1} parent=1 // pred_fallthru
      _
    // Predicated region
    $region26: #{tpu_custom_call.1} parent=1 // pred_check
      _
    $region27: #{tpu_custom_call.1} parent=1 // pred_check_branch
      %89 = sbr.rel (0) target = $region29
    $region28: #{tpu_custom_call.1} parent=1 // pred_region
      %s91 = ssub.s32 2048, 2048
      %92 = vsyncadd [#allocation13], %s91
      %s93 = sshll.u32 [#allocation14], 4
      %s94 = int_to_ptr.vmem [resolvable:$true] %s93
      %99 = dma.hbm_to_vmem [thread:$0]  %s6, 2048, %s94, [#allocation13], 64, 64, 4
    $region29: #{tpu_custom_call.1} parent=1 // pred_fallthru
      _
    // Predicated region
    $region30: #{tpu_custom_call.1} parent=1 // pred_check
      _
    $region31: #{tpu_custom_call.1} parent=1 // pred_check_branch
      %101 = sbr.rel (0) target = $region33
    $region32: #{tpu_custom_call.1} parent=1 // pred_region
      _
    $region33: #{tpu_custom_call.1} parent=1 // pred_fallthru
      _
    // Predicated region
    $region34: #{tpu_custom_call.1} parent=1 // pred_check
      _
    $region35: #{tpu_custom_call.1} parent=1 // pred_check_branch
      %103 = sbr.rel (0) target = $region37
    $region36: #{tpu_custom_call.1} parent=1 // pred_region
      %104 = dma.done [#allocation4], 128
    $region37: #{tpu_custom_call.1} parent=1 // pred_fallthru
      _
    // Predicated region
    $region38: #{tpu_custom_call.1} parent=1 // pred_check
      _
    $region39: #{tpu_custom_call.1} parent=1 // pred_check_branch
      %106 = sbr.rel (0) target = $region41
    $region40: #{tpu_custom_call.1} parent=1 // pred_region
      %107 = dma.done [#allocation7], 4096
    $region41: #{tpu_custom_call.1} parent=1 // pred_fallthru
      _
    // Predicated region
    $region42: #{tpu_custom_call.1} parent=1 // pred_check
      _
    $region43: #{tpu_custom_call.1} parent=1 // pred_check_branch
      %109 = sbr.rel (0) target = $region45
    $region44: #{tpu_custom_call.1} parent=1 // pred_region
      %110 = dma.done [#allocation7], 256
    $region45: #{tpu_custom_call.1} parent=1 // pred_fallthru
      _
    // Predicated region
    $region46: #{tpu_custom_call.1} parent=1 // pred_check
      _
    $region47: #{tpu_custom_call.1} parent=1 // pred_check_branch
      %112 = sbr.rel (0) target = $region49
    $region48: #{tpu_custom_call.1} parent=1 // pred_region
      %113 = dma.done [#allocation10], 16384
    $region49: #{tpu_custom_call.1} parent=1 // pred_fallthru
      _
    // Predicated region
    $region50: #{tpu_custom_call.1} parent=1 // pred_check
      _
    $region51: #{tpu_custom_call.1} parent=1 // pred_check_branch
      %115 = sbr.rel (0) target = $region53
    $region52: #{tpu_custom_call.1} parent=1 // pred_region
      %116 = dma.done [#allocation10], 16384
    $region53: #{tpu_custom_call.1} parent=1 // pred_fallthru
      _
    // Predicated region
    $region54: #{tpu_custom_call.1} parent=1 // pred_check
      _
    $region55: #{tpu_custom_call.1} parent=1 // pred_check_branch
      %118 = sbr.rel (0) target = $region57
    $region56: #{tpu_custom_call.1} parent=1 // pred_region
      %119 = dma.done [#allocation13], 2048
    $region57: #{tpu_custom_call.1} parent=1 // pred_fallthru
      _
    // Predicated region
    $region58: #{tpu_custom_call.1} parent=1 // pred_check
      _
    $region59: #{tpu_custom_call.1} parent=1 // pred_check_branch
      %121 = sbr.rel (0) target = $region61
    $region60: #{tpu_custom_call.1} parent=1 // pred_region
      %122 = dma.done [#allocation13], 2048
    $region61: #{tpu_custom_call.1} parent=1 // pred_fallthru
      _
    %v124 = vld [vmem:[#allocation3] sm:$0xf]
    %v125 = vld [vmem:[#allocation3 + $0x4] sm:$0xf]
    %v126 = vld [vmem:[#allocation6] sm:$0xff]
    %v127 = vld [vmem:[#allocation6 + $0x8] sm:$0xff]
    %v128 = vld [vmem:[#allocation6 + $0x10] sm:$0xff]
    %v129 = vld [vmem:[#allocation6 + $0x18] sm:$0xff]
    %v130 = vld [vmem:[#allocation6 + $0x20] sm:$0xff]
    %v131 = vld [vmem:[#allocation6 + $0x28] sm:$0xff]
    %v132 = vld [vmem:[#allocation6 + $0x30] sm:$0xff]
    %v133 = vld [vmem:[#allocation6 + $0x38] sm:$0xff]
    %v134 = vld [vmem:[#allocation6 + $0x40] sm:$0xff]
    %v135 = vld [vmem:[#allocation6 + $0x48] sm:$0xff]
    %v136 = vld [vmem:[#allocation6 + $0x50] sm:$0xff]
    %v137 = vld [vmem:[#allocation6 + $0x58] sm:$0xff]
    %v138 = vld [vmem:[#allocation6 + $0x60] sm:$0xff]
    %v139 = vld [vmem:[#allocation6 + $0x68] sm:$0xff]
    %v140 = vld [vmem:[#allocation6 + $0x70] sm:$0xff]
    %v141 = vld [vmem:[#allocation6 + $0x78] sm:$0xff]
    %v142 = vld [vmem:[#allocation6 + $0x80] sm:$0xff]
    %v143 = vld [vmem:[#allocation6 + $0x88] sm:$0xff]
    %v144 = vld [vmem:[#allocation6 + $0x90] sm:$0xff]
    %v145 = vld [vmem:[#allocation6 + $0x98] sm:$0xff]
    %v146 = vld [vmem:[#allocation6 + $0xa0] sm:$0xff]
    %v147 = vld [vmem:[#allocation6 + $0xa8] sm:$0xff]
    %v148 = vld [vmem:[#allocation6 + $0xb0] sm:$0xff]
    %v149 = vld [vmem:[#allocation6 + $0xb8] sm:$0xff]
    %v150 = vld [vmem:[#allocation6 + $0xc0] sm:$0xff]
    %v151 = vld [vmem:[#allocation6 + $0xc8] sm:$0xff]
    %v152 = vld [vmem:[#allocation6 + $0xd0] sm:$0xff]
    %v153 = vld [vmem:[#allocation6 + $0xd8] sm:$0xff]
    %v154 = vld [vmem:[#allocation6 + $0xe0] sm:$0xff]
    %v155 = vld [vmem:[#allocation6 + $0xe8] sm:$0xff]
    %v156 = vld [vmem:[#allocation6 + $0xf0] sm:$0xff]
    %v157 = vld [vmem:[#allocation6 + $0xf8] sm:$0xff]
    %v158 = vld [vmem:[#allocation8] sm:$0xff]
    %v159 = vld [vmem:[#allocation8 + $0x8] sm:$0xff]
    %v162 = vlaneseq
    %v163 = vshrl.u32 %v162, 7
    %v164 = vsub.s32 0, %v163
    %v165 = vrot.slane %v158, %v164
    %v166 = vlaneseq
    %v167 = vshrl.u32 %v166, 7
    %v168 = vsub.s32 1, %v167
    %v169 = vrot.slane %v158, %v168
    %v170 = vlaneseq
    %v171 = vshrl.u32 %v170, 7
    %v172 = vsub.s32 2, %v171
    %v173 = vrot.slane %v158, %v172
    %v174 = vlaneseq
    %v175 = vshrl.u32 %v174, 7
    %v176 = vsub.s32 3, %v175
    %v177 = vrot.slane %v158, %v176
    %v178 = vlaneseq
    %v179 = vshrl.u32 %v178, 7
    %v180 = vsub.s32 4, %v179
    %v181 = vrot.slane %v158, %v180
    %v182 = vlaneseq
    %v183 = vshrl.u32 %v182, 7
    %v184 = vsub.s32 5, %v183
    %v185 = vrot.slane %v158, %v184
    %v186 = vlaneseq
    %v187 = vshrl.u32 %v186, 7
    %v188 = vsub.s32 6, %v187
    %v189 = vrot.slane %v158, %v188
    %v190 = vlaneseq
    %v191 = vshrl.u32 %v190, 7
    %v192 = vsub.s32 7, %v191
    %v193 = vrot.slane %v158, %v192
    %v194 = vlaneseq
    %v195 = vshrl.u32 %v194, 7
    %v196 = vsub.s32 0, %v195
    %v197 = vrot.slane %v159, %v196
    %v198 = vlaneseq
    %v199 = vshrl.u32 %v198, 7
    %v200 = vsub.s32 1, %v199
    %v201 = vrot.slane %v159, %v200
    %v202 = vlaneseq
    %v203 = vshrl.u32 %v202, 7
    %v204 = vsub.s32 2, %v203
    %v205 = vrot.slane %v159, %v204
    %v206 = vlaneseq
    %v207 = vshrl.u32 %v206, 7
    %v208 = vsub.s32 3, %v207
    %v209 = vrot.slane %v159, %v208
    %v210 = vlaneseq
    %v211 = vshrl.u32 %v210, 7
    %v212 = vsub.s32 4, %v211
    %v213 = vrot.slane %v159, %v212
    %v214 = vlaneseq
    %v215 = vshrl.u32 %v214, 7
    %v216 = vsub.s32 5, %v215
    %v217 = vrot.slane %v159, %v216
    %v218 = vlaneseq
    %v219 = vshrl.u32 %v218, 7
    %v220 = vsub.s32 6, %v219
    %v221 = vrot.slane %v159, %v220
    %v222 = vlaneseq
    %v223 = vshrl.u32 %v222, 7
    %v224 = vsub.s32 7, %v223
    %v225 = vrot.slane %v159, %v224
    %v244 = vunpack.c.l.b16 %v124
    %v245 = vunpack.c.l.b16 %v125
    %v246 = vpack.c.b16 %v245, %v244
    %v279 = vunpack.c.l.b16 %v126
    %v280 = vunpack.c.h.b16 %v126
    %v281 = vunpack.c.l.b16 %v127
    %v282 = vunpack.c.h.b16 %v127
    %v283 = vunpack.c.l.b16 %v128
    %v284 = vunpack.c.h.b16 %v128
    %v285 = vunpack.c.l.b16 %v129
    %v286 = vunpack.c.h.b16 %v129
    %v287 = vunpack.c.l.b16 %v130
    %v288 = vunpack.c.h.b16 %v130
    %v289 = vunpack.c.l.b16 %v131
    %v290 = vunpack.c.h.b16 %v131
    %v291 = vunpack.c.l.b16 %v132
    %v292 = vunpack.c.h.b16 %v132
    %v293 = vunpack.c.l.b16 %v133
    %v294 = vunpack.c.h.b16 %v133
    %v295 = vunpack.c.l.b16 %v134
    %v296 = vunpack.c.h.b16 %v134
    %v297 = vunpack.c.l.b16 %v135
    %v298 = vunpack.c.h.b16 %v135
    %v299 = vunpack.c.l.b16 %v136
    %v300 = vunpack.c.h.b16 %v136
    %v301 = vunpack.c.l.b16 %v137
    %v302 = vunpack.c.h.b16 %v137
    %v303 = vunpack.c.l.b16 %v138
    %v304 = vunpack.c.h.b16 %v138
    %v305 = vunpack.c.l.b16 %v139
    %v306 = vunpack.c.h.b16 %v139
    %v307 = vunpack.c.l.b16 %v140
    %v308 = vunpack.c.h.b16 %v140
    %v309 = vunpack.c.l.b16 %v141
    %v310 = vunpack.c.h.b16 %v141
    %v311 = vunpack.c.l.b16 %v142
    %v312 = vunpack.c.h.b16 %v142
    %v313 = vunpack.c.l.b16 %v143
    %v314 = vunpack.c.h.b16 %v143
    %v315 = vunpack.c.l.b16 %v144
    %v316 = vunpack.c.h.b16 %v144
    %v317 = vunpack.c.l.b16 %v145
    %v318 = vunpack.c.h.b16 %v145
    %v319 = vunpack.c.l.b16 %v146
    %v320 = vunpack.c.h.b16 %v146
    %v321 = vunpack.c.l.b16 %v147
    %v322 = vunpack.c.h.b16 %v147
    %v323 = vunpack.c.l.b16 %v148
    %v324 = vunpack.c.h.b16 %v148
    %v325 = vunpack.c.l.b16 %v149
    %v326 = vunpack.c.h.b16 %v149
    %v327 = vunpack.c.l.b16 %v150
    %v328 = vunpack.c.h.b16 %v150
    %v329 = vunpack.c.l.b16 %v151
    %v330 = vunpack.c.h.b16 %v151
    %v331 = vunpack.c.l.b16 %v152
    %v332 = vunpack.c.h.b16 %v152
    %v333 = vunpack.c.l.b16 %v153
    %v334 = vunpack.c.h.b16 %v153
    %v335 = vunpack.c.l.b16 %v154
    %v336 = vunpack.c.h.b16 %v154
    %v337 = vunpack.c.l.b16 %v155
    %v338 = vunpack.c.h.b16 %v155
    %v339 = vunpack.c.l.b16 %v156
    %v340 = vunpack.c.h.b16 %v156
    %v341 = vunpack.c.l.b16 %v157
    %v342 = vunpack.c.h.b16 %v157
    %v343 = vpack.c.b16 %v295, %v279
    %v344 = vpack.c.b16 %v296, %v280
    %v345 = vpack.c.b16 %v297, %v281
    %v346 = vpack.c.b16 %v298, %v282
    %v347 = vpack.c.b16 %v299, %v283
    %v348 = vpack.c.b16 %v300, %v284
    %v349 = vpack.c.b16 %v301, %v285
    %v350 = vpack.c.b16 %v302, %v286
    %v351 = vpack.c.b16 %v303, %v287
    %v352 = vpack.c.b16 %v304, %v288
    %v353 = vpack.c.b16 %v305, %v289
    %v354 = vpack.c.b16 %v306, %v290
    %v355 = vpack.c.b16 %v307, %v291
    %v356 = vpack.c.b16 %v308, %v292
    %v357 = vpack.c.b16 %v309, %v293
    %v358 = vpack.c.b16 %v310, %v294
    %v359 = vpack.c.b16 %v327, %v311
    %v360 = vpack.c.b16 %v328, %v312
    %v361 = vpack.c.b16 %v329, %v313
    %v362 = vpack.c.b16 %v330, %v314
    %v363 = vpack.c.b16 %v331, %v315
    %v364 = vpack.c.b16 %v332, %v316
    %v365 = vpack.c.b16 %v333, %v317
    %v366 = vpack.c.b16 %v334, %v318
    %v367 = vpack.c.b16 %v335, %v319
    %v368 = vpack.c.b16 %v336, %v320
    %v369 = vpack.c.b16 %v337, %v321
    %v370 = vpack.c.b16 %v338, %v322
    %v371 = vpack.c.b16 %v339, %v323
    %v372 = vpack.c.b16 %v340, %v324
    %v373 = vpack.c.b16 %v341, %v325
    %v374 = vpack.c.b16 %v342, %v326
    %vm407 = vcmask 261120
    %v409 = vsel %vm407, %v246, 0
    %411 = vmatprep.subr.bf16.mxu0 %v344
    %412 = vmatpush1.bf16.msra.mxu0 %v343
    %413 = vmatprep.subr.bf16.mxu0 %v360
    %414 = vmatpush1.bf16.msra.mxu0 %v359
    %415 = vmatprep.subr.bf16.mxu0 0
    %416 = vmatpush1.bf16.msra.mxu0 0
    %417 = vmatprep.subr.bf16.mxu0 0
    %418 = vmatpush1.bf16.msra.mxu0 0
    %419 = vmatprep.subr.bf16.mxu0 0
    %420 = vmatpush1.bf16.msra.mxu0 0
    %421 = vmatprep.subr.bf16.mxu0 0
    %422 = vmatpush1.bf16.msra.mxu0 0
    %423 = vmatprep.subr.bf16.mxu0 0
    %424 = vmatpush1.bf16.msra.mxu0 0
    %425 = vmatprep.subr.bf16.mxu0 0
    %426 = vmatpush1.bf16.msra.mxu0 0
    %427 = vmatprep.subr.bf16.mxu0 0
    %428 = vmatpush1.bf16.msra.mxu0 0
    %429 = vmatprep.subr.bf16.mxu0 0
    %430 = vmatpush1.bf16.msra.mxu0 0
    %431 = vmatprep.subr.bf16.mxu0 0
    %432 = vmatpush1.bf16.msra.mxu0 0
    %433 = vmatprep.subr.bf16.mxu0 0
    %434 = vmatpush1.bf16.msra.mxu0 0
    %435 = vmatprep.subr.bf16.mxu0 0
    %436 = vmatpush1.bf16.msra.mxu0 0
    %437 = vmatprep.subr.bf16.mxu0 0
    %438 = vmatpush1.bf16.msra.mxu0 0
    %439 = vmatprep.subr.bf16.mxu0 0
    %440 = vmatpush1.bf16.msra.mxu0 0
    %441 = vmatprep.subr.bf16.mxu0 0
    %442 = vmatpush1.bf16.msra.mxu0 0
    %443 = vmatprep.mubr.bf16.mxu0 0
    %444 = vmatmul.mubr.bf16.gmra.mrb[0].mxu0 %v409
    %v445 = vpop.f32.mrb[0].mxu0
    %v446 = vadd.f32 %v165, %v445
    %v447 = vpop.f32.mrb[0].mxu0
    %v448 = vadd.f32 %v169, %v447
    %v449 = vpop.f32.mrb[0].mxu0
    %v450 = vadd.f32 %v165, %v449
    %v451 = vpop.f32.mrb[0].mxu0
    %v452 = vadd.f32 %v169, %v451
    %453 = vdwg.mxu0
    %454 = vmatprep.subr.bf16.mxu0 %v346
    %455 = vmatpush1.bf16.msra.mxu0 %v345
    %456 = vmatprep.subr.bf16.mxu0 %v362
    %457 = vmatpush1.bf16.msra.mxu0 %v361
    %458 = vmatprep.subr.bf16.mxu0 0
    %459 = vmatpush1.bf16.msra.mxu0 0
    %460 = vmatprep.subr.bf16.mxu0 0
    %461 = vmatpush1.bf16.msra.mxu0 0
    %462 = vmatprep.subr.bf16.mxu0 0
    %463 = vmatpush1.bf16.msra.mxu0 0
    %464 = vmatprep.subr.bf16.mxu0 0
    %465 = vmatpush1.bf16.msra.mxu0 0
    %466 = vmatprep.subr.bf16.mxu0 0
    %467 = vmatpush1.bf16.msra.mxu0 0
    %468 = vmatprep.subr.bf16.mxu0 0
    %469 = vmatpush1.bf16.msra.mxu0 0
    %470 = vmatprep.subr.bf16.mxu0 0
    %471 = vmatpush1.bf16.msra.mxu0 0
    %472 = vmatprep.subr.bf16.mxu0 0
    %473 = vmatpush1.bf16.msra.mxu0 0
    %474 = vmatprep.subr.bf16.mxu0 0
    %475 = vmatpush1.bf16.msra.mxu0 0
    %476 = vmatprep.subr.bf16.mxu0 0
    %477 = vmatpush1.bf16.msra.mxu0 0
    %478 = vmatprep.subr.bf16.mxu0 0
    %479 = vmatpush1.bf16.msra.mxu0 0
    %480 = vmatprep.subr.bf16.mxu0 0
    %481 = vmatpush1.bf16.msra.mxu0 0
    %482 = vmatprep.subr.bf16.mxu0 0
    %483 = vmatpush1.bf16.msra.mxu0 0
    %484 = vmatprep.subr.bf16.mxu0 0
    %485 = vmatpush1.bf16.msra.mxu0 0
    %486 = vmatprep.mubr.bf16.mxu0 0
    %487 = vmatmul.mubr.bf16.gmra.mrb[0].mxu0 %v409
    %v488 = vpop.f32.mrb[0].mxu0
    %v489 = vadd.f32 %v173, %v488
    %v490 = vpop.f32.mrb[0].mxu0
    %v491 = vadd.f32 %v177, %v490
    %v492 = vpop.f32.mrb[0].mxu0
    %v493 = vadd.f32 %v173, %v492
    %v494 = vpop.f32.mrb[0].mxu0
    %v495 = vadd.f32 %v177, %v494
    %496 = vdwg.mxu0
    %497 = vmatprep.subr.bf16.mxu0 %v348
    %498 = vmatpush1.bf16.msra.mxu0 %v347
    %499 = vmatprep.subr.bf16.mxu0 %v364
    %500 = vmatpush1.bf16.msra.mxu0 %v363
    %501 = vmatprep.subr.bf16.mxu0 0
    %502 = vmatpush1.bf16.msra.mxu0 0
    %503 = vmatprep.subr.bf16.mxu0 0
    %504 = vmatpush1.bf16.msra.mxu0 0
    %505 = vmatprep.subr.bf16.mxu0 0
    %506 = vmatpush1.bf16.msra.mxu0 0
    %507 = vmatprep.subr.bf16.mxu0 0
    %508 = vmatpush1.bf16.msra.mxu0 0
    %509 = vmatprep.subr.bf16.mxu0 0
    %510 = vmatpush1.bf16.msra.mxu0 0
    %511 = vmatprep.subr.bf16.mxu0 0
    %512 = vmatpush1.bf16.msra.mxu0 0
    %513 = vmatprep.subr.bf16.mxu0 0
    %514 = vmatpush1.bf16.msra.mxu0 0
    %515 = vmatprep.subr.bf16.mxu0 0
    %516 = vmatpush1.bf16.msra.mxu0 0
    %517 = vmatprep.subr.bf16.mxu0 0
    %518 = vmatpush1.bf16.msra.mxu0 0
    %519 = vmatprep.subr.bf16.mxu0 0
    %520 = vmatpush1.bf16.msra.mxu0 0
    %521 = vmatprep.subr.bf16.mxu0 0
    %522 = vmatpush1.bf16.msra.mxu0 0
    %523 = vmatprep.subr.bf16.mxu0 0
    %524 = vmatpush1.bf16.msra.mxu0 0
    %525 = vmatprep.subr.bf16.mxu0 0
    %526 = vmatpush1.bf16.msra.mxu0 0
    %527 = vmatprep.subr.bf16.mxu0 0
    %528 = vmatpush1.bf16.msra.mxu0 0
    %529 = vmatprep.mubr.bf16.mxu0 0
    %530 = vmatmul.mubr.bf16.gmra.mrb[0].mxu0 %v409
    %v531 = vpop.f32.mrb[0].mxu0
    %v532 = vadd.f32 %v181, %v531
    %v533 = vpop.f32.mrb[0].mxu0
    %v534 = vadd.f32 %v185, %v533
    %v535 = vpop.f32.mrb[0].mxu0
    %v536 = vadd.f32 %v181, %v535
    %v537 = vpop.f32.mrb[0].mxu0
    %v538 = vadd.f32 %v185, %v537
    %539 = vdwg.mxu0
    %540 = vmatprep.subr.bf16.mxu0 %v350
    %541 = vmatpush1.bf16.msra.mxu0 %v349
    %542 = vmatprep.subr.bf16.mxu0 %v366
    %543 = vmatpush1.bf16.msra.mxu0 %v365
    %544 = vmatprep.subr.bf16.mxu0 0
    %545 = vmatpush1.bf16.msra.mxu0 0
    %546 = vmatprep.subr.bf16.mxu0 0
    %547 = vmatpush1.bf16.msra.mxu0 0
    %548 = vmatprep.subr.bf16.mxu0 0
    %549 = vmatpush1.bf16.msra.mxu0 0
    %550 = vmatprep.subr.bf16.mxu0 0
    %551 = vmatpush1.bf16.msra.mxu0 0
    %552 = vmatprep.subr.bf16.mxu0 0
    %553 = vmatpush1.bf16.msra.mxu0 0
    %554 = vmatprep.subr.bf16.mxu0 0
    %555 = vmatpush1.bf16.msra.mxu0 0
    %556 = vmatprep.subr.bf16.mxu0 0
    %557 = vmatpush1.bf16.msra.mxu0 0
    %558 = vmatprep.subr.bf16.mxu0 0
    %559 = vmatpush1.bf16.msra.mxu0 0
    %560 = vmatprep.subr.bf16.mxu0 0
    %561 = vmatpush1.bf16.msra.mxu0 0
    %562 = vmatprep.subr.bf16.mxu0 0
    %563 = vmatpush1.bf16.msra.mxu0 0
    %564 = vmatprep.subr.bf16.mxu0 0
    %565 = vmatpush1.bf16.msra.mxu0 0
    %566 = vmatprep.subr.bf16.mxu0 0
    %567 = vmatpush1.bf16.msra.mxu0 0
    %568 = vmatprep.subr.bf16.mxu0 0
    %569 = vmatpush1.bf16.msra.mxu0 0
    %570 = vmatprep.subr.bf16.mxu0 0
    %571 = vmatpush1.bf16.msra.mxu0 0
    %572 = vmatprep.mubr.bf16.mxu0 0
    %573 = vmatmul.mubr.bf16.gmra.mrb[0].mxu0 %v409
    %v574 = vpop.f32.mrb[0].mxu0
    %v575 = vadd.f32 %v189, %v574
    %v576 = vpop.f32.mrb[0].mxu0
    %v577 = vadd.f32 %v193, %v576
    %v578 = vpop.f32.mrb[0].mxu0
    %v579 = vadd.f32 %v189, %v578
    %v580 = vpop.f32.mrb[0].mxu0
    %v581 = vadd.f32 %v193, %v580
    %582 = vdwg.mxu0
    %583 = vmatprep.subr.bf16.mxu0 %v352
    %584 = vmatpush1.bf16.msra.mxu0 %v351
    %585 = vmatprep.subr.bf16.mxu0 %v368
    %586 = vmatpush1.bf16.msra.mxu0 %v367
    %587 = vmatprep.subr.bf16.mxu0 0
    %588 = vmatpush1.bf16.msra.mxu0 0
    %589 = vmatprep.subr.bf16.mxu0 0
    %590 = vmatpush1.bf16.msra.mxu0 0
    %591 = vmatprep.subr.bf16.mxu0 0
    %592 = vmatpush1.bf16.msra.mxu0 0
    %593 = vmatprep.subr.bf16.mxu0 0
    %594 = vmatpush1.bf16.msra.mxu0 0
    %595 = vmatprep.subr.bf16.mxu0 0
    %596 = vmatpush1.bf16.msra.mxu0 0
    %597 = vmatprep.subr.bf16.mxu0 0
    %598 = vmatpush1.bf16.msra.mxu0 0
    %599 = vmatprep.subr.bf16.mxu0 0
    %600 = vmatpush1.bf16.msra.mxu0 0
    %601 = vmatprep.subr.bf16.mxu0 0
    %602 = vmatpush1.bf16.msra.mxu0 0
    %603 = vmatprep.subr.bf16.mxu0 0
    %604 = vmatpush1.bf16.msra.mxu0 0
    %605 = vmatprep.subr.bf16.mxu0 0
    %606 = vmatpush1.bf16.msra.mxu0 0
    %607 = vmatprep.subr.bf16.mxu0 0
    %608 = vmatpush1.bf16.msra.mxu0 0
    %609 = vmatprep.subr.bf16.mxu0 0
    %610 = vmatpush1.bf16.msra.mxu0 0
    %611 = vmatprep.subr.bf16.mxu0 0
    %612 = vmatpush1.bf16.msra.mxu0 0
    %613 = vmatprep.subr.bf16.mxu0 0
    %614 = vmatpush1.bf16.msra.mxu0 0
    %615 = vmatprep.mubr.bf16.mxu0 0
    %616 = vmatmul.mubr.bf16.gmra.mrb[0].mxu0 %v409
    %v617 = vpop.f32.mrb[0].mxu0
    %v618 = vadd.f32 %v197, %v617
    %v619 = vpop.f32.mrb[0].mxu0
    %v620 = vadd.f32 %v201, %v619
    %v621 = vpop.f32.mrb[0].mxu0
    %v622 = vadd.f32 %v197, %v621
    %v623 = vpop.f32.mrb[0].mxu0
    %v624 = vadd.f32 %v201, %v623
    %625 = vdwg.mxu0
    %626 = vmatprep.subr.bf16.mxu0 %v354
    %627 = vmatpush1.bf16.msra.mxu0 %v353
    %628 = vmatprep.subr.bf16.mxu0 %v370
    %629 = vmatpush1.bf16.msra.mxu0 %v369
    %630 = vmatprep.subr.bf16.mxu0 0
    %631 = vmatpush1.bf16.msra.mxu0 0
    %632 = vmatprep.subr.bf16.mxu0 0
    %633 = vmatpush1.bf16.msra.mxu0 0
    %634 = vmatprep.subr.bf16.mxu0 0
    %635 = vmatpush1.bf16.msra.mxu0 0
    %636 = vmatprep.subr.bf16.mxu0 0
    %637 = vmatpush1.bf16.msra.mxu0 0
    %638 = vmatprep.subr.bf16.mxu0 0
    %639 = vmatpush1.bf16.msra.mxu0 0
    %640 = vmatprep.subr.bf16.mxu0 0
    %641 = vmatpush1.bf16.msra.mxu0 0
    %642 = vmatprep.subr.bf16.mxu0 0
    %643 = vmatpush1.bf16.msra.mxu0 0
    %644 = vmatprep.subr.bf16.mxu0 0
    %645 = vmatpush1.bf16.msra.mxu0 0
    %646 = vmatprep.subr.bf16.mxu0 0
    %647 = vmatpush1.bf16.msra.mxu0 0
    %648 = vmatprep.subr.bf16.mxu0 0
    %649 = vmatpush1.bf16.msra.mxu0 0
    %650 = vmatprep.subr.bf16.mxu0 0
    %651 = vmatpush1.bf16.msra.mxu0 0
    %652 = vmatprep.subr.bf16.mxu0 0
    %653 = vmatpush1.bf16.msra.mxu0 0
    %654 = vmatprep.subr.bf16.mxu0 0
    %655 = vmatpush1.bf16.msra.mxu0 0
    %656 = vmatprep.subr.bf16.mxu0 0
    %657 = vmatpush1.bf16.msra.mxu0 0
    %658 = vmatprep.mubr.bf16.mxu0 0
    %659 = vmatmul.mubr.bf16.gmra.mrb[0].mxu0 %v409
    %v660 = vpop.f32.mrb[0].mxu0
    %v661 = vadd.f32 %v205, %v660
    %v662 = vpop.f32.mrb[0].mxu0
    %v663 = vadd.f32 %v209, %v662
    %v664 = vpop.f32.mrb[0].mxu0
    %v665 = vadd.f32 %v205, %v664
    %v666 = vpop.f32.mrb[0].mxu0
    %v667 = vadd.f32 %v209, %v666
    %668 = vdwg.mxu0
    %669 = vmatprep.subr.bf16.mxu0 %v356
    %670 = vmatpush1.bf16.msra.mxu0 %v355
    %671 = vmatprep.subr.bf16.mxu0 %v372
    %672 = vmatpush1.bf16.msra.mxu0 %v371
    %673 = vmatprep.subr.bf16.mxu0 0
    %674 = vmatpush1.bf16.msra.mxu0 0
    %675 = vmatprep.subr.bf16.mxu0 0
    %676 = vmatpush1.bf16.msra.mxu0 0
    %677 = vmatprep.subr.bf16.mxu0 0
    %678 = vmatpush1.bf16.msra.mxu0 0
    %679 = vmatprep.subr.bf16.mxu0 0
    %680 = vmatpush1.bf16.msra.mxu0 0
    %681 = vmatprep.subr.bf16.mxu0 0
    %682 = vmatpush1.bf16.msra.mxu0 0
    %683 = vmatprep.subr.bf16.mxu0 0
    %684 = vmatpush1.bf16.msra.mxu0 0
    %685 = vmatprep.subr.bf16.mxu0 0
    %686 = vmatpush1.bf16.msra.mxu0 0
    %687 = vmatprep.subr.bf16.mxu0 0
    %688 = vmatpush1.bf16.msra.mxu0 0
    %689 = vmatprep.subr.bf16.mxu0 0
    %690 = vmatpush1.bf16.msra.mxu0 0
    %691 = vmatprep.subr.bf16.mxu0 0
    %692 = vmatpush1.bf16.msra.mxu0 0
    %693 = vmatprep.subr.bf16.mxu0 0
    %694 = vmatpush1.bf16.msra.mxu0 0
    %695 = vmatprep.subr.bf16.mxu0 0
    %696 = vmatpush1.bf16.msra.mxu0 0
    %697 = vmatprep.subr.bf16.mxu0 0
    %698 = vmatpush1.bf16.msra.mxu0 0
    %699 = vmatprep.subr.bf16.mxu0 0
    %700 = vmatpush1.bf16.msra.mxu0 0
    %701 = vmatprep.mubr.bf16.mxu0 0
    %702 = vmatmul.mubr.bf16.gmra.mrb[0].mxu0 %v409
    %v703 = vpop.f32.mrb[0].mxu0
    %v704 = vadd.f32 %v213, %v703
    %v705 = vpop.f32.mrb[0].mxu0
    %v706 = vadd.f32 %v217, %v705
    %v707 = vpop.f32.mrb[0].mxu0
    %v708 = vadd.f32 %v213, %v707
    %v709 = vpop.f32.mrb[0].mxu0
    %v710 = vadd.f32 %v217, %v709
    %711 = vdwg.mxu0
    %712 = vmatprep.subr.bf16.mxu0 %v358
    %713 = vmatpush1.bf16.msra.mxu0 %v357
    %714 = vmatprep.subr.bf16.mxu0 %v374
    %715 = vmatpush1.bf16.msra.mxu0 %v373
    %716 = vmatprep.subr.bf16.mxu0 0
    %717 = vmatpush1.bf16.msra.mxu0 0
    %718 = vmatprep.subr.bf16.mxu0 0
    %719 = vmatpush1.bf16.msra.mxu0 0
    %720 = vmatprep.subr.bf16.mxu0 0
    %721 = vmatpush1.bf16.msra.mxu0 0
    %722 = vmatprep.subr.bf16.mxu0 0
    %723 = vmatpush1.bf16.msra.mxu0 0
    %724 = vmatprep.subr.bf16.mxu0 0
    %725 = vmatpush1.bf16.msra.mxu0 0
    %726 = vmatprep.subr.bf16.mxu0 0
    %727 = vmatpush1.bf16.msra.mxu0 0
    %728 = vmatprep.subr.bf16.mxu0 0
    %729 = vmatpush1.bf16.msra.mxu0 0
    %730 = vmatprep.subr.bf16.mxu0 0
    %731 = vmatpush1.bf16.msra.mxu0 0
    %732 = vmatprep.subr.bf16.mxu0 0
    %733 = vmatpush1.bf16.msra.mxu0 0
    %734 = vmatprep.subr.bf16.mxu0 0
    %735 = vmatpush1.bf16.msra.mxu0 0
    %736 = vmatprep.subr.bf16.mxu0 0
    %737 = vmatpush1.bf16.msra.mxu0 0
    %738 = vmatprep.subr.bf16.mxu0 0
    %739 = vmatpush1.bf16.msra.mxu0 0
    %740 = vmatprep.subr.bf16.mxu0 0
    %741 = vmatpush1.bf16.msra.mxu0 0
    %742 = vmatprep.subr.bf16.mxu0 0
    %743 = vmatpush1.bf16.msra.mxu0 0
    %744 = vmatprep.mubr.bf16.mxu0 0
    %745 = vmatmul.mubr.bf16.gmra.mrb[0].mxu0 %v409
    %v746 = vpop.f32.mrb[0].mxu0
    %v747 = vadd.f32 %v221, %v746
    %v748 = vpop.f32.mrb[0].mxu0
    %v749 = vadd.f32 %v225, %v748
    %v750 = vpop.f32.mrb[0].mxu0
    %v751 = vadd.f32 %v221, %v750
    %v752 = vpop.f32.mrb[0].mxu0
    %v753 = vadd.f32 %v225, %v752
    %754 = vdwg.mxu0
    %755 = vst [vmem:[#allocation2] sm:$0xff] %v446
    %756 = vst [vmem:[#allocation2 + $0x8] sm:$0xff] %v448
    %757 = vst [vmem:[#allocation2 + $0x10] sm:$0xff] %v489
    %758 = vst [vmem:[#allocation2 + $0x18] sm:$0xff] %v491
    %759 = vst [vmem:[#allocation2 + $0x20] sm:$0xff] %v532
    %760 = vst [vmem:[#allocation2 + $0x28] sm:$0xff] %v534
    %761 = vst [vmem:[#allocation2 + $0x30] sm:$0xff] %v575
    %762 = vst [vmem:[#allocation2 + $0x38] sm:$0xff] %v577
    %763 = vst [vmem:[#allocation2 + $0x40] sm:$0xff] %v618
    %764 = vst [vmem:[#allocation2 + $0x48] sm:$0xff] %v620
    %765 = vst [vmem:[#allocation2 + $0x50] sm:$0xff] %v661
    %766 = vst [vmem:[#allocation2 + $0x58] sm:$0xff] %v663
    %767 = vst [vmem:[#allocation2 + $0x60] sm:$0xff] %v704
    %768 = vst [vmem:[#allocation2 + $0x68] sm:$0xff] %v706
    %769 = vst [vmem:[#allocation2 + $0x70] sm:$0xff] %v747
    %770 = vst [vmem:[#allocation2 + $0x78] sm:$0xff] %v749
    %771 = vst [vmem:[#allocation2 + $0x80] sm:$0xff] %v450
    %772 = vst [vmem:[#allocation2 + $0x88] sm:$0xff] %v452
    %773 = vst [vmem:[#allocation2 + $0x90] sm:$0xff] %v493
    %774 = vst [vmem:[#allocation2 + $0x98] sm:$0xff] %v495
    %775 = vst [vmem:[#allocation2 + $0xa0] sm:$0xff] %v536
    %776 = vst [vmem:[#allocation2 + $0xa8] sm:$0xff] %v538
    %777 = vst [vmem:[#allocation2 + $0xb0] sm:$0xff] %v579
    %778 = vst [vmem:[#allocation2 + $0xb8] sm:$0xff] %v581
    %779 = vst [vmem:[#allocation2 + $0xc0] sm:$0xff] %v622
    %780 = vst [vmem:[#allocation2 + $0xc8] sm:$0xff] %v624
    %781 = vst [vmem:[#allocation2 + $0xd0] sm:$0xff] %v665
    %782 = vst [vmem:[#allocation2 + $0xd8] sm:$0xff] %v667
    %783 = vst [vmem:[#allocation2 + $0xe0] sm:$0xff] %v708
    %784 = vst [vmem:[#allocation2 + $0xe8] sm:$0xff] %v710
    %785 = vst [vmem:[#allocation2 + $0xf0] sm:$0xff] %v751
    %786 = vst [vmem:[#allocation2 + $0xf8] sm:$0xff] %v753
    %v787 = vld [vmem:[#allocation9] sm:$0xff]
    %v788 = vld [vmem:[#allocation9 + $0x8] sm:$0xff]
    %v789 = vld [vmem:[#allocation9 + $0x10] sm:$0xff]
    %v790 = vld [vmem:[#allocation9 + $0x18] sm:$0xff]
    %v791 = vld [vmem:[#allocation9 + $0x20] sm:$0xff]
    %v792 = vld [vmem:[#allocation9 + $0x28] sm:$0xff]
    %v793 = vld [vmem:[#allocation9 + $0x30] sm:$0xff]
    %v794 = vld [vmem:[#allocation9 + $0x38] sm:$0xff]
    %v795 = vld [vmem:[#allocation9 + $0x40] sm:$0xff]
    %v796 = vld [vmem:[#allocation9 + $0x48] sm:$0xff]
    %v797 = vld [vmem:[#allocation9 + $0x50] sm:$0xff]
    %v798 = vld [vmem:[#allocation9 + $0x58] sm:$0xff]
    %v799 = vld [vmem:[#allocation9 + $0x60] sm:$0xff]
    %v800 = vld [vmem:[#allocation9 + $0x68] sm:$0xff]
    %v801 = vld [vmem:[#allocation9 + $0x70] sm:$0xff]
    %v802 = vld [vmem:[#allocation9 + $0x78] sm:$0xff]
    %v803 = vld [vmem:[#allocation9 + $0x80] sm:$0xff]
    %v804 = vld [vmem:[#allocation9 + $0x88] sm:$0xff]
    %v805 = vld [vmem:[#allocation9 + $0x90] sm:$0xff]
    %v806 = vld [vmem:[#allocation9 + $0x98] sm:$0xff]
    %v807 = vld [vmem:[#allocation9 + $0xa0] sm:$0xff]
    %v808 = vld [vmem:[#allocation9 + $0xa8] sm:$0xff]
    %v809 = vld [vmem:[#allocation9 + $0xb0] sm:$0xff]
    %v810 = vld [vmem:[#allocation9 + $0xb8] sm:$0xff]
    %v811 = vld [vmem:[#allocation9 + $0xc0] sm:$0xff]
    %v812 = vld [vmem:[#allocation9 + $0xc8] sm:$0xff]
    %v813 = vld [vmem:[#allocation9 + $0xd0] sm:$0xff]
    %v814 = vld [vmem:[#allocation9 + $0xd8] sm:$0xff]
    %v815 = vld [vmem:[#allocation9 + $0xe0] sm:$0xff]
    %v816 = vld [vmem:[#allocation9 + $0xe8] sm:$0xff]
    %v817 = vld [vmem:[#allocation9 + $0xf0] sm:$0xff]
    %v818 = vld [vmem:[#allocation9 + $0xf8] sm:$0xff]
    %v819 = vld [vmem:[#allocation9 + $0x100] sm:$0xff]
    %v820 = vld [vmem:[#allocation9 + $0x108] sm:$0xff]
    %v821 = vld [vmem:[#allocation9 + $0x110] sm:$0xff]
    %v822 = vld [vmem:[#allocation9 + $0x118] sm:$0xff]
    %v823 = vld [vmem:[#allocation9 + $0x120] sm:$0xff]
    %v824 = vld [vmem:[#allocation9 + $0x128] sm:$0xff]
    %v825 = vld [vmem:[#allocation9 + $0x130] sm:$0xff]
    %v826 = vld [vmem:[#allocation9 + $0x138] sm:$0xff]
    %v827 = vld [vmem:[#allocation9 + $0x140] sm:$0xff]
    %v828 = vld [vmem:[#allocation9 + $0x148] sm:$0xff]
    %v829 = vld [vmem:[#allocation9 + $0x150] sm:$0xff]
    %v830 = vld [vmem:[#allocation9 + $0x158] sm:$0xff]
    %v831 = vld [vmem:[#allocation9 + $0x160] sm:$0xff]
    %v832 = vld [vmem:[#allocation9 + $0x168] sm:$0xff]
    %v833 = vld [vmem:[#allocation9 + $0x170] sm:$0xff]
    %v834 = vld [vmem:[#allocation9 + $0x178] sm:$0xff]
    %v835 = vld [vmem:[#allocation9 + $0x180] sm:$0xff]
    %v836 = vld [vmem:[#allocation9 + $0x188] sm:$0xff]
    %v837 = vld [vmem:[#allocation9 + $0x190] sm:$0xff]
    %v838 = vld [vmem:[#allocation9 + $0x198] sm:$0xff]
    %v839 = vld [vmem:[#allocation9 + $0x1a0] sm:$0xff]
    %v840 = vld [vmem:[#allocation9 + $0x1a8] sm:$0xff]
    %v841 = vld [vmem:[#allocation9 + $0x1b0] sm:$0xff]
    %v842 = vld [vmem:[#allocation9 + $0x1b8] sm:$0xff]
    %v843 = vld [vmem:[#allocation9 + $0x1c0] sm:$0xff]
    %v844 = vld [vmem:[#allocation9 + $0x1c8] sm:$0xff]
    %v845 = vld [vmem:[#allocation9 + $0x1d0] sm:$0xff]
    %v846 = vld [vmem:[#allocation9 + $0x1d8] sm:$0xff]
    %v847 = vld [vmem:[#allocation9 + $0x1e0] sm:$0xff]
    %v848 = vld [vmem:[#allocation9 + $0x1e8] sm:$0xff]
    %v849 = vld [vmem:[#allocation9 + $0x1f0] sm:$0xff]
    %v850 = vld [vmem:[#allocation9 + $0x1f8] sm:$0xff]
    %v851 = vld [vmem:[#allocation9 + $0x200] sm:$0xff]
    %v852 = vld [vmem:[#allocation9 + $0x208] sm:$0xff]
    %v853 = vld [vmem:[#allocation9 + $0x210] sm:$0xff]
    %v854 = vld [vmem:[#allocation9 + $0x218] sm:$0xff]
    %v855 = vld [vmem:[#allocation9 + $0x220] sm:$0xff]
    %v856 = vld [vmem:[#allocation9 + $0x228] sm:$0xff]
    %v857 = vld [vmem:[#allocation9 + $0x230] sm:$0xff]
    %v858 = vld [vmem:[#allocation9 + $0x238] sm:$0xff]
    %v859 = vld [vmem:[#allocation9 + $0x240] sm:$0xff]
    %v860 = vld [vmem:[#allocation9 + $0x248] sm:$0xff]
    %v861 = vld [vmem:[#allocation9 + $0x250] sm:$0xff]
    %v862 = vld [vmem:[#allocation9 + $0x258] sm:$0xff]
    %v863 = vld [vmem:[#allocation9 + $0x260] sm:$0xff]
    %v864 = vld [vmem:[#allocation9 + $0x268] sm:$0xff]
    %v865 = vld [vmem:[#allocation9 + $0x270] sm:$0xff]
    %v866 = vld [vmem:[#allocation9 + $0x278] sm:$0xff]
    %v867 = vld [vmem:[#allocation9 + $0x280] sm:$0xff]
    %v868 = vld [vmem:[#allocation9 + $0x288] sm:$0xff]
    %v869 = vld [vmem:[#allocation9 + $0x290] sm:$0xff]
    %v870 = vld [vmem:[#allocation9 + $0x298] sm:$0xff]
    %v871 = vld [vmem:[#allocation9 + $0x2a0] sm:$0xff]
    %v872 = vld [vmem:[#allocation9 + $0x2a8] sm:$0xff]
    %v873 = vld [vmem:[#allocation9 + $0x2b0] sm:$0xff]
    %v874 = vld [vmem:[#allocation9 + $0x2b8] sm:$0xff]
    %v875 = vld [vmem:[#allocation9 + $0x2c0] sm:$0xff]
    %v876 = vld [vmem:[#allocation9 + $0x2c8] sm:$0xff]
    %v877 = vld [vmem:[#allocation9 + $0x2d0] sm:$0xff]
    %v878 = vld [vmem:[#allocation9 + $0x2d8] sm:$0xff]
    %v879 = vld [vmem:[#allocation9 + $0x2e0] sm:$0xff]
    %v880 = vld [vmem:[#allocation9 + $0x2e8] sm:$0xff]
    %v881 = vld [vmem:[#allocation9 + $0x2f0] sm:$0xff]
    %v882 = vld [vmem:[#allocation9 + $0x2f8] sm:$0xff]
    %v883 = vld [vmem:[#allocation9 + $0x300] sm:$0xff]
    %v884 = vld [vmem:[#allocation9 + $0x308] sm:$0xff]
    %v885 = vld [vmem:[#allocation9 + $0x310] sm:$0xff]
    %v886 = vld [vmem:[#allocation9 + $0x318] sm:$0xff]
    %v887 = vld [vmem:[#allocation9 + $0x320] sm:$0xff]
    %v888 = vld [vmem:[#allocation9 + $0x328] sm:$0xff]
    %v889 = vld [vmem:[#allocation9 + $0x330] sm:$0xff]
    %v890 = vld [vmem:[#allocation9 + $0x338] sm:$0xff]
    %v891 = vld [vmem:[#allocation9 + $0x340] sm:$0xff]
    %v892 = vld [vmem:[#allocation9 + $0x348] sm:$0xff]
    %v893 = vld [vmem:[#allocation9 + $0x350] sm:$0xff]
    %v894 = vld [vmem:[#allocation9 + $0x358] sm:$0xff]
    %v895 = vld [vmem:[#allocation9 + $0x360] sm:$0xff]
    %v896 = vld [vmem:[#allocation9 + $0x368] sm:$0xff]
    %v897 = vld [vmem:[#allocation9 + $0x370] sm:$0xff]
    %v898 = vld [vmem:[#allocation9 + $0x378] sm:$0xff]
    %v899 = vld [vmem:[#allocation9 + $0x380] sm:$0xff]
    %v900 = vld [vmem:[#allocation9 + $0x388] sm:$0xff]
    %v901 = vld [vmem:[#allocation9 + $0x390] sm:$0xff]
    %v902 = vld [vmem:[#allocation9 + $0x398] sm:$0xff]
    %v903 = vld [vmem:[#allocation9 + $0x3a0] sm:$0xff]
    %v904 = vld [vmem:[#allocation9 + $0x3a8] sm:$0xff]
    %v905 = vld [vmem:[#allocation9 + $0x3b0] sm:$0xff]
    %v906 = vld [vmem:[#allocation9 + $0x3b8] sm:$0xff]
    %v907 = vld [vmem:[#allocation9 + $0x3c0] sm:$0xff]
    %v908 = vld [vmem:[#allocation9 + $0x3c8] sm:$0xff]
    %v909 = vld [vmem:[#allocation9 + $0x3d0] sm:$0xff]
    %v910 = vld [vmem:[#allocation9 + $0x3d8] sm:$0xff]
    %v911 = vld [vmem:[#allocation9 + $0x3e0] sm:$0xff]
    %v912 = vld [vmem:[#allocation9 + $0x3e8] sm:$0xff]
    %v913 = vld [vmem:[#allocation9 + $0x3f0] sm:$0xff]
    %v914 = vld [vmem:[#allocation9 + $0x3f8] sm:$0xff]
    %v915 = vld [vmem:[#allocation11] sm:$0xff]
    %v916 = vld [vmem:[#allocation11 + $0x8] sm:$0xff]
    %v917 = vld [vmem:[#allocation11 + $0x10] sm:$0xff]
    %v918 = vld [vmem:[#allocation11 + $0x18] sm:$0xff]
    %v919 = vld [vmem:[#allocation11 + $0x20] sm:$0xff]
    %v920 = vld [vmem:[#allocation11 + $0x28] sm:$0xff]
    %v921 = vld [vmem:[#allocation11 + $0x30] sm:$0xff]
    %v922 = vld [vmem:[#allocation11 + $0x38] sm:$0xff]
    %v923 = vld [vmem:[#allocation11 + $0x40] sm:$0xff]
    %v924 = vld [vmem:[#allocation11 + $0x48] sm:$0xff]
    %v925 = vld [vmem:[#allocation11 + $0x50] sm:$0xff]
    %v926 = vld [vmem:[#allocation11 + $0x58] sm:$0xff]
    %v927 = vld [vmem:[#allocation11 + $0x60] sm:$0xff]
    %v928 = vld [vmem:[#allocation11 + $0x68] sm:$0xff]
    %v929 = vld [vmem:[#allocation11 + $0x70] sm:$0xff]
    %v930 = vld [vmem:[#allocation11 + $0x78] sm:$0xff]
    %v931 = vld [vmem:[#allocation11 + $0x80] sm:$0xff]
    %v932 = vld [vmem:[#allocation11 + $0x88] sm:$0xff]
    %v933 = vld [vmem:[#allocation11 + $0x90] sm:$0xff]
    %v934 = vld [vmem:[#allocation11 + $0x98] sm:$0xff]
    %v935 = vld [vmem:[#allocation11 + $0xa0] sm:$0xff]
    %v936 = vld [vmem:[#allocation11 + $0xa8] sm:$0xff]
    %v937 = vld [vmem:[#allocation11 + $0xb0] sm:$0xff]
    %v938 = vld [vmem:[#allocation11 + $0xb8] sm:$0xff]
    %v939 = vld [vmem:[#allocation11 + $0xc0] sm:$0xff]
    %v940 = vld [vmem:[#allocation11 + $0xc8] sm:$0xff]
    %v941 = vld [vmem:[#allocation11 + $0xd0] sm:$0xff]
    %v942 = vld [vmem:[#allocation11 + $0xd8] sm:$0xff]
    %v943 = vld [vmem:[#allocation11 + $0xe0] sm:$0xff]
    %v944 = vld [vmem:[#allocation11 + $0xe8] sm:$0xff]
    %v945 = vld [vmem:[#allocation11 + $0xf0] sm:$0xff]
    %v946 = vld [vmem:[#allocation11 + $0xf8] sm:$0xff]
    %v947 = vld [vmem:[#allocation11 + $0x100] sm:$0xff]
    %v948 = vld [vmem:[#allocation11 + $0x108] sm:$0xff]
    %v949 = vld [vmem:[#allocation11 + $0x110] sm:$0xff]
    %v950 = vld [vmem:[#allocation11 + $0x118] sm:$0xff]
    %v951 = vld [vmem:[#allocation11 + $0x120] sm:$0xff]
    %v952 = vld [vmem:[#allocation11 + $0x128] sm:$0xff]
    %v953 = vld [vmem:[#allocation11 + $0x130] sm:$0xff]
    %v954 = vld [vmem:[#allocation11 + $0x138] sm:$0xff]
    %v955 = vld [vmem:[#allocation11 + $0x140] sm:$0xff]
    %v956 = vld [vmem:[#allocation11 + $0x148] sm:$0xff]
    %v957 = vld [vmem:[#allocation11 + $0x150] sm:$0xff]
    %v958 = vld [vmem:[#allocation11 + $0x158] sm:$0xff]
    %v959 = vld [vmem:[#allocation11 + $0x160] sm:$0xff]
    %v960 = vld [vmem:[#allocation11 + $0x168] sm:$0xff]
    %v961 = vld [vmem:[#allocation11 + $0x170] sm:$0xff]
    %v962 = vld [vmem:[#allocation11 + $0x178] sm:$0xff]
    %v963 = vld [vmem:[#allocation11 + $0x180] sm:$0xff]
    %v964 = vld [vmem:[#allocation11 + $0x188] sm:$0xff]
    %v965 = vld [vmem:[#allocation11 + $0x190] sm:$0xff]
    %v966 = vld [vmem:[#allocation11 + $0x198] sm:$0xff]
    %v967 = vld [vmem:[#allocation11 + $0x1a0] sm:$0xff]
    %v968 = vld [vmem:[#allocation11 + $0x1a8] sm:$0xff]
    %v969 = vld [vmem:[#allocation11 + $0x1b0] sm:$0xff]
    %v970 = vld [vmem:[#allocation11 + $0x1b8] sm:$0xff]
    %v971 = vld [vmem:[#allocation11 + $0x1c0] sm:$0xff]
    %v972 = vld [vmem:[#allocation11 + $0x1c8] sm:$0xff]
    %v973 = vld [vmem:[#allocation11 + $0x1d0] sm:$0xff]
    %v974 = vld [vmem:[#allocation11 + $0x1d8] sm:$0xff]
    %v975 = vld [vmem:[#allocation11 + $0x1e0] sm:$0xff]
    %v976 = vld [vmem:[#allocation11 + $0x1e8] sm:$0xff]
    %v977 = vld [vmem:[#allocation11 + $0x1f0] sm:$0xff]
    %v978 = vld [vmem:[#allocation11 + $0x1f8] sm:$0xff]
    %v979 = vld [vmem:[#allocation11 + $0x200] sm:$0xff]
    %v980 = vld [vmem:[#allocation11 + $0x208] sm:$0xff]
    %v981 = vld [vmem:[#allocation11 + $0x210] sm:$0xff]
    %v982 = vld [vmem:[#allocation11 + $0x218] sm:$0xff]
    %v983 = vld [vmem:[#allocation11 + $0x220] sm:$0xff]
    %v984 = vld [vmem:[#allocation11 + $0x228] sm:$0xff]
    %v985 = vld [vmem:[#allocation11 + $0x230] sm:$0xff]
    %v986 = vld [vmem:[#allocation11 + $0x238] sm:$0xff]
    %v987 = vld [vmem:[#allocation11 + $0x240] sm:$0xff]
    %v988 = vld [vmem:[#allocation11 + $0x248] sm:$0xff]
    %v989 = vld [vmem:[#allocation11 + $0x250] sm:$0xff]
    %v990 = vld [vmem:[#allocation11 + $0x258] sm:$0xff]
    %v991 = vld [vmem:[#allocation11 + $0x260] sm:$0xff]
    %v992 = vld [vmem:[#allocation11 + $0x268] sm:$0xff]
    %v993 = vld [vmem:[#allocation11 + $0x270] sm:$0xff]
    %v994 = vld [vmem:[#allocation11 + $0x278] sm:$0xff]
    %v995 = vld [vmem:[#allocation11 + $0x280] sm:$0xff]
    %v996 = vld [vmem:[#allocation11 + $0x288] sm:$0xff]
    %v997 = vld [vmem:[#allocation11 + $0x290] sm:$0xff]
    %v998 = vld [vmem:[#allocation11 + $0x298] sm:$0xff]
    %v999 = vld [vmem:[#allocation11 + $0x2a0] sm:$0xff]
    %v1000 = vld [vmem:[#allocation11 + $0x2a8] sm:$0xff]
    %v1001 = vld [vmem:[#allocation11 + $0x2b0] sm:$0xff]
    %v1002 = vld [vmem:[#allocation11 + $0x2b8] sm:$0xff]
    %v1003 = vld [vmem:[#allocation11 + $0x2c0] sm:$0xff]
    %v1004 = vld [vmem:[#allocation11 + $0x2c8] sm:$0xff]
    %v1005 = vld [vmem:[#allocation11 + $0x2d0] sm:$0xff]
    %v1006 = vld [vmem:[#allocation11 + $0x2d8] sm:$0xff]
    %v1007 = vld [vmem:[#allocation11 + $0x2e0] sm:$0xff]
    %v1008 = vld [vmem:[#allocation11 + $0x2e8] sm:$0xff]
    %v1009 = vld [vmem:[#allocation11 + $0x2f0] sm:$0xff]
    %v1010 = vld [vmem:[#allocation11 + $0x2f8] sm:$0xff]
    %v1011 = vld [vmem:[#allocation11 + $0x300] sm:$0xff]
    %v1012 = vld [vmem:[#allocation11 + $0x308] sm:$0xff]
    %v1013 = vld [vmem:[#allocation11 + $0x310] sm:$0xff]
    %v1014 = vld [vmem:[#allocation11 + $0x318] sm:$0xff]
    %v1015 = vld [vmem:[#allocation11 + $0x320] sm:$0xff]
    %v1016 = vld [vmem:[#allocation11 + $0x328] sm:$0xff]
    %v1017 = vld [vmem:[#allocation11 + $0x330] sm:$0xff]
    %v1018 = vld [vmem:[#allocation11 + $0x338] sm:$0xff]
    %v1019 = vld [vmem:[#allocation11 + $0x340] sm:$0xff]
    %v1020 = vld [vmem:[#allocation11 + $0x348] sm:$0xff]
    %v1021 = vld [vmem:[#allocation11 + $0x350] sm:$0xff]
    %v1022 = vld [vmem:[#allocation11 + $0x358] sm:$0xff]
    %v1023 = vld [vmem:[#allocation11 + $0x360] sm:$0xff]
    %v1024 = vld [vmem:[#allocation11 + $0x368] sm:$0xff]
    %v1025 = vld [vmem:[#allocation11 + $0x370] sm:$0xff]
    %v1026 = vld [vmem:[#allocation11 + $0x378] sm:$0xff]
    %v1027 = vld [vmem:[#allocation11 + $0x380] sm:$0xff]
    %v1028 = vld [vmem:[#allocation11 + $0x388] sm:$0xff]
    %v1029 = vld [vmem:[#allocation11 + $0x390] sm:$0xff]
    %v1030 = vld [vmem:[#allocation11 + $0x398] sm:$0xff]
    %v1031 = vld [vmem:[#allocation11 + $0x3a0] sm:$0xff]
    %v1032 = vld [vmem:[#allocation11 + $0x3a8] sm:$0xff]
    %v1033 = vld [vmem:[#allocation11 + $0x3b0] sm:$0xff]
    %v1034 = vld [vmem:[#allocation11 + $0x3b8] sm:$0xff]
    %v1035 = vld [vmem:[#allocation11 + $0x3c0] sm:$0xff]
    %v1036 = vld [vmem:[#allocation11 + $0x3c8] sm:$0xff]
    %v1037 = vld [vmem:[#allocation11 + $0x3d0] sm:$0xff]
    %v1038 = vld [vmem:[#allocation11 + $0x3d8] sm:$0xff]
    %v1039 = vld [vmem:[#allocation11 + $0x3e0] sm:$0xff]
    %v1040 = vld [vmem:[#allocation11 + $0x3e8] sm:$0xff]
    %v1041 = vld [vmem:[#allocation11 + $0x3f0] sm:$0xff]
    %v1042 = vld [vmem:[#allocation11 + $0x3f8] sm:$0xff]
    %v1043 = vld [vmem:[#allocation2] sm:$0x3]
    %v1044 = vld [vmem:[#allocation2 + $0x8] sm:$0x3]
    %v1045 = vld [vmem:[#allocation2 + $0x10] sm:$0x3]
    %v1046 = vld [vmem:[#allocation2 + $0x18] sm:$0x3]
    %v1047 = vld [vmem:[#allocation2 + $0x20] sm:$0x3]
    %v1048 = vld [vmem:[#allocation2 + $0x28] sm:$0x3]
    %v1049 = vld [vmem:[#allocation2 + $0x30] sm:$0x3]
    %v1050 = vld [vmem:[#allocation2 + $0x38] sm:$0x3]
    %v1051 = vld [vmem:[#allocation2 + $0xc0] sm:$0xc0]
    %v1052 = vld [vmem:[#allocation2 + $0xc8] sm:$0xc0]
    %v1053 = vld [vmem:[#allocation2 + $0xd0] sm:$0xc0]
    %v1054 = vld [vmem:[#allocation2 + $0xd8] sm:$0xc0]
    %v1055 = vld [vmem:[#allocation2 + $0xe0] sm:$0xc0]
    %v1056 = vld [vmem:[#allocation2 + $0xe8] sm:$0xc0]
    %v1057 = vld [vmem:[#allocation2 + $0xf0] sm:$0xc0]
    %v1058 = vld [vmem:[#allocation2 + $0xf8] sm:$0xc0]
    %v1187 = vunpack.c.l.b16 %v787
    %v1188 = vunpack.c.h.b16 %v787
    %v1189 = vunpack.c.l.b16 %v788
    %v1190 = vunpack.c.h.b16 %v788
    %v1191 = vunpack.c.l.b16 %v789
    %v1192 = vunpack.c.h.b16 %v789
    %v1193 = vunpack.c.l.b16 %v790
    %v1194 = vunpack.c.h.b16 %v790
    %v1195 = vunpack.c.l.b16 %v791
    %v1196 = vunpack.c.h.b16 %v791
    %v1197 = vunpack.c.l.b16 %v792
    %v1198 = vunpack.c.h.b16 %v792
    %v1199 = vunpack.c.l.b16 %v793
    %v1200 = vunpack.c.h.b16 %v793
    %v1201 = vunpack.c.l.b16 %v794
    %v1202 = vunpack.c.h.b16 %v794
    %v1203 = vunpack.c.l.b16 %v795
    %v1204 = vunpack.c.h.b16 %v795
    %v1205 = vunpack.c.l.b16 %v796
    %v1206 = vunpack.c.h.b16 %v796
    %v1207 = vunpack.c.l.b16 %v797
    %v1208 = vunpack.c.h.b16 %v797
    %v1209 = vunpack.c.l.b16 %v798
    %v1210 = vunpack.c.h.b16 %v798
    %v1211 = vunpack.c.l.b16 %v799
    %v1212 = vunpack.c.h.b16 %v799
    %v1213 = vunpack.c.l.b16 %v800
    %v1214 = vunpack.c.h.b16 %v800
    %v1215 = vunpack.c.l.b16 %v801
    %v1216 = vunpack.c.h.b16 %v801
    %v1217 = vunpack.c.l.b16 %v802
    %v1218 = vunpack.c.h.b16 %v802
    %v1219 = vunpack.c.l.b16 %v803
    %v1220 = vunpack.c.h.b16 %v803
    %v1221 = vunpack.c.l.b16 %v804
    %v1222 = vunpack.c.h.b16 %v804
    %v1223 = vunpack.c.l.b16 %v805
    %v1224 = vunpack.c.h.b16 %v805
    %v1225 = vunpack.c.l.b16 %v806
    %v1226 = vunpack.c.h.b16 %v806
    %v1227 = vunpack.c.l.b16 %v807
    %v1228 = vunpack.c.h.b16 %v807
    %v1229 = vunpack.c.l.b16 %v808
    %v1230 = vunpack.c.h.b16 %v808
    %v1231 = vunpack.c.l.b16 %v809
    %v1232 = vunpack.c.h.b16 %v809
    %v1233 = vunpack.c.l.b16 %v810
    %v1234 = vunpack.c.h.b16 %v810
    %v1235 = vunpack.c.l.b16 %v811
    %v1236 = vunpack.c.h.b16 %v811
    %v1237 = vunpack.c.l.b16 %v812
    %v1238 = vunpack.c.h.b16 %v812
    %v1239 = vunpack.c.l.b16 %v813
    %v1240 = vunpack.c.h.b16 %v813
    %v1241 = vunpack.c.l.b16 %v814
    %v1242 = vunpack.c.h.b16 %v814
    %v1243 = vunpack.c.l.b16 %v815
    %v1244 = vunpack.c.h.b16 %v815
    %v1245 = vunpack.c.l.b16 %v816
    %v1246 = vunpack.c.h.b16 %v816
    %v1247 = vunpack.c.l.b16 %v817
    %v1248 = vunpack.c.h.b16 %v817
    %v1249 = vunpack.c.l.b16 %v818
    %v1250 = vunpack.c.h.b16 %v818
    %v1251 = vunpack.c.l.b16 %v819
    %v1252 = vunpack.c.h.b16 %v819
    %v1253 = vunpack.c.l.b16 %v820
    %v1254 = vunpack.c.h.b16 %v820
    %v1255 = vunpack.c.l.b16 %v821
    %v1256 = vunpack.c.h.b16 %v821
    %v1257 = vunpack.c.l.b16 %v822
    %v1258 = vunpack.c.h.b16 %v822
    %v1259 = vunpack.c.l.b16 %v823
    %v1260 = vunpack.c.h.b16 %v823
    %v1261 = vunpack.c.l.b16 %v824
    %v1262 = vunpack.c.h.b16 %v824
    %v1263 = vunpack.c.l.b16 %v825
    %v1264 = vunpack.c.h.b16 %v825
    %v1265 = vunpack.c.l.b16 %v826
    %v1266 = vunpack.c.h.b16 %v826
    %v1267 = vunpack.c.l.b16 %v827
    %v1268 = vunpack.c.h.b16 %v827
    %v1269 = vunpack.c.l.b16 %v828
    %v1270 = vunpack.c.h.b16 %v828
    %v1271 = vunpack.c.l.b16 %v829
    %v1272 = vunpack.c.h.b16 %v829
    %v1273 = vunpack.c.l.b16 %v830
    %v1274 = vunpack.c.h.b16 %v830
    %v1275 = vunpack.c.l.b16 %v831
    %v1276 = vunpack.c.h.b16 %v831
    %v1277 = vunpack.c.l.b16 %v832
    %v1278 = vunpack.c.h.b16 %v832
    %v1279 = vunpack.c.l.b16 %v833
    %v1280 = vunpack.c.h.b16 %v833
    %v1281 = vunpack.c.l.b16 %v834
    %v1282 = vunpack.c.h.b16 %v834
    %v1283 = vunpack.c.l.b16 %v835
    %v1284 = vunpack.c.h.b16 %v835
    %v1285 = vunpack.c.l.b16 %v836
    %v1286 = vunpack.c.h.b16 %v836
    %v1287 = vunpack.c.l.b16 %v837
    %v1288 = vunpack.c.h.b16 %v837
    %v1289 = vunpack.c.l.b16 %v838
    %v1290 = vunpack.c.h.b16 %v838
    %v1291 = vunpack.c.l.b16 %v839
    %v1292 = vunpack.c.h.b16 %v839
    %v1293 = vunpack.c.l.b16 %v840
    %v1294 = vunpack.c.h.b16 %v840
    %v1295 = vunpack.c.l.b16 %v841
    %v1296 = vunpack.c.h.b16 %v841
    %v1297 = vunpack.c.l.b16 %v842
    %v1298 = vunpack.c.h.b16 %v842
    %v1299 = vunpack.c.l.b16 %v843
    %v1300 = vunpack.c.h.b16 %v843
    %v1301 = vunpack.c.l.b16 %v844
    %v1302 = vunpack.c.h.b16 %v844
    %v1303 = vunpack.c.l.b16 %v845
    %v1304 = vunpack.c.h.b16 %v845
    %v1305 = vunpack.c.l.b16 %v846
    %v1306 = vunpack.c.h.b16 %v846
    %v1307 = vunpack.c.l.b16 %v847
    %v1308 = vunpack.c.h.b16 %v847
    %v1309 = vunpack.c.l.b16 %v848
    %v1310 = vunpack.c.h.b16 %v848
    %v1311 = vunpack.c.l.b16 %v849
    %v1312 = vunpack.c.h.b16 %v849
    %v1313 = vunpack.c.l.b16 %v850
    %v1314 = vunpack.c.h.b16 %v850
    %v1315 = vunpack.c.l.b16 %v851
    %v1316 = vunpack.c.h.b16 %v851
    %v1317 = vunpack.c.l.b16 %v852
    %v1318 = vunpack.c.h.b16 %v852
    %v1319 = vunpack.c.l.b16 %v853
    %v1320 = vunpack.c.h.b16 %v853
    %v1321 = vunpack.c.l.b16 %v854
    %v1322 = vunpack.c.h.b16 %v854
    %v1323 = vunpack.c.l.b16 %v855
    %v1324 = vunpack.c.h.b16 %v855
    %v1325 = vunpack.c.l.b16 %v856
    %v1326 = vunpack.c.h.b16 %v856
    %v1327 = vunpack.c.l.b16 %v857
    %v1328 = vunpack.c.h.b16 %v857
    %v1329 = vunpack.c.l.b16 %v858
    %v1330 = vunpack.c.h.b16 %v858
    %v1331 = vunpack.c.l.b16 %v859
    %v1332 = vunpack.c.h.b16 %v859
    %v1333 = vunpack.c.l.b16 %v860
    %v1334 = vunpack.c.h.b16 %v860
    %v1335 = vunpack.c.l.b16 %v861
    %v1336 = vunpack.c.h.b16 %v861
    %v1337 = vunpack.c.l.b16 %v862
    %v1338 = vunpack.c.h.b16 %v862
    %v1339 = vunpack.c.l.b16 %v863
    %v1340 = vunpack.c.h.b16 %v863
    %v1341 = vunpack.c.l.b16 %v864
    %v1342 = vunpack.c.h.b16 %v864
    %v1343 = vunpack.c.l.b16 %v865
    %v1344 = vunpack.c.h.b16 %v865
    %v1345 = vunpack.c.l.b16 %v866
    %v1346 = vunpack.c.h.b16 %v866
    %v1347 = vunpack.c.l.b16 %v867
    %v1348 = vunpack.c.h.b16 %v867
    %v1349 = vunpack.c.l.b16 %v868
    %v1350 = vunpack.c.h.b16 %v868
    %v1351 = vunpack.c.l.b16 %v869
    %v1352 = vunpack.c.h.b16 %v869
    %v1353 = vunpack.c.l.b16 %v870
    %v1354 = vunpack.c.h.b16 %v870
    %v1355 = vunpack.c.l.b16 %v871
    %v1356 = vunpack.c.h.b16 %v871
    %v1357 = vunpack.c.l.b16 %v872
    %v1358 = vunpack.c.h.b16 %v872
    %v1359 = vunpack.c.l.b16 %v873
    %v1360 = vunpack.c.h.b16 %v873
    %v1361 = vunpack.c.l.b16 %v874
    %v1362 = vunpack.c.h.b16 %v874
    %v1363 = vunpack.c.l.b16 %v875
    %v1364 = vunpack.c.h.b16 %v875
    %v1365 = vunpack.c.l.b16 %v876
    %v1366 = vunpack.c.h.b16 %v876
    %v1367 = vunpack.c.l.b16 %v877
    %v1368 = vunpack.c.h.b16 %v877
    %v1369 = vunpack.c.l.b16 %v878
    %v1370 = vunpack.c.h.b16 %v878
    %v1371 = vunpack.c.l.b16 %v879
    %v1372 = vunpack.c.h.b16 %v879
    %v1373 = vunpack.c.l.b16 %v880
    %v1374 = vunpack.c.h.b16 %v880
    %v1375 = vunpack.c.l.b16 %v881
    %v1376 = vunpack.c.h.b16 %v881
    %v1377 = vunpack.c.l.b16 %v882
    %v1378 = vunpack.c.h.b16 %v882
    %v1379 = vunpack.c.l.b16 %v883
    %v1380 = vunpack.c.h.b16 %v883
    %v1381 = vunpack.c.l.b16 %v884
    %v1382 = vunpack.c.h.b16 %v884
    %v1383 = vunpack.c.l.b16 %v885
    %v1384 = vunpack.c.h.b16 %v885
    %v1385 = vunpack.c.l.b16 %v886
    %v1386 = vunpack.c.h.b16 %v886
    %v1387 = vunpack.c.l.b16 %v887
    %v1388 = vunpack.c.h.b16 %v887
    %v1389 = vunpack.c.l.b16 %v888
    %v1390 = vunpack.c.h.b16 %v888
    %v1391 = vunpack.c.l.b16 %v889
    %v1392 = vunpack.c.h.b16 %v889
    %v1393 = vunpack.c.l.b16 %v890
    %v1394 = vunpack.c.h.b16 %v890
    %v1395 = vunpack.c.l.b16 %v891
    %v1396 = vunpack.c.h.b16 %v891
    %v1397 = vunpack.c.l.b16 %v892
    %v1398 = vunpack.c.h.b16 %v892
    %v1399 = vunpack.c.l.b16 %v893
    %v1400 = vunpack.c.h.b16 %v893
    %v1401 = vunpack.c.l.b16 %v894
    %v1402 = vunpack.c.h.b16 %v894
    %v1403 = vunpack.c.l.b16 %v895
    %v1404 = vunpack.c.h.b16 %v895
    %v1405 = vunpack.c.l.b16 %v896
    %v1406 = vunpack.c.h.b16 %v896
    %v1407 = vunpack.c.l.b16 %v897
    %v1408 = vunpack.c.h.b16 %v897
    %v1409 = vunpack.c.l.b16 %v898
    %v1410 = vunpack.c.h.b16 %v898
    %v1411 = vunpack.c.l.b16 %v899
    %v1412 = vunpack.c.h.b16 %v899
    %v1413 = vunpack.c.l.b16 %v900
    %v1414 = vunpack.c.h.b16 %v900
    %v1415 = vunpack.c.l.b16 %v901
    %v1416 = vunpack.c.h.b16 %v901
    %v1417 = vunpack.c.l.b16 %v902
    %v1418 = vunpack.c.h.b16 %v902
    %v1419 = vunpack.c.l.b16 %v903
    %v1420 = vunpack.c.h.b16 %v903
    %v1421 = vunpack.c.l.b16 %v904
    %v1422 = vunpack.c.h.b16 %v904
    %v1423 = vunpack.c.l.b16 %v905
    %v1424 = vunpack.c.h.b16 %v905
    %v1425 = vunpack.c.l.b16 %v906
    %v1426 = vunpack.c.h.b16 %v906
    %v1427 = vunpack.c.l.b16 %v907
    %v1428 = vunpack.c.h.b16 %v907
    %v1429 = vunpack.c.l.b16 %v908
    %v1430 = vunpack.c.h.b16 %v908
    %v1431 = vunpack.c.l.b16 %v909
    %v1432 = vunpack.c.h.b16 %v909
    %v1433 = vunpack.c.l.b16 %v910
    %v1434 = vunpack.c.h.b16 %v910
    %v1435 = vunpack.c.l.b16 %v911
    %v1436 = vunpack.c.h.b16 %v911
    %v1437 = vunpack.c.l.b16 %v912
    %v1438 = vunpack.c.h.b16 %v912
    %v1439 = vunpack.c.l.b16 %v913
    %v1440 = vunpack.c.h.b16 %v913
    %v1441 = vunpack.c.l.b16 %v914
    %v1442 = vunpack.c.h.b16 %v914
    %v1443 = vpack.c.b16 %v1195, %v1187
    %v1444 = vpack.c.b16 %v1196, %v1188
    %v1445 = vpack.c.b16 %v1197, %v1189
    %v1446 = vpack.c.b16 %v1198, %v1190
    %v1447 = vpack.c.b16 %v1199, %v1191
    %v1448 = vpack.c.b16 %v1200, %v1192
    %v1449 = vpack.c.b16 %v1201, %v1193
    %v1450 = vpack.c.b16 %v1202, %v1194
    %v1451 = vpack.c.b16 %v1211, %v1203
    %v1452 = vpack.c.b16 %v1212, %v1204
    %v1453 = vpack.c.b16 %v1213, %v1205
    %v1454 = vpack.c.b16 %v1214, %v1206
    %v1455 = vpack.c.b16 %v1215, %v1207
    %v1456 = vpack.c.b16 %v1216, %v1208
    %v1457 = vpack.c.b16 %v1217, %v1209
    %v1458 = vpack.c.b16 %v1218, %v1210
    %v1459 = vpack.c.b16 %v1227, %v1219
    %v1460 = vpack.c.b16 %v1228, %v1220
    %v1461 = vpack.c.b16 %v1229, %v1221
    %v1462 = vpack.c.b16 %v1230, %v1222
    %v1463 = vpack.c.b16 %v1231, %v1223
    %v1464 = vpack.c.b16 %v1232, %v1224
    %v1465 = vpack.c.b16 %v1233, %v1225
    %v1466 = vpack.c.b16 %v1234, %v1226
    %v1467 = vpack.c.b16 %v1243, %v1235
    %v1468 = vpack.c.b16 %v1244, %v1236
    %v1469 = vpack.c.b16 %v1245, %v1237
    %v1470 = vpack.c.b16 %v1246, %v1238
    %v1471 = vpack.c.b16 %v1247, %v1239
    %v1472 = vpack.c.b16 %v1248, %v1240
    %v1473 = vpack.c.b16 %v1249, %v1241
    %v1474 = vpack.c.b16 %v1250, %v1242
    %v1475 = vpack.c.b16 %v1259, %v1251
    %v1476 = vpack.c.b16 %v1260, %v1252
    %v1477 = vpack.c.b16 %v1261, %v1253
    %v1478 = vpack.c.b16 %v1262, %v1254
    %v1479 = vpack.c.b16 %v1263, %v1255
    %v1480 = vpack.c.b16 %v1264, %v1256
    %v1481 = vpack.c.b16 %v1265, %v1257
    %v1482 = vpack.c.b16 %v1266, %v1258
    %v1483 = vpack.c.b16 %v1275, %v1267
    %v1484 = vpack.c.b16 %v1276, %v1268
    %v1485 = vpack.c.b16 %v1277, %v1269
    %v1486 = vpack.c.b16 %v1278, %v1270
    %v1487 = vpack.c.b16 %v1279, %v1271
    %v1488 = vpack.c.b16 %v1280, %v1272
    %v1489 = vpack.c.b16 %v1281, %v1273
    %v1490 = vpack.c.b16 %v1282, %v1274
    %v1491 = vpack.c.b16 %v1291, %v1283
    %v1492 = vpack.c.b16 %v1292, %v1284
    %v1493 = vpack.c.b16 %v1293, %v1285
    %v1494 = vpack.c.b16 %v1294, %v1286
    %v1495 = vpack.c.b16 %v1295, %v1287
    %v1496 = vpack.c.b16 %v1296, %v1288
    %v1497 = vpack.c.b16 %v1297, %v1289
    %v1498 = vpack.c.b16 %v1298, %v1290
    %v1499 = vpack.c.b16 %v1307, %v1299
    %v1500 = vpack.c.b16 %v1308, %v1300
    %v1501 = vpack.c.b16 %v1309, %v1301
    %v1502 = vpack.c.b16 %v1310, %v1302
    %v1503 = vpack.c.b16 %v1311, %v1303
    %v1504 = vpack.c.b16 %v1312, %v1304
    %v1505 = vpack.c.b16 %v1313, %v1305
    %v1506 = vpack.c.b16 %v1314, %v1306
    %v1507 = vpack.c.b16 %v1323, %v1315
    %v1508 = vpack.c.b16 %v1324, %v1316
    %v1509 = vpack.c.b16 %v1325, %v1317
    %v1510 = vpack.c.b16 %v1326, %v1318
    %v1511 = vpack.c.b16 %v1327, %v1319
    %v1512 = vpack.c.b16 %v1328, %v1320
    %v1513 = vpack.c.b16 %v1329, %v1321
    %v1514 = vpack.c.b16 %v1330, %v1322
    %v1515 = vpack.c.b16 %v1339, %v1331
    %v1516 = vpack.c.b16 %v1340, %v1332
    %v1517 = vpack.c.b16 %v1341, %v1333
    %v1518 = vpack.c.b16 %v1342, %v1334
    %v1519 = vpack.c.b16 %v1343, %v1335
    %v1520 = vpack.c.b16 %v1344, %v1336
    %v1521 = vpack.c.b16 %v1345, %v1337
    %v1522 = vpack.c.b16 %v1346, %v1338
    %v1523 = vpack.c.b16 %v1355, %v1347
    %v1524 = vpack.c.b16 %v1356, %v1348
    %v1525 = vpack.c.b16 %v1357, %v1349
    %v1526 = vpack.c.b16 %v1358, %v1350
    %v1527 = vpack.c.b16 %v1359, %v1351
    %v1528 = vpack.c.b16 %v1360, %v1352
    %v1529 = vpack.c.b16 %v1361, %v1353
    %v1530 = vpack.c.b16 %v1362, %v1354
    %v1531 = vpack.c.b16 %v1371, %v1363
    %v1532 = vpack.c.b16 %v1372, %v1364
    %v1533 = vpack.c.b16 %v1373, %v1365
    %v1534 = vpack.c.b16 %v1374, %v1366
    %v1535 = vpack.c.b16 %v1375, %v1367
    %v1536 = vpack.c.b16 %v1376, %v1368
    %v1537 = vpack.c.b16 %v1377, %v1369
    %v1538 = vpack.c.b16 %v1378, %v1370
    %v1539 = vpack.c.b16 %v1387, %v1379
    %v1540 = vpack.c.b16 %v1388, %v1380
    %v1541 = vpack.c.b16 %v1389, %v1381
    %v1542 = vpack.c.b16 %v1390, %v1382
    %v1543 = vpack.c.b16 %v1391, %v1383
    %v1544 = vpack.c.b16 %v1392, %v1384
    %v1545 = vpack.c.b16 %v1393, %v1385
    %v1546 = vpack.c.b16 %v1394, %v1386
    %v1547 = vpack.c.b16 %v1403, %v1395
    %v1548 = vpack.c.b16 %v1404, %v1396
    %v1549 = vpack.c.b16 %v1405, %v1397
    %v1550 = vpack.c.b16 %v1406, %v1398
    %v1551 = vpack.c.b16 %v1407, %v1399
    %v1552 = vpack.c.b16 %v1408, %v1400
    %v1553 = vpack.c.b16 %v1409, %v1401
    %v1554 = vpack.c.b16 %v1410, %v1402
    %v1555 = vpack.c.b16 %v1419, %v1411
    %v1556 = vpack.c.b16 %v1420, %v1412
    %v1557 = vpack.c.b16 %v1421, %v1413
    %v1558 = vpack.c.b16 %v1422, %v1414
    %v1559 = vpack.c.b16 %v1423, %v1415
    %v1560 = vpack.c.b16 %v1424, %v1416
    %v1561 = vpack.c.b16 %v1425, %v1417
    %v1562 = vpack.c.b16 %v1426, %v1418
    %v1563 = vpack.c.b16 %v1435, %v1427
    %v1564 = vpack.c.b16 %v1436, %v1428
    %v1565 = vpack.c.b16 %v1437, %v1429
    %v1566 = vpack.c.b16 %v1438, %v1430
    %v1567 = vpack.c.b16 %v1439, %v1431
    %v1568 = vpack.c.b16 %v1440, %v1432
    %v1569 = vpack.c.b16 %v1441, %v1433
    %v1570 = vpack.c.b16 %v1442, %v1434
    %1699 = vmatprep.subr.bf16.mxu0 %v1444
    %1700 = vmatpush1.bf16.msra.mxu0 %v1443
    %1701 = vmatprep.subr.bf16.mxu0 %v1452
    %1702 = vmatpush1.bf16.msra.mxu0 %v1451
    %1703 = vmatprep.subr.bf16.mxu0 %v1460
    %1704 = vmatpush1.bf16.msra.mxu0 %v1459
    %1705 = vmatprep.subr.bf16.mxu0 %v1468
    %1706 = vmatpush1.bf16.msra.mxu0 %v1467
    %1707 = vmatprep.subr.bf16.mxu0 %v1476
    %1708 = vmatpush1.bf16.msra.mxu0 %v1475
    %1709 = vmatprep.subr.bf16.mxu0 %v1484
    %1710 = vmatpush1.bf16.msra.mxu0 %v1483
    %1711 = vmatprep.subr.bf16.mxu0 %v1492
    %1712 = vmatpush1.bf16.msra.mxu0 %v1491
    %1713 = vmatprep.subr.bf16.mxu0 %v1500
    %1714 = vmatpush1.bf16.msra.mxu0 %v1499
    %1715 = vmatprep.subr.bf16.mxu0 %v1508
    %1716 = vmatpush1.bf16.msra.mxu0 %v1507
    %1717 = vmatprep.subr.bf16.mxu0 %v1516
    %1718 = vmatpush1.bf16.msra.mxu0 %v1515
    %1719 = vmatprep.subr.bf16.mxu0 %v1524
    %1720 = vmatpush1.bf16.msra.mxu0 %v1523
    %1721 = vmatprep.subr.bf16.mxu0 %v1532
    %1722 = vmatpush1.bf16.msra.mxu0 %v1531
    %1723 = vmatprep.subr.bf16.mxu0 %v1540
    %1724 = vmatpush1.bf16.msra.mxu0 %v1539
    %1725 = vmatprep.subr.bf16.mxu0 %v1548
    %1726 = vmatpush1.bf16.msra.mxu0 %v1547
    %1727 = vmatprep.subr.bf16.mxu0 %v1556
    %1728 = vmatpush1.bf16.msra.mxu0 %v1555
    %1729 = vmatprep.subr.bf16.mxu0 %v1564
    %1730 = vmatpush1.bf16.msra.mxu0 %v1563
    %1731 = vmatprep.mubr.bf16.mxu0 0
    %1732 = vmatmul.mubr.bf16.gmra.mrb[0].mxu0 0
    %v1733 = vpop.f32.mrb[0].mxu0
    %v1734 = vadd.f32 %v1043, %v1733
    %v1735 = vpop.f32.mrb[0].mxu0
    %v1736 = vadd.f32 %v1044, %v1735
    %v1737 = vpop.f32.mrb[0].mxu0
    %v1738 = vpop.f32.mrb[0].mxu0
    %1739 = vdwg.mxu0
    %1740 = vmatprep.subr.bf16.mxu0 %v1446
    %1741 = vmatpush1.bf16.msra.mxu0 %v1445
    %1742 = vmatprep.subr.bf16.mxu0 %v1454
    %1743 = vmatpush1.bf16.msra.mxu0 %v1453
    %1744 = vmatprep.subr.bf16.mxu0 %v1462
    %1745 = vmatpush1.bf16.msra.mxu0 %v1461
    %1746 = vmatprep.subr.bf16.mxu0 %v1470
    %1747 = vmatpush1.bf16.msra.mxu0 %v1469
    %1748 = vmatprep.subr.bf16.mxu0 %v1478
    %1749 = vmatpush1.bf16.msra.mxu0 %v1477
    %1750 = vmatprep.subr.bf16.mxu0 %v1486
    %1751 = vmatpush1.bf16.msra.mxu0 %v1485
    %1752 = vmatprep.subr.bf16.mxu0 %v1494
    %1753 = vmatpush1.bf16.msra.mxu0 %v1493
    %1754 = vmatprep.subr.bf16.mxu0 %v1502
    %1755 = vmatpush1.bf16.msra.mxu0 %v1501
    %1756 = vmatprep.subr.bf16.mxu0 %v1510
    %1757 = vmatpush1.bf16.msra.mxu0 %v1509
    %1758 = vmatprep.subr.bf16.mxu0 %v1518
    %1759 = vmatpush1.bf16.msra.mxu0 %v1517
    %1760 = vmatprep.subr.bf16.mxu0 %v1526
    %1761 = vmatpush1.bf16.msra.mxu0 %v1525
    %1762 = vmatprep.subr.bf16.mxu0 %v1534
    %1763 = vmatpush1.bf16.msra.mxu0 %v1533
    %1764 = vmatprep.subr.bf16.mxu0 %v1542
    %1765 = vmatpush1.bf16.msra.mxu0 %v1541
    %1766 = vmatprep.subr.bf16.mxu0 %v1550
    %1767 = vmatpush1.bf16.msra.mxu0 %v1549
    %1768 = vmatprep.subr.bf16.mxu0 %v1558
    %1769 = vmatpush1.bf16.msra.mxu0 %v1557
    %1770 = vmatprep.subr.bf16.mxu0 %v1566
    %1771 = vmatpush1.bf16.msra.mxu0 %v1565
    %1772 = vmatprep.mubr.bf16.mxu0 0
    %1773 = vmatmul.mubr.bf16.gmra.mrb[0].mxu0 0
    %v1774 = vpop.f32.mrb[0].mxu0
    %v1775 = vadd.f32 %v1045, %v1774
    %v1776 = vpop.f32.mrb[0].mxu0
    %v1777 = vadd.f32 %v1046, %v1776
    %v1778 = vpop.f32.mrb[0].mxu0
    %v1779 = vpop.f32.mrb[0].mxu0
    %1780 = vdwg.mxu0
    %1781 = vmatprep.subr.bf16.mxu0 %v1448
    %1782 = vmatpush1.bf16.msra.mxu0 %v1447
    %1783 = vmatprep.subr.bf16.mxu0 %v1456
    %1784 = vmatpush1.bf16.msra.mxu0 %v1455
    %1785 = vmatprep.subr.bf16.mxu0 %v1464
    %1786 = vmatpush1.bf16.msra.mxu0 %v1463
    %1787 = vmatprep.subr.bf16.mxu0 %v1472
    %1788 = vmatpush1.bf16.msra.mxu0 %v1471
    %1789 = vmatprep.subr.bf16.mxu0 %v1480
    %1790 = vmatpush1.bf16.msra.mxu0 %v1479
    %1791 = vmatprep.subr.bf16.mxu0 %v1488
    %1792 = vmatpush1.bf16.msra.mxu0 %v1487
    %1793 = vmatprep.subr.bf16.mxu0 %v1496
    %1794 = vmatpush1.bf16.msra.mxu0 %v1495
    %1795 = vmatprep.subr.bf16.mxu0 %v1504
    %1796 = vmatpush1.bf16.msra.mxu0 %v1503
    %1797 = vmatprep.subr.bf16.mxu0 %v1512
    %1798 = vmatpush1.bf16.msra.mxu0 %v1511
    %1799 = vmatprep.subr.bf16.mxu0 %v1520
    %1800 = vmatpush1.bf16.msra.mxu0 %v1519
    %1801 = vmatprep.subr.bf16.mxu0 %v1528
    %1802 = vmatpush1.bf16.msra.mxu0 %v1527
    %1803 = vmatprep.subr.bf16.mxu0 %v1536
    %1804 = vmatpush1.bf16.msra.mxu0 %v1535
    %1805 = vmatprep.subr.bf16.mxu0 %v1544
    %1806 = vmatpush1.bf16.msra.mxu0 %v1543
    %1807 = vmatprep.subr.bf16.mxu0 %v1552
    %1808 = vmatpush1.bf16.msra.mxu0 %v1551
    %1809 = vmatprep.subr.bf16.mxu0 %v1560
    %1810 = vmatpush1.bf16.msra.mxu0 %v1559
    %1811 = vmatprep.subr.bf16.mxu0 %v1568
    %1812 = vmatpush1.bf16.msra.mxu0 %v1567
    %1813 = vmatprep.mubr.bf16.mxu0 0
    %1814 = vmatmul.mubr.bf16.gmra.mrb[0].mxu0 0
    %v1815 = vpop.f32.mrb[0].mxu0
    %v1816 = vadd.f32 %v1047, %v1815
    %v1817 = vpop.f32.mrb[0].mxu0
    %v1818 = vadd.f32 %v1048, %v1817
    %v1819 = vpop.f32.mrb[0].mxu0
    %v1820 = vpop.f32.mrb[0].mxu0
    %1821 = vdwg.mxu0
    %1822 = vmatprep.subr.bf16.mxu0 %v1450
    %1823 = vmatpush1.bf16.msra.mxu0 %v1449
    %1824 = vmatprep.subr.bf16.mxu0 %v1458
    %1825 = vmatpush1.bf16.msra.mxu0 %v1457
    %1826 = vmatprep.subr.bf16.mxu0 %v1466
    %1827 = vmatpush1.bf16.msra.mxu0 %v1465
    %1828 = vmatprep.subr.bf16.mxu0 %v1474
    %1829 = vmatpush1.bf16.msra.mxu0 %v1473
    %1830 = vmatprep.subr.bf16.mxu0 %v1482
    %1831 = vmatpush1.bf16.msra.mxu0 %v1481
    %1832 = vmatprep.subr.bf16.mxu0 %v1490
    %1833 = vmatpush1.bf16.msra.mxu0 %v1489
    %1834 = vmatprep.subr.bf16.mxu0 %v1498
    %1835 = vmatpush1.bf16.msra.mxu0 %v1497
    %1836 = vmatprep.subr.bf16.mxu0 %v1506
    %1837 = vmatpush1.bf16.msra.mxu0 %v1505
    %1838 = vmatprep.subr.bf16.mxu0 %v1514
    %1839 = vmatpush1.bf16.msra.mxu0 %v1513
    %1840 = vmatprep.subr.bf16.mxu0 %v1522
    %1841 = vmatpush1.bf16.msra.mxu0 %v1521
    %1842 = vmatprep.subr.bf16.mxu0 %v1530
    %1843 = vmatpush1.bf16.msra.mxu0 %v1529
    %1844 = vmatprep.subr.bf16.mxu0 %v1538
    %1845 = vmatpush1.bf16.msra.mxu0 %v1537
    %1846 = vmatprep.subr.bf16.mxu0 %v1546
    %1847 = vmatpush1.bf16.msra.mxu0 %v1545
    %1848 = vmatprep.subr.bf16.mxu0 %v1554
    %1849 = vmatpush1.bf16.msra.mxu0 %v1553
    %1850 = vmatprep.subr.bf16.mxu0 %v1562
    %1851 = vmatpush1.bf16.msra.mxu0 %v1561
    %1852 = vmatprep.subr.bf16.mxu0 %v1570
    %1853 = vmatpush1.bf16.msra.mxu0 %v1569
    %1854 = vmatprep.mubr.bf16.mxu0 0
    %1855 = vmatmul.mubr.bf16.gmra.mrb[0].mxu0 0
    %v1856 = vpop.f32.mrb[0].mxu0
    %v1857 = vadd.f32 %v1049, %v1856
    %v1858 = vpop.f32.mrb[0].mxu0
    %v1859 = vadd.f32 %v1050, %v1858
    %v1860 = vpop.f32.mrb[0].mxu0
    %v1861 = vpop.f32.mrb[0].mxu0
    %1862 = vdwg.mxu0
    %v1991 = vunpack.c.l.b16 %v915
    %v1992 = vunpack.c.h.b16 %v915
    %v1993 = vunpack.c.l.b16 %v916
    %v1994 = vunpack.c.h.b16 %v916
    %v1995 = vunpack.c.l.b16 %v917
    %v1996 = vunpack.c.h.b16 %v917
    %v1997 = vunpack.c.l.b16 %v918
    %v1998 = vunpack.c.h.b16 %v918
    %v1999 = vunpack.c.l.b16 %v919
    %v2000 = vunpack.c.h.b16 %v919
    %v2001 = vunpack.c.l.b16 %v920
    %v2002 = vunpack.c.h.b16 %v920
    %v2003 = vunpack.c.l.b16 %v921
    %v2004 = vunpack.c.h.b16 %v921
    %v2005 = vunpack.c.l.b16 %v922
    %v2006 = vunpack.c.h.b16 %v922
    %v2007 = vunpack.c.l.b16 %v923
    %v2008 = vunpack.c.h.b16 %v923
    %v2009 = vunpack.c.l.b16 %v924
    %v2010 = vunpack.c.h.b16 %v924
    %v2011 = vunpack.c.l.b16 %v925
    %v2012 = vunpack.c.h.b16 %v925
    %v2013 = vunpack.c.l.b16 %v926
    %v2014 = vunpack.c.h.b16 %v926
    %v2015 = vunpack.c.l.b16 %v927
    %v2016 = vunpack.c.h.b16 %v927
    %v2017 = vunpack.c.l.b16 %v928
    %v2018 = vunpack.c.h.b16 %v928
    %v2019 = vunpack.c.l.b16 %v929
    %v2020 = vunpack.c.h.b16 %v929
    %v2021 = vunpack.c.l.b16 %v930
    %v2022 = vunpack.c.h.b16 %v930
    %v2023 = vunpack.c.l.b16 %v931
    %v2024 = vunpack.c.h.b16 %v931
    %v2025 = vunpack.c.l.b16 %v932
    %v2026 = vunpack.c.h.b16 %v932
    %v2027 = vunpack.c.l.b16 %v933
    %v2028 = vunpack.c.h.b16 %v933
    %v2029 = vunpack.c.l.b16 %v934
    %v2030 = vunpack.c.h.b16 %v934
    %v2031 = vunpack.c.l.b16 %v935
    %v2032 = vunpack.c.h.b16 %v935
    %v2033 = vunpack.c.l.b16 %v936
    %v2034 = vunpack.c.h.b16 %v936
    %v2035 = vunpack.c.l.b16 %v937
    %v2036 = vunpack.c.h.b16 %v937
    %v2037 = vunpack.c.l.b16 %v938
    %v2038 = vunpack.c.h.b16 %v938
    %v2039 = vunpack.c.l.b16 %v939
    %v2040 = vunpack.c.h.b16 %v939
    %v2041 = vunpack.c.l.b16 %v940
    %v2042 = vunpack.c.h.b16 %v940
    %v2043 = vunpack.c.l.b16 %v941
    %v2044 = vunpack.c.h.b16 %v941
    %v2045 = vunpack.c.l.b16 %v942
    %v2046 = vunpack.c.h.b16 %v942
    %v2047 = vunpack.c.l.b16 %v943
    %v2048 = vunpack.c.h.b16 %v943
    %v2049 = vunpack.c.l.b16 %v944
    %v2050 = vunpack.c.h.b16 %v944
    %v2051 = vunpack.c.l.b16 %v945
    %v2052 = vunpack.c.h.b16 %v945
    %v2053 = vunpack.c.l.b16 %v946
    %v2054 = vunpack.c.h.b16 %v946
    %v2055 = vunpack.c.l.b16 %v947
    %v2056 = vunpack.c.h.b16 %v947
    %v2057 = vunpack.c.l.b16 %v948
    %v2058 = vunpack.c.h.b16 %v948
    %v2059 = vunpack.c.l.b16 %v949
    %v2060 = vunpack.c.h.b16 %v949
    %v2061 = vunpack.c.l.b16 %v950
    %v2062 = vunpack.c.h.b16 %v950
    %v2063 = vunpack.c.l.b16 %v951
    %v2064 = vunpack.c.h.b16 %v951
    %v2065 = vunpack.c.l.b16 %v952
    %v2066 = vunpack.c.h.b16 %v952
    %v2067 = vunpack.c.l.b16 %v953
    %v2068 = vunpack.c.h.b16 %v953
    %v2069 = vunpack.c.l.b16 %v954
    %v2070 = vunpack.c.h.b16 %v954
    %v2071 = vunpack.c.l.b16 %v955
    %v2072 = vunpack.c.h.b16 %v955
    %v2073 = vunpack.c.l.b16 %v956
    %v2074 = vunpack.c.h.b16 %v956
    %v2075 = vunpack.c.l.b16 %v957
    %v2076 = vunpack.c.h.b16 %v957
    %v2077 = vunpack.c.l.b16 %v958
    %v2078 = vunpack.c.h.b16 %v958
    %v2079 = vunpack.c.l.b16 %v959
    %v2080 = vunpack.c.h.b16 %v959
    %v2081 = vunpack.c.l.b16 %v960
    %v2082 = vunpack.c.h.b16 %v960
    %v2083 = vunpack.c.l.b16 %v961
    %v2084 = vunpack.c.h.b16 %v961
    %v2085 = vunpack.c.l.b16 %v962
    %v2086 = vunpack.c.h.b16 %v962
    %v2087 = vunpack.c.l.b16 %v963
    %v2088 = vunpack.c.h.b16 %v963
    %v2089 = vunpack.c.l.b16 %v964
    %v2090 = vunpack.c.h.b16 %v964
    %v2091 = vunpack.c.l.b16 %v965
    %v2092 = vunpack.c.h.b16 %v965
    %v2093 = vunpack.c.l.b16 %v966
    %v2094 = vunpack.c.h.b16 %v966
    %v2095 = vunpack.c.l.b16 %v967
    %v2096 = vunpack.c.h.b16 %v967
    %v2097 = vunpack.c.l.b16 %v968
    %v2098 = vunpack.c.h.b16 %v968
    %v2099 = vunpack.c.l.b16 %v969
    %v2100 = vunpack.c.h.b16 %v969
    %v2101 = vunpack.c.l.b16 %v970
    %v2102 = vunpack.c.h.b16 %v970
    %v2103 = vunpack.c.l.b16 %v971
    %v2104 = vunpack.c.h.b16 %v971
    %v2105 = vunpack.c.l.b16 %v972
    %v2106 = vunpack.c.h.b16 %v972
    %v2107 = vunpack.c.l.b16 %v973
    %v2108 = vunpack.c.h.b16 %v973
    %v2109 = vunpack.c.l.b16 %v974
    %v2110 = vunpack.c.h.b16 %v974
    %v2111 = vunpack.c.l.b16 %v975
    %v2112 = vunpack.c.h.b16 %v975
    %v2113 = vunpack.c.l.b16 %v976
    %v2114 = vunpack.c.h.b16 %v976
    %v2115 = vunpack.c.l.b16 %v977
    %v2116 = vunpack.c.h.b16 %v977
    %v2117 = vunpack.c.l.b16 %v978
    %v2118 = vunpack.c.h.b16 %v978
    %v2119 = vunpack.c.l.b16 %v979
    %v2120 = vunpack.c.h.b16 %v979
    %v2121 = vunpack.c.l.b16 %v980
    %v2122 = vunpack.c.h.b16 %v980
    %v2123 = vunpack.c.l.b16 %v981
    %v2124 = vunpack.c.h.b16 %v981
    %v2125 = vunpack.c.l.b16 %v982
    %v2126 = vunpack.c.h.b16 %v982
    %v2127 = vunpack.c.l.b16 %v983
    %v2128 = vunpack.c.h.b16 %v983
    %v2129 = vunpack.c.l.b16 %v984
    %v2130 = vunpack.c.h.b16 %v984
    %v2131 = vunpack.c.l.b16 %v985
    %v2132 = vunpack.c.h.b16 %v985
    %v2133 = vunpack.c.l.b16 %v986
    %v2134 = vunpack.c.h.b16 %v986
    %v2135 = vunpack.c.l.b16 %v987
    %v2136 = vunpack.c.h.b16 %v987
    %v2137 = vunpack.c.l.b16 %v988
    %v2138 = vunpack.c.h.b16 %v988
    %v2139 = vunpack.c.l.b16 %v989
    %v2140 = vunpack.c.h.b16 %v989
    %v2141 = vunpack.c.l.b16 %v990
    %v2142 = vunpack.c.h.b16 %v990
    %v2143 = vunpack.c.l.b16 %v991
    %v2144 = vunpack.c.h.b16 %v991
    %v2145 = vunpack.c.l.b16 %v992
    %v2146 = vunpack.c.h.b16 %v992
    %v2147 = vunpack.c.l.b16 %v993
    %v2148 = vunpack.c.h.b16 %v993
    %v2149 = vunpack.c.l.b16 %v994
    %v2150 = vunpack.c.h.b16 %v994
    %v2151 = vunpack.c.l.b16 %v995
    %v2152 = vunpack.c.h.b16 %v995
    %v2153 = vunpack.c.l.b16 %v996
    %v2154 = vunpack.c.h.b16 %v996
    %v2155 = vunpack.c.l.b16 %v997
    %v2156 = vunpack.c.h.b16 %v997
    %v2157 = vunpack.c.l.b16 %v998
    %v2158 = vunpack.c.h.b16 %v998
    %v2159 = vunpack.c.l.b16 %v999
    %v2160 = vunpack.c.h.b16 %v999
    %v2161 = vunpack.c.l.b16 %v1000
    %v2162 = vunpack.c.h.b16 %v1000
    %v2163 = vunpack.c.l.b16 %v1001
    %v2164 = vunpack.c.h.b16 %v1001
    %v2165 = vunpack.c.l.b16 %v1002
    %v2166 = vunpack.c.h.b16 %v1002
    %v2167 = vunpack.c.l.b16 %v1003
    %v2168 = vunpack.c.h.b16 %v1003
    %v2169 = vunpack.c.l.b16 %v1004
    %v2170 = vunpack.c.h.b16 %v1004
    %v2171 = vunpack.c.l.b16 %v1005
    %v2172 = vunpack.c.h.b16 %v1005
    %v2173 = vunpack.c.l.b16 %v1006
    %v2174 = vunpack.c.h.b16 %v1006
    %v2175 = vunpack.c.l.b16 %v1007
    %v2176 = vunpack.c.h.b16 %v1007
    %v2177 = vunpack.c.l.b16 %v1008
    %v2178 = vunpack.c.h.b16 %v1008
    %v2179 = vunpack.c.l.b16 %v1009
    %v2180 = vunpack.c.h.b16 %v1009
    %v2181 = vunpack.c.l.b16 %v1010
    %v2182 = vunpack.c.h.b16 %v1010
    %v2183 = vunpack.c.l.b16 %v1011
    %v2184 = vunpack.c.h.b16 %v1011
    %v2185 = vunpack.c.l.b16 %v1012
    %v2186 = vunpack.c.h.b16 %v1012
    %v2187 = vunpack.c.l.b16 %v1013
    %v2188 = vunpack.c.h.b16 %v1013
    %v2189 = vunpack.c.l.b16 %v1014
    %v2190 = vunpack.c.h.b16 %v1014
    %v2191 = vunpack.c.l.b16 %v1015
    %v2192 = vunpack.c.h.b16 %v1015
    %v2193 = vunpack.c.l.b16 %v1016
    %v2194 = vunpack.c.h.b16 %v1016
    %v2195 = vunpack.c.l.b16 %v1017
    %v2196 = vunpack.c.h.b16 %v1017
    %v2197 = vunpack.c.l.b16 %v1018
    %v2198 = vunpack.c.h.b16 %v1018
    %v2199 = vunpack.c.l.b16 %v1019
    %v2200 = vunpack.c.h.b16 %v1019
    %v2201 = vunpack.c.l.b16 %v1020
    %v2202 = vunpack.c.h.b16 %v1020
    %v2203 = vunpack.c.l.b16 %v1021
    %v2204 = vunpack.c.h.b16 %v1021
    %v2205 = vunpack.c.l.b16 %v1022
    %v2206 = vunpack.c.h.b16 %v1022
    %v2207 = vunpack.c.l.b16 %v1023
    %v2208 = vunpack.c.h.b16 %v1023
    %v2209 = vunpack.c.l.b16 %v1024
    %v2210 = vunpack.c.h.b16 %v1024
    %v2211 = vunpack.c.l.b16 %v1025
    %v2212 = vunpack.c.h.b16 %v1025
    %v2213 = vunpack.c.l.b16 %v1026
    %v2214 = vunpack.c.h.b16 %v1026
    %v2215 = vunpack.c.l.b16 %v1027
    %v2216 = vunpack.c.h.b16 %v1027
    %v2217 = vunpack.c.l.b16 %v1028
    %v2218 = vunpack.c.h.b16 %v1028
    %v2219 = vunpack.c.l.b16 %v1029
    %v2220 = vunpack.c.h.b16 %v1029
    %v2221 = vunpack.c.l.b16 %v1030
    %v2222 = vunpack.c.h.b16 %v1030
    %v2223 = vunpack.c.l.b16 %v1031
    %v2224 = vunpack.c.h.b16 %v1031
    %v2225 = vunpack.c.l.b16 %v1032
    %v2226 = vunpack.c.h.b16 %v1032
    %v2227 = vunpack.c.l.b16 %v1033
    %v2228 = vunpack.c.h.b16 %v1033
    %v2229 = vunpack.c.l.b16 %v1034
    %v2230 = vunpack.c.h.b16 %v1034
    %v2231 = vunpack.c.l.b16 %v1035
    %v2232 = vunpack.c.h.b16 %v1035
    %v2233 = vunpack.c.l.b16 %v1036
    %v2234 = vunpack.c.h.b16 %v1036
    %v2235 = vunpack.c.l.b16 %v1037
    %v2236 = vunpack.c.h.b16 %v1037
    %v2237 = vunpack.c.l.b16 %v1038
    %v2238 = vunpack.c.h.b16 %v1038
    %v2239 = vunpack.c.l.b16 %v1039
    %v2240 = vunpack.c.h.b16 %v1039
    %v2241 = vunpack.c.l.b16 %v1040
    %v2242 = vunpack.c.h.b16 %v1040
    %v2243 = vunpack.c.l.b16 %v1041
    %v2244 = vunpack.c.h.b16 %v1041
    %v2245 = vunpack.c.l.b16 %v1042
    %v2246 = vunpack.c.h.b16 %v1042
    %v2247 = vpack.c.b16 %v1999, %v1991
    %v2248 = vpack.c.b16 %v2000, %v1992
    %v2249 = vpack.c.b16 %v2001, %v1993
    %v2250 = vpack.c.b16 %v2002, %v1994
    %v2251 = vpack.c.b16 %v2003, %v1995
    %v2252 = vpack.c.b16 %v2004, %v1996
    %v2253 = vpack.c.b16 %v2005, %v1997
    %v2254 = vpack.c.b16 %v2006, %v1998
    %v2255 = vpack.c.b16 %v2015, %v2007
    %v2256 = vpack.c.b16 %v2016, %v2008
    %v2257 = vpack.c.b16 %v2017, %v2009
    %v2258 = vpack.c.b16 %v2018, %v2010
    %v2259 = vpack.c.b16 %v2019, %v2011
    %v2260 = vpack.c.b16 %v2020, %v2012
    %v2261 = vpack.c.b16 %v2021, %v2013
    %v2262 = vpack.c.b16 %v2022, %v2014
    %v2263 = vpack.c.b16 %v2031, %v2023
    %v2264 = vpack.c.b16 %v2032, %v2024
    %v2265 = vpack.c.b16 %v2033, %v2025
    %v2266 = vpack.c.b16 %v2034, %v2026
    %v2267 = vpack.c.b16 %v2035, %v2027
    %v2268 = vpack.c.b16 %v2036, %v2028
    %v2269 = vpack.c.b16 %v2037, %v2029
    %v2270 = vpack.c.b16 %v2038, %v2030
    %v2271 = vpack.c.b16 %v2047, %v2039
    %v2272 = vpack.c.b16 %v2048, %v2040
    %v2273 = vpack.c.b16 %v2049, %v2041
    %v2274 = vpack.c.b16 %v2050, %v2042
    %v2275 = vpack.c.b16 %v2051, %v2043
    %v2276 = vpack.c.b16 %v2052, %v2044
    %v2277 = vpack.c.b16 %v2053, %v2045
    %v2278 = vpack.c.b16 %v2054, %v2046
    %v2279 = vpack.c.b16 %v2063, %v2055
    %v2280 = vpack.c.b16 %v2064, %v2056
    %v2281 = vpack.c.b16 %v2065, %v2057
    %v2282 = vpack.c.b16 %v2066, %v2058
    %v2283 = vpack.c.b16 %v2067, %v2059
    %v2284 = vpack.c.b16 %v2068, %v2060
    %v2285 = vpack.c.b16 %v2069, %v2061
    %v2286 = vpack.c.b16 %v2070, %v2062
    %v2287 = vpack.c.b16 %v2079, %v2071
    %v2288 = vpack.c.b16 %v2080, %v2072
    %v2289 = vpack.c.b16 %v2081, %v2073
    %v2290 = vpack.c.b16 %v2082, %v2074
    %v2291 = vpack.c.b16 %v2083, %v2075
    %v2292 = vpack.c.b16 %v2084, %v2076
    %v2293 = vpack.c.b16 %v2085, %v2077
    %v2294 = vpack.c.b16 %v2086, %v2078
    %v2295 = vpack.c.b16 %v2095, %v2087
    %v2296 = vpack.c.b16 %v2096, %v2088
    %v2297 = vpack.c.b16 %v2097, %v2089
    %v2298 = vpack.c.b16 %v2098, %v2090
    %v2299 = vpack.c.b16 %v2099, %v2091
    %v2300 = vpack.c.b16 %v2100, %v2092
    %v2301 = vpack.c.b16 %v2101, %v2093
    %v2302 = vpack.c.b16 %v2102, %v2094
    %v2303 = vpack.c.b16 %v2111, %v2103
    %v2304 = vpack.c.b16 %v2112, %v2104
    %v2305 = vpack.c.b16 %v2113, %v2105
    %v2306 = vpack.c.b16 %v2114, %v2106
    %v2307 = vpack.c.b16 %v2115, %v2107
    %v2308 = vpack.c.b16 %v2116, %v2108
    %v2309 = vpack.c.b16 %v2117, %v2109
    %v2310 = vpack.c.b16 %v2118, %v2110
    %v2311 = vpack.c.b16 %v2127, %v2119
    %v2312 = vpack.c.b16 %v2128, %v2120
    %v2313 = vpack.c.b16 %v2129, %v2121
    %v2314 = vpack.c.b16 %v2130, %v2122
    %v2315 = vpack.c.b16 %v2131, %v2123
    %v2316 = vpack.c.b16 %v2132, %v2124
    %v2317 = vpack.c.b16 %v2133, %v2125
    %v2318 = vpack.c.b16 %v2134, %v2126
    %v2319 = vpack.c.b16 %v2143, %v2135
    %v2320 = vpack.c.b16 %v2144, %v2136
    %v2321 = vpack.c.b16 %v2145, %v2137
    %v2322 = vpack.c.b16 %v2146, %v2138
    %v2323 = vpack.c.b16 %v2147, %v2139
    %v2324 = vpack.c.b16 %v2148, %v2140
    %v2325 = vpack.c.b16 %v2149, %v2141
    %v2326 = vpack.c.b16 %v2150, %v2142
    %v2327 = vpack.c.b16 %v2159, %v2151
    %v2328 = vpack.c.b16 %v2160, %v2152
    %v2329 = vpack.c.b16 %v2161, %v2153
    %v2330 = vpack.c.b16 %v2162, %v2154
    %v2331 = vpack.c.b16 %v2163, %v2155
    %v2332 = vpack.c.b16 %v2164, %v2156
    %v2333 = vpack.c.b16 %v2165, %v2157
    %v2334 = vpack.c.b16 %v2166, %v2158
    %v2335 = vpack.c.b16 %v2175, %v2167
    %v2336 = vpack.c.b16 %v2176, %v2168
    %v2337 = vpack.c.b16 %v2177, %v2169
    %v2338 = vpack.c.b16 %v2178, %v2170
    %v2339 = vpack.c.b16 %v2179, %v2171
    %v2340 = vpack.c.b16 %v2180, %v2172
    %v2341 = vpack.c.b16 %v2181, %v2173
    %v2342 = vpack.c.b16 %v2182, %v2174
    %v2343 = vpack.c.b16 %v2191, %v2183
    %v2344 = vpack.c.b16 %v2192, %v2184
    %v2345 = vpack.c.b16 %v2193, %v2185
    %v2346 = vpack.c.b16 %v2194, %v2186
    %v2347 = vpack.c.b16 %v2195, %v2187
    %v2348 = vpack.c.b16 %v2196, %v2188
    %v2349 = vpack.c.b16 %v2197, %v2189
    %v2350 = vpack.c.b16 %v2198, %v2190
    %v2351 = vpack.c.b16 %v2207, %v2199
    %v2352 = vpack.c.b16 %v2208, %v2200
    %v2353 = vpack.c.b16 %v2209, %v2201
    %v2354 = vpack.c.b16 %v2210, %v2202
    %v2355 = vpack.c.b16 %v2211, %v2203
    %v2356 = vpack.c.b16 %v2212, %v2204
    %v2357 = vpack.c.b16 %v2213, %v2205
    %v2358 = vpack.c.b16 %v2214, %v2206
    %v2359 = vpack.c.b16 %v2223, %v2215
    %v2360 = vpack.c.b16 %v2224, %v2216
    %v2361 = vpack.c.b16 %v2225, %v2217
    %v2362 = vpack.c.b16 %v2226, %v2218
    %v2363 = vpack.c.b16 %v2227, %v2219
    %v2364 = vpack.c.b16 %v2228, %v2220
    %v2365 = vpack.c.b16 %v2229, %v2221
    %v2366 = vpack.c.b16 %v2230, %v2222
    %v2367 = vpack.c.b16 %v2239, %v2231
    %v2368 = vpack.c.b16 %v2240, %v2232
    %v2369 = vpack.c.b16 %v2241, %v2233
    %v2370 = vpack.c.b16 %v2242, %v2234
    %v2371 = vpack.c.b16 %v2243, %v2235
    %v2372 = vpack.c.b16 %v2244, %v2236
    %v2373 = vpack.c.b16 %v2245, %v2237
    %v2374 = vpack.c.b16 %v2246, %v2238
    %v2511 = vrot.slane %v1051, 6
    %v2512 = vrot.slane %v1052, 6
    %v2513 = vrot.slane %v1053, 6
    %v2514 = vrot.slane %v1054, 6
    %v2515 = vrot.slane %v1055, 6
    %v2516 = vrot.slane %v1056, 6
    %v2517 = vrot.slane %v1057, 6
    %v2518 = vrot.slane %v1058, 6
    %2527 = vmatprep.subr.bf16.mxu0 %v2248
    %2528 = vmatpush1.bf16.msra.mxu0 %v2247
    %2529 = vmatprep.subr.bf16.mxu0 %v2256
    %2530 = vmatpush1.bf16.msra.mxu0 %v2255
    %2531 = vmatprep.subr.bf16.mxu0 %v2264
    %2532 = vmatpush1.bf16.msra.mxu0 %v2263
    %2533 = vmatprep.subr.bf16.mxu0 %v2272
    %2534 = vmatpush1.bf16.msra.mxu0 %v2271
    %2535 = vmatprep.subr.bf16.mxu0 %v2280
    %2536 = vmatpush1.bf16.msra.mxu0 %v2279
    %2537 = vmatprep.subr.bf16.mxu0 %v2288
    %2538 = vmatpush1.bf16.msra.mxu0 %v2287
    %2539 = vmatprep.subr.bf16.mxu0 %v2296
    %2540 = vmatpush1.bf16.msra.mxu0 %v2295
    %2541 = vmatprep.subr.bf16.mxu0 %v2304
    %2542 = vmatpush1.bf16.msra.mxu0 %v2303
    %2543 = vmatprep.subr.bf16.mxu0 %v2312
    %2544 = vmatpush1.bf16.msra.mxu0 %v2311
    %2545 = vmatprep.subr.bf16.mxu0 %v2320
    %2546 = vmatpush1.bf16.msra.mxu0 %v2319
    %2547 = vmatprep.subr.bf16.mxu0 %v2328
    %2548 = vmatpush1.bf16.msra.mxu0 %v2327
    %2549 = vmatprep.subr.bf16.mxu0 %v2336
    %2550 = vmatpush1.bf16.msra.mxu0 %v2335
    %2551 = vmatprep.subr.bf16.mxu0 %v2344
    %2552 = vmatpush1.bf16.msra.mxu0 %v2343
    %2553 = vmatprep.subr.bf16.mxu0 %v2352
    %2554 = vmatpush1.bf16.msra.mxu0 %v2351
    %2555 = vmatprep.subr.bf16.mxu0 %v2360
    %2556 = vmatpush1.bf16.msra.mxu0 %v2359
    %2557 = vmatprep.subr.bf16.mxu0 %v2368
    %2558 = vmatpush1.bf16.msra.mxu0 %v2367
    %2559 = vmatprep.mubr.bf16.mxu0 0
    %2560 = vmatmul.mubr.bf16.gmra.mrb[0].mxu0 0
    %v2561 = vpop.f32.mrb[0].mxu0
    %v2562 = vadd.f32 %v2511, %v2561
    %v2563 = vpop.f32.mrb[0].mxu0
    %v2564 = vadd.f32 %v2512, %v2563
    %v2565 = vpop.f32.mrb[0].mxu0
    %v2566 = vpop.f32.mrb[0].mxu0
    %2567 = vdwg.mxu0
    %2568 = vmatprep.subr.bf16.mxu0 %v2250
    %2569 = vmatpush1.bf16.msra.mxu0 %v2249
    %2570 = vmatprep.subr.bf16.mxu0 %v2258
    %2571 = vmatpush1.bf16.msra.mxu0 %v2257
    %2572 = vmatprep.subr.bf16.mxu0 %v2266
    %2573 = vmatpush1.bf16.msra.mxu0 %v2265
    %2574 = vmatprep.subr.bf16.mxu0 %v2274
    %2575 = vmatpush1.bf16.msra.mxu0 %v2273
    %2576 = vmatprep.subr.bf16.mxu0 %v2282
    %2577 = vmatpush1.bf16.msra.mxu0 %v2281
    %2578 = vmatprep.subr.bf16.mxu0 %v2290
    %2579 = vmatpush1.bf16.msra.mxu0 %v2289
    %2580 = vmatprep.subr.bf16.mxu0 %v2298
    %2581 = vmatpush1.bf16.msra.mxu0 %v2297
    %2582 = vmatprep.subr.bf16.mxu0 %v2306
    %2583 = vmatpush1.bf16.msra.mxu0 %v2305
    %2584 = vmatprep.subr.bf16.mxu0 %v2314
    %2585 = vmatpush1.bf16.msra.mxu0 %v2313
    %2586 = vmatprep.subr.bf16.mxu0 %v2322
    %2587 = vmatpush1.bf16.msra.mxu0 %v2321
    %2588 = vmatprep.subr.bf16.mxu0 %v2330
    %2589 = vmatpush1.bf16.msra.mxu0 %v2329
    %2590 = vmatprep.subr.bf16.mxu0 %v2338
    %2591 = vmatpush1.bf16.msra.mxu0 %v2337
    %2592 = vmatprep.subr.bf16.mxu0 %v2346
    %2593 = vmatpush1.bf16.msra.mxu0 %v2345
    %2594 = vmatprep.subr.bf16.mxu0 %v2354
    %2595 = vmatpush1.bf16.msra.mxu0 %v2353
    %2596 = vmatprep.subr.bf16.mxu0 %v2362
    %2597 = vmatpush1.bf16.msra.mxu0 %v2361
    %2598 = vmatprep.subr.bf16.mxu0 %v2370
    %2599 = vmatpush1.bf16.msra.mxu0 %v2369
    %2600 = vmatprep.mubr.bf16.mxu0 0
    %2601 = vmatmul.mubr.bf16.gmra.mrb[0].mxu0 0
    %v2602 = vpop.f32.mrb[0].mxu0
    %v2603 = vadd.f32 %v2513, %v2602
    %v2604 = vpop.f32.mrb[0].mxu0
    %v2605 = vadd.f32 %v2514, %v2604
    %v2606 = vpop.f32.mrb[0].mxu0
    %v2607 = vpop.f32.mrb[0].mxu0
    %2608 = vdwg.mxu0
    %2609 = vmatprep.subr.bf16.mxu0 %v2252
    %2610 = vmatpush1.bf16.msra.mxu0 %v2251
    %2611 = vmatprep.subr.bf16.mxu0 %v2260
    %2612 = vmatpush1.bf16.msra.mxu0 %v2259
    %2613 = vmatprep.subr.bf16.mxu0 %v2268
    %2614 = vmatpush1.bf16.msra.mxu0 %v2267
    %2615 = vmatprep.subr.bf16.mxu0 %v2276
    %2616 = vmatpush1.bf16.msra.mxu0 %v2275
    %2617 = vmatprep.subr.bf16.mxu0 %v2284
    %2618 = vmatpush1.bf16.msra.mxu0 %v2283
    %2619 = vmatprep.subr.bf16.mxu0 %v2292
    %2620 = vmatpush1.bf16.msra.mxu0 %v2291
    %2621 = vmatprep.subr.bf16.mxu0 %v2300
    %2622 = vmatpush1.bf16.msra.mxu0 %v2299
    %2623 = vmatprep.subr.bf16.mxu0 %v2308
    %2624 = vmatpush1.bf16.msra.mxu0 %v2307
    %2625 = vmatprep.subr.bf16.mxu0 %v2316
    %2626 = vmatpush1.bf16.msra.mxu0 %v2315
    %2627 = vmatprep.subr.bf16.mxu0 %v2324
    %2628 = vmatpush1.bf16.msra.mxu0 %v2323
    %2629 = vmatprep.subr.bf16.mxu0 %v2332
    %2630 = vmatpush1.bf16.msra.mxu0 %v2331
    %2631 = vmatprep.subr.bf16.mxu0 %v2340
    %2632 = vmatpush1.bf16.msra.mxu0 %v2339
    %2633 = vmatprep.subr.bf16.mxu0 %v2348
    %2634 = vmatpush1.bf16.msra.mxu0 %v2347
    %2635 = vmatprep.subr.bf16.mxu0 %v2356
    %2636 = vmatpush1.bf16.msra.mxu0 %v2355
    %2637 = vmatprep.subr.bf16.mxu0 %v2364
    %2638 = vmatpush1.bf16.msra.mxu0 %v2363
    %2639 = vmatprep.subr.bf16.mxu0 %v2372
    %2640 = vmatpush1.bf16.msra.mxu0 %v2371
    %2641 = vmatprep.mubr.bf16.mxu0 0
    %2642 = vmatmul.mubr.bf16.gmra.mrb[0].mxu0 0
    %v2643 = vpop.f32.mrb[0].mxu0
    %v2644 = vadd.f32 %v2515, %v2643
    %v2645 = vpop.f32.mrb[0].mxu0
    %v2646 = vadd.f32 %v2516, %v2645
    %v2647 = vpop.f32.mrb[0].mxu0
    %v2648 = vpop.f32.mrb[0].mxu0
    %2649 = vdwg.mxu0
    %2650 = vmatprep.subr.bf16.mxu0 %v2254
    %2651 = vmatpush1.bf16.msra.mxu0 %v2253
    %2652 = vmatprep.subr.bf16.mxu0 %v2262
    %2653 = vmatpush1.bf16.msra.mxu0 %v2261
    %2654 = vmatprep.subr.bf16.mxu0 %v2270
    %2655 = vmatpush1.bf16.msra.mxu0 %v2269
    %2656 = vmatprep.subr.bf16.mxu0 %v2278
    %2657 = vmatpush1.bf16.msra.mxu0 %v2277
    %2658 = vmatprep.subr.bf16.mxu0 %v2286
    %2659 = vmatpush1.bf16.msra.mxu0 %v2285
    %2660 = vmatprep.subr.bf16.mxu0 %v2294
    %2661 = vmatpush1.bf16.msra.mxu0 %v2293
    %2662 = vmatprep.subr.bf16.mxu0 %v2302
    %2663 = vmatpush1.bf16.msra.mxu0 %v2301
    %2664 = vmatprep.subr.bf16.mxu0 %v2310
    %2665 = vmatpush1.bf16.msra.mxu0 %v2309
    %2666 = vmatprep.subr.bf16.mxu0 %v2318
    %2667 = vmatpush1.bf16.msra.mxu0 %v2317
    %2668 = vmatprep.subr.bf16.mxu0 %v2326
    %2669 = vmatpush1.bf16.msra.mxu0 %v2325
    %2670 = vmatprep.subr.bf16.mxu0 %v2334
    %2671 = vmatpush1.bf16.msra.mxu0 %v2333
    %2672 = vmatprep.subr.bf16.mxu0 %v2342
    %2673 = vmatpush1.bf16.msra.mxu0 %v2341
    %2674 = vmatprep.subr.bf16.mxu0 %v2350
    %2675 = vmatpush1.bf16.msra.mxu0 %v2349
    %2676 = vmatprep.subr.bf16.mxu0 %v2358
    %2677 = vmatpush1.bf16.msra.mxu0 %v2357
    %2678 = vmatprep.subr.bf16.mxu0 %v2366
    %2679 = vmatpush1.bf16.msra.mxu0 %v2365
    %2680 = vmatprep.subr.bf16.mxu0 %v2374
    %2681 = vmatpush1.bf16.msra.mxu0 %v2373
    %2682 = vmatprep.mubr.bf16.mxu0 0
    %2683 = vmatmul.mubr.bf16.gmra.mrb[0].mxu0 0
    %v2684 = vpop.f32.mrb[0].mxu0
    %v2685 = vadd.f32 %v2517, %v2684
    %v2686 = vpop.f32.mrb[0].mxu0
    %v2687 = vadd.f32 %v2518, %v2686
    %v2688 = vpop.f32.mrb[0].mxu0
    %v2689 = vpop.f32.mrb[0].mxu0
    %2690 = vdwg.mxu0
    %v2691 = vxor.u32 %v1734, 2147483648
    %v2692 = vxor.u32 %v1736, 2147483648
    %v2693 = vmul.f32 %v2691, 1.442695
    %v2694 = vpow.pop %v2693
    %v2695 = vmul.f32 %v2692, 1.442695
    %v2696 = vpow.pop %v2695
    %v2697 = vadd.f32 %v2694, 1.0
    %v2698 = vadd.f32 %v2696, 1.0
    %v2699 = vrcp.pop %v2697
    %v2700 = vmul.f32 1.0, %v2699
    %v2701 = vrcp.pop %v2698
    %v2702 = vmul.f32 1.0, %v2701
    %v2703 = vxor.u32 %v1775, 2147483648
    %v2704 = vxor.u32 %v1777, 2147483648
    %v2705 = vmul.f32 %v2703, 1.442695
    %v2706 = vpow.pop %v2705
    %v2707 = vmul.f32 %v2704, 1.442695
    %v2708 = vpow.pop %v2707
    %v2709 = vadd.f32 %v2706, 1.0
    %v2710 = vadd.f32 %v2708, 1.0
    %v2711 = vrcp.pop %v2709
    %v2712 = vmul.f32 1.0, %v2711
    %v2713 = vrcp.pop %v2710
    %v2714 = vmul.f32 1.0, %v2713
    %v2715 = vtanh.pop %v1816
    %v2716 = vtanh.pop %v1818
    %v2717 = vxor.u32 %v1857, 2147483648
    %v2718 = vxor.u32 %v1859, 2147483648
    %v2719 = vmul.f32 %v2717, 1.442695
    %v2720 = vpow.pop %v2719
    %v2721 = vmul.f32 %v2718, 1.442695
    %v2722 = vpow.pop %v2721
    %v2723 = vadd.f32 %v2720, 1.0
    %v2724 = vadd.f32 %v2722, 1.0
    %v2725 = vrcp.pop %v2723
    %v2726 = vmul.f32 1.0, %v2725
    %v2727 = vrcp.pop %v2724
    %v2728 = vmul.f32 1.0, %v2727
    %v2729 = vmul.f32 %v2712, 0.0
    %v2730 = vmul.f32 %v2714, 0.0
    %v2731 = vmul.f32 %v2700, %v2715
    %v2732 = vmul.f32 %v2702, %v2716
    %v2733 = vadd.f32 %v2729, %v2731
    %v2734 = vadd.f32 %v2730, %v2732
    %v2735 = vtanh.pop %v2733
    %v2736 = vtanh.pop %v2734
    %v2737 = vmul.f32 %v2726, %v2735
    %v2738 = vmul.f32 %v2728, %v2736
    %v2739 = vxor.u32 %v2562, 2147483648
    %v2740 = vxor.u32 %v2564, 2147483648
    %v2741 = vmul.f32 %v2739, 1.442695
    %v2742 = vpow.pop %v2741
    %v2743 = vmul.f32 %v2740, 1.442695
    %v2744 = vpow.pop %v2743
    %v2745 = vadd.f32 %v2742, 1.0
    %v2746 = vadd.f32 %v2744, 1.0
    %v2747 = vrcp.pop %v2745
    %v2748 = vmul.f32 1.0, %v2747
    %v2749 = vrcp.pop %v2746
    %v2750 = vmul.f32 1.0, %v2749
    %v2751 = vxor.u32 %v2603, 2147483648
    %v2752 = vxor.u32 %v2605, 2147483648
    %v2753 = vmul.f32 %v2751, 1.442695
    %v2754 = vpow.pop %v2753
    %v2755 = vmul.f32 %v2752, 1.442695
    %v2756 = vpow.pop %v2755
    %v2757 = vadd.f32 %v2754, 1.0
    %v2758 = vadd.f32 %v2756, 1.0
    %v2759 = vrcp.pop %v2757
    %v2760 = vmul.f32 1.0, %v2759
    %v2761 = vrcp.pop %v2758
    %v2762 = vmul.f32 1.0, %v2761
    %v2763 = vtanh.pop %v2644
    %v2764 = vtanh.pop %v2646
    %v2765 = vxor.u32 %v2685, 2147483648
    %v2766 = vxor.u32 %v2687, 2147483648
    %v2767 = vmul.f32 %v2765, 1.442695
    %v2768 = vpow.pop %v2767
    %v2769 = vmul.f32 %v2766, 1.442695
    %v2770 = vpow.pop %v2769
    %v2771 = vadd.f32 %v2768, 1.0
    %v2772 = vadd.f32 %v2770, 1.0
    %v2773 = vrcp.pop %v2771
    %v2774 = vmul.f32 1.0, %v2773
    %v2775 = vrcp.pop %v2772
    %v2776 = vmul.f32 1.0, %v2775
    %v2777 = vmul.f32 %v2760, 0.0
    %v2778 = vmul.f32 %v2762, 0.0
    %v2779 = vmul.f32 %v2748, %v2763
    %v2780 = vmul.f32 %v2750, %v2764
    %v2781 = vadd.f32 %v2777, %v2779
    %v2782 = vadd.f32 %v2778, %v2780
    %v2783 = vtanh.pop %v2781
    %v2784 = vtanh.pop %v2782
    %v2785 = vmul.f32 %v2774, %v2783
    %v2786 = vmul.f32 %v2776, %v2784
    %v2787 = vld [vmem:[#allocation2] sm:$0xc]
    %v2788 = vld [vmem:[#allocation2 + $0x8] sm:$0xc]
    %v2789 = vld [vmem:[#allocation2 + $0x10] sm:$0xc]
    %v2790 = vld [vmem:[#allocation2 + $0x18] sm:$0xc]
    %v2791 = vld [vmem:[#allocation2 + $0x20] sm:$0xc]
    %v2792 = vld [vmem:[#allocation2 + $0x28] sm:$0xc]
    %v2793 = vld [vmem:[#allocation2 + $0x30] sm:$0xc]
    %v2794 = vld [vmem:[#allocation2 + $0x38] sm:$0xc]
    %v2795 = vld [vmem:[#allocation2 + $0xc0] sm:$0x30]
    %v2796 = vld [vmem:[#allocation2 + $0xc8] sm:$0x30]
    %v2797 = vld [vmem:[#allocation2 + $0xd0] sm:$0x30]
    %v2798 = vld [vmem:[#allocation2 + $0xd8] sm:$0x30]
    %v2799 = vld [vmem:[#allocation2 + $0xe0] sm:$0x30]
    %v2800 = vld [vmem:[#allocation2 + $0xe8] sm:$0x30]
    %v2801 = vld [vmem:[#allocation2 + $0xf0] sm:$0x30]
    %v2802 = vld [vmem:[#allocation2 + $0xf8] sm:$0x30]
    %v2803 = vpack.c.bf16 %v2737, %v2737
    %v2804 = vpack.c.bf16 %v2738, %v2738
    %v2813 = vrot.slane %v2787, 2
    %v2814 = vrot.slane %v2788, 2
    %v2815 = vrot.slane %v2789, 2
    %v2816 = vrot.slane %v2790, 2
    %v2817 = vrot.slane %v2791, 2
    %v2818 = vrot.slane %v2792, 2
    %v2819 = vrot.slane %v2793, 2
    %v2820 = vrot.slane %v2794, 2
    %2829 = vmatprep.subr.bf16.mxu0 %v1444
    %2830 = vmatpush1.bf16.msra.mxu0 %v1443
    %2831 = vmatprep.subr.bf16.mxu0 %v1452
    %2832 = vmatpush1.bf16.msra.mxu0 %v1451
    %2833 = vmatprep.subr.bf16.mxu0 %v1460
    %2834 = vmatpush1.bf16.msra.mxu0 %v1459
    %2835 = vmatprep.subr.bf16.mxu0 %v1468
    %2836 = vmatpush1.bf16.msra.mxu0 %v1467
    %2837 = vmatprep.subr.bf16.mxu0 %v1476
    %2838 = vmatpush1.bf16.msra.mxu0 %v1475
    %2839 = vmatprep.subr.bf16.mxu0 %v1484
    %2840 = vmatpush1.bf16.msra.mxu0 %v1483
    %2841 = vmatprep.subr.bf16.mxu0 %v1492
    %2842 = vmatpush1.bf16.msra.mxu0 %v1491
    %2843 = vmatprep.subr.bf16.mxu0 %v1500
    %2844 = vmatpush1.bf16.msra.mxu0 %v1499
    %2845 = vmatprep.subr.bf16.mxu0 %v1508
    %2846 = vmatpush1.bf16.msra.mxu0 %v1507
    %2847 = vmatprep.subr.bf16.mxu0 %v1516
    %2848 = vmatpush1.bf16.msra.mxu0 %v1515
    %2849 = vmatprep.subr.bf16.mxu0 %v1524
    %2850 = vmatpush1.bf16.msra.mxu0 %v1523
    %2851 = vmatprep.subr.bf16.mxu0 %v1532
    %2852 = vmatpush1.bf16.msra.mxu0 %v1531
    %2853 = vmatprep.subr.bf16.mxu0 %v1540
    %2854 = vmatpush1.bf16.msra.mxu0 %v1539
    %2855 = vmatprep.subr.bf16.mxu0 %v1548
    %2856 = vmatpush1.bf16.msra.mxu0 %v1547
    %2857 = vmatprep.subr.bf16.mxu0 %v1556
    %2858 = vmatpush1.bf16.msra.mxu0 %v1555
    %2859 = vmatprep.subr.bf16.mxu0 %v1564
    %2860 = vmatpush1.bf16.msra.mxu0 %v1563
    %2861 = vmatprep.mubr.bf16.mxu0 %v2804
    %2862 = vmatmul.mubr.bf16.gmra.mrb[0].mxu0 %v2803
    %v2863 = vpop.f32.mrb[0].mxu0
    %v2864 = vadd.f32 %v2813, %v2863
    %v2865 = vpop.f32.mrb[0].mxu0
    %v2866 = vadd.f32 %v2814, %v2865
    %v2867 = vpop.f32.mrb[0].mxu0
    %v2868 = vpop.f32.mrb[0].mxu0
    %2869 = vdwg.mxu0
    %2870 = vmatprep.subr.bf16.mxu0 %v1446
    %2871 = vmatpush1.bf16.msra.mxu0 %v1445
    %2872 = vmatprep.subr.bf16.mxu0 %v1454
    %2873 = vmatpush1.bf16.msra.mxu0 %v1453
    %2874 = vmatprep.subr.bf16.mxu0 %v1462
    %2875 = vmatpush1.bf16.msra.mxu0 %v1461
    %2876 = vmatprep.subr.bf16.mxu0 %v1470
    %2877 = vmatpush1.bf16.msra.mxu0 %v1469
    %2878 = vmatprep.subr.bf16.mxu0 %v1478
    %2879 = vmatpush1.bf16.msra.mxu0 %v1477
    %2880 = vmatprep.subr.bf16.mxu0 %v1486
    %2881 = vmatpush1.bf16.msra.mxu0 %v1485
    %2882 = vmatprep.subr.bf16.mxu0 %v1494
    %2883 = vmatpush1.bf16.msra.mxu0 %v1493
    %2884 = vmatprep.subr.bf16.mxu0 %v1502
    %2885 = vmatpush1.bf16.msra.mxu0 %v1501
    %2886 = vmatprep.subr.bf16.mxu0 %v1510
    %2887 = vmatpush1.bf16.msra.mxu0 %v1509
    %2888 = vmatprep.subr.bf16.mxu0 %v1518
    %2889 = vmatpush1.bf16.msra.mxu0 %v1517
    %2890 = vmatprep.subr.bf16.mxu0 %v1526
    %2891 = vmatpush1.bf16.msra.mxu0 %v1525
    %2892 = vmatprep.subr.bf16.mxu0 %v1534
    %2893 = vmatpush1.bf16.msra.mxu0 %v1533
    %2894 = vmatprep.subr.bf16.mxu0 %v1542
    %2895 = vmatpush1.bf16.msra.mxu0 %v1541
    %2896 = vmatprep.subr.bf16.mxu0 %v1550
    %2897 = vmatpush1.bf16.msra.mxu0 %v1549
    %2898 = vmatprep.subr.bf16.mxu0 %v1558
    %2899 = vmatpush1.bf16.msra.mxu0 %v1557
    %2900 = vmatprep.subr.bf16.mxu0 %v1566
    %2901 = vmatpush1.bf16.msra.mxu0 %v1565
    %2902 = vmatprep.mubr.bf16.mxu0 %v2804
    %2903 = vmatmul.mubr.bf16.gmra.mrb[0].mxu0 %v2803
    %v2904 = vpop.f32.mrb[0].mxu0
    %v2905 = vadd.f32 %v2815, %v2904
    %v2906 = vpop.f32.mrb[0].mxu0
    %v2907 = vadd.f32 %v2816, %v2906
    %v2908 = vpop.f32.mrb[0].mxu0
    %v2909 = vpop.f32.mrb[0].mxu0
    %2910 = vdwg.mxu0
    %2911 = vmatprep.subr.bf16.mxu0 %v1448
    %2912 = vmatpush1.bf16.msra.mxu0 %v1447
    %2913 = vmatprep.subr.bf16.mxu0 %v1456
    %2914 = vmatpush1.bf16.msra.mxu0 %v1455
    %2915 = vmatprep.subr.bf16.mxu0 %v1464
    %2916 = vmatpush1.bf16.msra.mxu0 %v1463
    %2917 = vmatprep.subr.bf16.mxu0 %v1472
    %2918 = vmatpush1.bf16.msra.mxu0 %v1471
    %2919 = vmatprep.subr.bf16.mxu0 %v1480
    %2920 = vmatpush1.bf16.msra.mxu0 %v1479
    %2921 = vmatprep.subr.bf16.mxu0 %v1488
    %2922 = vmatpush1.bf16.msra.mxu0 %v1487
    %2923 = vmatprep.subr.bf16.mxu0 %v1496
    %2924 = vmatpush1.bf16.msra.mxu0 %v1495
    %2925 = vmatprep.subr.bf16.mxu0 %v1504
    %2926 = vmatpush1.bf16.msra.mxu0 %v1503
    %2927 = vmatprep.subr.bf16.mxu0 %v1512
    %2928 = vmatpush1.bf16.msra.mxu0 %v1511
    %2929 = vmatprep.subr.bf16.mxu0 %v1520
    %2930 = vmatpush1.bf16.msra.mxu0 %v1519
    %2931 = vmatprep.subr.bf16.mxu0 %v1528
    %2932 = vmatpush1.bf16.msra.mxu0 %v1527
    %2933 = vmatprep.subr.bf16.mxu0 %v1536
    %2934 = vmatpush1.bf16.msra.mxu0 %v1535
    %2935 = vmatprep.subr.bf16.mxu0 %v1544
    %2936 = vmatpush1.bf16.msra.mxu0 %v1543
    %2937 = vmatprep.subr.bf16.mxu0 %v1552
    %2938 = vmatpush1.bf16.msra.mxu0 %v1551
    %2939 = vmatprep.subr.bf16.mxu0 %v1560
    %2940 = vmatpush1.bf16.msra.mxu0 %v1559
    %2941 = vmatprep.subr.bf16.mxu0 %v1568
    %2942 = vmatpush1.bf16.msra.mxu0 %v1567
    %2943 = vmatprep.mubr.bf16.mxu0 %v2804
    %2944 = vmatmul.mubr.bf16.gmra.mrb[0].mxu0 %v2803
    %v2945 = vpop.f32.mrb[0].mxu0
    %v2946 = vadd.f32 %v2817, %v2945
    %v2947 = vpop.f32.mrb[0].mxu0
    %v2948 = vadd.f32 %v2818, %v2947
    %v2949 = vpop.f32.mrb[0].mxu0
    %v2950 = vpop.f32.mrb[0].mxu0
    %2951 = vdwg.mxu0
    %2952 = vmatprep.subr.bf16.mxu0 %v1450
    %2953 = vmatpush1.bf16.msra.mxu0 %v1449
    %2954 = vmatprep.subr.bf16.mxu0 %v1458
    %2955 = vmatpush1.bf16.msra.mxu0 %v1457
    %2956 = vmatprep.subr.bf16.mxu0 %v1466
    %2957 = vmatpush1.bf16.msra.mxu0 %v1465
    %2958 = vmatprep.subr.bf16.mxu0 %v1474
    %2959 = vmatpush1.bf16.msra.mxu0 %v1473
    %2960 = vmatprep.subr.bf16.mxu0 %v1482
    %2961 = vmatpush1.bf16.msra.mxu0 %v1481
    %2962 = vmatprep.subr.bf16.mxu0 %v1490
    %2963 = vmatpush1.bf16.msra.mxu0 %v1489
    %2964 = vmatprep.subr.bf16.mxu0 %v1498
    %2965 = vmatpush1.bf16.msra.mxu0 %v1497
    %2966 = vmatprep.subr.bf16.mxu0 %v1506
    %2967 = vmatpush1.bf16.msra.mxu0 %v1505
    %2968 = vmatprep.subr.bf16.mxu0 %v1514
    %2969 = vmatpush1.bf16.msra.mxu0 %v1513
    %2970 = vmatprep.subr.bf16.mxu0 %v1522
    %2971 = vmatpush1.bf16.msra.mxu0 %v1521
    %2972 = vmatprep.subr.bf16.mxu0 %v1530
    %2973 = vmatpush1.bf16.msra.mxu0 %v1529
    %2974 = vmatprep.subr.bf16.mxu0 %v1538
    %2975 = vmatpush1.bf16.msra.mxu0 %v1537
    %2976 = vmatprep.subr.bf16.mxu0 %v1546
    %2977 = vmatpush1.bf16.msra.mxu0 %v1545
    %2978 = vmatprep.subr.bf16.mxu0 %v1554
    %2979 = vmatpush1.bf16.msra.mxu0 %v1553
    %2980 = vmatprep.subr.bf16.mxu0 %v1562
    %2981 = vmatpush1.bf16.msra.mxu0 %v1561
    %2982 = vmatprep.subr.bf16.mxu0 %v1570
    %2983 = vmatpush1.bf16.msra.mxu0 %v1569
    %2984 = vmatprep.mubr.bf16.mxu0 %v2804
    %2985 = vmatmul.mubr.bf16.gmra.mrb[0].mxu0 %v2803
    %v2986 = vpop.f32.mrb[0].mxu0
    %v2987 = vadd.f32 %v2819, %v2986
    %v2988 = vpop.f32.mrb[0].mxu0
    %v2989 = vadd.f32 %v2820, %v2988
    %v2990 = vpop.f32.mrb[0].mxu0
    %v2991 = vpop.f32.mrb[0].mxu0
    %2992 = vdwg.mxu0
    %v2993 = vpack.c.bf16 %v2785, %v2785
    %v2994 = vpack.c.bf16 %v2786, %v2786
    %v3003 = vrot.slane %v2795, 4
    %v3004 = vrot.slane %v2796, 4
    %v3005 = vrot.slane %v2797, 4
    %v3006 = vrot.slane %v2798, 4
    %v3007 = vrot.slane %v2799, 4
    %v3008 = vrot.slane %v2800, 4
    %v3009 = vrot.slane %v2801, 4
    %v3010 = vrot.slane %v2802, 4
    %3019 = vmatprep.subr.bf16.mxu0 %v2248
    %3020 = vmatpush1.bf16.msra.mxu0 %v2247
    %3021 = vmatprep.subr.bf16.mxu0 %v2256
    %3022 = vmatpush1.bf16.msra.mxu0 %v2255
    %3023 = vmatprep.subr.bf16.mxu0 %v2264
    %3024 = vmatpush1.bf16.msra.mxu0 %v2263
    %3025 = vmatprep.subr.bf16.mxu0 %v2272
    %3026 = vmatpush1.bf16.msra.mxu0 %v2271
    %3027 = vmatprep.subr.bf16.mxu0 %v2280
    %3028 = vmatpush1.bf16.msra.mxu0 %v2279
    %3029 = vmatprep.subr.bf16.mxu0 %v2288
    %3030 = vmatpush1.bf16.msra.mxu0 %v2287
    %3031 = vmatprep.subr.bf16.mxu0 %v2296
    %3032 = vmatpush1.bf16.msra.mxu0 %v2295
    %3033 = vmatprep.subr.bf16.mxu0 %v2304
    %3034 = vmatpush1.bf16.msra.mxu0 %v2303
    %3035 = vmatprep.subr.bf16.mxu0 %v2312
    %3036 = vmatpush1.bf16.msra.mxu0 %v2311
    %3037 = vmatprep.subr.bf16.mxu0 %v2320
    %3038 = vmatpush1.bf16.msra.mxu0 %v2319
    %3039 = vmatprep.subr.bf16.mxu0 %v2328
    %3040 = vmatpush1.bf16.msra.mxu0 %v2327
    %3041 = vmatprep.subr.bf16.mxu0 %v2336
    %3042 = vmatpush1.bf16.msra.mxu0 %v2335
    %3043 = vmatprep.subr.bf16.mxu0 %v2344
    %3044 = vmatpush1.bf16.msra.mxu0 %v2343
    %3045 = vmatprep.subr.bf16.mxu0 %v2352
    %3046 = vmatpush1.bf16.msra.mxu0 %v2351
    %3047 = vmatprep.subr.bf16.mxu0 %v2360
    %3048 = vmatpush1.bf16.msra.mxu0 %v2359
    %3049 = vmatprep.subr.bf16.mxu0 %v2368
    %3050 = vmatpush1.bf16.msra.mxu0 %v2367
    %3051 = vmatprep.mubr.bf16.mxu0 %v2994
    %3052 = vmatmul.mubr.bf16.gmra.mrb[0].mxu0 %v2993
    %v3053 = vpop.f32.mrb[0].mxu0
    %v3054 = vadd.f32 %v3003, %v3053
    %v3055 = vpop.f32.mrb[0].mxu0
    %v3056 = vadd.f32 %v3004, %v3055
    %v3057 = vpop.f32.mrb[0].mxu0
    %v3058 = vpop.f32.mrb[0].mxu0
    %3059 = vdwg.mxu0
    %3060 = vmatprep.subr.bf16.mxu0 %v2250
    %3061 = vmatpush1.bf16.msra.mxu0 %v2249
    %3062 = vmatprep.subr.bf16.mxu0 %v2258
    %3063 = vmatpush1.bf16.msra.mxu0 %v2257
    %3064 = vmatprep.subr.bf16.mxu0 %v2266
    %3065 = vmatpush1.bf16.msra.mxu0 %v2265
    %3066 = vmatprep.subr.bf16.mxu0 %v2274
    %3067 = vmatpush1.bf16.msra.mxu0 %v2273
    %3068 = vmatprep.subr.bf16.mxu0 %v2282
    %3069 = vmatpush1.bf16.msra.mxu0 %v2281
    %3070 = vmatprep.subr.bf16.mxu0 %v2290
    %3071 = vmatpush1.bf16.msra.mxu0 %v2289
    %3072 = vmatprep.subr.bf16.mxu0 %v2298
    %3073 = vmatpush1.bf16.msra.mxu0 %v2297
    %3074 = vmatprep.subr.bf16.mxu0 %v2306
    %3075 = vmatpush1.bf16.msra.mxu0 %v2305
    %3076 = vmatprep.subr.bf16.mxu0 %v2314
    %3077 = vmatpush1.bf16.msra.mxu0 %v2313
    %3078 = vmatprep.subr.bf16.mxu0 %v2322
    %3079 = vmatpush1.bf16.msra.mxu0 %v2321
    %3080 = vmatprep.subr.bf16.mxu0 %v2330
    %3081 = vmatpush1.bf16.msra.mxu0 %v2329
    %3082 = vmatprep.subr.bf16.mxu0 %v2338
    %3083 = vmatpush1.bf16.msra.mxu0 %v2337
    %3084 = vmatprep.subr.bf16.mxu0 %v2346
    %3085 = vmatpush1.bf16.msra.mxu0 %v2345
    %3086 = vmatprep.subr.bf16.mxu0 %v2354
    %3087 = vmatpush1.bf16.msra.mxu0 %v2353
    %3088 = vmatprep.subr.bf16.mxu0 %v2362
    %3089 = vmatpush1.bf16.msra.mxu0 %v2361
    %3090 = vmatprep.subr.bf16.mxu0 %v2370
    %3091 = vmatpush1.bf16.msra.mxu0 %v2369
    %3092 = vmatprep.mubr.bf16.mxu0 %v2994
    %3093 = vmatmul.mubr.bf16.gmra.mrb[0].mxu0 %v2993
    %v3094 = vpop.f32.mrb[0].mxu0
    %v3095 = vadd.f32 %v3005, %v3094
    %v3096 = vpop.f32.mrb[0].mxu0
    %v3097 = vadd.f32 %v3006, %v3096
    %v3098 = vpop.f32.mrb[0].mxu0
    %v3099 = vpop.f32.mrb[0].mxu0
    %3100 = vdwg.mxu0
    %3101 = vmatprep.subr.bf16.mxu0 %v2252
    %3102 = vmatpush1.bf16.msra.mxu0 %v2251
    %3103 = vmatprep.subr.bf16.mxu0 %v2260
    %3104 = vmatpush1.bf16.msra.mxu0 %v2259
    %3105 = vmatprep.subr.bf16.mxu0 %v2268
    %3106 = vmatpush1.bf16.msra.mxu0 %v2267
    %3107 = vmatprep.subr.bf16.mxu0 %v2276
    %3108 = vmatpush1.bf16.msra.mxu0 %v2275
    %3109 = vmatprep.subr.bf16.mxu0 %v2284
    %3110 = vmatpush1.bf16.msra.mxu0 %v2283
    %3111 = vmatprep.subr.bf16.mxu0 %v2292
    %3112 = vmatpush1.bf16.msra.mxu0 %v2291
    %3113 = vmatprep.subr.bf16.mxu0 %v2300
    %3114 = vmatpush1.bf16.msra.mxu0 %v2299
    %3115 = vmatprep.subr.bf16.mxu0 %v2308
    %3116 = vmatpush1.bf16.msra.mxu0 %v2307
    %3117 = vmatprep.subr.bf16.mxu0 %v2316
    %3118 = vmatpush1.bf16.msra.mxu0 %v2315
    %3119 = vmatprep.subr.bf16.mxu0 %v2324
    %3120 = vmatpush1.bf16.msra.mxu0 %v2323
    %3121 = vmatprep.subr.bf16.mxu0 %v2332
    %3122 = vmatpush1.bf16.msra.mxu0 %v2331
    %3123 = vmatprep.subr.bf16.mxu0 %v2340
    %3124 = vmatpush1.bf16.msra.mxu0 %v2339
    %3125 = vmatprep.subr.bf16.mxu0 %v2348
    %3126 = vmatpush1.bf16.msra.mxu0 %v2347
    %3127 = vmatprep.subr.bf16.mxu0 %v2356
    %3128 = vmatpush1.bf16.msra.mxu0 %v2355
    %3129 = vmatprep.subr.bf16.mxu0 %v2364
    %3130 = vmatpush1.bf16.msra.mxu0 %v2363
    %3131 = vmatprep.subr.bf16.mxu0 %v2372
    %3132 = vmatpush1.bf16.msra.mxu0 %v2371
    %3133 = vmatprep.mubr.bf16.mxu0 %v2994
    %3134 = vmatmul.mubr.bf16.gmra.mrb[0].mxu0 %v2993
    %v3135 = vpop.f32.mrb[0].mxu0
    %v3136 = vadd.f32 %v3007, %v3135
    %v3137 = vpop.f32.mrb[0].mxu0
    %v3138 = vadd.f32 %v3008, %v3137
    %v3139 = vpop.f32.mrb[0].mxu0
    %v3140 = vpop.f32.mrb[0].mxu0
    %3141 = vdwg.mxu0
    %3142 = vmatprep.subr.bf16.mxu0 %v2254
    %3143 = vmatpush1.bf16.msra.mxu0 %v2253
    %3144 = vmatprep.subr.bf16.mxu0 %v2262
    %3145 = vmatpush1.bf16.msra.mxu0 %v2261
    %3146 = vmatprep.subr.bf16.mxu0 %v2270
    %3147 = vmatpush1.bf16.msra.mxu0 %v2269
    %3148 = vmatprep.subr.bf16.mxu0 %v2278
    %3149 = vmatpush1.bf16.msra.mxu0 %v2277
    %3150 = vmatprep.subr.bf16.mxu0 %v2286
    %3151 = vmatpush1.bf16.msra.mxu0 %v2285
    %3152 = vmatprep.subr.bf16.mxu0 %v2294
    %3153 = vmatpush1.bf16.msra.mxu0 %v2293
    %3154 = vmatprep.subr.bf16.mxu0 %v2302
    %3155 = vmatpush1.bf16.msra.mxu0 %v2301
    %3156 = vmatprep.subr.bf16.mxu0 %v2310
    %3157 = vmatpush1.bf16.msra.mxu0 %v2309
    %3158 = vmatprep.subr.bf16.mxu0 %v2318
    %3159 = vmatpush1.bf16.msra.mxu0 %v2317
    %3160 = vmatprep.subr.bf16.mxu0 %v2326
    %3161 = vmatpush1.bf16.msra.mxu0 %v2325
    %3162 = vmatprep.subr.bf16.mxu0 %v2334
    %3163 = vmatpush1.bf16.msra.mxu0 %v2333
    %3164 = vmatprep.subr.bf16.mxu0 %v2342
    %3165 = vmatpush1.bf16.msra.mxu0 %v2341
    %3166 = vmatprep.subr.bf16.mxu0 %v2350
    %3167 = vmatpush1.bf16.msra.mxu0 %v2349
    %3168 = vmatprep.subr.bf16.mxu0 %v2358
    %3169 = vmatpush1.bf16.msra.mxu0 %v2357
    %3170 = vmatprep.subr.bf16.mxu0 %v2366
    %3171 = vmatpush1.bf16.msra.mxu0 %v2365
    %3172 = vmatprep.subr.bf16.mxu0 %v2374
    %3173 = vmatpush1.bf16.msra.mxu0 %v2373
    %3174 = vmatprep.mubr.bf16.mxu0 %v2994
    %3175 = vmatmul.mubr.bf16.gmra.mrb[0].mxu0 %v2993
    %v3176 = vpop.f32.mrb[0].mxu0
    %v3177 = vadd.f32 %v3009, %v3176
    %v3178 = vpop.f32.mrb[0].mxu0
    %v3179 = vadd.f32 %v3010, %v3178
    %v3180 = vpop.f32.mrb[0].mxu0
    %v3181 = vpop.f32.mrb[0].mxu0
    %3182 = vdwg.mxu0
    %v3183 = vxor.u32 %v2864, 2147483648
    %v3184 = vxor.u32 %v2866, 2147483648
    %v3185 = vmul.f32 %v3183, 1.442695
    %v3186 = vpow.pop %v3185
    %v3187 = vmul.f32 %v3184, 1.442695
    %v3188 = vpow.pop %v3187
    %v3189 = vadd.f32 %v3186, 1.0
    %v3190 = vadd.f32 %v3188, 1.0
    %v3191 = vrcp.pop %v3189
    %v3192 = vmul.f32 1.0, %v3191
    %v3193 = vrcp.pop %v3190
    %v3194 = vmul.f32 1.0, %v3193
    %v3195 = vxor.u32 %v2905, 2147483648
    %v3196 = vxor.u32 %v2907, 2147483648
    %v3197 = vmul.f32 %v3195, 1.442695
    %v3198 = vpow.pop %v3197
    %v3199 = vmul.f32 %v3196, 1.442695
    %v3200 = vpow.pop %v3199
    %v3201 = vadd.f32 %v3198, 1.0
    %v3202 = vadd.f32 %v3200, 1.0
    %v3203 = vrcp.pop %v3201
    %v3204 = vmul.f32 1.0, %v3203
    %v3205 = vrcp.pop %v3202
    %v3206 = vmul.f32 1.0, %v3205
    %v3207 = vtanh.pop %v2946
    %v3208 = vtanh.pop %v2948
    %v3209 = vxor.u32 %v2987, 2147483648
    %v3210 = vxor.u32 %v2989, 2147483648
    %v3211 = vmul.f32 %v3209, 1.442695
    %v3212 = vpow.pop %v3211
    %v3213 = vmul.f32 %v3210, 1.442695
    %v3214 = vpow.pop %v3213
    %v3215 = vadd.f32 %v3212, 1.0
    %v3216 = vadd.f32 %v3214, 1.0
    %v3217 = vrcp.pop %v3215
    %v3218 = vmul.f32 1.0, %v3217
    %v3219 = vrcp.pop %v3216
    %v3220 = vmul.f32 1.0, %v3219
    %v3221 = vmul.f32 %v3204, %v2733
    %v3222 = vmul.f32 %v3206, %v2734
    %v3223 = vmul.f32 %v3192, %v3207
    %v3224 = vmul.f32 %v3194, %v3208
    %v3225 = vadd.f32 %v3221, %v3223
    %v3226 = vadd.f32 %v3222, %v3224
    %v3227 = vtanh.pop %v3225
    %v3228 = vtanh.pop %v3226
    %v3229 = vmul.f32 %v3218, %v3227
    %v3230 = vmul.f32 %v3220, %v3228
    %v3231 = vxor.u32 %v3054, 2147483648
    %v3232 = vxor.u32 %v3056, 2147483648
    %v3233 = vmul.f32 %v3231, 1.442695
    %v3234 = vpow.pop %v3233
    %v3235 = vmul.f32 %v3232, 1.442695
    %v3236 = vpow.pop %v3235
    %v3237 = vadd.f32 %v3234, 1.0
    %v3238 = vadd.f32 %v3236, 1.0
    %v3239 = vrcp.pop %v3237
    %v3240 = vmul.f32 1.0, %v3239
    %v3241 = vrcp.pop %v3238
    %v3242 = vmul.f32 1.0, %v3241
    %v3243 = vxor.u32 %v3095, 2147483648
    %v3244 = vxor.u32 %v3097, 2147483648
    %v3245 = vmul.f32 %v3243, 1.442695
    %v3246 = vpow.pop %v3245
    %v3247 = vmul.f32 %v3244, 1.442695
    %v3248 = vpow.pop %v3247
    %v3249 = vadd.f32 %v3246, 1.0
    %v3250 = vadd.f32 %v3248, 1.0
    %v3251 = vrcp.pop %v3249
    %v3252 = vmul.f32 1.0, %v3251
    %v3253 = vrcp.pop %v3250
    %v3254 = vmul.f32 1.0, %v3253
    %v3255 = vtanh.pop %v3136
    %v3256 = vtanh.pop %v3138
    %v3257 = vxor.u32 %v3177, 2147483648
    %v3258 = vxor.u32 %v3179, 2147483648
    %v3259 = vmul.f32 %v3257, 1.442695
    %v3260 = vpow.pop %v3259
    %v3261 = vmul.f32 %v3258, 1.442695
    %v3262 = vpow.pop %v3261
    %v3263 = vadd.f32 %v3260, 1.0
    %v3264 = vadd.f32 %v3262, 1.0
    %v3265 = vrcp.pop %v3263
    %v3266 = vmul.f32 1.0, %v3265
    %v3267 = vrcp.pop %v3264
    %v3268 = vmul.f32 1.0, %v3267
    %v3269 = vmul.f32 %v3252, %v2781
    %v3270 = vmul.f32 %v3254, %v2782
    %v3271 = vmul.f32 %v3240, %v3255
    %v3272 = vmul.f32 %v3242, %v3256
    %v3273 = vadd.f32 %v3269, %v3271
    %v3274 = vadd.f32 %v3270, %v3272
    %v3275 = vtanh.pop %v3273
    %v3276 = vtanh.pop %v3274
    %v3277 = vmul.f32 %v3266, %v3275
    %v3278 = vmul.f32 %v3268, %v3276
    %v3279 = vld [vmem:[#allocation2] sm:$0x30]
    %v3280 = vld [vmem:[#allocation2 + $0x8] sm:$0x30]
    %v3281 = vld [vmem:[#allocation2 + $0x10] sm:$0x30]
    %v3282 = vld [vmem:[#allocation2 + $0x18] sm:$0x30]
    %v3283 = vld [vmem:[#allocation2 + $0x20] sm:$0x30]
    %v3284 = vld [vmem:[#allocation2 + $0x28] sm:$0x30]
    %v3285 = vld [vmem:[#allocation2 + $0x30] sm:$0x30]
    %v3286 = vld [vmem:[#allocation2 + $0x38] sm:$0x30]
    %v3287 = vld [vmem:[#allocation2 + $0xc0] sm:$0xc]
    %v3288 = vld [vmem:[#allocation2 + $0xc8] sm:$0xc]
    %v3289 = vld [vmem:[#allocation2 + $0xd0] sm:$0xc]
    %v3290 = vld [vmem:[#allocation2 + $0xd8] sm:$0xc]
    %v3291 = vld [vmem:[#allocation2 + $0xe0] sm:$0xc]
    %v3292 = vld [vmem:[#allocation2 + $0xe8] sm:$0xc]
    %v3293 = vld [vmem:[#allocation2 + $0xf0] sm:$0xc]
    %v3294 = vld [vmem:[#allocation2 + $0xf8] sm:$0xc]
    %v3295 = vpack.c.bf16 %v3229, %v3229
    %v3296 = vpack.c.bf16 %v3230, %v3230
    %v3305 = vrot.slane %v3279, 4
    %v3306 = vrot.slane %v3280, 4
    %v3307 = vrot.slane %v3281, 4
    %v3308 = vrot.slane %v3282, 4
    %v3309 = vrot.slane %v3283, 4
    %v3310 = vrot.slane %v3284, 4
    %v3311 = vrot.slane %v3285, 4
    %v3312 = vrot.slane %v3286, 4
    %3321 = vmatprep.subr.bf16.mxu0 %v1444
    %3322 = vmatpush1.bf16.msra.mxu0 %v1443
    %3323 = vmatprep.subr.bf16.mxu0 %v1452
    %3324 = vmatpush1.bf16.msra.mxu0 %v1451
    %3325 = vmatprep.subr.bf16.mxu0 %v1460
    %3326 = vmatpush1.bf16.msra.mxu0 %v1459
    %3327 = vmatprep.subr.bf16.mxu0 %v1468
    %3328 = vmatpush1.bf16.msra.mxu0 %v1467
    %3329 = vmatprep.subr.bf16.mxu0 %v1476
    %3330 = vmatpush1.bf16.msra.mxu0 %v1475
    %3331 = vmatprep.subr.bf16.mxu0 %v1484
    %3332 = vmatpush1.bf16.msra.mxu0 %v1483
    %3333 = vmatprep.subr.bf16.mxu0 %v1492
    %3334 = vmatpush1.bf16.msra.mxu0 %v1491
    %3335 = vmatprep.subr.bf16.mxu0 %v1500
    %3336 = vmatpush1.bf16.msra.mxu0 %v1499
    %3337 = vmatprep.subr.bf16.mxu0 %v1508
    %3338 = vmatpush1.bf16.msra.mxu0 %v1507
    %3339 = vmatprep.subr.bf16.mxu0 %v1516
    %3340 = vmatpush1.bf16.msra.mxu0 %v1515
    %3341 = vmatprep.subr.bf16.mxu0 %v1524
    %3342 = vmatpush1.bf16.msra.mxu0 %v1523
    %3343 = vmatprep.subr.bf16.mxu0 %v1532
    %3344 = vmatpush1.bf16.msra.mxu0 %v1531
    %3345 = vmatprep.subr.bf16.mxu0 %v1540
    %3346 = vmatpush1.bf16.msra.mxu0 %v1539
    %3347 = vmatprep.subr.bf16.mxu0 %v1548
    %3348 = vmatpush1.bf16.msra.mxu0 %v1547
    %3349 = vmatprep.subr.bf16.mxu0 %v1556
    %3350 = vmatpush1.bf16.msra.mxu0 %v1555
    %3351 = vmatprep.subr.bf16.mxu0 %v1564
    %3352 = vmatpush1.bf16.msra.mxu0 %v1563
    %3353 = vmatprep.mubr.bf16.mxu0 %v3296
    %3354 = vmatmul.mubr.bf16.gmra.mrb[0].mxu0 %v3295
    %v3355 = vpop.f32.mrb[0].mxu0
    %v3356 = vadd.f32 %v3305, %v3355
    %v3357 = vpop.f32.mrb[0].mxu0
    %v3358 = vadd.f32 %v3306, %v3357
    %v3359 = vpop.f32.mrb[0].mxu0
    %v3360 = vpop.f32.mrb[0].mxu0
    %3361 = vdwg.mxu0
    %3362 = vmatprep.subr.bf16.mxu0 %v1446
    %3363 = vmatpush1.bf16.msra.mxu0 %v1445
    %3364 = vmatprep.subr.bf16.mxu0 %v1454
    %3365 = vmatpush1.bf16.msra.mxu0 %v1453
    %3366 = vmatprep.subr.bf16.mxu0 %v1462
    %3367 = vmatpush1.bf16.msra.mxu0 %v1461
    %3368 = vmatprep.subr.bf16.mxu0 %v1470
    %3369 = vmatpush1.bf16.msra.mxu0 %v1469
    %3370 = vmatprep.subr.bf16.mxu0 %v1478
    %3371 = vmatpush1.bf16.msra.mxu0 %v1477
    %3372 = vmatprep.subr.bf16.mxu0 %v1486
    %3373 = vmatpush1.bf16.msra.mxu0 %v1485
    %3374 = vmatprep.subr.bf16.mxu0 %v1494
    %3375 = vmatpush1.bf16.msra.mxu0 %v1493
    %3376 = vmatprep.subr.bf16.mxu0 %v1502
    %3377 = vmatpush1.bf16.msra.mxu0 %v1501
    %3378 = vmatprep.subr.bf16.mxu0 %v1510
    %3379 = vmatpush1.bf16.msra.mxu0 %v1509
    %3380 = vmatprep.subr.bf16.mxu0 %v1518
    %3381 = vmatpush1.bf16.msra.mxu0 %v1517
    %3382 = vmatprep.subr.bf16.mxu0 %v1526
    %3383 = vmatpush1.bf16.msra.mxu0 %v1525
    %3384 = vmatprep.subr.bf16.mxu0 %v1534
    %3385 = vmatpush1.bf16.msra.mxu0 %v1533
    %3386 = vmatprep.subr.bf16.mxu0 %v1542
    %3387 = vmatpush1.bf16.msra.mxu0 %v1541
    %3388 = vmatprep.subr.bf16.mxu0 %v1550
    %3389 = vmatpush1.bf16.msra.mxu0 %v1549
    %3390 = vmatprep.subr.bf16.mxu0 %v1558
    %3391 = vmatpush1.bf16.msra.mxu0 %v1557
    %3392 = vmatprep.subr.bf16.mxu0 %v1566
    %3393 = vmatpush1.bf16.msra.mxu0 %v1565
    %3394 = vmatprep.mubr.bf16.mxu0 %v3296
    %3395 = vmatmul.mubr.bf16.gmra.mrb[0].mxu0 %v3295
    %v3396 = vpop.f32.mrb[0].mxu0
    %v3397 = vadd.f32 %v3307, %v3396
    %v3398 = vpop.f32.mrb[0].mxu0
    %v3399 = vadd.f32 %v3308, %v3398
    %v3400 = vpop.f32.mrb[0].mxu0
    %v3401 = vpop.f32.mrb[0].mxu0
    %3402 = vdwg.mxu0
    %3403 = vmatprep.subr.bf16.mxu0 %v1448
    %3404 = vmatpush1.bf16.msra.mxu0 %v1447
    %3405 = vmatprep.subr.bf16.mxu0 %v1456
    %3406 = vmatpush1.bf16.msra.mxu0 %v1455
    %3407 = vmatprep.subr.bf16.mxu0 %v1464
    %3408 = vmatpush1.bf16.msra.mxu0 %v1463
    %3409 = vmatprep.subr.bf16.mxu0 %v1472
    %3410 = vmatpush1.bf16.msra.mxu0 %v1471
    %3411 = vmatprep.subr.bf16.mxu0 %v1480
    %3412 = vmatpush1.bf16.msra.mxu0 %v1479
    %3413 = vmatprep.subr.bf16.mxu0 %v1488
    %3414 = vmatpush1.bf16.msra.mxu0 %v1487
    %3415 = vmatprep.subr.bf16.mxu0 %v1496
    %3416 = vmatpush1.bf16.msra.mxu0 %v1495
    %3417 = vmatprep.subr.bf16.mxu0 %v1504
    %3418 = vmatpush1.bf16.msra.mxu0 %v1503
    %3419 = vmatprep.subr.bf16.mxu0 %v1512
    %3420 = vmatpush1.bf16.msra.mxu0 %v1511
    %3421 = vmatprep.subr.bf16.mxu0 %v1520
    %3422 = vmatpush1.bf16.msra.mxu0 %v1519
    %3423 = vmatprep.subr.bf16.mxu0 %v1528
    %3424 = vmatpush1.bf16.msra.mxu0 %v1527
    %3425 = vmatprep.subr.bf16.mxu0 %v1536
    %3426 = vmatpush1.bf16.msra.mxu0 %v1535
    %3427 = vmatprep.subr.bf16.mxu0 %v1544
    %3428 = vmatpush1.bf16.msra.mxu0 %v1543
    %3429 = vmatprep.subr.bf16.mxu0 %v1552
    %3430 = vmatpush1.bf16.msra.mxu0 %v1551
    %3431 = vmatprep.subr.bf16.mxu0 %v1560
    %3432 = vmatpush1.bf16.msra.mxu0 %v1559
    %3433 = vmatprep.subr.bf16.mxu0 %v1568
    %3434 = vmatpush1.bf16.msra.mxu0 %v1567
    %3435 = vmatprep.mubr.bf16.mxu0 %v3296
    %3436 = vmatmul.mubr.bf16.gmra.mrb[0].mxu0 %v3295
    %v3437 = vpop.f32.mrb[0].mxu0
    %v3438 = vadd.f32 %v3309, %v3437
    %v3439 = vpop.f32.mrb[0].mxu0
    %v3440 = vadd.f32 %v3310, %v3439
    %v3441 = vpop.f32.mrb[0].mxu0
    %v3442 = vpop.f32.mrb[0].mxu0
    %3443 = vdwg.mxu0
    %3444 = vmatprep.subr.bf16.mxu0 %v1450
    %3445 = vmatpush1.bf16.msra.mxu0 %v1449
    %3446 = vmatprep.subr.bf16.mxu0 %v1458
    %3447 = vmatpush1.bf16.msra.mxu0 %v1457
    %3448 = vmatprep.subr.bf16.mxu0 %v1466
    %3449 = vmatpush1.bf16.msra.mxu0 %v1465
    %3450 = vmatprep.subr.bf16.mxu0 %v1474
    %3451 = vmatpush1.bf16.msra.mxu0 %v1473
    %3452 = vmatprep.subr.bf16.mxu0 %v1482
    %3453 = vmatpush1.bf16.msra.mxu0 %v1481
    %3454 = vmatprep.subr.bf16.mxu0 %v1490
    %3455 = vmatpush1.bf16.msra.mxu0 %v1489
    %3456 = vmatprep.subr.bf16.mxu0 %v1498
    %3457 = vmatpush1.bf16.msra.mxu0 %v1497
    %3458 = vmatprep.subr.bf16.mxu0 %v1506
    %3459 = vmatpush1.bf16.msra.mxu0 %v1505
    %3460 = vmatprep.subr.bf16.mxu0 %v1514
    %3461 = vmatpush1.bf16.msra.mxu0 %v1513
    %3462 = vmatprep.subr.bf16.mxu0 %v1522
    %3463 = vmatpush1.bf16.msra.mxu0 %v1521
    %3464 = vmatprep.subr.bf16.mxu0 %v1530
    %3465 = vmatpush1.bf16.msra.mxu0 %v1529
    %3466 = vmatprep.subr.bf16.mxu0 %v1538
    %3467 = vmatpush1.bf16.msra.mxu0 %v1537
    %3468 = vmatprep.subr.bf16.mxu0 %v1546
    %3469 = vmatpush1.bf16.msra.mxu0 %v1545
    %3470 = vmatprep.subr.bf16.mxu0 %v1554
    %3471 = vmatpush1.bf16.msra.mxu0 %v1553
    %3472 = vmatprep.subr.bf16.mxu0 %v1562
    %3473 = vmatpush1.bf16.msra.mxu0 %v1561
    %3474 = vmatprep.subr.bf16.mxu0 %v1570
    %3475 = vmatpush1.bf16.msra.mxu0 %v1569
    %3476 = vmatprep.mubr.bf16.mxu0 %v3296
    %3477 = vmatmul.mubr.bf16.gmra.mrb[0].mxu0 %v3295
    %v3478 = vpop.f32.mrb[0].mxu0
    %v3479 = vadd.f32 %v3311, %v3478
    %v3480 = vpop.f32.mrb[0].mxu0
    %v3481 = vadd.f32 %v3312, %v3480
    %v3482 = vpop.f32.mrb[0].mxu0
    %v3483 = vpop.f32.mrb[0].mxu0
    %3484 = vdwg.mxu0
    %v3485 = vpack.c.bf16 %v3277, %v3277
    %v3486 = vpack.c.bf16 %v3278, %v3278
    %v3495 = vrot.slane %v3287, 2
    %v3496 = vrot.slane %v3288, 2
    %v3497 = vrot.slane %v3289, 2
    %v3498 = vrot.slane %v3290, 2
    %v3499 = vrot.slane %v3291, 2
    %v3500 = vrot.slane %v3292, 2
    %v3501 = vrot.slane %v3293, 2
    %v3502 = vrot.slane %v3294, 2
    %3511 = vmatprep.subr.bf16.mxu0 %v2248
    %3512 = vmatpush1.bf16.msra.mxu0 %v2247
    %3513 = vmatprep.subr.bf16.mxu0 %v2256
    %3514 = vmatpush1.bf16.msra.mxu0 %v2255
    %3515 = vmatprep.subr.bf16.mxu0 %v2264
    %3516 = vmatpush1.bf16.msra.mxu0 %v2263
    %3517 = vmatprep.subr.bf16.mxu0 %v2272
    %3518 = vmatpush1.bf16.msra.mxu0 %v2271
    %3519 = vmatprep.subr.bf16.mxu0 %v2280
    %3520 = vmatpush1.bf16.msra.mxu0 %v2279
    %3521 = vmatprep.subr.bf16.mxu0 %v2288
    %3522 = vmatpush1.bf16.msra.mxu0 %v2287
    %3523 = vmatprep.subr.bf16.mxu0 %v2296
    %3524 = vmatpush1.bf16.msra.mxu0 %v2295
    %3525 = vmatprep.subr.bf16.mxu0 %v2304
    %3526 = vmatpush1.bf16.msra.mxu0 %v2303
    %3527 = vmatprep.subr.bf16.mxu0 %v2312
    %3528 = vmatpush1.bf16.msra.mxu0 %v2311
    %3529 = vmatprep.subr.bf16.mxu0 %v2320
    %3530 = vmatpush1.bf16.msra.mxu0 %v2319
    %3531 = vmatprep.subr.bf16.mxu0 %v2328
    %3532 = vmatpush1.bf16.msra.mxu0 %v2327
    %3533 = vmatprep.subr.bf16.mxu0 %v2336
    %3534 = vmatpush1.bf16.msra.mxu0 %v2335
    %3535 = vmatprep.subr.bf16.mxu0 %v2344
    %3536 = vmatpush1.bf16.msra.mxu0 %v2343
    %3537 = vmatprep.subr.bf16.mxu0 %v2352
    %3538 = vmatpush1.bf16.msra.mxu0 %v2351
    %3539 = vmatprep.subr.bf16.mxu0 %v2360
    %3540 = vmatpush1.bf16.msra.mxu0 %v2359
    %3541 = vmatprep.subr.bf16.mxu0 %v2368
    %3542 = vmatpush1.bf16.msra.mxu0 %v2367
    %3543 = vmatprep.mubr.bf16.mxu0 %v3486
    %3544 = vmatmul.mubr.bf16.gmra.mrb[0].mxu0 %v3485
    %v3545 = vpop.f32.mrb[0].mxu0
    %v3546 = vadd.f32 %v3495, %v3545
    %v3547 = vpop.f32.mrb[0].mxu0
    %v3548 = vadd.f32 %v3496, %v3547
    %v3549 = vpop.f32.mrb[0].mxu0
    %v3550 = vpop.f32.mrb[0].mxu0
    %3551 = vdwg.mxu0
    %3552 = vmatprep.subr.bf16.mxu0 %v2250
    %3553 = vmatpush1.bf16.msra.mxu0 %v2249
    %3554 = vmatprep.subr.bf16.mxu0 %v2258
    %3555 = vmatpush1.bf16.msra.mxu0 %v2257
    %3556 = vmatprep.subr.bf16.mxu0 %v2266
    %3557 = vmatpush1.bf16.msra.mxu0 %v2265
    %3558 = vmatprep.subr.bf16.mxu0 %v2274
    %3559 = vmatpush1.bf16.msra.mxu0 %v2273
    %3560 = vmatprep.subr.bf16.mxu0 %v2282
    %3561 = vmatpush1.bf16.msra.mxu0 %v2281
    %3562 = vmatprep.subr.bf16.mxu0 %v2290
    %3563 = vmatpush1.bf16.msra.mxu0 %v2289
    %3564 = vmatprep.subr.bf16.mxu0 %v2298
    %3565 = vmatpush1.bf16.msra.mxu0 %v2297
    %3566 = vmatprep.subr.bf16.mxu0 %v2306
    %3567 = vmatpush1.bf16.msra.mxu0 %v2305
    %3568 = vmatprep.subr.bf16.mxu0 %v2314
    %3569 = vmatpush1.bf16.msra.mxu0 %v2313
    %3570 = vmatprep.subr.bf16.mxu0 %v2322
    %3571 = vmatpush1.bf16.msra.mxu0 %v2321
    %3572 = vmatprep.subr.bf16.mxu0 %v2330
    %3573 = vmatpush1.bf16.msra.mxu0 %v2329
    %3574 = vmatprep.subr.bf16.mxu0 %v2338
    %3575 = vmatpush1.bf16.msra.mxu0 %v2337
    %3576 = vmatprep.subr.bf16.mxu0 %v2346
    %3577 = vmatpush1.bf16.msra.mxu0 %v2345
    %3578 = vmatprep.subr.bf16.mxu0 %v2354
    %3579 = vmatpush1.bf16.msra.mxu0 %v2353
    %3580 = vmatprep.subr.bf16.mxu0 %v2362
    %3581 = vmatpush1.bf16.msra.mxu0 %v2361
    %3582 = vmatprep.subr.bf16.mxu0 %v2370
    %3583 = vmatpush1.bf16.msra.mxu0 %v2369
    %3584 = vmatprep.mubr.bf16.mxu0 %v3486
    %3585 = vmatmul.mubr.bf16.gmra.mrb[0].mxu0 %v3485
    %v3586 = vpop.f32.mrb[0].mxu0
    %v3587 = vadd.f32 %v3497, %v3586
    %v3588 = vpop.f32.mrb[0].mxu0
    %v3589 = vadd.f32 %v3498, %v3588
    %v3590 = vpop.f32.mrb[0].mxu0
    %v3591 = vpop.f32.mrb[0].mxu0
    %3592 = vdwg.mxu0
    %3593 = vmatprep.subr.bf16.mxu0 %v2252
    %3594 = vmatpush1.bf16.msra.mxu0 %v2251
    %3595 = vmatprep.subr.bf16.mxu0 %v2260
    %3596 = vmatpush1.bf16.msra.mxu0 %v2259
    %3597 = vmatprep.subr.bf16.mxu0 %v2268
    %3598 = vmatpush1.bf16.msra.mxu0 %v2267
    %3599 = vmatprep.subr.bf16.mxu0 %v2276
    %3600 = vmatpush1.bf16.msra.mxu0 %v2275
    %3601 = vmatprep.subr.bf16.mxu0 %v2284
    %3602 = vmatpush1.bf16.msra.mxu0 %v2283
    %3603 = vmatprep.subr.bf16.mxu0 %v2292
    %3604 = vmatpush1.bf16.msra.mxu0 %v2291
    %3605 = vmatprep.subr.bf16.mxu0 %v2300
    %3606 = vmatpush1.bf16.msra.mxu0 %v2299
    %3607 = vmatprep.subr.bf16.mxu0 %v2308
    %3608 = vmatpush1.bf16.msra.mxu0 %v2307
    %3609 = vmatprep.subr.bf16.mxu0 %v2316
    %3610 = vmatpush1.bf16.msra.mxu0 %v2315
    %3611 = vmatprep.subr.bf16.mxu0 %v2324
    %3612 = vmatpush1.bf16.msra.mxu0 %v2323
    %3613 = vmatprep.subr.bf16.mxu0 %v2332
    %3614 = vmatpush1.bf16.msra.mxu0 %v2331
    %3615 = vmatprep.subr.bf16.mxu0 %v2340
    %3616 = vmatpush1.bf16.msra.mxu0 %v2339
    %3617 = vmatprep.subr.bf16.mxu0 %v2348
    %3618 = vmatpush1.bf16.msra.mxu0 %v2347
    %3619 = vmatprep.subr.bf16.mxu0 %v2356
    %3620 = vmatpush1.bf16.msra.mxu0 %v2355
    %3621 = vmatprep.subr.bf16.mxu0 %v2364
    %3622 = vmatpush1.bf16.msra.mxu0 %v2363
    %3623 = vmatprep.subr.bf16.mxu0 %v2372
    %3624 = vmatpush1.bf16.msra.mxu0 %v2371
    %3625 = vmatprep.mubr.bf16.mxu0 %v3486
    %3626 = vmatmul.mubr.bf16.gmra.mrb[0].mxu0 %v3485
    %v3627 = vpop.f32.mrb[0].mxu0
    %v3628 = vadd.f32 %v3499, %v3627
    %v3629 = vpop.f32.mrb[0].mxu0
    %v3630 = vadd.f32 %v3500, %v3629
    %v3631 = vpop.f32.mrb[0].mxu0
    %v3632 = vpop.f32.mrb[0].mxu0
    %3633 = vdwg.mxu0
    %3634 = vmatprep.subr.bf16.mxu0 %v2254
    %3635 = vmatpush1.bf16.msra.mxu0 %v2253
    %3636 = vmatprep.subr.bf16.mxu0 %v2262
    %3637 = vmatpush1.bf16.msra.mxu0 %v2261
    %3638 = vmatprep.subr.bf16.mxu0 %v2270
    %3639 = vmatpush1.bf16.msra.mxu0 %v2269
    %3640 = vmatprep.subr.bf16.mxu0 %v2278
    %3641 = vmatpush1.bf16.msra.mxu0 %v2277
    %3642 = vmatprep.subr.bf16.mxu0 %v2286
    %3643 = vmatpush1.bf16.msra.mxu0 %v2285
    %3644 = vmatprep.subr.bf16.mxu0 %v2294
    %3645 = vmatpush1.bf16.msra.mxu0 %v2293
    %3646 = vmatprep.subr.bf16.mxu0 %v2302
    %3647 = vmatpush1.bf16.msra.mxu0 %v2301
    %3648 = vmatprep.subr.bf16.mxu0 %v2310
    %3649 = vmatpush1.bf16.msra.mxu0 %v2309
    %3650 = vmatprep.subr.bf16.mxu0 %v2318
    %3651 = vmatpush1.bf16.msra.mxu0 %v2317
    %3652 = vmatprep.subr.bf16.mxu0 %v2326
    %3653 = vmatpush1.bf16.msra.mxu0 %v2325
    %3654 = vmatprep.subr.bf16.mxu0 %v2334
    %3655 = vmatpush1.bf16.msra.mxu0 %v2333
    %3656 = vmatprep.subr.bf16.mxu0 %v2342
    %3657 = vmatpush1.bf16.msra.mxu0 %v2341
    %3658 = vmatprep.subr.bf16.mxu0 %v2350
    %3659 = vmatpush1.bf16.msra.mxu0 %v2349
    %3660 = vmatprep.subr.bf16.mxu0 %v2358
    %3661 = vmatpush1.bf16.msra.mxu0 %v2357
    %3662 = vmatprep.subr.bf16.mxu0 %v2366
    %3663 = vmatpush1.bf16.msra.mxu0 %v2365
    %3664 = vmatprep.subr.bf16.mxu0 %v2374
    %3665 = vmatpush1.bf16.msra.mxu0 %v2373
    %3666 = vmatprep.mubr.bf16.mxu0 %v3486
    %3667 = vmatmul.mubr.bf16.gmra.mrb[0].mxu0 %v3485
    %v3668 = vpop.f32.mrb[0].mxu0
    %v3669 = vadd.f32 %v3501, %v3668
    %v3670 = vpop.f32.mrb[0].mxu0
    %v3671 = vadd.f32 %v3502, %v3670
    %v3672 = vpop.f32.mrb[0].mxu0
    %v3673 = vpop.f32.mrb[0].mxu0
    %3674 = vdwg.mxu0
    %v3675 = vxor.u32 %v3356, 2147483648
    %v3676 = vxor.u32 %v3358, 2147483648
    %v3677 = vmul.f32 %v3675, 1.442695
    %v3678 = vpow.pop %v3677
    %v3679 = vmul.f32 %v3676, 1.442695
    %v3680 = vpow.pop %v3679
    %v3681 = vadd.f32 %v3678, 1.0
    %v3682 = vadd.f32 %v3680, 1.0
    %v3683 = vrcp.pop %v3681
    %v3684 = vmul.f32 1.0, %v3683
    %v3685 = vrcp.pop %v3682
    %v3686 = vmul.f32 1.0, %v3685
    %v3687 = vxor.u32 %v3397, 2147483648
    %v3688 = vxor.u32 %v3399, 2147483648
    %v3689 = vmul.f32 %v3687, 1.442695
    %v3690 = vpow.pop %v3689
    %v3691 = vmul.f32 %v3688, 1.442695
    %v3692 = vpow.pop %v3691
    %v3693 = vadd.f32 %v3690, 1.0
    %v3694 = vadd.f32 %v3692, 1.0
    %v3695 = vrcp.pop %v3693
    %v3696 = vmul.f32 1.0, %v3695
    %v3697 = vrcp.pop %v3694
    %v3698 = vmul.f32 1.0, %v3697
    %v3699 = vtanh.pop %v3438
    %v3700 = vtanh.pop %v3440
    %v3701 = vxor.u32 %v3479, 2147483648
    %v3702 = vxor.u32 %v3481, 2147483648
    %v3703 = vmul.f32 %v3701, 1.442695
    %v3704 = vpow.pop %v3703
    %v3705 = vmul.f32 %v3702, 1.442695
    %v3706 = vpow.pop %v3705
    %v3707 = vadd.f32 %v3704, 1.0
    %v3708 = vadd.f32 %v3706, 1.0
    %v3709 = vrcp.pop %v3707
    %v3710 = vmul.f32 1.0, %v3709
    %v3711 = vrcp.pop %v3708
    %v3712 = vmul.f32 1.0, %v3711
    %v3713 = vmul.f32 %v3696, %v3225
    %v3714 = vmul.f32 %v3698, %v3226
    %v3715 = vmul.f32 %v3684, %v3699
    %v3716 = vmul.f32 %v3686, %v3700
    %v3717 = vadd.f32 %v3713, %v3715
    %v3718 = vadd.f32 %v3714, %v3716
    %v3719 = vtanh.pop %v3717
    %v3720 = vtanh.pop %v3718
    %v3721 = vmul.f32 %v3710, %v3719
    %v3722 = vmul.f32 %v3712, %v3720
    %v3723 = vxor.u32 %v3546, 2147483648
    %v3724 = vxor.u32 %v3548, 2147483648
    %v3725 = vmul.f32 %v3723, 1.442695
    %v3726 = vpow.pop %v3725
    %v3727 = vmul.f32 %v3724, 1.442695
    %v3728 = vpow.pop %v3727
    %v3729 = vadd.f32 %v3726, 1.0
    %v3730 = vadd.f32 %v3728, 1.0
    %v3731 = vrcp.pop %v3729
    %v3732 = vmul.f32 1.0, %v3731
    %v3733 = vrcp.pop %v3730
    %v3734 = vmul.f32 1.0, %v3733
    %v3735 = vxor.u32 %v3587, 2147483648
    %v3736 = vxor.u32 %v3589, 2147483648
    %v3737 = vmul.f32 %v3735, 1.442695
    %v3738 = vpow.pop %v3737
    %v3739 = vmul.f32 %v3736, 1.442695
    %v3740 = vpow.pop %v3739
    %v3741 = vadd.f32 %v3738, 1.0
    %v3742 = vadd.f32 %v3740, 1.0
    %v3743 = vrcp.pop %v3741
    %v3744 = vmul.f32 1.0, %v3743
    %v3745 = vrcp.pop %v3742
    %v3746 = vmul.f32 1.0, %v3745
    %v3747 = vtanh.pop %v3628
    %v3748 = vtanh.pop %v3630
    %v3749 = vxor.u32 %v3669, 2147483648
    %v3750 = vxor.u32 %v3671, 2147483648
    %v3751 = vmul.f32 %v3749, 1.442695
    %v3752 = vpow.pop %v3751
    %v3753 = vmul.f32 %v3750, 1.442695
    %v3754 = vpow.pop %v3753
    %v3755 = vadd.f32 %v3752, 1.0
    %v3756 = vadd.f32 %v3754, 1.0
    %v3757 = vrcp.pop %v3755
    %v3758 = vmul.f32 1.0, %v3757
    %v3759 = vrcp.pop %v3756
    %v3760 = vmul.f32 1.0, %v3759
    %v3761 = vmul.f32 %v3744, %v3273
    %v3762 = vmul.f32 %v3746, %v3274
    %v3763 = vmul.f32 %v3732, %v3747
    %v3764 = vmul.f32 %v3734, %v3748
    %v3765 = vadd.f32 %v3761, %v3763
    %v3766 = vadd.f32 %v3762, %v3764
    %v3767 = vtanh.pop %v3765
    %v3768 = vtanh.pop %v3766
    %v3769 = vmul.f32 %v3758, %v3767
    %v3770 = vmul.f32 %v3760, %v3768
    %v3771 = vld [vmem:[#allocation2] sm:$0xc0]
    %v3772 = vld [vmem:[#allocation2 + $0x8] sm:$0xc0]
    %v3773 = vld [vmem:[#allocation2 + $0x10] sm:$0xc0]
    %v3774 = vld [vmem:[#allocation2 + $0x18] sm:$0xc0]
    %v3775 = vld [vmem:[#allocation2 + $0x20] sm:$0xc0]
    %v3776 = vld [vmem:[#allocation2 + $0x28] sm:$0xc0]
    %v3777 = vld [vmem:[#allocation2 + $0x30] sm:$0xc0]
    %v3778 = vld [vmem:[#allocation2 + $0x38] sm:$0xc0]
    %v3779 = vld [vmem:[#allocation2 + $0xc0] sm:$0x3]
    %v3780 = vld [vmem:[#allocation2 + $0xc8] sm:$0x3]
    %v3781 = vld [vmem:[#allocation2 + $0xd0] sm:$0x3]
    %v3782 = vld [vmem:[#allocation2 + $0xd8] sm:$0x3]
    %v3783 = vld [vmem:[#allocation2 + $0xe0] sm:$0x3]
    %v3784 = vld [vmem:[#allocation2 + $0xe8] sm:$0x3]
    %v3785 = vld [vmem:[#allocation2 + $0xf0] sm:$0x3]
    %v3786 = vld [vmem:[#allocation2 + $0xf8] sm:$0x3]
    %v3787 = vpack.c.bf16 %v3721, %v3721
    %v3788 = vpack.c.bf16 %v3722, %v3722
    %v3797 = vrot.slane %v3771, 6
    %v3798 = vrot.slane %v3772, 6
    %v3799 = vrot.slane %v3773, 6
    %v3800 = vrot.slane %v3774, 6
    %v3801 = vrot.slane %v3775, 6
    %v3802 = vrot.slane %v3776, 6
    %v3803 = vrot.slane %v3777, 6
    %v3804 = vrot.slane %v3778, 6
    %3813 = vmatprep.subr.bf16.mxu0 %v1444
    %3814 = vmatpush1.bf16.msra.mxu0 %v1443
    %3815 = vmatprep.subr.bf16.mxu0 %v1452
    %3816 = vmatpush1.bf16.msra.mxu0 %v1451
    %3817 = vmatprep.subr.bf16.mxu0 %v1460
    %3818 = vmatpush1.bf16.msra.mxu0 %v1459
    %3819 = vmatprep.subr.bf16.mxu0 %v1468
    %3820 = vmatpush1.bf16.msra.mxu0 %v1467
    %3821 = vmatprep.subr.bf16.mxu0 %v1476
    %3822 = vmatpush1.bf16.msra.mxu0 %v1475
    %3823 = vmatprep.subr.bf16.mxu0 %v1484
    %3824 = vmatpush1.bf16.msra.mxu0 %v1483
    %3825 = vmatprep.subr.bf16.mxu0 %v1492
    %3826 = vmatpush1.bf16.msra.mxu0 %v1491
    %3827 = vmatprep.subr.bf16.mxu0 %v1500
    %3828 = vmatpush1.bf16.msra.mxu0 %v1499
    %3829 = vmatprep.subr.bf16.mxu0 %v1508
    %3830 = vmatpush1.bf16.msra.mxu0 %v1507
    %3831 = vmatprep.subr.bf16.mxu0 %v1516
    %3832 = vmatpush1.bf16.msra.mxu0 %v1515
    %3833 = vmatprep.subr.bf16.mxu0 %v1524
    %3834 = vmatpush1.bf16.msra.mxu0 %v1523
    %3835 = vmatprep.subr.bf16.mxu0 %v1532
    %3836 = vmatpush1.bf16.msra.mxu0 %v1531
    %3837 = vmatprep.subr.bf16.mxu0 %v1540
    %3838 = vmatpush1.bf16.msra.mxu0 %v1539
    %3839 = vmatprep.subr.bf16.mxu0 %v1548
    %3840 = vmatpush1.bf16.msra.mxu0 %v1547
    %3841 = vmatprep.subr.bf16.mxu0 %v1556
    %3842 = vmatpush1.bf16.msra.mxu0 %v1555
    %3843 = vmatprep.subr.bf16.mxu0 %v1564
    %3844 = vmatpush1.bf16.msra.mxu0 %v1563
    %3845 = vmatprep.mubr.bf16.mxu0 %v3788
    %3846 = vmatmul.mubr.bf16.gmra.mrb[0].mxu0 %v3787
    %v3847 = vpop.f32.mrb[0].mxu0
    %v3848 = vadd.f32 %v3797, %v3847
    %v3849 = vpop.f32.mrb[0].mxu0
    %v3850 = vadd.f32 %v3798, %v3849
    %v3851 = vpop.f32.mrb[0].mxu0
    %v3852 = vpop.f32.mrb[0].mxu0
    %3853 = vdwg.mxu0
    %3854 = vmatprep.subr.bf16.mxu0 %v1446
    %3855 = vmatpush1.bf16.msra.mxu0 %v1445
    %3856 = vmatprep.subr.bf16.mxu0 %v1454
    %3857 = vmatpush1.bf16.msra.mxu0 %v1453
    %3858 = vmatprep.subr.bf16.mxu0 %v1462
    %3859 = vmatpush1.bf16.msra.mxu0 %v1461
    %3860 = vmatprep.subr.bf16.mxu0 %v1470
    %3861 = vmatpush1.bf16.msra.mxu0 %v1469
    %3862 = vmatprep.subr.bf16.mxu0 %v1478
    %3863 = vmatpush1.bf16.msra.mxu0 %v1477
    %3864 = vmatprep.subr.bf16.mxu0 %v1486
    %3865 = vmatpush1.bf16.msra.mxu0 %v1485
    %3866 = vmatprep.subr.bf16.mxu0 %v1494
    %3867 = vmatpush1.bf16.msra.mxu0 %v1493
    %3868 = vmatprep.subr.bf16.mxu0 %v1502
    %3869 = vmatpush1.bf16.msra.mxu0 %v1501
    %3870 = vmatprep.subr.bf16.mxu0 %v1510
    %3871 = vmatpush1.bf16.msra.mxu0 %v1509
    %3872 = vmatprep.subr.bf16.mxu0 %v1518
    %3873 = vmatpush1.bf16.msra.mxu0 %v1517
    %3874 = vmatprep.subr.bf16.mxu0 %v1526
    %3875 = vmatpush1.bf16.msra.mxu0 %v1525
    %3876 = vmatprep.subr.bf16.mxu0 %v1534
    %3877 = vmatpush1.bf16.msra.mxu0 %v1533
    %3878 = vmatprep.subr.bf16.mxu0 %v1542
    %3879 = vmatpush1.bf16.msra.mxu0 %v1541
    %3880 = vmatprep.subr.bf16.mxu0 %v1550
    %3881 = vmatpush1.bf16.msra.mxu0 %v1549
    %3882 = vmatprep.subr.bf16.mxu0 %v1558
    %3883 = vmatpush1.bf16.msra.mxu0 %v1557
    %3884 = vmatprep.subr.bf16.mxu0 %v1566
    %3885 = vmatpush1.bf16.msra.mxu0 %v1565
    %3886 = vmatprep.mubr.bf16.mxu0 %v3788
    %3887 = vmatmul.mubr.bf16.gmra.mrb[0].mxu0 %v3787
    %v3888 = vpop.f32.mrb[0].mxu0
    %v3889 = vadd.f32 %v3799, %v3888
    %v3890 = vpop.f32.mrb[0].mxu0
    %v3891 = vadd.f32 %v3800, %v3890
    %v3892 = vpop.f32.mrb[0].mxu0
    %v3893 = vpop.f32.mrb[0].mxu0
    %3894 = vdwg.mxu0
    %3895 = vmatprep.subr.bf16.mxu0 %v1448
    %3896 = vmatpush1.bf16.msra.mxu0 %v1447
    %3897 = vmatprep.subr.bf16.mxu0 %v1456
    %3898 = vmatpush1.bf16.msra.mxu0 %v1455
    %3899 = vmatprep.subr.bf16.mxu0 %v1464
    %3900 = vmatpush1.bf16.msra.mxu0 %v1463
    %3901 = vmatprep.subr.bf16.mxu0 %v1472
    %3902 = vmatpush1.bf16.msra.mxu0 %v1471
    %3903 = vmatprep.subr.bf16.mxu0 %v1480
    %3904 = vmatpush1.bf16.msra.mxu0 %v1479
    %3905 = vmatprep.subr.bf16.mxu0 %v1488
    %3906 = vmatpush1.bf16.msra.mxu0 %v1487
    %3907 = vmatprep.subr.bf16.mxu0 %v1496
    %3908 = vmatpush1.bf16.msra.mxu0 %v1495
    %3909 = vmatprep.subr.bf16.mxu0 %v1504
    %3910 = vmatpush1.bf16.msra.mxu0 %v1503
    %3911 = vmatprep.subr.bf16.mxu0 %v1512
    %3912 = vmatpush1.bf16.msra.mxu0 %v1511
    %3913 = vmatprep.subr.bf16.mxu0 %v1520
    %3914 = vmatpush1.bf16.msra.mxu0 %v1519
    %3915 = vmatprep.subr.bf16.mxu0 %v1528
    %3916 = vmatpush1.bf16.msra.mxu0 %v1527
    %3917 = vmatprep.subr.bf16.mxu0 %v1536
    %3918 = vmatpush1.bf16.msra.mxu0 %v1535
    %3919 = vmatprep.subr.bf16.mxu0 %v1544
    %3920 = vmatpush1.bf16.msra.mxu0 %v1543
    %3921 = vmatprep.subr.bf16.mxu0 %v1552
    %3922 = vmatpush1.bf16.msra.mxu0 %v1551
    %3923 = vmatprep.subr.bf16.mxu0 %v1560
    %3924 = vmatpush1.bf16.msra.mxu0 %v1559
    %3925 = vmatprep.subr.bf16.mxu0 %v1568
    %3926 = vmatpush1.bf16.msra.mxu0 %v1567
    %3927 = vmatprep.mubr.bf16.mxu0 %v3788
    %3928 = vmatmul.mubr.bf16.gmra.mrb[0].mxu0 %v3787
    %v3929 = vpop.f32.mrb[0].mxu0
    %v3930 = vadd.f32 %v3801, %v3929
    %v3931 = vpop.f32.mrb[0].mxu0
    %v3932 = vadd.f32 %v3802, %v3931
    %v3933 = vpop.f32.mrb[0].mxu0
    %v3934 = vpop.f32.mrb[0].mxu0
    %3935 = vdwg.mxu0
    %3936 = vmatprep.subr.bf16.mxu0 %v1450
    %3937 = vmatpush1.bf16.msra.mxu0 %v1449
    %3938 = vmatprep.subr.bf16.mxu0 %v1458
    %3939 = vmatpush1.bf16.msra.mxu0 %v1457
    %3940 = vmatprep.subr.bf16.mxu0 %v1466
    %3941 = vmatpush1.bf16.msra.mxu0 %v1465
    %3942 = vmatprep.subr.bf16.mxu0 %v1474
    %3943 = vmatpush1.bf16.msra.mxu0 %v1473
    %3944 = vmatprep.subr.bf16.mxu0 %v1482
    %3945 = vmatpush1.bf16.msra.mxu0 %v1481
    %3946 = vmatprep.subr.bf16.mxu0 %v1490
    %3947 = vmatpush1.bf16.msra.mxu0 %v1489
    %3948 = vmatprep.subr.bf16.mxu0 %v1498
    %3949 = vmatpush1.bf16.msra.mxu0 %v1497
    %3950 = vmatprep.subr.bf16.mxu0 %v1506
    %3951 = vmatpush1.bf16.msra.mxu0 %v1505
    %3952 = vmatprep.subr.bf16.mxu0 %v1514
    %3953 = vmatpush1.bf16.msra.mxu0 %v1513
    %3954 = vmatprep.subr.bf16.mxu0 %v1522
    %3955 = vmatpush1.bf16.msra.mxu0 %v1521
    %3956 = vmatprep.subr.bf16.mxu0 %v1530
    %3957 = vmatpush1.bf16.msra.mxu0 %v1529
    %3958 = vmatprep.subr.bf16.mxu0 %v1538
    %3959 = vmatpush1.bf16.msra.mxu0 %v1537
    %3960 = vmatprep.subr.bf16.mxu0 %v1546
    %3961 = vmatpush1.bf16.msra.mxu0 %v1545
    %3962 = vmatprep.subr.bf16.mxu0 %v1554
    %3963 = vmatpush1.bf16.msra.mxu0 %v1553
    %3964 = vmatprep.subr.bf16.mxu0 %v1562
    %3965 = vmatpush1.bf16.msra.mxu0 %v1561
    %3966 = vmatprep.subr.bf16.mxu0 %v1570
    %3967 = vmatpush1.bf16.msra.mxu0 %v1569
    %3968 = vmatprep.mubr.bf16.mxu0 %v3788
    %3969 = vmatmul.mubr.bf16.gmra.mrb[0].mxu0 %v3787
    %v3970 = vpop.f32.mrb[0].mxu0
    %v3971 = vadd.f32 %v3803, %v3970
    %v3972 = vpop.f32.mrb[0].mxu0
    %v3973 = vadd.f32 %v3804, %v3972
    %v3974 = vpop.f32.mrb[0].mxu0
    %v3975 = vpop.f32.mrb[0].mxu0
    %3976 = vdwg.mxu0
    %v3977 = vpack.c.bf16 %v3769, %v3769
    %v3978 = vpack.c.bf16 %v3770, %v3770
    %3979 = vmatprep.subr.bf16.mxu0 %v2248
    %3980 = vmatpush1.bf16.msra.mxu0 %v2247
    %3981 = vmatprep.subr.bf16.mxu0 %v2256
    %3982 = vmatpush1.bf16.msra.mxu0 %v2255
    %3983 = vmatprep.subr.bf16.mxu0 %v2264
    %3984 = vmatpush1.bf16.msra.mxu0 %v2263
    %3985 = vmatprep.subr.bf16.mxu0 %v2272
    %3986 = vmatpush1.bf16.msra.mxu0 %v2271
    %3987 = vmatprep.subr.bf16.mxu0 %v2280
    %3988 = vmatpush1.bf16.msra.mxu0 %v2279
    %3989 = vmatprep.subr.bf16.mxu0 %v2288
    %3990 = vmatpush1.bf16.msra.mxu0 %v2287
    %3991 = vmatprep.subr.bf16.mxu0 %v2296
    %3992 = vmatpush1.bf16.msra.mxu0 %v2295
    %3993 = vmatprep.subr.bf16.mxu0 %v2304
    %3994 = vmatpush1.bf16.msra.mxu0 %v2303
    %3995 = vmatprep.subr.bf16.mxu0 %v2312
    %3996 = vmatpush1.bf16.msra.mxu0 %v2311
    %3997 = vmatprep.subr.bf16.mxu0 %v2320
    %3998 = vmatpush1.bf16.msra.mxu0 %v2319
    %3999 = vmatprep.subr.bf16.mxu0 %v2328
    %4000 = vmatpush1.bf16.msra.mxu0 %v2327
    %4001 = vmatprep.subr.bf16.mxu0 %v2336
    %4002 = vmatpush1.bf16.msra.mxu0 %v2335
    %4003 = vmatprep.subr.bf16.mxu0 %v2344
    %4004 = vmatpush1.bf16.msra.mxu0 %v2343
    %4005 = vmatprep.subr.bf16.mxu0 %v2352
    %4006 = vmatpush1.bf16.msra.mxu0 %v2351
    %4007 = vmatprep.subr.bf16.mxu0 %v2360
    %4008 = vmatpush1.bf16.msra.mxu0 %v2359
    %4009 = vmatprep.subr.bf16.mxu0 %v2368
    %4010 = vmatpush1.bf16.msra.mxu0 %v2367
    %4011 = vmatprep.mubr.bf16.mxu0 %v3978
    %4012 = vmatmul.mubr.bf16.gmra.mrb[0].mxu0 %v3977
    %v4013 = vpop.f32.mrb[0].mxu0
    %v4014 = vadd.f32 %v3779, %v4013
    %v4015 = vpop.f32.mrb[0].mxu0
    %v4016 = vadd.f32 %v3780, %v4015
    %v4017 = vpop.f32.mrb[0].mxu0
    %v4018 = vpop.f32.mrb[0].mxu0
    %4019 = vdwg.mxu0
    %4020 = vmatprep.subr.bf16.mxu0 %v2250
    %4021 = vmatpush1.bf16.msra.mxu0 %v2249
    %4022 = vmatprep.subr.bf16.mxu0 %v2258
    %4023 = vmatpush1.bf16.msra.mxu0 %v2257
    %4024 = vmatprep.subr.bf16.mxu0 %v2266
    %4025 = vmatpush1.bf16.msra.mxu0 %v2265
    %4026 = vmatprep.subr.bf16.mxu0 %v2274
    %4027 = vmatpush1.bf16.msra.mxu0 %v2273
    %4028 = vmatprep.subr.bf16.mxu0 %v2282
    %4029 = vmatpush1.bf16.msra.mxu0 %v2281
    %4030 = vmatprep.subr.bf16.mxu0 %v2290
    %4031 = vmatpush1.bf16.msra.mxu0 %v2289
    %4032 = vmatprep.subr.bf16.mxu0 %v2298
    %4033 = vmatpush1.bf16.msra.mxu0 %v2297
    %4034 = vmatprep.subr.bf16.mxu0 %v2306
    %4035 = vmatpush1.bf16.msra.mxu0 %v2305
    %4036 = vmatprep.subr.bf16.mxu0 %v2314
    %4037 = vmatpush1.bf16.msra.mxu0 %v2313
    %4038 = vmatprep.subr.bf16.mxu0 %v2322
    %4039 = vmatpush1.bf16.msra.mxu0 %v2321
    %4040 = vmatprep.subr.bf16.mxu0 %v2330
    %4041 = vmatpush1.bf16.msra.mxu0 %v2329
    %4042 = vmatprep.subr.bf16.mxu0 %v2338
    %4043 = vmatpush1.bf16.msra.mxu0 %v2337
    %4044 = vmatprep.subr.bf16.mxu0 %v2346
    %4045 = vmatpush1.bf16.msra.mxu0 %v2345
    %4046 = vmatprep.subr.bf16.mxu0 %v2354
    %4047 = vmatpush1.bf16.msra.mxu0 %v2353
    %4048 = vmatprep.subr.bf16.mxu0 %v2362
    %4049 = vmatpush1.bf16.msra.mxu0 %v2361
    %4050 = vmatprep.subr.bf16.mxu0 %v2370
    %4051 = vmatpush1.bf16.msra.mxu0 %v2369
    %4052 = vmatprep.mubr.bf16.mxu0 %v3978
    %4053 = vmatmul.mubr.bf16.gmra.mrb[0].mxu0 %v3977
    %v4054 = vpop.f32.mrb[0].mxu0
    %v4055 = vadd.f32 %v3781, %v4054
    %v4056 = vpop.f32.mrb[0].mxu0
    %v4057 = vadd.f32 %v3782, %v4056
    %v4058 = vpop.f32.mrb[0].mxu0
    %v4059 = vpop.f32.mrb[0].mxu0
    %4060 = vdwg.mxu0
    %4061 = vmatprep.subr.bf16.mxu0 %v2252
    %4062 = vmatpush1.bf16.msra.mxu0 %v2251
    %4063 = vmatprep.subr.bf16.mxu0 %v2260
    %4064 = vmatpush1.bf16.msra.mxu0 %v2259
    %4065 = vmatprep.subr.bf16.mxu0 %v2268
    %4066 = vmatpush1.bf16.msra.mxu0 %v2267
    %4067 = vmatprep.subr.bf16.mxu0 %v2276
    %4068 = vmatpush1.bf16.msra.mxu0 %v2275
    %4069 = vmatprep.subr.bf16.mxu0 %v2284
    %4070 = vmatpush1.bf16.msra.mxu0 %v2283
    %4071 = vmatprep.subr.bf16.mxu0 %v2292
    %4072 = vmatpush1.bf16.msra.mxu0 %v2291
    %4073 = vmatprep.subr.bf16.mxu0 %v2300
    %4074 = vmatpush1.bf16.msra.mxu0 %v2299
    %4075 = vmatprep.subr.bf16.mxu0 %v2308
    %4076 = vmatpush1.bf16.msra.mxu0 %v2307
    %4077 = vmatprep.subr.bf16.mxu0 %v2316
    %4078 = vmatpush1.bf16.msra.mxu0 %v2315
    %4079 = vmatprep.subr.bf16.mxu0 %v2324
    %4080 = vmatpush1.bf16.msra.mxu0 %v2323
    %4081 = vmatprep.subr.bf16.mxu0 %v2332
    %4082 = vmatpush1.bf16.msra.mxu0 %v2331
    %4083 = vmatprep.subr.bf16.mxu0 %v2340
    %4084 = vmatpush1.bf16.msra.mxu0 %v2339
    %4085 = vmatprep.subr.bf16.mxu0 %v2348
    %4086 = vmatpush1.bf16.msra.mxu0 %v2347
    %4087 = vmatprep.subr.bf16.mxu0 %v2356
    %4088 = vmatpush1.bf16.msra.mxu0 %v2355
    %4089 = vmatprep.subr.bf16.mxu0 %v2364
    %4090 = vmatpush1.bf16.msra.mxu0 %v2363
    %4091 = vmatprep.subr.bf16.mxu0 %v2372
    %4092 = vmatpush1.bf16.msra.mxu0 %v2371
    %4093 = vmatprep.mubr.bf16.mxu0 %v3978
    %4094 = vmatmul.mubr.bf16.gmra.mrb[0].mxu0 %v3977
    %v4095 = vpop.f32.mrb[0].mxu0
    %v4096 = vadd.f32 %v3783, %v4095
    %v4097 = vpop.f32.mrb[0].mxu0
    %v4098 = vadd.f32 %v3784, %v4097
    %v4099 = vpop.f32.mrb[0].mxu0
    %v4100 = vpop.f32.mrb[0].mxu0
    %4101 = vdwg.mxu0
    %4102 = vmatprep.subr.bf16.mxu0 %v2254
    %4103 = vmatpush1.bf16.msra.mxu0 %v2253
    %4104 = vmatprep.subr.bf16.mxu0 %v2262
    %4105 = vmatpush1.bf16.msra.mxu0 %v2261
    %4106 = vmatprep.subr.bf16.mxu0 %v2270
    %4107 = vmatpush1.bf16.msra.mxu0 %v2269
    %4108 = vmatprep.subr.bf16.mxu0 %v2278
    %4109 = vmatpush1.bf16.msra.mxu0 %v2277
    %4110 = vmatprep.subr.bf16.mxu0 %v2286
    %4111 = vmatpush1.bf16.msra.mxu0 %v2285
    %4112 = vmatprep.subr.bf16.mxu0 %v2294
    %4113 = vmatpush1.bf16.msra.mxu0 %v2293
    %4114 = vmatprep.subr.bf16.mxu0 %v2302
    %4115 = vmatpush1.bf16.msra.mxu0 %v2301
    %4116 = vmatprep.subr.bf16.mxu0 %v2310
    %4117 = vmatpush1.bf16.msra.mxu0 %v2309
    %4118 = vmatprep.subr.bf16.mxu0 %v2318
    %4119 = vmatpush1.bf16.msra.mxu0 %v2317
    %4120 = vmatprep.subr.bf16.mxu0 %v2326
    %4121 = vmatpush1.bf16.msra.mxu0 %v2325
    %4122 = vmatprep.subr.bf16.mxu0 %v2334
    %4123 = vmatpush1.bf16.msra.mxu0 %v2333
    %4124 = vmatprep.subr.bf16.mxu0 %v2342
    %4125 = vmatpush1.bf16.msra.mxu0 %v2341
    %4126 = vmatprep.subr.bf16.mxu0 %v2350
    %4127 = vmatpush1.bf16.msra.mxu0 %v2349
    %4128 = vmatprep.subr.bf16.mxu0 %v2358
    %4129 = vmatpush1.bf16.msra.mxu0 %v2357
    %4130 = vmatprep.subr.bf16.mxu0 %v2366
    %4131 = vmatpush1.bf16.msra.mxu0 %v2365
    %4132 = vmatprep.subr.bf16.mxu0 %v2374
    %4133 = vmatpush1.bf16.msra.mxu0 %v2373
    %4134 = vmatprep.mubr.bf16.mxu0 %v3978
    %4135 = vmatmul.mubr.bf16.gmra.mrb[0].mxu0 %v3977
    %v4136 = vpop.f32.mrb[0].mxu0
    %v4137 = vadd.f32 %v3785, %v4136
    %v4138 = vpop.f32.mrb[0].mxu0
    %v4139 = vadd.f32 %v3786, %v4138
    %v4140 = vpop.f32.mrb[0].mxu0
    %v4141 = vpop.f32.mrb[0].mxu0
    %4142 = vdwg.mxu0
    %v4143 = vxor.u32 %v3848, 2147483648
    %v4144 = vxor.u32 %v3850, 2147483648
    %v4145 = vmul.f32 %v4143, 1.442695
    %v4146 = vpow.pop %v4145
    %v4147 = vmul.f32 %v4144, 1.442695
    %v4148 = vpow.pop %v4147
    %v4149 = vadd.f32 %v4146, 1.0
    %v4150 = vadd.f32 %v4148, 1.0
    %v4151 = vrcp.pop %v4149
    %v4152 = vmul.f32 1.0, %v4151
    %v4153 = vrcp.pop %v4150
    %v4154 = vmul.f32 1.0, %v4153
    %v4155 = vxor.u32 %v3889, 2147483648
    %v4156 = vxor.u32 %v3891, 2147483648
    %v4157 = vmul.f32 %v4155, 1.442695
    %v4158 = vpow.pop %v4157
    %v4159 = vmul.f32 %v4156, 1.442695
    %v4160 = vpow.pop %v4159
    %v4161 = vadd.f32 %v4158, 1.0
    %v4162 = vadd.f32 %v4160, 1.0
    %v4163 = vrcp.pop %v4161
    %v4164 = vmul.f32 1.0, %v4163
    %v4165 = vrcp.pop %v4162
    %v4166 = vmul.f32 1.0, %v4165
    %v4167 = vtanh.pop %v3930
    %v4168 = vtanh.pop %v3932
    %v4169 = vxor.u32 %v3971, 2147483648
    %v4170 = vxor.u32 %v3973, 2147483648
    %v4171 = vmul.f32 %v4169, 1.442695
    %v4172 = vpow.pop %v4171
    %v4173 = vmul.f32 %v4170, 1.442695
    %v4174 = vpow.pop %v4173
    %v4175 = vadd.f32 %v4172, 1.0
    %v4176 = vadd.f32 %v4174, 1.0
    %v4177 = vrcp.pop %v4175
    %v4178 = vmul.f32 1.0, %v4177
    %v4179 = vrcp.pop %v4176
    %v4180 = vmul.f32 1.0, %v4179
    %v4181 = vmul.f32 %v4164, %v3717
    %v4182 = vmul.f32 %v4166, %v3718
    %v4183 = vmul.f32 %v4152, %v4167
    %v4184 = vmul.f32 %v4154, %v4168
    %v4185 = vadd.f32 %v4181, %v4183
    %v4186 = vadd.f32 %v4182, %v4184
    %v4187 = vtanh.pop %v4185
    %v4188 = vtanh.pop %v4186
    %v4189 = vmul.f32 %v4178, %v4187
    %v4190 = vmul.f32 %v4180, %v4188
    %v4191 = vxor.u32 %v4014, 2147483648
    %v4192 = vxor.u32 %v4016, 2147483648
    %v4193 = vmul.f32 %v4191, 1.442695
    %v4194 = vpow.pop %v4193
    %v4195 = vmul.f32 %v4192, 1.442695
    %v4196 = vpow.pop %v4195
    %v4197 = vadd.f32 %v4194, 1.0
    %v4198 = vadd.f32 %v4196, 1.0
    %v4199 = vrcp.pop %v4197
    %v4200 = vmul.f32 1.0, %v4199
    %v4201 = vrcp.pop %v4198
    %v4202 = vmul.f32 1.0, %v4201
    %v4203 = vxor.u32 %v4055, 2147483648
    %v4204 = vxor.u32 %v4057, 2147483648
    %v4205 = vmul.f32 %v4203, 1.442695
    %v4206 = vpow.pop %v4205
    %v4207 = vmul.f32 %v4204, 1.442695
    %v4208 = vpow.pop %v4207
    %v4209 = vadd.f32 %v4206, 1.0
    %v4210 = vadd.f32 %v4208, 1.0
    %v4211 = vrcp.pop %v4209
    %v4212 = vmul.f32 1.0, %v4211
    %v4213 = vrcp.pop %v4210
    %v4214 = vmul.f32 1.0, %v4213
    %v4215 = vtanh.pop %v4096
    %v4216 = vtanh.pop %v4098
    %v4217 = vxor.u32 %v4137, 2147483648
    %v4218 = vxor.u32 %v4139, 2147483648
    %v4219 = vmul.f32 %v4217, 1.442695
    %v4220 = vpow.pop %v4219
    %v4221 = vmul.f32 %v4218, 1.442695
    %v4222 = vpow.pop %v4221
    %v4223 = vadd.f32 %v4220, 1.0
    %v4224 = vadd.f32 %v4222, 1.0
    %v4225 = vrcp.pop %v4223
    %v4226 = vmul.f32 1.0, %v4225
    %v4227 = vrcp.pop %v4224
    %v4228 = vmul.f32 1.0, %v4227
    %v4229 = vmul.f32 %v4212, %v3765
    %v4230 = vmul.f32 %v4214, %v3766
    %v4231 = vmul.f32 %v4200, %v4215
    %v4232 = vmul.f32 %v4202, %v4216
    %v4233 = vadd.f32 %v4229, %v4231
    %v4234 = vadd.f32 %v4230, %v4232
    %v4235 = vtanh.pop %v4233
    %v4236 = vtanh.pop %v4234
    %v4237 = vmul.f32 %v4226, %v4235
    %v4238 = vmul.f32 %v4228, %v4236
    %v4239 = vld [vmem:[#allocation2 + $0x80] sm:$0x3]
    %v4240 = vld [vmem:[#allocation2 + $0x88] sm:$0x3]
    %v4241 = vld [vmem:[#allocation2 + $0x90] sm:$0x3]
    %v4242 = vld [vmem:[#allocation2 + $0x98] sm:$0x3]
    %v4243 = vld [vmem:[#allocation2 + $0xa0] sm:$0x3]
    %v4244 = vld [vmem:[#allocation2 + $0xa8] sm:$0x3]
    %v4245 = vld [vmem:[#allocation2 + $0xb0] sm:$0x3]
    %v4246 = vld [vmem:[#allocation2 + $0xb8] sm:$0x3]
    %v4247 = vld [vmem:[#allocation2 + $0x40] sm:$0xc0]
    %v4248 = vld [vmem:[#allocation2 + $0x48] sm:$0xc0]
    %v4249 = vld [vmem:[#allocation2 + $0x50] sm:$0xc0]
    %v4250 = vld [vmem:[#allocation2 + $0x58] sm:$0xc0]
    %v4251 = vld [vmem:[#allocation2 + $0x60] sm:$0xc0]
    %v4252 = vld [vmem:[#allocation2 + $0x68] sm:$0xc0]
    %v4253 = vld [vmem:[#allocation2 + $0x70] sm:$0xc0]
    %v4254 = vld [vmem:[#allocation2 + $0x78] sm:$0xc0]
    %v4255 = vpack.c.bf16 %v4189, %v4189
    %v4256 = vpack.c.bf16 %v4190, %v4190
    %4257 = vmatprep.subr.bf16.mxu0 %v1444
    %4258 = vmatpush1.bf16.msra.mxu0 %v1443
    %4259 = vmatprep.subr.bf16.mxu0 %v1452
    %4260 = vmatpush1.bf16.msra.mxu0 %v1451
    %4261 = vmatprep.subr.bf16.mxu0 %v1460
    %4262 = vmatpush1.bf16.msra.mxu0 %v1459
    %4263 = vmatprep.subr.bf16.mxu0 %v1468
    %4264 = vmatpush1.bf16.msra.mxu0 %v1467
    %4265 = vmatprep.subr.bf16.mxu0 %v1476
    %4266 = vmatpush1.bf16.msra.mxu0 %v1475
    %4267 = vmatprep.subr.bf16.mxu0 %v1484
    %4268 = vmatpush1.bf16.msra.mxu0 %v1483
    %4269 = vmatprep.subr.bf16.mxu0 %v1492
    %4270 = vmatpush1.bf16.msra.mxu0 %v1491
    %4271 = vmatprep.subr.bf16.mxu0 %v1500
    %4272 = vmatpush1.bf16.msra.mxu0 %v1499
    %4273 = vmatprep.subr.bf16.mxu0 %v1508
    %4274 = vmatpush1.bf16.msra.mxu0 %v1507
    %4275 = vmatprep.subr.bf16.mxu0 %v1516
    %4276 = vmatpush1.bf16.msra.mxu0 %v1515
    %4277 = vmatprep.subr.bf16.mxu0 %v1524
    %4278 = vmatpush1.bf16.msra.mxu0 %v1523
    %4279 = vmatprep.subr.bf16.mxu0 %v1532
    %4280 = vmatpush1.bf16.msra.mxu0 %v1531
    %4281 = vmatprep.subr.bf16.mxu0 %v1540
    %4282 = vmatpush1.bf16.msra.mxu0 %v1539
    %4283 = vmatprep.subr.bf16.mxu0 %v1548
    %4284 = vmatpush1.bf16.msra.mxu0 %v1547
    %4285 = vmatprep.subr.bf16.mxu0 %v1556
    %4286 = vmatpush1.bf16.msra.mxu0 %v1555
    %4287 = vmatprep.subr.bf16.mxu0 %v1564
    %4288 = vmatpush1.bf16.msra.mxu0 %v1563
    %4289 = vmatprep.mubr.bf16.mxu0 %v4256
    %4290 = vmatmul.mubr.bf16.gmra.mrb[0].mxu0 %v4255
    %v4291 = vpop.f32.mrb[0].mxu0
    %v4292 = vadd.f32 %v4239, %v4291
    %v4293 = vpop.f32.mrb[0].mxu0
    %v4294 = vadd.f32 %v4240, %v4293
    %v4295 = vpop.f32.mrb[0].mxu0
    %v4296 = vpop.f32.mrb[0].mxu0
    %4297 = vdwg.mxu0
    %4298 = vmatprep.subr.bf16.mxu0 %v1446
    %4299 = vmatpush1.bf16.msra.mxu0 %v1445
    %4300 = vmatprep.subr.bf16.mxu0 %v1454
    %4301 = vmatpush1.bf16.msra.mxu0 %v1453
    %4302 = vmatprep.subr.bf16.mxu0 %v1462
    %4303 = vmatpush1.bf16.msra.mxu0 %v1461
    %4304 = vmatprep.subr.bf16.mxu0 %v1470
    %4305 = vmatpush1.bf16.msra.mxu0 %v1469
    %4306 = vmatprep.subr.bf16.mxu0 %v1478
    %4307 = vmatpush1.bf16.msra.mxu0 %v1477
    %4308 = vmatprep.subr.bf16.mxu0 %v1486
    %4309 = vmatpush1.bf16.msra.mxu0 %v1485
    %4310 = vmatprep.subr.bf16.mxu0 %v1494
    %4311 = vmatpush1.bf16.msra.mxu0 %v1493
    %4312 = vmatprep.subr.bf16.mxu0 %v1502
    %4313 = vmatpush1.bf16.msra.mxu0 %v1501
    %4314 = vmatprep.subr.bf16.mxu0 %v1510
    %4315 = vmatpush1.bf16.msra.mxu0 %v1509
    %4316 = vmatprep.subr.bf16.mxu0 %v1518
    %4317 = vmatpush1.bf16.msra.mxu0 %v1517
    %4318 = vmatprep.subr.bf16.mxu0 %v1526
    %4319 = vmatpush1.bf16.msra.mxu0 %v1525
    %4320 = vmatprep.subr.bf16.mxu0 %v1534
    %4321 = vmatpush1.bf16.msra.mxu0 %v1533
    %4322 = vmatprep.subr.bf16.mxu0 %v1542
    %4323 = vmatpush1.bf16.msra.mxu0 %v1541
    %4324 = vmatprep.subr.bf16.mxu0 %v1550
    %4325 = vmatpush1.bf16.msra.mxu0 %v1549
    %4326 = vmatprep.subr.bf16.mxu0 %v1558
    %4327 = vmatpush1.bf16.msra.mxu0 %v1557
    %4328 = vmatprep.subr.bf16.mxu0 %v1566
    %4329 = vmatpush1.bf16.msra.mxu0 %v1565
    %4330 = vmatprep.mubr.bf16.mxu0 %v4256
    %4331 = vmatmul.mubr.bf16.gmra.mrb[0].mxu0 %v4255
    %v4332 = vpop.f32.mrb[0].mxu0
    %v4333 = vadd.f32 %v4241, %v4332
    %v4334 = vpop.f32.mrb[0].mxu0
    %v4335 = vadd.f32 %v4242, %v4334
    %v4336 = vpop.f32.mrb[0].mxu0
    %v4337 = vpop.f32.mrb[0].mxu0
    %4338 = vdwg.mxu0
    %4339 = vmatprep.subr.bf16.mxu0 %v1448
    %4340 = vmatpush1.bf16.msra.mxu0 %v1447
    %4341 = vmatprep.subr.bf16.mxu0 %v1456
    %4342 = vmatpush1.bf16.msra.mxu0 %v1455
    %4343 = vmatprep.subr.bf16.mxu0 %v1464
    %4344 = vmatpush1.bf16.msra.mxu0 %v1463
    %4345 = vmatprep.subr.bf16.mxu0 %v1472
    %4346 = vmatpush1.bf16.msra.mxu0 %v1471
    %4347 = vmatprep.subr.bf16.mxu0 %v1480
    %4348 = vmatpush1.bf16.msra.mxu0 %v1479
    %4349 = vmatprep.subr.bf16.mxu0 %v1488
    %4350 = vmatpush1.bf16.msra.mxu0 %v1487
    %4351 = vmatprep.subr.bf16.mxu0 %v1496
    %4352 = vmatpush1.bf16.msra.mxu0 %v1495
    %4353 = vmatprep.subr.bf16.mxu0 %v1504
    %4354 = vmatpush1.bf16.msra.mxu0 %v1503
    %4355 = vmatprep.subr.bf16.mxu0 %v1512
    %4356 = vmatpush1.bf16.msra.mxu0 %v1511
    %4357 = vmatprep.subr.bf16.mxu0 %v1520
    %4358 = vmatpush1.bf16.msra.mxu0 %v1519
    %4359 = vmatprep.subr.bf16.mxu0 %v1528
    %4360 = vmatpush1.bf16.msra.mxu0 %v1527
    %4361 = vmatprep.subr.bf16.mxu0 %v1536
    %4362 = vmatpush1.bf16.msra.mxu0 %v1535
    %4363 = vmatprep.subr.bf16.mxu0 %v1544
    %4364 = vmatpush1.bf16.msra.mxu0 %v1543
    %4365 = vmatprep.subr.bf16.mxu0 %v1552
    %4366 = vmatpush1.bf16.msra.mxu0 %v1551
    %4367 = vmatprep.subr.bf16.mxu0 %v1560
    %4368 = vmatpush1.bf16.msra.mxu0 %v1559
    %4369 = vmatprep.subr.bf16.mxu0 %v1568
    %4370 = vmatpush1.bf16.msra.mxu0 %v1567
    %4371 = vmatprep.mubr.bf16.mxu0 %v4256
    %4372 = vmatmul.mubr.bf16.gmra.mrb[0].mxu0 %v4255
    %v4373 = vpop.f32.mrb[0].mxu0
    %v4374 = vadd.f32 %v4243, %v4373
    %v4375 = vpop.f32.mrb[0].mxu0
    %v4376 = vadd.f32 %v4244, %v4375
    %v4377 = vpop.f32.mrb[0].mxu0
    %v4378 = vpop.f32.mrb[0].mxu0
    %4379 = vdwg.mxu0
    %4380 = vmatprep.subr.bf16.mxu0 %v1450
    %4381 = vmatpush1.bf16.msra.mxu0 %v1449
    %4382 = vmatprep.subr.bf16.mxu0 %v1458
    %4383 = vmatpush1.bf16.msra.mxu0 %v1457
    %4384 = vmatprep.subr.bf16.mxu0 %v1466
    %4385 = vmatpush1.bf16.msra.mxu0 %v1465
    %4386 = vmatprep.subr.bf16.mxu0 %v1474
    %4387 = vmatpush1.bf16.msra.mxu0 %v1473
    %4388 = vmatprep.subr.bf16.mxu0 %v1482
    %4389 = vmatpush1.bf16.msra.mxu0 %v1481
    %4390 = vmatprep.subr.bf16.mxu0 %v1490
    %4391 = vmatpush1.bf16.msra.mxu0 %v1489
    %4392 = vmatprep.subr.bf16.mxu0 %v1498
    %4393 = vmatpush1.bf16.msra.mxu0 %v1497
    %4394 = vmatprep.subr.bf16.mxu0 %v1506
    %4395 = vmatpush1.bf16.msra.mxu0 %v1505
    %4396 = vmatprep.subr.bf16.mxu0 %v1514
    %4397 = vmatpush1.bf16.msra.mxu0 %v1513
    %4398 = vmatprep.subr.bf16.mxu0 %v1522
    %4399 = vmatpush1.bf16.msra.mxu0 %v1521
    %4400 = vmatprep.subr.bf16.mxu0 %v1530
    %4401 = vmatpush1.bf16.msra.mxu0 %v1529
    %4402 = vmatprep.subr.bf16.mxu0 %v1538
    %4403 = vmatpush1.bf16.msra.mxu0 %v1537
    %4404 = vmatprep.subr.bf16.mxu0 %v1546
    %4405 = vmatpush1.bf16.msra.mxu0 %v1545
    %4406 = vmatprep.subr.bf16.mxu0 %v1554
    %4407 = vmatpush1.bf16.msra.mxu0 %v1553
    %4408 = vmatprep.subr.bf16.mxu0 %v1562
    %4409 = vmatpush1.bf16.msra.mxu0 %v1561
    %4410 = vmatprep.subr.bf16.mxu0 %v1570
    %4411 = vmatpush1.bf16.msra.mxu0 %v1569
    %4412 = vmatprep.mubr.bf16.mxu0 %v4256
    %4413 = vmatmul.mubr.bf16.gmra.mrb[0].mxu0 %v4255
    %v4414 = vpop.f32.mrb[0].mxu0
    %v4415 = vadd.f32 %v4245, %v4414
    %v4416 = vpop.f32.mrb[0].mxu0
    %v4417 = vadd.f32 %v4246, %v4416
    %v4418 = vpop.f32.mrb[0].mxu0
    %v4419 = vpop.f32.mrb[0].mxu0
    %4420 = vdwg.mxu0
    %v4421 = vpack.c.bf16 %v4237, %v4237
    %v4422 = vpack.c.bf16 %v4238, %v4238
    %v4431 = vrot.slane %v4247, 6
    %v4432 = vrot.slane %v4248, 6
    %v4433 = vrot.slane %v4249, 6
    %v4434 = vrot.slane %v4250, 6
    %v4435 = vrot.slane %v4251, 6
    %v4436 = vrot.slane %v4252, 6
    %v4437 = vrot.slane %v4253, 6
    %v4438 = vrot.slane %v4254, 6
    %4447 = vmatprep.subr.bf16.mxu0 %v2248
    %4448 = vmatpush1.bf16.msra.mxu0 %v2247
    %4449 = vmatprep.subr.bf16.mxu0 %v2256
    %4450 = vmatpush1.bf16.msra.mxu0 %v2255
    %4451 = vmatprep.subr.bf16.mxu0 %v2264
    %4452 = vmatpush1.bf16.msra.mxu0 %v2263
    %4453 = vmatprep.subr.bf16.mxu0 %v2272
    %4454 = vmatpush1.bf16.msra.mxu0 %v2271
    %4455 = vmatprep.subr.bf16.mxu0 %v2280
    %4456 = vmatpush1.bf16.msra.mxu0 %v2279
    %4457 = vmatprep.subr.bf16.mxu0 %v2288
    %4458 = vmatpush1.bf16.msra.mxu0 %v2287
    %4459 = vmatprep.subr.bf16.mxu0 %v2296
    %4460 = vmatpush1.bf16.msra.mxu0 %v2295
    %4461 = vmatprep.subr.bf16.mxu0 %v2304
    %4462 = vmatpush1.bf16.msra.mxu0 %v2303
    %4463 = vmatprep.subr.bf16.mxu0 %v2312
    %4464 = vmatpush1.bf16.msra.mxu0 %v2311
    %4465 = vmatprep.subr.bf16.mxu0 %v2320
    %4466 = vmatpush1.bf16.msra.mxu0 %v2319
    %4467 = vmatprep.subr.bf16.mxu0 %v2328
    %4468 = vmatpush1.bf16.msra.mxu0 %v2327
    %4469 = vmatprep.subr.bf16.mxu0 %v2336
    %4470 = vmatpush1.bf16.msra.mxu0 %v2335
    %4471 = vmatprep.subr.bf16.mxu0 %v2344
    %4472 = vmatpush1.bf16.msra.mxu0 %v2343
    %4473 = vmatprep.subr.bf16.mxu0 %v2352
    %4474 = vmatpush1.bf16.msra.mxu0 %v2351
    %4475 = vmatprep.subr.bf16.mxu0 %v2360
    %4476 = vmatpush1.bf16.msra.mxu0 %v2359
    %4477 = vmatprep.subr.bf16.mxu0 %v2368
    %4478 = vmatpush1.bf16.msra.mxu0 %v2367
    %4479 = vmatprep.mubr.bf16.mxu0 %v4422
    %4480 = vmatmul.mubr.bf16.gmra.mrb[0].mxu0 %v4421
    %v4481 = vpop.f32.mrb[0].mxu0
    %v4482 = vadd.f32 %v4431, %v4481
    %v4483 = vpop.f32.mrb[0].mxu0
    %v4484 = vadd.f32 %v4432, %v4483
    %v4485 = vpop.f32.mrb[0].mxu0
    %v4486 = vpop.f32.mrb[0].mxu0
    %4487 = vdwg.mxu0
    %4488 = vmatprep.subr.bf16.mxu0 %v2250
    %4489 = vmatpush1.bf16.msra.mxu0 %v2249
    %4490 = vmatprep.subr.bf16.mxu0 %v2258
    %4491 = vmatpush1.bf16.msra.mxu0 %v2257
    %4492 = vmatprep.subr.bf16.mxu0 %v2266
    %4493 = vmatpush1.bf16.msra.mxu0 %v2265
    %4494 = vmatprep.subr.bf16.mxu0 %v2274
    %4495 = vmatpush1.bf16.msra.mxu0 %v2273
    %4496 = vmatprep.subr.bf16.mxu0 %v2282
    %4497 = vmatpush1.bf16.msra.mxu0 %v2281
    %4498 = vmatprep.subr.bf16.mxu0 %v2290
    %4499 = vmatpush1.bf16.msra.mxu0 %v2289
    %4500 = vmatprep.subr.bf16.mxu0 %v2298
    %4501 = vmatpush1.bf16.msra.mxu0 %v2297
    %4502 = vmatprep.subr.bf16.mxu0 %v2306
    %4503 = vmatpush1.bf16.msra.mxu0 %v2305
    %4504 = vmatprep.subr.bf16.mxu0 %v2314
    %4505 = vmatpush1.bf16.msra.mxu0 %v2313
    %4506 = vmatprep.subr.bf16.mxu0 %v2322
    %4507 = vmatpush1.bf16.msra.mxu0 %v2321
    %4508 = vmatprep.subr.bf16.mxu0 %v2330
    %4509 = vmatpush1.bf16.msra.mxu0 %v2329
    %4510 = vmatprep.subr.bf16.mxu0 %v2338
    %4511 = vmatpush1.bf16.msra.mxu0 %v2337
    %4512 = vmatprep.subr.bf16.mxu0 %v2346
    %4513 = vmatpush1.bf16.msra.mxu0 %v2345
    %4514 = vmatprep.subr.bf16.mxu0 %v2354
    %4515 = vmatpush1.bf16.msra.mxu0 %v2353
    %4516 = vmatprep.subr.bf16.mxu0 %v2362
    %4517 = vmatpush1.bf16.msra.mxu0 %v2361
    %4518 = vmatprep.subr.bf16.mxu0 %v2370
    %4519 = vmatpush1.bf16.msra.mxu0 %v2369
    %4520 = vmatprep.mubr.bf16.mxu0 %v4422
    %4521 = vmatmul.mubr.bf16.gmra.mrb[0].mxu0 %v4421
    %v4522 = vpop.f32.mrb[0].mxu0
    %v4523 = vadd.f32 %v4433, %v4522
    %v4524 = vpop.f32.mrb[0].mxu0
    %v4525 = vadd.f32 %v4434, %v4524
    %v4526 = vpop.f32.mrb[0].mxu0
    %v4527 = vpop.f32.mrb[0].mxu0
    %4528 = vdwg.mxu0
    %4529 = vmatprep.subr.bf16.mxu0 %v2252
    %4530 = vmatpush1.bf16.msra.mxu0 %v2251
    %4531 = vmatprep.subr.bf16.mxu0 %v2260
    %4532 = vmatpush1.bf16.msra.mxu0 %v2259
    %4533 = vmatprep.subr.bf16.mxu0 %v2268
    %4534 = vmatpush1.bf16.msra.mxu0 %v2267
    %4535 = vmatprep.subr.bf16.mxu0 %v2276
    %4536 = vmatpush1.bf16.msra.mxu0 %v2275
    %4537 = vmatprep.subr.bf16.mxu0 %v2284
    %4538 = vmatpush1.bf16.msra.mxu0 %v2283
    %4539 = vmatprep.subr.bf16.mxu0 %v2292
    %4540 = vmatpush1.bf16.msra.mxu0 %v2291
    %4541 = vmatprep.subr.bf16.mxu0 %v2300
    %4542 = vmatpush1.bf16.msra.mxu0 %v2299
    %4543 = vmatprep.subr.bf16.mxu0 %v2308
    %4544 = vmatpush1.bf16.msra.mxu0 %v2307
    %4545 = vmatprep.subr.bf16.mxu0 %v2316
    %4546 = vmatpush1.bf16.msra.mxu0 %v2315
    %4547 = vmatprep.subr.bf16.mxu0 %v2324
    %4548 = vmatpush1.bf16.msra.mxu0 %v2323
    %4549 = vmatprep.subr.bf16.mxu0 %v2332
    %4550 = vmatpush1.bf16.msra.mxu0 %v2331
    %4551 = vmatprep.subr.bf16.mxu0 %v2340
    %4552 = vmatpush1.bf16.msra.mxu0 %v2339
    %4553 = vmatprep.subr.bf16.mxu0 %v2348
    %4554 = vmatpush1.bf16.msra.mxu0 %v2347
    %4555 = vmatprep.subr.bf16.mxu0 %v2356
    %4556 = vmatpush1.bf16.msra.mxu0 %v2355
    %4557 = vmatprep.subr.bf16.mxu0 %v2364
    %4558 = vmatpush1.bf16.msra.mxu0 %v2363
    %4559 = vmatprep.subr.bf16.mxu0 %v2372
    %4560 = vmatpush1.bf16.msra.mxu0 %v2371
    %4561 = vmatprep.mubr.bf16.mxu0 %v4422
    %4562 = vmatmul.mubr.bf16.gmra.mrb[0].mxu0 %v4421
    %v4563 = vpop.f32.mrb[0].mxu0
    %v4564 = vadd.f32 %v4435, %v4563
    %v4565 = vpop.f32.mrb[0].mxu0
    %v4566 = vadd.f32 %v4436, %v4565
    %v4567 = vpop.f32.mrb[0].mxu0
    %v4568 = vpop.f32.mrb[0].mxu0
    %4569 = vdwg.mxu0
    %4570 = vmatprep.subr.bf16.mxu0 %v2254
    %4571 = vmatpush1.bf16.msra.mxu0 %v2253
    %4572 = vmatprep.subr.bf16.mxu0 %v2262
    %4573 = vmatpush1.bf16.msra.mxu0 %v2261
    %4574 = vmatprep.subr.bf16.mxu0 %v2270
    %4575 = vmatpush1.bf16.msra.mxu0 %v2269
    %4576 = vmatprep.subr.bf16.mxu0 %v2278
    %4577 = vmatpush1.bf16.msra.mxu0 %v2277
    %4578 = vmatprep.subr.bf16.mxu0 %v2286
    %4579 = vmatpush1.bf16.msra.mxu0 %v2285
    %4580 = vmatprep.subr.bf16.mxu0 %v2294
    %4581 = vmatpush1.bf16.msra.mxu0 %v2293
    %4582 = vmatprep.subr.bf16.mxu0 %v2302
    %4583 = vmatpush1.bf16.msra.mxu0 %v2301
    %4584 = vmatprep.subr.bf16.mxu0 %v2310
    %4585 = vmatpush1.bf16.msra.mxu0 %v2309
    %4586 = vmatprep.subr.bf16.mxu0 %v2318
    %4587 = vmatpush1.bf16.msra.mxu0 %v2317
    %4588 = vmatprep.subr.bf16.mxu0 %v2326
    %4589 = vmatpush1.bf16.msra.mxu0 %v2325
    %4590 = vmatprep.subr.bf16.mxu0 %v2334
    %4591 = vmatpush1.bf16.msra.mxu0 %v2333
    %4592 = vmatprep.subr.bf16.mxu0 %v2342
    %4593 = vmatpush1.bf16.msra.mxu0 %v2341
    %4594 = vmatprep.subr.bf16.mxu0 %v2350
    %4595 = vmatpush1.bf16.msra.mxu0 %v2349
    %4596 = vmatprep.subr.bf16.mxu0 %v2358
    %4597 = vmatpush1.bf16.msra.mxu0 %v2357
    %4598 = vmatprep.subr.bf16.mxu0 %v2366
    %4599 = vmatpush1.bf16.msra.mxu0 %v2365
    %4600 = vmatprep.subr.bf16.mxu0 %v2374
    %4601 = vmatpush1.bf16.msra.mxu0 %v2373
    %4602 = vmatprep.mubr.bf16.mxu0 %v4422
    %4603 = vmatmul.mubr.bf16.gmra.mrb[0].mxu0 %v4421
    %v4604 = vpop.f32.mrb[0].mxu0
    %v4605 = vadd.f32 %v4437, %v4604
    %v4606 = vpop.f32.mrb[0].mxu0
    %v4607 = vadd.f32 %v4438, %v4606
    %v4608 = vpop.f32.mrb[0].mxu0
    %v4609 = vpop.f32.mrb[0].mxu0
    %4610 = vdwg.mxu0
    %v4611 = vxor.u32 %v4292, 2147483648
    %v4612 = vxor.u32 %v4294, 2147483648
    %v4613 = vmul.f32 %v4611, 1.442695
    %v4614 = vpow.pop %v4613
    %v4615 = vmul.f32 %v4612, 1.442695
    %v4616 = vpow.pop %v4615
    %v4617 = vadd.f32 %v4614, 1.0
    %v4618 = vadd.f32 %v4616, 1.0
    %v4619 = vrcp.pop %v4617
    %v4620 = vmul.f32 1.0, %v4619
    %v4621 = vrcp.pop %v4618
    %v4622 = vmul.f32 1.0, %v4621
    %v4623 = vxor.u32 %v4333, 2147483648
    %v4624 = vxor.u32 %v4335, 2147483648
    %v4625 = vmul.f32 %v4623, 1.442695
    %v4626 = vpow.pop %v4625
    %v4627 = vmul.f32 %v4624, 1.442695
    %v4628 = vpow.pop %v4627
    %v4629 = vadd.f32 %v4626, 1.0
    %v4630 = vadd.f32 %v4628, 1.0
    %v4631 = vrcp.pop %v4629
    %v4632 = vmul.f32 1.0, %v4631
    %v4633 = vrcp.pop %v4630
    %v4634 = vmul.f32 1.0, %v4633
    %v4635 = vtanh.pop %v4374
    %v4636 = vtanh.pop %v4376
    %v4637 = vxor.u32 %v4415, 2147483648
    %v4638 = vxor.u32 %v4417, 2147483648
    %v4639 = vmul.f32 %v4637, 1.442695
    %v4640 = vpow.pop %v4639
    %v4641 = vmul.f32 %v4638, 1.442695
    %v4642 = vpow.pop %v4641
    %v4643 = vadd.f32 %v4640, 1.0
    %v4644 = vadd.f32 %v4642, 1.0
    %v4645 = vrcp.pop %v4643
    %v4646 = vmul.f32 1.0, %v4645
    %v4647 = vrcp.pop %v4644
    %v4648 = vmul.f32 1.0, %v4647
    %v4649 = vmul.f32 %v4632, %v4185
    %v4650 = vmul.f32 %v4634, %v4186
    %v4651 = vmul.f32 %v4620, %v4635
    %v4652 = vmul.f32 %v4622, %v4636
    %v4653 = vadd.f32 %v4649, %v4651
    %v4654 = vadd.f32 %v4650, %v4652
    %v4655 = vtanh.pop %v4653
    %v4656 = vtanh.pop %v4654
    %v4657 = vmul.f32 %v4646, %v4655
    %v4658 = vmul.f32 %v4648, %v4656
    %v4659 = vxor.u32 %v4482, 2147483648
    %v4660 = vxor.u32 %v4484, 2147483648
    %v4661 = vmul.f32 %v4659, 1.442695
    %v4662 = vpow.pop %v4661
    %v4663 = vmul.f32 %v4660, 1.442695
    %v4664 = vpow.pop %v4663
    %v4665 = vadd.f32 %v4662, 1.0
    %v4666 = vadd.f32 %v4664, 1.0
    %v4667 = vrcp.pop %v4665
    %v4668 = vmul.f32 1.0, %v4667
    %v4669 = vrcp.pop %v4666
    %v4670 = vmul.f32 1.0, %v4669
    %v4671 = vxor.u32 %v4523, 2147483648
    %v4672 = vxor.u32 %v4525, 2147483648
    %v4673 = vmul.f32 %v4671, 1.442695
    %v4674 = vpow.pop %v4673
    %v4675 = vmul.f32 %v4672, 1.442695
    %v4676 = vpow.pop %v4675
    %v4677 = vadd.f32 %v4674, 1.0
    %v4678 = vadd.f32 %v4676, 1.0
    %v4679 = vrcp.pop %v4677
    %v4680 = vmul.f32 1.0, %v4679
    %v4681 = vrcp.pop %v4678
    %v4682 = vmul.f32 1.0, %v4681
    %v4683 = vtanh.pop %v4564
    %v4684 = vtanh.pop %v4566
    %v4685 = vxor.u32 %v4605, 2147483648
    %v4686 = vxor.u32 %v4607, 2147483648
    %v4687 = vmul.f32 %v4685, 1.442695
    %v4688 = vpow.pop %v4687
    %v4689 = vmul.f32 %v4686, 1.442695
    %v4690 = vpow.pop %v4689
    %v4691 = vadd.f32 %v4688, 1.0
    %v4692 = vadd.f32 %v4690, 1.0
    %v4693 = vrcp.pop %v4691
    %v4694 = vmul.f32 1.0, %v4693
    %v4695 = vrcp.pop %v4692
    %v4696 = vmul.f32 1.0, %v4695
    %v4697 = vmul.f32 %v4680, %v4233
    %v4698 = vmul.f32 %v4682, %v4234
    %v4699 = vmul.f32 %v4668, %v4683
    %v4700 = vmul.f32 %v4670, %v4684
    %v4701 = vadd.f32 %v4697, %v4699
    %v4702 = vadd.f32 %v4698, %v4700
    %v4703 = vtanh.pop %v4701
    %v4704 = vtanh.pop %v4702
    %v4705 = vmul.f32 %v4694, %v4703
    %v4706 = vmul.f32 %v4696, %v4704
    %v4707 = vld [vmem:[#allocation2 + $0x80] sm:$0xc]
    %v4708 = vld [vmem:[#allocation2 + $0x88] sm:$0xc]
    %v4709 = vld [vmem:[#allocation2 + $0x90] sm:$0xc]
    %v4710 = vld [vmem:[#allocation2 + $0x98] sm:$0xc]
    %v4711 = vld [vmem:[#allocation2 + $0xa0] sm:$0xc]
    %v4712 = vld [vmem:[#allocation2 + $0xa8] sm:$0xc]
    %v4713 = vld [vmem:[#allocation2 + $0xb0] sm:$0xc]
    %v4714 = vld [vmem:[#allocation2 + $0xb8] sm:$0xc]
    %v4715 = vld [vmem:[#allocation2 + $0x40] sm:$0x30]
    %v4716 = vld [vmem:[#allocation2 + $0x48] sm:$0x30]
    %v4717 = vld [vmem:[#allocation2 + $0x50] sm:$0x30]
    %v4718 = vld [vmem:[#allocation2 + $0x58] sm:$0x30]
    %v4719 = vld [vmem:[#allocation2 + $0x60] sm:$0x30]
    %v4720 = vld [vmem:[#allocation2 + $0x68] sm:$0x30]
    %v4721 = vld [vmem:[#allocation2 + $0x70] sm:$0x30]
    %v4722 = vld [vmem:[#allocation2 + $0x78] sm:$0x30]
    %v4723 = vpack.c.bf16 %v4657, %v4657
    %v4724 = vpack.c.bf16 %v4658, %v4658
    %v4733 = vrot.slane %v4707, 2
    %v4734 = vrot.slane %v4708, 2
    %v4735 = vrot.slane %v4709, 2
    %v4736 = vrot.slane %v4710, 2
    %v4737 = vrot.slane %v4711, 2
    %v4738 = vrot.slane %v4712, 2
    %v4739 = vrot.slane %v4713, 2
    %v4740 = vrot.slane %v4714, 2
    %4749 = vmatprep.subr.bf16.mxu0 %v1444
    %4750 = vmatpush1.bf16.msra.mxu0 %v1443
    %4751 = vmatprep.subr.bf16.mxu0 %v1452
    %4752 = vmatpush1.bf16.msra.mxu0 %v1451
    %4753 = vmatprep.subr.bf16.mxu0 %v1460
    %4754 = vmatpush1.bf16.msra.mxu0 %v1459
    %4755 = vmatprep.subr.bf16.mxu0 %v1468
    %4756 = vmatpush1.bf16.msra.mxu0 %v1467
    %4757 = vmatprep.subr.bf16.mxu0 %v1476
    %4758 = vmatpush1.bf16.msra.mxu0 %v1475
    %4759 = vmatprep.subr.bf16.mxu0 %v1484
    %4760 = vmatpush1.bf16.msra.mxu0 %v1483
    %4761 = vmatprep.subr.bf16.mxu0 %v1492
    %4762 = vmatpush1.bf16.msra.mxu0 %v1491
    %4763 = vmatprep.subr.bf16.mxu0 %v1500
    %4764 = vmatpush1.bf16.msra.mxu0 %v1499
    %4765 = vmatprep.subr.bf16.mxu0 %v1508
    %4766 = vmatpush1.bf16.msra.mxu0 %v1507
    %4767 = vmatprep.subr.bf16.mxu0 %v1516
    %4768 = vmatpush1.bf16.msra.mxu0 %v1515
    %4769 = vmatprep.subr.bf16.mxu0 %v1524
    %4770 = vmatpush1.bf16.msra.mxu0 %v1523
    %4771 = vmatprep.subr.bf16.mxu0 %v1532
    %4772 = vmatpush1.bf16.msra.mxu0 %v1531
    %4773 = vmatprep.subr.bf16.mxu0 %v1540
    %4774 = vmatpush1.bf16.msra.mxu0 %v1539
    %4775 = vmatprep.subr.bf16.mxu0 %v1548
    %4776 = vmatpush1.bf16.msra.mxu0 %v1547
    %4777 = vmatprep.subr.bf16.mxu0 %v1556
    %4778 = vmatpush1.bf16.msra.mxu0 %v1555
    %4779 = vmatprep.subr.bf16.mxu0 %v1564
    %4780 = vmatpush1.bf16.msra.mxu0 %v1563
    %4781 = vmatprep.mubr.bf16.mxu0 %v4724
    %4782 = vmatmul.mubr.bf16.gmra.mrb[0].mxu0 %v4723
    %v4783 = vpop.f32.mrb[0].mxu0
    %v4784 = vadd.f32 %v4733, %v4783
    %v4785 = vpop.f32.mrb[0].mxu0
    %v4786 = vadd.f32 %v4734, %v4785
    %v4787 = vpop.f32.mrb[0].mxu0
    %v4788 = vpop.f32.mrb[0].mxu0
    %4789 = vdwg.mxu0
    %4790 = vmatprep.subr.bf16.mxu0 %v1446
    %4791 = vmatpush1.bf16.msra.mxu0 %v1445
    %4792 = vmatprep.subr.bf16.mxu0 %v1454
    %4793 = vmatpush1.bf16.msra.mxu0 %v1453
    %4794 = vmatprep.subr.bf16.mxu0 %v1462
    %4795 = vmatpush1.bf16.msra.mxu0 %v1461
    %4796 = vmatprep.subr.bf16.mxu0 %v1470
    %4797 = vmatpush1.bf16.msra.mxu0 %v1469
    %4798 = vmatprep.subr.bf16.mxu0 %v1478
    %4799 = vmatpush1.bf16.msra.mxu0 %v1477
    %4800 = vmatprep.subr.bf16.mxu0 %v1486
    %4801 = vmatpush1.bf16.msra.mxu0 %v1485
    %4802 = vmatprep.subr.bf16.mxu0 %v1494
    %4803 = vmatpush1.bf16.msra.mxu0 %v1493
    %4804 = vmatprep.subr.bf16.mxu0 %v1502
    %4805 = vmatpush1.bf16.msra.mxu0 %v1501
    %4806 = vmatprep.subr.bf16.mxu0 %v1510
    %4807 = vmatpush1.bf16.msra.mxu0 %v1509
    %4808 = vmatprep.subr.bf16.mxu0 %v1518
    %4809 = vmatpush1.bf16.msra.mxu0 %v1517
    %4810 = vmatprep.subr.bf16.mxu0 %v1526
    %4811 = vmatpush1.bf16.msra.mxu0 %v1525
    %4812 = vmatprep.subr.bf16.mxu0 %v1534
    %4813 = vmatpush1.bf16.msra.mxu0 %v1533
    %4814 = vmatprep.subr.bf16.mxu0 %v1542
    %4815 = vmatpush1.bf16.msra.mxu0 %v1541
    %4816 = vmatprep.subr.bf16.mxu0 %v1550
    %4817 = vmatpush1.bf16.msra.mxu0 %v1549
    %4818 = vmatprep.subr.bf16.mxu0 %v1558
    %4819 = vmatpush1.bf16.msra.mxu0 %v1557
    %4820 = vmatprep.subr.bf16.mxu0 %v1566
    %4821 = vmatpush1.bf16.msra.mxu0 %v1565
    %4822 = vmatprep.mubr.bf16.mxu0 %v4724
    %4823 = vmatmul.mubr.bf16.gmra.mrb[0].mxu0 %v4723
    %v4824 = vpop.f32.mrb[0].mxu0
    %v4825 = vadd.f32 %v4735, %v4824
    %v4826 = vpop.f32.mrb[0].mxu0
    %v4827 = vadd.f32 %v4736, %v4826
    %v4828 = vpop.f32.mrb[0].mxu0
    %v4829 = vpop.f32.mrb[0].mxu0
    %4830 = vdwg.mxu0
    %4831 = vmatprep.subr.bf16.mxu0 %v1448
    %4832 = vmatpush1.bf16.msra.mxu0 %v1447
    %4833 = vmatprep.subr.bf16.mxu0 %v1456
    %4834 = vmatpush1.bf16.msra.mxu0 %v1455
    %4835 = vmatprep.subr.bf16.mxu0 %v1464
    %4836 = vmatpush1.bf16.msra.mxu0 %v1463
    %4837 = vmatprep.subr.bf16.mxu0 %v1472
    %4838 = vmatpush1.bf16.msra.mxu0 %v1471
    %4839 = vmatprep.subr.bf16.mxu0 %v1480
    %4840 = vmatpush1.bf16.msra.mxu0 %v1479
    %4841 = vmatprep.subr.bf16.mxu0 %v1488
    %4842 = vmatpush1.bf16.msra.mxu0 %v1487
    %4843 = vmatprep.subr.bf16.mxu0 %v1496
    %4844 = vmatpush1.bf16.msra.mxu0 %v1495
    %4845 = vmatprep.subr.bf16.mxu0 %v1504
    %4846 = vmatpush1.bf16.msra.mxu0 %v1503
    %4847 = vmatprep.subr.bf16.mxu0 %v1512
    %4848 = vmatpush1.bf16.msra.mxu0 %v1511
    %4849 = vmatprep.subr.bf16.mxu0 %v1520
    %4850 = vmatpush1.bf16.msra.mxu0 %v1519
    %4851 = vmatprep.subr.bf16.mxu0 %v1528
    %4852 = vmatpush1.bf16.msra.mxu0 %v1527
    %4853 = vmatprep.subr.bf16.mxu0 %v1536
    %4854 = vmatpush1.bf16.msra.mxu0 %v1535
    %4855 = vmatprep.subr.bf16.mxu0 %v1544
    %4856 = vmatpush1.bf16.msra.mxu0 %v1543
    %4857 = vmatprep.subr.bf16.mxu0 %v1552
    %4858 = vmatpush1.bf16.msra.mxu0 %v1551
    %4859 = vmatprep.subr.bf16.mxu0 %v1560
    %4860 = vmatpush1.bf16.msra.mxu0 %v1559
    %4861 = vmatprep.subr.bf16.mxu0 %v1568
    %4862 = vmatpush1.bf16.msra.mxu0 %v1567
    %4863 = vmatprep.mubr.bf16.mxu0 %v4724
    %4864 = vmatmul.mubr.bf16.gmra.mrb[0].mxu0 %v4723
    %v4865 = vpop.f32.mrb[0].mxu0
    %v4866 = vadd.f32 %v4737, %v4865
    %v4867 = vpop.f32.mrb[0].mxu0
    %v4868 = vadd.f32 %v4738, %v4867
    %v4869 = vpop.f32.mrb[0].mxu0
    %v4870 = vpop.f32.mrb[0].mxu0
    %4871 = vdwg.mxu0
    %4872 = vmatprep.subr.bf16.mxu0 %v1450
    %4873 = vmatpush1.bf16.msra.mxu0 %v1449
    %4874 = vmatprep.subr.bf16.mxu0 %v1458
    %4875 = vmatpush1.bf16.msra.mxu0 %v1457
    %4876 = vmatprep.subr.bf16.mxu0 %v1466
    %4877 = vmatpush1.bf16.msra.mxu0 %v1465
    %4878 = vmatprep.subr.bf16.mxu0 %v1474
    %4879 = vmatpush1.bf16.msra.mxu0 %v1473
    %4880 = vmatprep.subr.bf16.mxu0 %v1482
    %4881 = vmatpush1.bf16.msra.mxu0 %v1481
    %4882 = vmatprep.subr.bf16.mxu0 %v1490
    %4883 = vmatpush1.bf16.msra.mxu0 %v1489
    %4884 = vmatprep.subr.bf16.mxu0 %v1498
    %4885 = vmatpush1.bf16.msra.mxu0 %v1497
    %4886 = vmatprep.subr.bf16.mxu0 %v1506
    %4887 = vmatpush1.bf16.msra.mxu0 %v1505
    %4888 = vmatprep.subr.bf16.mxu0 %v1514
    %4889 = vmatpush1.bf16.msra.mxu0 %v1513
    %4890 = vmatprep.subr.bf16.mxu0 %v1522
    %4891 = vmatpush1.bf16.msra.mxu0 %v1521
    %4892 = vmatprep.subr.bf16.mxu0 %v1530
    %4893 = vmatpush1.bf16.msra.mxu0 %v1529
    %4894 = vmatprep.subr.bf16.mxu0 %v1538
    %4895 = vmatpush1.bf16.msra.mxu0 %v1537
    %4896 = vmatprep.subr.bf16.mxu0 %v1546
    %4897 = vmatpush1.bf16.msra.mxu0 %v1545
    %4898 = vmatprep.subr.bf16.mxu0 %v1554
    %4899 = vmatpush1.bf16.msra.mxu0 %v1553
    %4900 = vmatprep.subr.bf16.mxu0 %v1562
    %4901 = vmatpush1.bf16.msra.mxu0 %v1561
    %4902 = vmatprep.subr.bf16.mxu0 %v1570
    %4903 = vmatpush1.bf16.msra.mxu0 %v1569
    %4904 = vmatprep.mubr.bf16.mxu0 %v4724
    %4905 = vmatmul.mubr.bf16.gmra.mrb[0].mxu0 %v4723
    %v4906 = vpop.f32.mrb[0].mxu0
    %v4907 = vadd.f32 %v4739, %v4906
    %v4908 = vpop.f32.mrb[0].mxu0
    %v4909 = vadd.f32 %v4740, %v4908
    %v4910 = vpop.f32.mrb[0].mxu0
    %v4911 = vpop.f32.mrb[0].mxu0
    %4912 = vdwg.mxu0
    %v4913 = vpack.c.bf16 %v4705, %v4705
    %v4914 = vpack.c.bf16 %v4706, %v4706
    %v4923 = vrot.slane %v4715, 4
    %v4924 = vrot.slane %v4716, 4
    %v4925 = vrot.slane %v4717, 4
    %v4926 = vrot.slane %v4718, 4
    %v4927 = vrot.slane %v4719, 4
    %v4928 = vrot.slane %v4720, 4
    %v4929 = vrot.slane %v4721, 4
    %v4930 = vrot.slane %v4722, 4
    %4939 = vmatprep.subr.bf16.mxu0 %v2248
    %4940 = vmatpush1.bf16.msra.mxu0 %v2247
    %4941 = vmatprep.subr.bf16.mxu0 %v2256
    %4942 = vmatpush1.bf16.msra.mxu0 %v2255
    %4943 = vmatprep.subr.bf16.mxu0 %v2264
    %4944 = vmatpush1.bf16.msra.mxu0 %v2263
    %4945 = vmatprep.subr.bf16.mxu0 %v2272
    %4946 = vmatpush1.bf16.msra.mxu0 %v2271
    %4947 = vmatprep.subr.bf16.mxu0 %v2280
    %4948 = vmatpush1.bf16.msra.mxu0 %v2279
    %4949 = vmatprep.subr.bf16.mxu0 %v2288
    %4950 = vmatpush1.bf16.msra.mxu0 %v2287
    %4951 = vmatprep.subr.bf16.mxu0 %v2296
    %4952 = vmatpush1.bf16.msra.mxu0 %v2295
    %4953 = vmatprep.subr.bf16.mxu0 %v2304
    %4954 = vmatpush1.bf16.msra.mxu0 %v2303
    %4955 = vmatprep.subr.bf16.mxu0 %v2312
    %4956 = vmatpush1.bf16.msra.mxu0 %v2311
    %4957 = vmatprep.subr.bf16.mxu0 %v2320
    %4958 = vmatpush1.bf16.msra.mxu0 %v2319
    %4959 = vmatprep.subr.bf16.mxu0 %v2328
    %4960 = vmatpush1.bf16.msra.mxu0 %v2327
    %4961 = vmatprep.subr.bf16.mxu0 %v2336
    %4962 = vmatpush1.bf16.msra.mxu0 %v2335
    %4963 = vmatprep.subr.bf16.mxu0 %v2344
    %4964 = vmatpush1.bf16.msra.mxu0 %v2343
    %4965 = vmatprep.subr.bf16.mxu0 %v2352
    %4966 = vmatpush1.bf16.msra.mxu0 %v2351
    %4967 = vmatprep.subr.bf16.mxu0 %v2360
    %4968 = vmatpush1.bf16.msra.mxu0 %v2359
    %4969 = vmatprep.subr.bf16.mxu0 %v2368
    %4970 = vmatpush1.bf16.msra.mxu0 %v2367
    %4971 = vmatprep.mubr.bf16.mxu0 %v4914
    %4972 = vmatmul.mubr.bf16.gmra.mrb[0].mxu0 %v4913
    %v4973 = vpop.f32.mrb[0].mxu0
    %v4974 = vadd.f32 %v4923, %v4973
    %v4975 = vpop.f32.mrb[0].mxu0
    %v4976 = vadd.f32 %v4924, %v4975
    %v4977 = vpop.f32.mrb[0].mxu0
    %v4978 = vpop.f32.mrb[0].mxu0
    %4979 = vdwg.mxu0
    %4980 = vmatprep.subr.bf16.mxu0 %v2250
    %4981 = vmatpush1.bf16.msra.mxu0 %v2249
    %4982 = vmatprep.subr.bf16.mxu0 %v2258
    %4983 = vmatpush1.bf16.msra.mxu0 %v2257
    %4984 = vmatprep.subr.bf16.mxu0 %v2266
    %4985 = vmatpush1.bf16.msra.mxu0 %v2265
    %4986 = vmatprep.subr.bf16.mxu0 %v2274
    %4987 = vmatpush1.bf16.msra.mxu0 %v2273
    %4988 = vmatprep.subr.bf16.mxu0 %v2282
    %4989 = vmatpush1.bf16.msra.mxu0 %v2281
    %4990 = vmatprep.subr.bf16.mxu0 %v2290
    %4991 = vmatpush1.bf16.msra.mxu0 %v2289
    %4992 = vmatprep.subr.bf16.mxu0 %v2298
    %4993 = vmatpush1.bf16.msra.mxu0 %v2297
    %4994 = vmatprep.subr.bf16.mxu0 %v2306
    %4995 = vmatpush1.bf16.msra.mxu0 %v2305
    %4996 = vmatprep.subr.bf16.mxu0 %v2314
    %4997 = vmatpush1.bf16.msra.mxu0 %v2313
    %4998 = vmatprep.subr.bf16.mxu0 %v2322
    %4999 = vmatpush1.bf16.msra.mxu0 %v2321
    %5000 = vmatprep.subr.bf16.mxu0 %v2330
    %5001 = vmatpush1.bf16.msra.mxu0 %v2329
    %5002 = vmatprep.subr.bf16.mxu0 %v2338
    %5003 = vmatpush1.bf16.msra.mxu0 %v2337
    %5004 = vmatprep.subr.bf16.mxu0 %v2346
    %5005 = vmatpush1.bf16.msra.mxu0 %v2345
    %5006 = vmatprep.subr.bf16.mxu0 %v2354
    %5007 = vmatpush1.bf16.msra.mxu0 %v2353
    %5008 = vmatprep.subr.bf16.mxu0 %v2362
    %5009 = vmatpush1.bf16.msra.mxu0 %v2361
    %5010 = vmatprep.subr.bf16.mxu0 %v2370
    %5011 = vmatpush1.bf16.msra.mxu0 %v2369
    %5012 = vmatprep.mubr.bf16.mxu0 %v4914
    %5013 = vmatmul.mubr.bf16.gmra.mrb[0].mxu0 %v4913
    %v5014 = vpop.f32.mrb[0].mxu0
    %v5015 = vadd.f32 %v4925, %v5014
    %v5016 = vpop.f32.mrb[0].mxu0
    %v5017 = vadd.f32 %v4926, %v5016
    %v5018 = vpop.f32.mrb[0].mxu0
    %v5019 = vpop.f32.mrb[0].mxu0
    %5020 = vdwg.mxu0
    %5021 = vmatprep.subr.bf16.mxu0 %v2252
    %5022 = vmatpush1.bf16.msra.mxu0 %v2251
    %5023 = vmatprep.subr.bf16.mxu0 %v2260
    %5024 = vmatpush1.bf16.msra.mxu0 %v2259
    %5025 = vmatprep.subr.bf16.mxu0 %v2268
    %5026 = vmatpush1.bf16.msra.mxu0 %v2267
    %5027 = vmatprep.subr.bf16.mxu0 %v2276
    %5028 = vmatpush1.bf16.msra.mxu0 %v2275
    %5029 = vmatprep.subr.bf16.mxu0 %v2284
    %5030 = vmatpush1.bf16.msra.mxu0 %v2283
    %5031 = vmatprep.subr.bf16.mxu0 %v2292
    %5032 = vmatpush1.bf16.msra.mxu0 %v2291
    %5033 = vmatprep.subr.bf16.mxu0 %v2300
    %5034 = vmatpush1.bf16.msra.mxu0 %v2299
    %5035 = vmatprep.subr.bf16.mxu0 %v2308
    %5036 = vmatpush1.bf16.msra.mxu0 %v2307
    %5037 = vmatprep.subr.bf16.mxu0 %v2316
    %5038 = vmatpush1.bf16.msra.mxu0 %v2315
    %5039 = vmatprep.subr.bf16.mxu0 %v2324
    %5040 = vmatpush1.bf16.msra.mxu0 %v2323
    %5041 = vmatprep.subr.bf16.mxu0 %v2332
    %5042 = vmatpush1.bf16.msra.mxu0 %v2331
    %5043 = vmatprep.subr.bf16.mxu0 %v2340
    %5044 = vmatpush1.bf16.msra.mxu0 %v2339
    %5045 = vmatprep.subr.bf16.mxu0 %v2348
    %5046 = vmatpush1.bf16.msra.mxu0 %v2347
    %5047 = vmatprep.subr.bf16.mxu0 %v2356
    %5048 = vmatpush1.bf16.msra.mxu0 %v2355
    %5049 = vmatprep.subr.bf16.mxu0 %v2364
    %5050 = vmatpush1.bf16.msra.mxu0 %v2363
    %5051 = vmatprep.subr.bf16.mxu0 %v2372
    %5052 = vmatpush1.bf16.msra.mxu0 %v2371
    %5053 = vmatprep.mubr.bf16.mxu0 %v4914
    %5054 = vmatmul.mubr.bf16.gmra.mrb[0].mxu0 %v4913
    %v5055 = vpop.f32.mrb[0].mxu0
    %v5056 = vadd.f32 %v4927, %v5055
    %v5057 = vpop.f32.mrb[0].mxu0
    %v5058 = vadd.f32 %v4928, %v5057
    %v5059 = vpop.f32.mrb[0].mxu0
    %v5060 = vpop.f32.mrb[0].mxu0
    %5061 = vdwg.mxu0
    %5062 = vmatprep.subr.bf16.mxu0 %v2254
    %5063 = vmatpush1.bf16.msra.mxu0 %v2253
    %5064 = vmatprep.subr.bf16.mxu0 %v2262
    %5065 = vmatpush1.bf16.msra.mxu0 %v2261
    %5066 = vmatprep.subr.bf16.mxu0 %v2270
    %5067 = vmatpush1.bf16.msra.mxu0 %v2269
    %5068 = vmatprep.subr.bf16.mxu0 %v2278
    %5069 = vmatpush1.bf16.msra.mxu0 %v2277
    %5070 = vmatprep.subr.bf16.mxu0 %v2286
    %5071 = vmatpush1.bf16.msra.mxu0 %v2285
    %5072 = vmatprep.subr.bf16.mxu0 %v2294
    %5073 = vmatpush1.bf16.msra.mxu0 %v2293
    %5074 = vmatprep.subr.bf16.mxu0 %v2302
    %5075 = vmatpush1.bf16.msra.mxu0 %v2301
    %5076 = vmatprep.subr.bf16.mxu0 %v2310
    %5077 = vmatpush1.bf16.msra.mxu0 %v2309
    %5078 = vmatprep.subr.bf16.mxu0 %v2318
    %5079 = vmatpush1.bf16.msra.mxu0 %v2317
    %5080 = vmatprep.subr.bf16.mxu0 %v2326
    %5081 = vmatpush1.bf16.msra.mxu0 %v2325
    %5082 = vmatprep.subr.bf16.mxu0 %v2334
    %5083 = vmatpush1.bf16.msra.mxu0 %v2333
    %5084 = vmatprep.subr.bf16.mxu0 %v2342
    %5085 = vmatpush1.bf16.msra.mxu0 %v2341
    %5086 = vmatprep.subr.bf16.mxu0 %v2350
    %5087 = vmatpush1.bf16.msra.mxu0 %v2349
    %5088 = vmatprep.subr.bf16.mxu0 %v2358
    %5089 = vmatpush1.bf16.msra.mxu0 %v2357
    %5090 = vmatprep.subr.bf16.mxu0 %v2366
    %5091 = vmatpush1.bf16.msra.mxu0 %v2365
    %5092 = vmatprep.subr.bf16.mxu0 %v2374
    %5093 = vmatpush1.bf16.msra.mxu0 %v2373
    %5094 = vmatprep.mubr.bf16.mxu0 %v4914
    %5095 = vmatmul.mubr.bf16.gmra.mrb[0].mxu0 %v4913
    %v5096 = vpop.f32.mrb[0].mxu0
    %v5097 = vadd.f32 %v4929, %v5096
    %v5098 = vpop.f32.mrb[0].mxu0
    %v5099 = vadd.f32 %v4930, %v5098
    %v5100 = vpop.f32.mrb[0].mxu0
    %v5101 = vpop.f32.mrb[0].mxu0
    %5102 = vdwg.mxu0
    %v5103 = vxor.u32 %v4784, 2147483648
    %v5104 = vxor.u32 %v4786, 2147483648
    %v5105 = vmul.f32 %v5103, 1.442695
    %v5106 = vpow.pop %v5105
    %v5107 = vmul.f32 %v5104, 1.442695
    %v5108 = vpow.pop %v5107
    %v5109 = vadd.f32 %v5106, 1.0
    %v5110 = vadd.f32 %v5108, 1.0
    %v5111 = vrcp.pop %v5109
    %v5112 = vmul.f32 1.0, %v5111
    %v5113 = vrcp.pop %v5110
    %v5114 = vmul.f32 1.0, %v5113
    %v5115 = vxor.u32 %v4825, 2147483648
    %v5116 = vxor.u32 %v4827, 2147483648
    %v5117 = vmul.f32 %v5115, 1.442695
    %v5118 = vpow.pop %v5117
    %v5119 = vmul.f32 %v5116, 1.442695
    %v5120 = vpow.pop %v5119
    %v5121 = vadd.f32 %v5118, 1.0
    %v5122 = vadd.f32 %v5120, 1.0
    %v5123 = vrcp.pop %v5121
    %v5124 = vmul.f32 1.0, %v5123
    %v5125 = vrcp.pop %v5122
    %v5126 = vmul.f32 1.0, %v5125
    %v5127 = vtanh.pop %v4866
    %v5128 = vtanh.pop %v4868
    %v5129 = vxor.u32 %v4907, 2147483648
    %v5130 = vxor.u32 %v4909, 2147483648
    %v5131 = vmul.f32 %v5129, 1.442695
    %v5132 = vpow.pop %v5131
    %v5133 = vmul.f32 %v5130, 1.442695
    %v5134 = vpow.pop %v5133
    %v5135 = vadd.f32 %v5132, 1.0
    %v5136 = vadd.f32 %v5134, 1.0
    %v5137 = vrcp.pop %v5135
    %v5138 = vmul.f32 1.0, %v5137
    %v5139 = vrcp.pop %v5136
    %v5140 = vmul.f32 1.0, %v5139
    %v5141 = vmul.f32 %v5124, %v4653
    %v5142 = vmul.f32 %v5126, %v4654
    %v5143 = vmul.f32 %v5112, %v5127
    %v5144 = vmul.f32 %v5114, %v5128
    %v5145 = vadd.f32 %v5141, %v5143
    %v5146 = vadd.f32 %v5142, %v5144
    %v5147 = vtanh.pop %v5145
    %v5148 = vtanh.pop %v5146
    %v5149 = vmul.f32 %v5138, %v5147
    %v5150 = vmul.f32 %v5140, %v5148
    %v5151 = vxor.u32 %v4974, 2147483648
    %v5152 = vxor.u32 %v4976, 2147483648
    %v5153 = vmul.f32 %v5151, 1.442695
    %v5154 = vpow.pop %v5153
    %v5155 = vmul.f32 %v5152, 1.442695
    %v5156 = vpow.pop %v5155
    %v5157 = vadd.f32 %v5154, 1.0
    %v5158 = vadd.f32 %v5156, 1.0
    %v5159 = vrcp.pop %v5157
    %v5160 = vmul.f32 1.0, %v5159
    %v5161 = vrcp.pop %v5158
    %v5162 = vmul.f32 1.0, %v5161
    %v5163 = vxor.u32 %v5015, 2147483648
    %v5164 = vxor.u32 %v5017, 2147483648
    %v5165 = vmul.f32 %v5163, 1.442695
    %v5166 = vpow.pop %v5165
    %v5167 = vmul.f32 %v5164, 1.442695
    %v5168 = vpow.pop %v5167
    %v5169 = vadd.f32 %v5166, 1.0
    %v5170 = vadd.f32 %v5168, 1.0
    %v5171 = vrcp.pop %v5169
    %v5172 = vmul.f32 1.0, %v5171
    %v5173 = vrcp.pop %v5170
    %v5174 = vmul.f32 1.0, %v5173
    %v5175 = vtanh.pop %v5056
    %v5176 = vtanh.pop %v5058
    %v5177 = vxor.u32 %v5097, 2147483648
    %v5178 = vxor.u32 %v5099, 2147483648
    %v5179 = vmul.f32 %v5177, 1.442695
    %v5180 = vpow.pop %v5179
    %v5181 = vmul.f32 %v5178, 1.442695
    %v5182 = vpow.pop %v5181
    %v5183 = vadd.f32 %v5180, 1.0
    %v5184 = vadd.f32 %v5182, 1.0
    %v5185 = vrcp.pop %v5183
    %v5186 = vmul.f32 1.0, %v5185
    %v5187 = vrcp.pop %v5184
    %v5188 = vmul.f32 1.0, %v5187
    %v5189 = vmul.f32 %v5172, %v4701
    %v5190 = vmul.f32 %v5174, %v4702
    %v5191 = vmul.f32 %v5160, %v5175
    %v5192 = vmul.f32 %v5162, %v5176
    %v5193 = vadd.f32 %v5189, %v5191
    %v5194 = vadd.f32 %v5190, %v5192
    %v5195 = vtanh.pop %v5193
    %v5196 = vtanh.pop %v5194
    %v5197 = vmul.f32 %v5186, %v5195
    %v5198 = vmul.f32 %v5188, %v5196
    %v5199 = vld [vmem:[#allocation2 + $0x80] sm:$0x30]
    %v5200 = vld [vmem:[#allocation2 + $0x88] sm:$0x30]
    %v5201 = vld [vmem:[#allocation2 + $0x90] sm:$0x30]
    %v5202 = vld [vmem:[#allocation2 + $0x98] sm:$0x30]
    %v5203 = vld [vmem:[#allocation2 + $0xa0] sm:$0x30]
    %v5204 = vld [vmem:[#allocation2 + $0xa8] sm:$0x30]
    %v5205 = vld [vmem:[#allocation2 + $0xb0] sm:$0x30]
    %v5206 = vld [vmem:[#allocation2 + $0xb8] sm:$0x30]
    %v5207 = vld [vmem:[#allocation2 + $0x40] sm:$0xc]
    %v5208 = vld [vmem:[#allocation2 + $0x48] sm:$0xc]
    %v5209 = vld [vmem:[#allocation2 + $0x50] sm:$0xc]
    %v5210 = vld [vmem:[#allocation2 + $0x58] sm:$0xc]
    %v5211 = vld [vmem:[#allocation2 + $0x60] sm:$0xc]
    %v5212 = vld [vmem:[#allocation2 + $0x68] sm:$0xc]
    %v5213 = vld [vmem:[#allocation2 + $0x70] sm:$0xc]
    %v5214 = vld [vmem:[#allocation2 + $0x78] sm:$0xc]
    %v5215 = vpack.c.bf16 %v5149, %v5149
    %v5216 = vpack.c.bf16 %v5150, %v5150
    %v5225 = vrot.slane %v5199, 4
    %v5226 = vrot.slane %v5200, 4
    %v5227 = vrot.slane %v5201, 4
    %v5228 = vrot.slane %v5202, 4
    %v5229 = vrot.slane %v5203, 4
    %v5230 = vrot.slane %v5204, 4
    %v5231 = vrot.slane %v5205, 4
    %v5232 = vrot.slane %v5206, 4
    %5241 = vmatprep.subr.bf16.mxu0 %v1444
    %5242 = vmatpush1.bf16.msra.mxu0 %v1443
    %5243 = vmatprep.subr.bf16.mxu0 %v1452
    %5244 = vmatpush1.bf16.msra.mxu0 %v1451
    %5245 = vmatprep.subr.bf16.mxu0 %v1460
    %5246 = vmatpush1.bf16.msra.mxu0 %v1459
    %5247 = vmatprep.subr.bf16.mxu0 %v1468
    %5248 = vmatpush1.bf16.msra.mxu0 %v1467
    %5249 = vmatprep.subr.bf16.mxu0 %v1476
    %5250 = vmatpush1.bf16.msra.mxu0 %v1475
    %5251 = vmatprep.subr.bf16.mxu0 %v1484
    %5252 = vmatpush1.bf16.msra.mxu0 %v1483
    %5253 = vmatprep.subr.bf16.mxu0 %v1492
    %5254 = vmatpush1.bf16.msra.mxu0 %v1491
    %5255 = vmatprep.subr.bf16.mxu0 %v1500
    %5256 = vmatpush1.bf16.msra.mxu0 %v1499
    %5257 = vmatprep.subr.bf16.mxu0 %v1508
    %5258 = vmatpush1.bf16.msra.mxu0 %v1507
    %5259 = vmatprep.subr.bf16.mxu0 %v1516
    %5260 = vmatpush1.bf16.msra.mxu0 %v1515
    %5261 = vmatprep.subr.bf16.mxu0 %v1524
    %5262 = vmatpush1.bf16.msra.mxu0 %v1523
    %5263 = vmatprep.subr.bf16.mxu0 %v1532
    %5264 = vmatpush1.bf16.msra.mxu0 %v1531
    %5265 = vmatprep.subr.bf16.mxu0 %v1540
    %5266 = vmatpush1.bf16.msra.mxu0 %v1539
    %5267 = vmatprep.subr.bf16.mxu0 %v1548
    %5268 = vmatpush1.bf16.msra.mxu0 %v1547
    %5269 = vmatprep.subr.bf16.mxu0 %v1556
    %5270 = vmatpush1.bf16.msra.mxu0 %v1555
    %5271 = vmatprep.subr.bf16.mxu0 %v1564
    %5272 = vmatpush1.bf16.msra.mxu0 %v1563
    %5273 = vmatprep.mubr.bf16.mxu0 %v5216
    %5274 = vmatmul.mubr.bf16.gmra.mrb[0].mxu0 %v5215
    %v5275 = vpop.f32.mrb[0].mxu0
    %v5276 = vadd.f32 %v5225, %v5275
    %v5277 = vpop.f32.mrb[0].mxu0
    %v5278 = vadd.f32 %v5226, %v5277
    %v5279 = vpop.f32.mrb[0].mxu0
    %v5280 = vpop.f32.mrb[0].mxu0
    %5281 = vdwg.mxu0
    %5282 = vmatprep.subr.bf16.mxu0 %v1446
    %5283 = vmatpush1.bf16.msra.mxu0 %v1445
    %5284 = vmatprep.subr.bf16.mxu0 %v1454
    %5285 = vmatpush1.bf16.msra.mxu0 %v1453
    %5286 = vmatprep.subr.bf16.mxu0 %v1462
    %5287 = vmatpush1.bf16.msra.mxu0 %v1461
    %5288 = vmatprep.subr.bf16.mxu0 %v1470
    %5289 = vmatpush1.bf16.msra.mxu0 %v1469
    %5290 = vmatprep.subr.bf16.mxu0 %v1478
    %5291 = vmatpush1.bf16.msra.mxu0 %v1477
    %5292 = vmatprep.subr.bf16.mxu0 %v1486
    %5293 = vmatpush1.bf16.msra.mxu0 %v1485
    %5294 = vmatprep.subr.bf16.mxu0 %v1494
    %5295 = vmatpush1.bf16.msra.mxu0 %v1493
    %5296 = vmatprep.subr.bf16.mxu0 %v1502
    %5297 = vmatpush1.bf16.msra.mxu0 %v1501
    %5298 = vmatprep.subr.bf16.mxu0 %v1510
    %5299 = vmatpush1.bf16.msra.mxu0 %v1509
    %5300 = vmatprep.subr.bf16.mxu0 %v1518
    %5301 = vmatpush1.bf16.msra.mxu0 %v1517
    %5302 = vmatprep.subr.bf16.mxu0 %v1526
    %5303 = vmatpush1.bf16.msra.mxu0 %v1525
    %5304 = vmatprep.subr.bf16.mxu0 %v1534
    %5305 = vmatpush1.bf16.msra.mxu0 %v1533
    %5306 = vmatprep.subr.bf16.mxu0 %v1542
    %5307 = vmatpush1.bf16.msra.mxu0 %v1541
    %5308 = vmatprep.subr.bf16.mxu0 %v1550
    %5309 = vmatpush1.bf16.msra.mxu0 %v1549
    %5310 = vmatprep.subr.bf16.mxu0 %v1558
    %5311 = vmatpush1.bf16.msra.mxu0 %v1557
    %5312 = vmatprep.subr.bf16.mxu0 %v1566
    %5313 = vmatpush1.bf16.msra.mxu0 %v1565
    %5314 = vmatprep.mubr.bf16.mxu0 %v5216
    %5315 = vmatmul.mubr.bf16.gmra.mrb[0].mxu0 %v5215
    %v5316 = vpop.f32.mrb[0].mxu0
    %v5317 = vadd.f32 %v5227, %v5316
    %v5318 = vpop.f32.mrb[0].mxu0
    %v5319 = vadd.f32 %v5228, %v5318
    %v5320 = vpop.f32.mrb[0].mxu0
    %v5321 = vpop.f32.mrb[0].mxu0
    %5322 = vdwg.mxu0
    %5323 = vmatprep.subr.bf16.mxu0 %v1448
    %5324 = vmatpush1.bf16.msra.mxu0 %v1447
    %5325 = vmatprep.subr.bf16.mxu0 %v1456
    %5326 = vmatpush1.bf16.msra.mxu0 %v1455
    %5327 = vmatprep.subr.bf16.mxu0 %v1464
    %5328 = vmatpush1.bf16.msra.mxu0 %v1463
    %5329 = vmatprep.subr.bf16.mxu0 %v1472
    %5330 = vmatpush1.bf16.msra.mxu0 %v1471
    %5331 = vmatprep.subr.bf16.mxu0 %v1480
    %5332 = vmatpush1.bf16.msra.mxu0 %v1479
    %5333 = vmatprep.subr.bf16.mxu0 %v1488
    %5334 = vmatpush1.bf16.msra.mxu0 %v1487
    %5335 = vmatprep.subr.bf16.mxu0 %v1496
    %5336 = vmatpush1.bf16.msra.mxu0 %v1495
    %5337 = vmatprep.subr.bf16.mxu0 %v1504
    %5338 = vmatpush1.bf16.msra.mxu0 %v1503
    %5339 = vmatprep.subr.bf16.mxu0 %v1512
    %5340 = vmatpush1.bf16.msra.mxu0 %v1511
    %5341 = vmatprep.subr.bf16.mxu0 %v1520
    %5342 = vmatpush1.bf16.msra.mxu0 %v1519
    %5343 = vmatprep.subr.bf16.mxu0 %v1528
    %5344 = vmatpush1.bf16.msra.mxu0 %v1527
    %5345 = vmatprep.subr.bf16.mxu0 %v1536
    %5346 = vmatpush1.bf16.msra.mxu0 %v1535
    %5347 = vmatprep.subr.bf16.mxu0 %v1544
    %5348 = vmatpush1.bf16.msra.mxu0 %v1543
    %5349 = vmatprep.subr.bf16.mxu0 %v1552
    %5350 = vmatpush1.bf16.msra.mxu0 %v1551
    %5351 = vmatprep.subr.bf16.mxu0 %v1560
    %5352 = vmatpush1.bf16.msra.mxu0 %v1559
    %5353 = vmatprep.subr.bf16.mxu0 %v1568
    %5354 = vmatpush1.bf16.msra.mxu0 %v1567
    %5355 = vmatprep.mubr.bf16.mxu0 %v5216
    %5356 = vmatmul.mubr.bf16.gmra.mrb[0].mxu0 %v5215
    %v5357 = vpop.f32.mrb[0].mxu0
    %v5358 = vadd.f32 %v5229, %v5357
    %v5359 = vpop.f32.mrb[0].mxu0
    %v5360 = vadd.f32 %v5230, %v5359
    %v5361 = vpop.f32.mrb[0].mxu0
    %v5362 = vpop.f32.mrb[0].mxu0
    %5363 = vdwg.mxu0
    %5364 = vmatprep.subr.bf16.mxu0 %v1450
    %5365 = vmatpush1.bf16.msra.mxu0 %v1449
    %5366 = vmatprep.subr.bf16.mxu0 %v1458
    %5367 = vmatpush1.bf16.msra.mxu0 %v1457
    %5368 = vmatprep.subr.bf16.mxu0 %v1466
    %5369 = vmatpush1.bf16.msra.mxu0 %v1465
    %5370 = vmatprep.subr.bf16.mxu0 %v1474
    %5371 = vmatpush1.bf16.msra.mxu0 %v1473
    %5372 = vmatprep.subr.bf16.mxu0 %v1482
    %5373 = vmatpush1.bf16.msra.mxu0 %v1481
    %5374 = vmatprep.subr.bf16.mxu0 %v1490
    %5375 = vmatpush1.bf16.msra.mxu0 %v1489
    %5376 = vmatprep.subr.bf16.mxu0 %v1498
    %5377 = vmatpush1.bf16.msra.mxu0 %v1497
    %5378 = vmatprep.subr.bf16.mxu0 %v1506
    %5379 = vmatpush1.bf16.msra.mxu0 %v1505
    %5380 = vmatprep.subr.bf16.mxu0 %v1514
    %5381 = vmatpush1.bf16.msra.mxu0 %v1513
    %5382 = vmatprep.subr.bf16.mxu0 %v1522
    %5383 = vmatpush1.bf16.msra.mxu0 %v1521
    %5384 = vmatprep.subr.bf16.mxu0 %v1530
    %5385 = vmatpush1.bf16.msra.mxu0 %v1529
    %5386 = vmatprep.subr.bf16.mxu0 %v1538
    %5387 = vmatpush1.bf16.msra.mxu0 %v1537
    %5388 = vmatprep.subr.bf16.mxu0 %v1546
    %5389 = vmatpush1.bf16.msra.mxu0 %v1545
    %5390 = vmatprep.subr.bf16.mxu0 %v1554
    %5391 = vmatpush1.bf16.msra.mxu0 %v1553
    %5392 = vmatprep.subr.bf16.mxu0 %v1562
    %5393 = vmatpush1.bf16.msra.mxu0 %v1561
    %5394 = vmatprep.subr.bf16.mxu0 %v1570
    %5395 = vmatpush1.bf16.msra.mxu0 %v1569
    %5396 = vmatprep.mubr.bf16.mxu0 %v5216
    %5397 = vmatmul.mubr.bf16.gmra.mrb[0].mxu0 %v5215
    %v5398 = vpop.f32.mrb[0].mxu0
    %v5399 = vadd.f32 %v5231, %v5398
    %v5400 = vpop.f32.mrb[0].mxu0
    %v5401 = vadd.f32 %v5232, %v5400
    %v5402 = vpop.f32.mrb[0].mxu0
    %v5403 = vpop.f32.mrb[0].mxu0
    %5404 = vdwg.mxu0
    %v5405 = vpack.c.bf16 %v5197, %v5197
    %v5406 = vpack.c.bf16 %v5198, %v5198
    %v5415 = vrot.slane %v5207, 2
    %v5416 = vrot.slane %v5208, 2
    %v5417 = vrot.slane %v5209, 2
    %v5418 = vrot.slane %v5210, 2
    %v5419 = vrot.slane %v5211, 2
    %v5420 = vrot.slane %v5212, 2
    %v5421 = vrot.slane %v5213, 2
    %v5422 = vrot.slane %v5214, 2
    %5431 = vmatprep.subr.bf16.mxu0 %v2248
    %5432 = vmatpush1.bf16.msra.mxu0 %v2247
    %5433 = vmatprep.subr.bf16.mxu0 %v2256
    %5434 = vmatpush1.bf16.msra.mxu0 %v2255
    %5435 = vmatprep.subr.bf16.mxu0 %v2264
    %5436 = vmatpush1.bf16.msra.mxu0 %v2263
    %5437 = vmatprep.subr.bf16.mxu0 %v2272
    %5438 = vmatpush1.bf16.msra.mxu0 %v2271
    %5439 = vmatprep.subr.bf16.mxu0 %v2280
    %5440 = vmatpush1.bf16.msra.mxu0 %v2279
    %5441 = vmatprep.subr.bf16.mxu0 %v2288
    %5442 = vmatpush1.bf16.msra.mxu0 %v2287
    %5443 = vmatprep.subr.bf16.mxu0 %v2296
    %5444 = vmatpush1.bf16.msra.mxu0 %v2295
    %5445 = vmatprep.subr.bf16.mxu0 %v2304
    %5446 = vmatpush1.bf16.msra.mxu0 %v2303
    %5447 = vmatprep.subr.bf16.mxu0 %v2312
    %5448 = vmatpush1.bf16.msra.mxu0 %v2311
    %5449 = vmatprep.subr.bf16.mxu0 %v2320
    %5450 = vmatpush1.bf16.msra.mxu0 %v2319
    %5451 = vmatprep.subr.bf16.mxu0 %v2328
    %5452 = vmatpush1.bf16.msra.mxu0 %v2327
    %5453 = vmatprep.subr.bf16.mxu0 %v2336
    %5454 = vmatpush1.bf16.msra.mxu0 %v2335
    %5455 = vmatprep.subr.bf16.mxu0 %v2344
    %5456 = vmatpush1.bf16.msra.mxu0 %v2343
    %5457 = vmatprep.subr.bf16.mxu0 %v2352
    %5458 = vmatpush1.bf16.msra.mxu0 %v2351
    %5459 = vmatprep.subr.bf16.mxu0 %v2360
    %5460 = vmatpush1.bf16.msra.mxu0 %v2359
    %5461 = vmatprep.subr.bf16.mxu0 %v2368
    %5462 = vmatpush1.bf16.msra.mxu0 %v2367
    %5463 = vmatprep.mubr.bf16.mxu0 %v5406
    %5464 = vmatmul.mubr.bf16.gmra.mrb[0].mxu0 %v5405
    %v5465 = vpop.f32.mrb[0].mxu0
    %v5466 = vadd.f32 %v5415, %v5465
    %v5467 = vpop.f32.mrb[0].mxu0
    %v5468 = vadd.f32 %v5416, %v5467
    %v5469 = vpop.f32.mrb[0].mxu0
    %v5470 = vpop.f32.mrb[0].mxu0
    %5471 = vdwg.mxu0
    %5472 = vmatprep.subr.bf16.mxu0 %v2250
    %5473 = vmatpush1.bf16.msra.mxu0 %v2249
    %5474 = vmatprep.subr.bf16.mxu0 %v2258
    %5475 = vmatpush1.bf16.msra.mxu0 %v2257
    %5476 = vmatprep.subr.bf16.mxu0 %v2266
    %5477 = vmatpush1.bf16.msra.mxu0 %v2265
    %5478 = vmatprep.subr.bf16.mxu0 %v2274
    %5479 = vmatpush1.bf16.msra.mxu0 %v2273
    %5480 = vmatprep.subr.bf16.mxu0 %v2282
    %5481 = vmatpush1.bf16.msra.mxu0 %v2281
    %5482 = vmatprep.subr.bf16.mxu0 %v2290
    %5483 = vmatpush1.bf16.msra.mxu0 %v2289
    %5484 = vmatprep.subr.bf16.mxu0 %v2298
    %5485 = vmatpush1.bf16.msra.mxu0 %v2297
    %5486 = vmatprep.subr.bf16.mxu0 %v2306
    %5487 = vmatpush1.bf16.msra.mxu0 %v2305
    %5488 = vmatprep.subr.bf16.mxu0 %v2314
    %5489 = vmatpush1.bf16.msra.mxu0 %v2313
    %5490 = vmatprep.subr.bf16.mxu0 %v2322
    %5491 = vmatpush1.bf16.msra.mxu0 %v2321
    %5492 = vmatprep.subr.bf16.mxu0 %v2330
    %5493 = vmatpush1.bf16.msra.mxu0 %v2329
    %5494 = vmatprep.subr.bf16.mxu0 %v2338
    %5495 = vmatpush1.bf16.msra.mxu0 %v2337
    %5496 = vmatprep.subr.bf16.mxu0 %v2346
    %5497 = vmatpush1.bf16.msra.mxu0 %v2345
    %5498 = vmatprep.subr.bf16.mxu0 %v2354
    %5499 = vmatpush1.bf16.msra.mxu0 %v2353
    %5500 = vmatprep.subr.bf16.mxu0 %v2362
    %5501 = vmatpush1.bf16.msra.mxu0 %v2361
    %5502 = vmatprep.subr.bf16.mxu0 %v2370
    %5503 = vmatpush1.bf16.msra.mxu0 %v2369
    %5504 = vmatprep.mubr.bf16.mxu0 %v5406
    %5505 = vmatmul.mubr.bf16.gmra.mrb[0].mxu0 %v5405
    %v5506 = vpop.f32.mrb[0].mxu0
    %v5507 = vadd.f32 %v5417, %v5506
    %v5508 = vpop.f32.mrb[0].mxu0
    %v5509 = vadd.f32 %v5418, %v5508
    %v5510 = vpop.f32.mrb[0].mxu0
    %v5511 = vpop.f32.mrb[0].mxu0
    %5512 = vdwg.mxu0
    %5513 = vmatprep.subr.bf16.mxu0 %v2252
    %5514 = vmatpush1.bf16.msra.mxu0 %v2251
    %5515 = vmatprep.subr.bf16.mxu0 %v2260
    %5516 = vmatpush1.bf16.msra.mxu0 %v2259
    %5517 = vmatprep.subr.bf16.mxu0 %v2268
    %5518 = vmatpush1.bf16.msra.mxu0 %v2267
    %5519 = vmatprep.subr.bf16.mxu0 %v2276
    %5520 = vmatpush1.bf16.msra.mxu0 %v2275
    %5521 = vmatprep.subr.bf16.mxu0 %v2284
    %5522 = vmatpush1.bf16.msra.mxu0 %v2283
    %5523 = vmatprep.subr.bf16.mxu0 %v2292
    %5524 = vmatpush1.bf16.msra.mxu0 %v2291
    %5525 = vmatprep.subr.bf16.mxu0 %v2300
    %5526 = vmatpush1.bf16.msra.mxu0 %v2299
    %5527 = vmatprep.subr.bf16.mxu0 %v2308
    %5528 = vmatpush1.bf16.msra.mxu0 %v2307
    %5529 = vmatprep.subr.bf16.mxu0 %v2316
    %5530 = vmatpush1.bf16.msra.mxu0 %v2315
    %5531 = vmatprep.subr.bf16.mxu0 %v2324
    %5532 = vmatpush1.bf16.msra.mxu0 %v2323
    %5533 = vmatprep.subr.bf16.mxu0 %v2332
    %5534 = vmatpush1.bf16.msra.mxu0 %v2331
    %5535 = vmatprep.subr.bf16.mxu0 %v2340
    %5536 = vmatpush1.bf16.msra.mxu0 %v2339
    %5537 = vmatprep.subr.bf16.mxu0 %v2348
    %5538 = vmatpush1.bf16.msra.mxu0 %v2347
    %5539 = vmatprep.subr.bf16.mxu0 %v2356
    %5540 = vmatpush1.bf16.msra.mxu0 %v2355
    %5541 = vmatprep.subr.bf16.mxu0 %v2364
    %5542 = vmatpush1.bf16.msra.mxu0 %v2363
    %5543 = vmatprep.subr.bf16.mxu0 %v2372
    %5544 = vmatpush1.bf16.msra.mxu0 %v2371
    %5545 = vmatprep.mubr.bf16.mxu0 %v5406
    %5546 = vmatmul.mubr.bf16.gmra.mrb[0].mxu0 %v5405
    %v5547 = vpop.f32.mrb[0].mxu0
    %v5548 = vadd.f32 %v5419, %v5547
    %v5549 = vpop.f32.mrb[0].mxu0
    %v5550 = vadd.f32 %v5420, %v5549
    %v5551 = vpop.f32.mrb[0].mxu0
    %v5552 = vpop.f32.mrb[0].mxu0
    %5553 = vdwg.mxu0
    %5554 = vmatprep.subr.bf16.mxu0 %v2254
    %5555 = vmatpush1.bf16.msra.mxu0 %v2253
    %5556 = vmatprep.subr.bf16.mxu0 %v2262
    %5557 = vmatpush1.bf16.msra.mxu0 %v2261
    %5558 = vmatprep.subr.bf16.mxu0 %v2270
    %5559 = vmatpush1.bf16.msra.mxu0 %v2269
    %5560 = vmatprep.subr.bf16.mxu0 %v2278
    %5561 = vmatpush1.bf16.msra.mxu0 %v2277
    %5562 = vmatprep.subr.bf16.mxu0 %v2286
    %5563 = vmatpush1.bf16.msra.mxu0 %v2285
    %5564 = vmatprep.subr.bf16.mxu0 %v2294
    %5565 = vmatpush1.bf16.msra.mxu0 %v2293
    %5566 = vmatprep.subr.bf16.mxu0 %v2302
    %5567 = vmatpush1.bf16.msra.mxu0 %v2301
    %5568 = vmatprep.subr.bf16.mxu0 %v2310
    %5569 = vmatpush1.bf16.msra.mxu0 %v2309
    %5570 = vmatprep.subr.bf16.mxu0 %v2318
    %5571 = vmatpush1.bf16.msra.mxu0 %v2317
    %5572 = vmatprep.subr.bf16.mxu0 %v2326
    %5573 = vmatpush1.bf16.msra.mxu0 %v2325
    %5574 = vmatprep.subr.bf16.mxu0 %v2334
    %5575 = vmatpush1.bf16.msra.mxu0 %v2333
    %5576 = vmatprep.subr.bf16.mxu0 %v2342
    %5577 = vmatpush1.bf16.msra.mxu0 %v2341
    %5578 = vmatprep.subr.bf16.mxu0 %v2350
    %5579 = vmatpush1.bf16.msra.mxu0 %v2349
    %5580 = vmatprep.subr.bf16.mxu0 %v2358
    %5581 = vmatpush1.bf16.msra.mxu0 %v2357
    %5582 = vmatprep.subr.bf16.mxu0 %v2366
    %5583 = vmatpush1.bf16.msra.mxu0 %v2365
    %5584 = vmatprep.subr.bf16.mxu0 %v2374
    %5585 = vmatpush1.bf16.msra.mxu0 %v2373
    %5586 = vmatprep.mubr.bf16.mxu0 %v5406
    %5587 = vmatmul.mubr.bf16.gmra.mrb[0].mxu0 %v5405
    %v5588 = vpop.f32.mrb[0].mxu0
    %v5589 = vadd.f32 %v5421, %v5588
    %v5590 = vpop.f32.mrb[0].mxu0
    %v5591 = vadd.f32 %v5422, %v5590
    %v5592 = vpop.f32.mrb[0].mxu0
    %v5593 = vpop.f32.mrb[0].mxu0
    %5594 = vdwg.mxu0
    %v5595 = vxor.u32 %v5276, 2147483648
    %v5596 = vxor.u32 %v5278, 2147483648
    %v5597 = vmul.f32 %v5595, 1.442695
    %v5598 = vpow.pop %v5597
    %v5599 = vmul.f32 %v5596, 1.442695
    %v5600 = vpow.pop %v5599
    %v5601 = vadd.f32 %v5598, 1.0
    %v5602 = vadd.f32 %v5600, 1.0
    %v5603 = vrcp.pop %v5601
    %v5604 = vmul.f32 1.0, %v5603
    %v5605 = vrcp.pop %v5602
    %v5606 = vmul.f32 1.0, %v5605
    %v5607 = vxor.u32 %v5317, 2147483648
    %v5608 = vxor.u32 %v5319, 2147483648
    %v5609 = vmul.f32 %v5607, 1.442695
    %v5610 = vpow.pop %v5609
    %v5611 = vmul.f32 %v5608, 1.442695
    %v5612 = vpow.pop %v5611
    %v5613 = vadd.f32 %v5610, 1.0
    %v5614 = vadd.f32 %v5612, 1.0
    %v5615 = vrcp.pop %v5613
    %v5616 = vmul.f32 1.0, %v5615
    %v5617 = vrcp.pop %v5614
    %v5618 = vmul.f32 1.0, %v5617
    %v5619 = vtanh.pop %v5358
    %v5620 = vtanh.pop %v5360
    %v5621 = vxor.u32 %v5399, 2147483648
    %v5622 = vxor.u32 %v5401, 2147483648
    %v5623 = vmul.f32 %v5621, 1.442695
    %v5624 = vpow.pop %v5623
    %v5625 = vmul.f32 %v5622, 1.442695
    %v5626 = vpow.pop %v5625
    %v5627 = vadd.f32 %v5624, 1.0
    %v5628 = vadd.f32 %v5626, 1.0
    %v5629 = vrcp.pop %v5627
    %v5630 = vmul.f32 1.0, %v5629
    %v5631 = vrcp.pop %v5628
    %v5632 = vmul.f32 1.0, %v5631
    %v5633 = vmul.f32 %v5616, %v5145
    %v5634 = vmul.f32 %v5618, %v5146
    %v5635 = vmul.f32 %v5604, %v5619
    %v5636 = vmul.f32 %v5606, %v5620
    %v5637 = vadd.f32 %v5633, %v5635
    %v5638 = vadd.f32 %v5634, %v5636
    %v5639 = vtanh.pop %v5637
    %v5640 = vtanh.pop %v5638
    %v5641 = vmul.f32 %v5630, %v5639
    %v5642 = vmul.f32 %v5632, %v5640
    %v5643 = vxor.u32 %v5466, 2147483648
    %v5644 = vxor.u32 %v5468, 2147483648
    %v5645 = vmul.f32 %v5643, 1.442695
    %v5646 = vpow.pop %v5645
    %v5647 = vmul.f32 %v5644, 1.442695
    %v5648 = vpow.pop %v5647
    %v5649 = vadd.f32 %v5646, 1.0
    %v5650 = vadd.f32 %v5648, 1.0
    %v5651 = vrcp.pop %v5649
    %v5652 = vmul.f32 1.0, %v5651
    %v5653 = vrcp.pop %v5650
    %v5654 = vmul.f32 1.0, %v5653
    %v5655 = vxor.u32 %v5507, 2147483648
    %v5656 = vxor.u32 %v5509, 2147483648
    %v5657 = vmul.f32 %v5655, 1.442695
    %v5658 = vpow.pop %v5657
    %v5659 = vmul.f32 %v5656, 1.442695
    %v5660 = vpow.pop %v5659
    %v5661 = vadd.f32 %v5658, 1.0
    %v5662 = vadd.f32 %v5660, 1.0
    %v5663 = vrcp.pop %v5661
    %v5664 = vmul.f32 1.0, %v5663
    %v5665 = vrcp.pop %v5662
    %v5666 = vmul.f32 1.0, %v5665
    %v5667 = vtanh.pop %v5548
    %v5668 = vtanh.pop %v5550
    %v5669 = vxor.u32 %v5589, 2147483648
    %v5670 = vxor.u32 %v5591, 2147483648
    %v5671 = vmul.f32 %v5669, 1.442695
    %v5672 = vpow.pop %v5671
    %v5673 = vmul.f32 %v5670, 1.442695
    %v5674 = vpow.pop %v5673
    %v5675 = vadd.f32 %v5672, 1.0
    %v5676 = vadd.f32 %v5674, 1.0
    %v5677 = vrcp.pop %v5675
    %v5678 = vmul.f32 1.0, %v5677
    %v5679 = vrcp.pop %v5676
    %v5680 = vmul.f32 1.0, %v5679
    %v5681 = vmul.f32 %v5664, %v5193
    %v5682 = vmul.f32 %v5666, %v5194
    %v5683 = vmul.f32 %v5652, %v5667
    %v5684 = vmul.f32 %v5654, %v5668
    %v5685 = vadd.f32 %v5681, %v5683
    %v5686 = vadd.f32 %v5682, %v5684
    %v5687 = vtanh.pop %v5685
    %v5688 = vtanh.pop %v5686
    %v5689 = vmul.f32 %v5678, %v5687
    %v5690 = vmul.f32 %v5680, %v5688
    %v5691 = vld [vmem:[#allocation2 + $0x80] sm:$0xc0]
    %v5692 = vld [vmem:[#allocation2 + $0x88] sm:$0xc0]
    %v5693 = vld [vmem:[#allocation2 + $0x90] sm:$0xc0]
    %v5694 = vld [vmem:[#allocation2 + $0x98] sm:$0xc0]
    %v5695 = vld [vmem:[#allocation2 + $0xa0] sm:$0xc0]
    %v5696 = vld [vmem:[#allocation2 + $0xa8] sm:$0xc0]
    %v5697 = vld [vmem:[#allocation2 + $0xb0] sm:$0xc0]
    %v5698 = vld [vmem:[#allocation2 + $0xb8] sm:$0xc0]
    %v5699 = vld [vmem:[#allocation2 + $0x40] sm:$0x3]
    %v5700 = vld [vmem:[#allocation2 + $0x48] sm:$0x3]
    %v5701 = vld [vmem:[#allocation2 + $0x50] sm:$0x3]
    %v5702 = vld [vmem:[#allocation2 + $0x58] sm:$0x3]
    %v5703 = vld [vmem:[#allocation2 + $0x60] sm:$0x3]
    %v5704 = vld [vmem:[#allocation2 + $0x68] sm:$0x3]
    %v5705 = vld [vmem:[#allocation2 + $0x70] sm:$0x3]
    %v5706 = vld [vmem:[#allocation2 + $0x78] sm:$0x3]
    %v5707 = vpack.c.bf16 %v5641, %v5641
    %v5708 = vpack.c.bf16 %v5642, %v5642
    %v5717 = vrot.slane %v5691, 6
    %v5718 = vrot.slane %v5692, 6
    %v5719 = vrot.slane %v5693, 6
    %v5720 = vrot.slane %v5694, 6
    %v5721 = vrot.slane %v5695, 6
    %v5722 = vrot.slane %v5696, 6
    %v5723 = vrot.slane %v5697, 6
    %v5724 = vrot.slane %v5698, 6
    %5733 = vmatprep.subr.bf16.mxu0 %v1444
    %5734 = vmatpush1.bf16.msra.mxu0 %v1443
    %5735 = vmatprep.subr.bf16.mxu0 %v1452
    %5736 = vmatpush1.bf16.msra.mxu0 %v1451
    %5737 = vmatprep.subr.bf16.mxu0 %v1460
    %5738 = vmatpush1.bf16.msra.mxu0 %v1459
    %5739 = vmatprep.subr.bf16.mxu0 %v1468
    %5740 = vmatpush1.bf16.msra.mxu0 %v1467
    %5741 = vmatprep.subr.bf16.mxu0 %v1476
    %5742 = vmatpush1.bf16.msra.mxu0 %v1475
    %5743 = vmatprep.subr.bf16.mxu0 %v1484
    %5744 = vmatpush1.bf16.msra.mxu0 %v1483
    %5745 = vmatprep.subr.bf16.mxu0 %v1492
    %5746 = vmatpush1.bf16.msra.mxu0 %v1491
    %5747 = vmatprep.subr.bf16.mxu0 %v1500
    %5748 = vmatpush1.bf16.msra.mxu0 %v1499
    %5749 = vmatprep.subr.bf16.mxu0 %v1508
    %5750 = vmatpush1.bf16.msra.mxu0 %v1507
    %5751 = vmatprep.subr.bf16.mxu0 %v1516
    %5752 = vmatpush1.bf16.msra.mxu0 %v1515
    %5753 = vmatprep.subr.bf16.mxu0 %v1524
    %5754 = vmatpush1.bf16.msra.mxu0 %v1523
    %5755 = vmatprep.subr.bf16.mxu0 %v1532
    %5756 = vmatpush1.bf16.msra.mxu0 %v1531
    %5757 = vmatprep.subr.bf16.mxu0 %v1540
    %5758 = vmatpush1.bf16.msra.mxu0 %v1539
    %5759 = vmatprep.subr.bf16.mxu0 %v1548
    %5760 = vmatpush1.bf16.msra.mxu0 %v1547
    %5761 = vmatprep.subr.bf16.mxu0 %v1556
    %5762 = vmatpush1.bf16.msra.mxu0 %v1555
    %5763 = vmatprep.subr.bf16.mxu0 %v1564
    %5764 = vmatpush1.bf16.msra.mxu0 %v1563
    %5765 = vmatprep.mubr.bf16.mxu0 %v5708
    %5766 = vmatmul.mubr.bf16.gmra.mrb[0].mxu0 %v5707
    %v5767 = vpop.f32.mrb[0].mxu0
    %v5768 = vadd.f32 %v5717, %v5767
    %v5769 = vpop.f32.mrb[0].mxu0
    %v5770 = vadd.f32 %v5718, %v5769
    %v5771 = vpop.f32.mrb[0].mxu0
    %v5772 = vpop.f32.mrb[0].mxu0
    %5773 = vdwg.mxu0
    %5774 = vmatprep.subr.bf16.mxu0 %v1446
    %5775 = vmatpush1.bf16.msra.mxu0 %v1445
    %5776 = vmatprep.subr.bf16.mxu0 %v1454
    %5777 = vmatpush1.bf16.msra.mxu0 %v1453
    %5778 = vmatprep.subr.bf16.mxu0 %v1462
    %5779 = vmatpush1.bf16.msra.mxu0 %v1461
    %5780 = vmatprep.subr.bf16.mxu0 %v1470
    %5781 = vmatpush1.bf16.msra.mxu0 %v1469
    %5782 = vmatprep.subr.bf16.mxu0 %v1478
    %5783 = vmatpush1.bf16.msra.mxu0 %v1477
    %5784 = vmatprep.subr.bf16.mxu0 %v1486
    %5785 = vmatpush1.bf16.msra.mxu0 %v1485
    %5786 = vmatprep.subr.bf16.mxu0 %v1494
    %5787 = vmatpush1.bf16.msra.mxu0 %v1493
    %5788 = vmatprep.subr.bf16.mxu0 %v1502
    %5789 = vmatpush1.bf16.msra.mxu0 %v1501
    %5790 = vmatprep.subr.bf16.mxu0 %v1510
    %5791 = vmatpush1.bf16.msra.mxu0 %v1509
    %5792 = vmatprep.subr.bf16.mxu0 %v1518
    %5793 = vmatpush1.bf16.msra.mxu0 %v1517
    %5794 = vmatprep.subr.bf16.mxu0 %v1526
    %5795 = vmatpush1.bf16.msra.mxu0 %v1525
    %5796 = vmatprep.subr.bf16.mxu0 %v1534
    %5797 = vmatpush1.bf16.msra.mxu0 %v1533
    %5798 = vmatprep.subr.bf16.mxu0 %v1542
    %5799 = vmatpush1.bf16.msra.mxu0 %v1541
    %5800 = vmatprep.subr.bf16.mxu0 %v1550
    %5801 = vmatpush1.bf16.msra.mxu0 %v1549
    %5802 = vmatprep.subr.bf16.mxu0 %v1558
    %5803 = vmatpush1.bf16.msra.mxu0 %v1557
    %5804 = vmatprep.subr.bf16.mxu0 %v1566
    %5805 = vmatpush1.bf16.msra.mxu0 %v1565
    %5806 = vmatprep.mubr.bf16.mxu0 %v5708
    %5807 = vmatmul.mubr.bf16.gmra.mrb[0].mxu0 %v5707
    %v5808 = vpop.f32.mrb[0].mxu0
    %v5809 = vadd.f32 %v5719, %v5808
    %v5810 = vpop.f32.mrb[0].mxu0
    %v5811 = vadd.f32 %v5720, %v5810
    %v5812 = vpop.f32.mrb[0].mxu0
    %v5813 = vpop.f32.mrb[0].mxu0
    %5814 = vdwg.mxu0
    %5815 = vmatprep.subr.bf16.mxu0 %v1448
    %5816 = vmatpush1.bf16.msra.mxu0 %v1447
    %5817 = vmatprep.subr.bf16.mxu0 %v1456
    %5818 = vmatpush1.bf16.msra.mxu0 %v1455
    %5819 = vmatprep.subr.bf16.mxu0 %v1464
    %5820 = vmatpush1.bf16.msra.mxu0 %v1463
    %5821 = vmatprep.subr.bf16.mxu0 %v1472
    %5822 = vmatpush1.bf16.msra.mxu0 %v1471
    %5823 = vmatprep.subr.bf16.mxu0 %v1480
    %5824 = vmatpush1.bf16.msra.mxu0 %v1479
    %5825 = vmatprep.subr.bf16.mxu0 %v1488
    %5826 = vmatpush1.bf16.msra.mxu0 %v1487
    %5827 = vmatprep.subr.bf16.mxu0 %v1496
    %5828 = vmatpush1.bf16.msra.mxu0 %v1495
    %5829 = vmatprep.subr.bf16.mxu0 %v1504
    %5830 = vmatpush1.bf16.msra.mxu0 %v1503
    %5831 = vmatprep.subr.bf16.mxu0 %v1512
    %5832 = vmatpush1.bf16.msra.mxu0 %v1511
    %5833 = vmatprep.subr.bf16.mxu0 %v1520
    %5834 = vmatpush1.bf16.msra.mxu0 %v1519
    %5835 = vmatprep.subr.bf16.mxu0 %v1528
    %5836 = vmatpush1.bf16.msra.mxu0 %v1527
    %5837 = vmatprep.subr.bf16.mxu0 %v1536
    %5838 = vmatpush1.bf16.msra.mxu0 %v1535
    %5839 = vmatprep.subr.bf16.mxu0 %v1544
    %5840 = vmatpush1.bf16.msra.mxu0 %v1543
    %5841 = vmatprep.subr.bf16.mxu0 %v1552
    %5842 = vmatpush1.bf16.msra.mxu0 %v1551
    %5843 = vmatprep.subr.bf16.mxu0 %v1560
    %5844 = vmatpush1.bf16.msra.mxu0 %v1559
    %5845 = vmatprep.subr.bf16.mxu0 %v1568
    %5846 = vmatpush1.bf16.msra.mxu0 %v1567
    %5847 = vmatprep.mubr.bf16.mxu0 %v5708
    %5848 = vmatmul.mubr.bf16.gmra.mrb[0].mxu0 %v5707
    %v5849 = vpop.f32.mrb[0].mxu0
    %v5850 = vadd.f32 %v5721, %v5849
    %v5851 = vpop.f32.mrb[0].mxu0
    %v5852 = vadd.f32 %v5722, %v5851
    %v5853 = vpop.f32.mrb[0].mxu0
    %v5854 = vpop.f32.mrb[0].mxu0
    %5855 = vdwg.mxu0
    %5856 = vmatprep.subr.bf16.mxu0 %v1450
    %5857 = vmatpush1.bf16.msra.mxu0 %v1449
    %5858 = vmatprep.subr.bf16.mxu0 %v1458
    %5859 = vmatpush1.bf16.msra.mxu0 %v1457
    %5860 = vmatprep.subr.bf16.mxu0 %v1466
    %5861 = vmatpush1.bf16.msra.mxu0 %v1465
    %5862 = vmatprep.subr.bf16.mxu0 %v1474
    %5863 = vmatpush1.bf16.msra.mxu0 %v1473
    %5864 = vmatprep.subr.bf16.mxu0 %v1482
    %5865 = vmatpush1.bf16.msra.mxu0 %v1481
    %5866 = vmatprep.subr.bf16.mxu0 %v1490
    %5867 = vmatpush1.bf16.msra.mxu0 %v1489
    %5868 = vmatprep.subr.bf16.mxu0 %v1498
    %5869 = vmatpush1.bf16.msra.mxu0 %v1497
    %5870 = vmatprep.subr.bf16.mxu0 %v1506
    %5871 = vmatpush1.bf16.msra.mxu0 %v1505
    %5872 = vmatprep.subr.bf16.mxu0 %v1514
    %5873 = vmatpush1.bf16.msra.mxu0 %v1513
    %5874 = vmatprep.subr.bf16.mxu0 %v1522
    %5875 = vmatpush1.bf16.msra.mxu0 %v1521
    %5876 = vmatprep.subr.bf16.mxu0 %v1530
    %5877 = vmatpush1.bf16.msra.mxu0 %v1529
    %5878 = vmatprep.subr.bf16.mxu0 %v1538
    %5879 = vmatpush1.bf16.msra.mxu0 %v1537
    %5880 = vmatprep.subr.bf16.mxu0 %v1546
    %5881 = vmatpush1.bf16.msra.mxu0 %v1545
    %5882 = vmatprep.subr.bf16.mxu0 %v1554
    %5883 = vmatpush1.bf16.msra.mxu0 %v1553
    %5884 = vmatprep.subr.bf16.mxu0 %v1562
    %5885 = vmatpush1.bf16.msra.mxu0 %v1561
    %5886 = vmatprep.subr.bf16.mxu0 %v1570
    %5887 = vmatpush1.bf16.msra.mxu0 %v1569
    %5888 = vmatprep.mubr.bf16.mxu0 %v5708
    %5889 = vmatmul.mubr.bf16.gmra.mrb[0].mxu0 %v5707
    %v5890 = vpop.f32.mrb[0].mxu0
    %v5891 = vadd.f32 %v5723, %v5890
    %v5892 = vpop.f32.mrb[0].mxu0
    %v5893 = vadd.f32 %v5724, %v5892
    %v5894 = vpop.f32.mrb[0].mxu0
    %v5895 = vpop.f32.mrb[0].mxu0
    %5896 = vdwg.mxu0
    %v5897 = vpack.c.bf16 %v5689, %v5689
    %v5898 = vpack.c.bf16 %v5690, %v5690
    %5899 = vmatprep.subr.bf16.mxu0 %v2248
    %5900 = vmatpush1.bf16.msra.mxu0 %v2247
    %5901 = vmatprep.subr.bf16.mxu0 %v2256
    %5902 = vmatpush1.bf16.msra.mxu0 %v2255
    %5903 = vmatprep.subr.bf16.mxu0 %v2264
    %5904 = vmatpush1.bf16.msra.mxu0 %v2263
    %5905 = vmatprep.subr.bf16.mxu0 %v2272
    %5906 = vmatpush1.bf16.msra.mxu0 %v2271
    %5907 = vmatprep.subr.bf16.mxu0 %v2280
    %5908 = vmatpush1.bf16.msra.mxu0 %v2279
    %5909 = vmatprep.subr.bf16.mxu0 %v2288
    %5910 = vmatpush1.bf16.msra.mxu0 %v2287
    %5911 = vmatprep.subr.bf16.mxu0 %v2296
    %5912 = vmatpush1.bf16.msra.mxu0 %v2295
    %5913 = vmatprep.subr.bf16.mxu0 %v2304
    %5914 = vmatpush1.bf16.msra.mxu0 %v2303
    %5915 = vmatprep.subr.bf16.mxu0 %v2312
    %5916 = vmatpush1.bf16.msra.mxu0 %v2311
    %5917 = vmatprep.subr.bf16.mxu0 %v2320
    %5918 = vmatpush1.bf16.msra.mxu0 %v2319
    %5919 = vmatprep.subr.bf16.mxu0 %v2328
    %5920 = vmatpush1.bf16.msra.mxu0 %v2327
    %5921 = vmatprep.subr.bf16.mxu0 %v2336
    %5922 = vmatpush1.bf16.msra.mxu0 %v2335
    %5923 = vmatprep.subr.bf16.mxu0 %v2344
    %5924 = vmatpush1.bf16.msra.mxu0 %v2343
    %5925 = vmatprep.subr.bf16.mxu0 %v2352
    %5926 = vmatpush1.bf16.msra.mxu0 %v2351
    %5927 = vmatprep.subr.bf16.mxu0 %v2360
    %5928 = vmatpush1.bf16.msra.mxu0 %v2359
    %5929 = vmatprep.subr.bf16.mxu0 %v2368
    %5930 = vmatpush1.bf16.msra.mxu0 %v2367
    %5931 = vmatprep.mubr.bf16.mxu0 %v5898
    %5932 = vmatmul.mubr.bf16.gmra.mrb[0].mxu0 %v5897
    %v5933 = vpop.f32.mrb[0].mxu0
    %v5934 = vadd.f32 %v5699, %v5933
    %v5935 = vpop.f32.mrb[0].mxu0
    %v5936 = vadd.f32 %v5700, %v5935
    %v5937 = vpop.f32.mrb[0].mxu0
    %v5938 = vpop.f32.mrb[0].mxu0
    %5939 = vdwg.mxu0
    %5940 = vmatprep.subr.bf16.mxu0 %v2250
    %5941 = vmatpush1.bf16.msra.mxu0 %v2249
    %5942 = vmatprep.subr.bf16.mxu0 %v2258
    %5943 = vmatpush1.bf16.msra.mxu0 %v2257
    %5944 = vmatprep.subr.bf16.mxu0 %v2266
    %5945 = vmatpush1.bf16.msra.mxu0 %v2265
    %5946 = vmatprep.subr.bf16.mxu0 %v2274
    %5947 = vmatpush1.bf16.msra.mxu0 %v2273
    %5948 = vmatprep.subr.bf16.mxu0 %v2282
    %5949 = vmatpush1.bf16.msra.mxu0 %v2281
    %5950 = vmatprep.subr.bf16.mxu0 %v2290
    %5951 = vmatpush1.bf16.msra.mxu0 %v2289
    %5952 = vmatprep.subr.bf16.mxu0 %v2298
    %5953 = vmatpush1.bf16.msra.mxu0 %v2297
    %5954 = vmatprep.subr.bf16.mxu0 %v2306
    %5955 = vmatpush1.bf16.msra.mxu0 %v2305
    %5956 = vmatprep.subr.bf16.mxu0 %v2314
    %5957 = vmatpush1.bf16.msra.mxu0 %v2313
    %5958 = vmatprep.subr.bf16.mxu0 %v2322
    %5959 = vmatpush1.bf16.msra.mxu0 %v2321
    %5960 = vmatprep.subr.bf16.mxu0 %v2330
    %5961 = vmatpush1.bf16.msra.mxu0 %v2329
    %5962 = vmatprep.subr.bf16.mxu0 %v2338
    %5963 = vmatpush1.bf16.msra.mxu0 %v2337
    %5964 = vmatprep.subr.bf16.mxu0 %v2346
    %5965 = vmatpush1.bf16.msra.mxu0 %v2345
    %5966 = vmatprep.subr.bf16.mxu0 %v2354
    %5967 = vmatpush1.bf16.msra.mxu0 %v2353
    %5968 = vmatprep.subr.bf16.mxu0 %v2362
    %5969 = vmatpush1.bf16.msra.mxu0 %v2361
    %5970 = vmatprep.subr.bf16.mxu0 %v2370
    %5971 = vmatpush1.bf16.msra.mxu0 %v2369
    %5972 = vmatprep.mubr.bf16.mxu0 %v5898
    %5973 = vmatmul.mubr.bf16.gmra.mrb[0].mxu0 %v5897
    %v5974 = vpop.f32.mrb[0].mxu0
    %v5975 = vadd.f32 %v5701, %v5974
    %v5976 = vpop.f32.mrb[0].mxu0
    %v5977 = vadd.f32 %v5702, %v5976
    %v5978 = vpop.f32.mrb[0].mxu0
    %v5979 = vpop.f32.mrb[0].mxu0
    %5980 = vdwg.mxu0
    %5981 = vmatprep.subr.bf16.mxu0 %v2252
    %5982 = vmatpush1.bf16.msra.mxu0 %v2251
    %5983 = vmatprep.subr.bf16.mxu0 %v2260
    %5984 = vmatpush1.bf16.msra.mxu0 %v2259
    %5985 = vmatprep.subr.bf16.mxu0 %v2268
    %5986 = vmatpush1.bf16.msra.mxu0 %v2267
    %5987 = vmatprep.subr.bf16.mxu0 %v2276
    %5988 = vmatpush1.bf16.msra.mxu0 %v2275
    %5989 = vmatprep.subr.bf16.mxu0 %v2284
    %5990 = vmatpush1.bf16.msra.mxu0 %v2283
    %5991 = vmatprep.subr.bf16.mxu0 %v2292
    %5992 = vmatpush1.bf16.msra.mxu0 %v2291
    %5993 = vmatprep.subr.bf16.mxu0 %v2300
    %5994 = vmatpush1.bf16.msra.mxu0 %v2299
    %5995 = vmatprep.subr.bf16.mxu0 %v2308
    %5996 = vmatpush1.bf16.msra.mxu0 %v2307
    %5997 = vmatprep.subr.bf16.mxu0 %v2316
    %5998 = vmatpush1.bf16.msra.mxu0 %v2315
    %5999 = vmatprep.subr.bf16.mxu0 %v2324
    %6000 = vmatpush1.bf16.msra.mxu0 %v2323
    %6001 = vmatprep.subr.bf16.mxu0 %v2332
    %6002 = vmatpush1.bf16.msra.mxu0 %v2331
    %6003 = vmatprep.subr.bf16.mxu0 %v2340
    %6004 = vmatpush1.bf16.msra.mxu0 %v2339
    %6005 = vmatprep.subr.bf16.mxu0 %v2348
    %6006 = vmatpush1.bf16.msra.mxu0 %v2347
    %6007 = vmatprep.subr.bf16.mxu0 %v2356
    %6008 = vmatpush1.bf16.msra.mxu0 %v2355
    %6009 = vmatprep.subr.bf16.mxu0 %v2364
    %6010 = vmatpush1.bf16.msra.mxu0 %v2363
    %6011 = vmatprep.subr.bf16.mxu0 %v2372
    %6012 = vmatpush1.bf16.msra.mxu0 %v2371
    %6013 = vmatprep.mubr.bf16.mxu0 %v5898
    %6014 = vmatmul.mubr.bf16.gmra.mrb[0].mxu0 %v5897
    %v6015 = vpop.f32.mrb[0].mxu0
    %v6016 = vadd.f32 %v5703, %v6015
    %v6017 = vpop.f32.mrb[0].mxu0
    %v6018 = vadd.f32 %v5704, %v6017
    %v6019 = vpop.f32.mrb[0].mxu0
    %v6020 = vpop.f32.mrb[0].mxu0
    %6021 = vdwg.mxu0
    %6022 = vmatprep.subr.bf16.mxu0 %v2254
    %6023 = vmatpush1.bf16.msra.mxu0 %v2253
    %6024 = vmatprep.subr.bf16.mxu0 %v2262
    %6025 = vmatpush1.bf16.msra.mxu0 %v2261
    %6026 = vmatprep.subr.bf16.mxu0 %v2270
    %6027 = vmatpush1.bf16.msra.mxu0 %v2269
    %6028 = vmatprep.subr.bf16.mxu0 %v2278
    %6029 = vmatpush1.bf16.msra.mxu0 %v2277
    %6030 = vmatprep.subr.bf16.mxu0 %v2286
    %6031 = vmatpush1.bf16.msra.mxu0 %v2285
    %6032 = vmatprep.subr.bf16.mxu0 %v2294
    %6033 = vmatpush1.bf16.msra.mxu0 %v2293
    %6034 = vmatprep.subr.bf16.mxu0 %v2302
    %6035 = vmatpush1.bf16.msra.mxu0 %v2301
    %6036 = vmatprep.subr.bf16.mxu0 %v2310
    %6037 = vmatpush1.bf16.msra.mxu0 %v2309
    %6038 = vmatprep.subr.bf16.mxu0 %v2318
    %6039 = vmatpush1.bf16.msra.mxu0 %v2317
    %6040 = vmatprep.subr.bf16.mxu0 %v2326
    %6041 = vmatpush1.bf16.msra.mxu0 %v2325
    %6042 = vmatprep.subr.bf16.mxu0 %v2334
    %6043 = vmatpush1.bf16.msra.mxu0 %v2333
    %6044 = vmatprep.subr.bf16.mxu0 %v2342
    %6045 = vmatpush1.bf16.msra.mxu0 %v2341
    %6046 = vmatprep.subr.bf16.mxu0 %v2350
    %6047 = vmatpush1.bf16.msra.mxu0 %v2349
    %6048 = vmatprep.subr.bf16.mxu0 %v2358
    %6049 = vmatpush1.bf16.msra.mxu0 %v2357
    %6050 = vmatprep.subr.bf16.mxu0 %v2366
    %6051 = vmatpush1.bf16.msra.mxu0 %v2365
    %6052 = vmatprep.subr.bf16.mxu0 %v2374
    %6053 = vmatpush1.bf16.msra.mxu0 %v2373
    %6054 = vmatprep.mubr.bf16.mxu0 %v5898
    %6055 = vmatmul.mubr.bf16.gmra.mrb[0].mxu0 %v5897
    %v6056 = vpop.f32.mrb[0].mxu0
    %v6057 = vadd.f32 %v5705, %v6056
    %v6058 = vpop.f32.mrb[0].mxu0
    %v6059 = vadd.f32 %v5706, %v6058
    %v6060 = vpop.f32.mrb[0].mxu0
    %v6061 = vpop.f32.mrb[0].mxu0
    %6062 = vdwg.mxu0
    %v6063 = vxor.u32 %v5768, 2147483648
    %v6064 = vxor.u32 %v5770, 2147483648
    %v6065 = vmul.f32 %v6063, 1.442695
    %v6066 = vpow.pop %v6065
    %v6067 = vmul.f32 %v6064, 1.442695
    %v6068 = vpow.pop %v6067
    %v6069 = vadd.f32 %v6066, 1.0
    %v6070 = vadd.f32 %v6068, 1.0
    %v6071 = vrcp.pop %v6069
    %v6072 = vmul.f32 1.0, %v6071
    %v6073 = vrcp.pop %v6070
    %v6074 = vmul.f32 1.0, %v6073
    %v6075 = vxor.u32 %v5809, 2147483648
    %v6076 = vxor.u32 %v5811, 2147483648
    %v6077 = vmul.f32 %v6075, 1.442695
    %v6078 = vpow.pop %v6077
    %v6079 = vmul.f32 %v6076, 1.442695
    %v6080 = vpow.pop %v6079
    %v6081 = vadd.f32 %v6078, 1.0
    %v6082 = vadd.f32 %v6080, 1.0
    %v6083 = vrcp.pop %v6081
    %v6084 = vmul.f32 1.0, %v6083
    %v6085 = vrcp.pop %v6082
    %v6086 = vmul.f32 1.0, %v6085
    %v6087 = vtanh.pop %v5850
    %v6088 = vtanh.pop %v5852
    %v6089 = vxor.u32 %v5891, 2147483648
    %v6090 = vxor.u32 %v5893, 2147483648
    %v6091 = vmul.f32 %v6089, 1.442695
    %v6092 = vpow.pop %v6091
    %v6093 = vmul.f32 %v6090, 1.442695
    %v6094 = vpow.pop %v6093
    %v6095 = vadd.f32 %v6092, 1.0
    %v6096 = vadd.f32 %v6094, 1.0
    %v6097 = vrcp.pop %v6095
    %v6098 = vmul.f32 1.0, %v6097
    %v6099 = vrcp.pop %v6096
    %v6100 = vmul.f32 1.0, %v6099
    %v6101 = vmul.f32 %v6084, %v5637
    %v6102 = vmul.f32 %v6086, %v5638
    %v6103 = vmul.f32 %v6072, %v6087
    %v6104 = vmul.f32 %v6074, %v6088
    %v6105 = vadd.f32 %v6101, %v6103
    %v6106 = vadd.f32 %v6102, %v6104
    %v6107 = vtanh.pop %v6105
    %v6108 = vtanh.pop %v6106
    %v6109 = vmul.f32 %v6098, %v6107
    %v6110 = vmul.f32 %v6100, %v6108
    %v6111 = vxor.u32 %v5934, 2147483648
    %v6112 = vxor.u32 %v5936, 2147483648
    %v6113 = vmul.f32 %v6111, 1.442695
    %v6114 = vpow.pop %v6113
    %v6115 = vmul.f32 %v6112, 1.442695
    %v6116 = vpow.pop %v6115
    %v6117 = vadd.f32 %v6114, 1.0
    %v6118 = vadd.f32 %v6116, 1.0
    %v6119 = vrcp.pop %v6117
    %v6120 = vmul.f32 1.0, %v6119
    %v6121 = vrcp.pop %v6118
    %v6122 = vmul.f32 1.0, %v6121
    %v6123 = vxor.u32 %v5975, 2147483648
    %v6124 = vxor.u32 %v5977, 2147483648
    %v6125 = vmul.f32 %v6123, 1.442695
    %v6126 = vpow.pop %v6125
    %v6127 = vmul.f32 %v6124, 1.442695
    %v6128 = vpow.pop %v6127
    %v6129 = vadd.f32 %v6126, 1.0
    %v6130 = vadd.f32 %v6128, 1.0
    %v6131 = vrcp.pop %v6129
    %v6132 = vmul.f32 1.0, %v6131
    %v6133 = vrcp.pop %v6130
    %v6134 = vmul.f32 1.0, %v6133
    %v6135 = vtanh.pop %v6016
    %v6136 = vtanh.pop %v6018
    %v6137 = vxor.u32 %v6057, 2147483648
    %v6138 = vxor.u32 %v6059, 2147483648
    %v6139 = vmul.f32 %v6137, 1.442695
    %v6140 = vpow.pop %v6139
    %v6141 = vmul.f32 %v6138, 1.442695
    %v6142 = vpow.pop %v6141
    %v6143 = vadd.f32 %v6140, 1.0
    %v6144 = vadd.f32 %v6142, 1.0
    %v6145 = vrcp.pop %v6143
    %v6146 = vmul.f32 1.0, %v6145
    %v6147 = vrcp.pop %v6144
    %v6148 = vmul.f32 1.0, %v6147
    %v6149 = vmul.f32 %v6132, %v5685
    %v6150 = vmul.f32 %v6134, %v5686
    %v6151 = vmul.f32 %v6120, %v6135
    %v6152 = vmul.f32 %v6122, %v6136
    %v6153 = vadd.f32 %v6149, %v6151
    %v6154 = vadd.f32 %v6150, %v6152
    %v6155 = vtanh.pop %v6153
    %v6156 = vtanh.pop %v6154
    %v6157 = vmul.f32 %v6146, %v6155
    %v6158 = vmul.f32 %v6148, %v6156
    %v6159 = vpack.c.bf16 %v6109, %v6109
    %v6160 = vpack.c.bf16 %v6110, %v6110
    %v6161 = vld [vmem:[#allocation12] sm:$0xf]
    %v6162 = vld [vmem:[#allocation12 + $0x4] sm:$0xf]
    %v6163 = vld [vmem:[#allocation12 + $0x8] sm:$0xf]
    %v6164 = vld [vmem:[#allocation12 + $0xc] sm:$0xf]
    %v6165 = vld [vmem:[#allocation12 + $0x10] sm:$0xf]
    %v6166 = vld [vmem:[#allocation12 + $0x14] sm:$0xf]
    %v6167 = vld [vmem:[#allocation12 + $0x18] sm:$0xf]
    %v6168 = vld [vmem:[#allocation12 + $0x1c] sm:$0xf]
    %v6169 = vld [vmem:[#allocation12 + $0x20] sm:$0xf]
    %v6170 = vld [vmem:[#allocation12 + $0x24] sm:$0xf]
    %v6171 = vld [vmem:[#allocation12 + $0x28] sm:$0xf]
    %v6172 = vld [vmem:[#allocation12 + $0x2c] sm:$0xf]
    %v6173 = vld [vmem:[#allocation12 + $0x30] sm:$0xf]
    %v6174 = vld [vmem:[#allocation12 + $0x34] sm:$0xf]
    %v6175 = vld [vmem:[#allocation12 + $0x38] sm:$0xf]
    %v6176 = vld [vmem:[#allocation12 + $0x3c] sm:$0xf]
    %v6177 = vld [vmem:[#allocation12 + $0x40] sm:$0xf]
    %v6178 = vld [vmem:[#allocation12 + $0x44] sm:$0xf]
    %v6179 = vld [vmem:[#allocation12 + $0x48] sm:$0xf]
    %v6180 = vld [vmem:[#allocation12 + $0x4c] sm:$0xf]
    %v6181 = vld [vmem:[#allocation12 + $0x50] sm:$0xf]
    %v6182 = vld [vmem:[#allocation12 + $0x54] sm:$0xf]
    %v6183 = vld [vmem:[#allocation12 + $0x58] sm:$0xf]
    %v6184 = vld [vmem:[#allocation12 + $0x5c] sm:$0xf]
    %v6185 = vld [vmem:[#allocation12 + $0x60] sm:$0xf]
    %v6186 = vld [vmem:[#allocation12 + $0x64] sm:$0xf]
    %v6187 = vld [vmem:[#allocation12 + $0x68] sm:$0xf]
    %v6188 = vld [vmem:[#allocation12 + $0x6c] sm:$0xf]
    %v6189 = vld [vmem:[#allocation12 + $0x70] sm:$0xf]
    %v6190 = vld [vmem:[#allocation12 + $0x74] sm:$0xf]
    %v6191 = vld [vmem:[#allocation12 + $0x78] sm:$0xf]
    %v6192 = vld [vmem:[#allocation12 + $0x7c] sm:$0xf]
    %v6193 = vpack.c.bf16 %v6157, %v6157
    %v6194 = vpack.c.bf16 %v6158, %v6158
    %v6195 = vld [vmem:[#allocation14] sm:$0xf]
    %v6196 = vld [vmem:[#allocation14 + $0x4] sm:$0xf]
    %v6197 = vld [vmem:[#allocation14 + $0x8] sm:$0xf]
    %v6198 = vld [vmem:[#allocation14 + $0xc] sm:$0xf]
    %v6199 = vld [vmem:[#allocation14 + $0x10] sm:$0xf]
    %v6200 = vld [vmem:[#allocation14 + $0x14] sm:$0xf]
    %v6201 = vld [vmem:[#allocation14 + $0x18] sm:$0xf]
    %v6202 = vld [vmem:[#allocation14 + $0x1c] sm:$0xf]
    %v6203 = vld [vmem:[#allocation14 + $0x20] sm:$0xf]
    %v6204 = vld [vmem:[#allocation14 + $0x24] sm:$0xf]
    %v6205 = vld [vmem:[#allocation14 + $0x28] sm:$0xf]
    %v6206 = vld [vmem:[#allocation14 + $0x2c] sm:$0xf]
    %v6207 = vld [vmem:[#allocation14 + $0x30] sm:$0xf]
    %v6208 = vld [vmem:[#allocation14 + $0x34] sm:$0xf]
    %v6209 = vld [vmem:[#allocation14 + $0x38] sm:$0xf]
    %v6210 = vld [vmem:[#allocation14 + $0x3c] sm:$0xf]
    %v6211 = vld [vmem:[#allocation14 + $0x40] sm:$0xf]
    %v6212 = vld [vmem:[#allocation14 + $0x44] sm:$0xf]
    %v6213 = vld [vmem:[#allocation14 + $0x48] sm:$0xf]
    %v6214 = vld [vmem:[#allocation14 + $0x4c] sm:$0xf]
    %v6215 = vld [vmem:[#allocation14 + $0x50] sm:$0xf]
    %v6216 = vld [vmem:[#allocation14 + $0x54] sm:$0xf]
    %v6217 = vld [vmem:[#allocation14 + $0x58] sm:$0xf]
    %v6218 = vld [vmem:[#allocation14 + $0x5c] sm:$0xf]
    %v6219 = vld [vmem:[#allocation14 + $0x60] sm:$0xf]
    %v6220 = vld [vmem:[#allocation14 + $0x64] sm:$0xf]
    %v6221 = vld [vmem:[#allocation14 + $0x68] sm:$0xf]
    %v6222 = vld [vmem:[#allocation14 + $0x6c] sm:$0xf]
    %v6223 = vld [vmem:[#allocation14 + $0x70] sm:$0xf]
    %v6224 = vld [vmem:[#allocation14 + $0x74] sm:$0xf]
    %v6225 = vld [vmem:[#allocation14 + $0x78] sm:$0xf]
    %v6226 = vld [vmem:[#allocation14 + $0x7c] sm:$0xf]
    %v6259 = vunpack.c.l.b16 %v6195
    %v6260 = vunpack.c.l.b16 %v6196
    %v6261 = vunpack.c.l.b16 %v6197
    %v6262 = vunpack.c.l.b16 %v6198
    %v6263 = vunpack.c.l.b16 %v6199
    %v6264 = vunpack.c.l.b16 %v6200
    %v6265 = vunpack.c.l.b16 %v6201
    %v6266 = vunpack.c.l.b16 %v6202
    %v6267 = vunpack.c.l.b16 %v6203
    %v6268 = vunpack.c.l.b16 %v6204
    %v6269 = vunpack.c.l.b16 %v6205
    %v6270 = vunpack.c.l.b16 %v6206
    %v6271 = vunpack.c.l.b16 %v6207
    %v6272 = vunpack.c.l.b16 %v6208
    %v6273 = vunpack.c.l.b16 %v6209
    %v6274 = vunpack.c.l.b16 %v6210
    %v6275 = vunpack.c.l.b16 %v6211
    %v6276 = vunpack.c.l.b16 %v6212
    %v6277 = vunpack.c.l.b16 %v6213
    %v6278 = vunpack.c.l.b16 %v6214
    %v6279 = vunpack.c.l.b16 %v6215
    %v6280 = vunpack.c.l.b16 %v6216
    %v6281 = vunpack.c.l.b16 %v6217
    %v6282 = vunpack.c.l.b16 %v6218
    %v6283 = vunpack.c.l.b16 %v6219
    %v6284 = vunpack.c.l.b16 %v6220
    %v6285 = vunpack.c.l.b16 %v6221
    %v6286 = vunpack.c.l.b16 %v6222
    %v6287 = vunpack.c.l.b16 %v6223
    %v6288 = vunpack.c.l.b16 %v6224
    %v6289 = vunpack.c.l.b16 %v6225
    %v6290 = vunpack.c.l.b16 %v6226
    %v6291 = vpack.c.b16 %v6260, %v6259
    %v6292 = vpack.c.b16 %v6262, %v6261
    %v6293 = vpack.c.b16 %v6264, %v6263
    %v6294 = vpack.c.b16 %v6266, %v6265
    %v6295 = vpack.c.b16 %v6268, %v6267
    %v6296 = vpack.c.b16 %v6270, %v6269
    %v6297 = vpack.c.b16 %v6272, %v6271
    %v6298 = vpack.c.b16 %v6274, %v6273
    %v6299 = vpack.c.b16 %v6276, %v6275
    %v6300 = vpack.c.b16 %v6278, %v6277
    %v6301 = vpack.c.b16 %v6280, %v6279
    %v6302 = vpack.c.b16 %v6282, %v6281
    %v6303 = vpack.c.b16 %v6284, %v6283
    %v6304 = vpack.c.b16 %v6286, %v6285
    %v6305 = vpack.c.b16 %v6288, %v6287
    %v6306 = vpack.c.b16 %v6290, %v6289
    %6323 = vmatprep.subr.bf16.mxu0 0
    %6324 = vmatpush1.bf16.msra.mxu0 %v6291
    %6325 = vmatprep.subr.bf16.mxu0 0
    %6326 = vmatpush1.bf16.msra.mxu0 %v6292
    %6327 = vmatprep.subr.bf16.mxu0 0
    %6328 = vmatpush1.bf16.msra.mxu0 %v6293
    %6329 = vmatprep.subr.bf16.mxu0 0
    %6330 = vmatpush1.bf16.msra.mxu0 %v6294
    %6331 = vmatprep.subr.bf16.mxu0 0
    %6332 = vmatpush1.bf16.msra.mxu0 %v6295
    %6333 = vmatprep.subr.bf16.mxu0 0
    %6334 = vmatpush1.bf16.msra.mxu0 %v6296
    %6335 = vmatprep.subr.bf16.mxu0 0
    %6336 = vmatpush1.bf16.msra.mxu0 %v6297
    %6337 = vmatprep.subr.bf16.mxu0 0
    %6338 = vmatpush1.bf16.msra.mxu0 %v6298
    %6339 = vmatprep.subr.bf16.mxu0 0
    %6340 = vmatpush1.bf16.msra.mxu0 %v6299
    %6341 = vmatprep.subr.bf16.mxu0 0
    %6342 = vmatpush1.bf16.msra.mxu0 %v6300
    %6343 = vmatprep.subr.bf16.mxu0 0
    %6344 = vmatpush1.bf16.msra.mxu0 %v6301
    %6345 = vmatprep.subr.bf16.mxu0 0
    %6346 = vmatpush1.bf16.msra.mxu0 %v6302
    %6347 = vmatprep.subr.bf16.mxu0 0
    %6348 = vmatpush1.bf16.msra.mxu0 %v6303
    %6349 = vmatprep.subr.bf16.mxu0 0
    %6350 = vmatpush1.bf16.msra.mxu0 %v6304
    %6351 = vmatprep.subr.bf16.mxu0 0
    %6352 = vmatpush1.bf16.msra.mxu0 %v6305
    %6353 = vmatprep.subr.bf16.mxu0 0
    %6354 = vmatpush1.bf16.msra.mxu0 %v6306
    %6355 = vmatprep.mubr.bf16.mxu0 %v6194
    %6356 = vmatmul.mubr.bf16.gmra.mrb[0].mxu0 %v6193
    %v6357 = vpop.f32.mrb[0].mxu0
    %v6358 = vadd.f32 0.0, %v6357
    %v6359 = vpop.f32.mrb[0].mxu0
    %v6360 = vpop.f32.mrb[0].mxu0
    %v6361 = vpop.f32.mrb[0].mxu0
    %6362 = vdwg.mxu0
    %v6395 = vunpack.c.l.b16 %v6161
    %v6396 = vunpack.c.l.b16 %v6162
    %v6397 = vunpack.c.l.b16 %v6163
    %v6398 = vunpack.c.l.b16 %v6164
    %v6399 = vunpack.c.l.b16 %v6165
    %v6400 = vunpack.c.l.b16 %v6166
    %v6401 = vunpack.c.l.b16 %v6167
    %v6402 = vunpack.c.l.b16 %v6168
    %v6403 = vunpack.c.l.b16 %v6169
    %v6404 = vunpack.c.l.b16 %v6170
    %v6405 = vunpack.c.l.b16 %v6171
    %v6406 = vunpack.c.l.b16 %v6172
    %v6407 = vunpack.c.l.b16 %v6173
    %v6408 = vunpack.c.l.b16 %v6174
    %v6409 = vunpack.c.l.b16 %v6175
    %v6410 = vunpack.c.l.b16 %v6176
    %v6411 = vunpack.c.l.b16 %v6177
    %v6412 = vunpack.c.l.b16 %v6178
    %v6413 = vunpack.c.l.b16 %v6179
    %v6414 = vunpack.c.l.b16 %v6180
    %v6415 = vunpack.c.l.b16 %v6181
    %v6416 = vunpack.c.l.b16 %v6182
    %v6417 = vunpack.c.l.b16 %v6183
    %v6418 = vunpack.c.l.b16 %v6184
    %v6419 = vunpack.c.l.b16 %v6185
    %v6420 = vunpack.c.l.b16 %v6186
    %v6421 = vunpack.c.l.b16 %v6187
    %v6422 = vunpack.c.l.b16 %v6188
    %v6423 = vunpack.c.l.b16 %v6189
    %v6424 = vunpack.c.l.b16 %v6190
    %v6425 = vunpack.c.l.b16 %v6191
    %v6426 = vunpack.c.l.b16 %v6192
    %v6427 = vpack.c.b16 %v6396, %v6395
    %v6428 = vpack.c.b16 %v6398, %v6397
    %v6429 = vpack.c.b16 %v6400, %v6399
    %v6430 = vpack.c.b16 %v6402, %v6401
    %v6431 = vpack.c.b16 %v6404, %v6403
    %v6432 = vpack.c.b16 %v6406, %v6405
    %v6433 = vpack.c.b16 %v6408, %v6407
    %v6434 = vpack.c.b16 %v6410, %v6409
    %v6435 = vpack.c.b16 %v6412, %v6411
    %v6436 = vpack.c.b16 %v6414, %v6413
    %v6437 = vpack.c.b16 %v6416, %v6415
    %v6438 = vpack.c.b16 %v6418, %v6417
    %v6439 = vpack.c.b16 %v6420, %v6419
    %v6440 = vpack.c.b16 %v6422, %v6421
    %v6441 = vpack.c.b16 %v6424, %v6423
    %v6442 = vpack.c.b16 %v6426, %v6425
    %6459 = vmatprep.subr.bf16.mxu0 0
    %6460 = vmatpush1.bf16.msra.mxu0 %v6427
    %6461 = vmatprep.subr.bf16.mxu0 0
    %6462 = vmatpush1.bf16.msra.mxu0 %v6428
    %6463 = vmatprep.subr.bf16.mxu0 0
    %6464 = vmatpush1.bf16.msra.mxu0 %v6429
    %6465 = vmatprep.subr.bf16.mxu0 0
    %6466 = vmatpush1.bf16.msra.mxu0 %v6430
    %6467 = vmatprep.subr.bf16.mxu0 0
    %6468 = vmatpush1.bf16.msra.mxu0 %v6431
    %6469 = vmatprep.subr.bf16.mxu0 0
    %6470 = vmatpush1.bf16.msra.mxu0 %v6432
    %6471 = vmatprep.subr.bf16.mxu0 0
    %6472 = vmatpush1.bf16.msra.mxu0 %v6433
    %6473 = vmatprep.subr.bf16.mxu0 0
    %6474 = vmatpush1.bf16.msra.mxu0 %v6434
    %6475 = vmatprep.subr.bf16.mxu0 0
    %6476 = vmatpush1.bf16.msra.mxu0 %v6435
    %6477 = vmatprep.subr.bf16.mxu0 0
    %6478 = vmatpush1.bf16.msra.mxu0 %v6436
    %6479 = vmatprep.subr.bf16.mxu0 0
    %6480 = vmatpush1.bf16.msra.mxu0 %v6437
    %6481 = vmatprep.subr.bf16.mxu0 0
    %6482 = vmatpush1.bf16.msra.mxu0 %v6438
    %6483 = vmatprep.subr.bf16.mxu0 0
    %6484 = vmatpush1.bf16.msra.mxu0 %v6439
    %6485 = vmatprep.subr.bf16.mxu0 0
    %6486 = vmatpush1.bf16.msra.mxu0 %v6440
    %6487 = vmatprep.subr.bf16.mxu0 0
    %6488 = vmatpush1.bf16.msra.mxu0 %v6441
    %6489 = vmatprep.subr.bf16.mxu0 0
    %6490 = vmatpush1.bf16.msra.mxu0 %v6442
    %6491 = vmatprep.mubr.bf16.mxu0 %v6160
    %6492 = vmatmul.mubr.bf16.gmra.mrb[0].mxu0 %v6159
    %v6493 = vpop.f32.mrb[0].mxu0
    %v6494 = vadd.f32 %v6358, %v6493
    %v6495 = vpop.f32.mrb[0].mxu0
    %v6496 = vpop.f32.mrb[0].mxu0
    %v6497 = vpop.f32.mrb[0].mxu0
    %6498 = vdwg.mxu0
    %v6499 = vld [vmem:[%s7] sm:$0x1]
    %v6501 = vlaneseq
    %v6502 = vshrl.u32 %v6501, 7
    %v6503 = vsub.s32 0, %v6502
    %v6504 = vrot.slane %v6499, %v6503
    %v6506 = vadd.f32 %v6494, %v6504
    %vm6507 = vcmask 1041408
    %v6508 = vsel %vm6507, %v6506, -inf
    %6509 = vmax.xlane.f32.xlu0 %v6508
    %v6510 = vpop.xlane.xlu0 %6509
    %v6511 = vsub.f32 %v6506, %v6510
    %v6512 = vmul.f32 %v6511, 1.442695
    %v6513 = vpow.pop %v6512
    %v6514 = vsel %vm6507, %v6513, 0.0
    %6515 = vadd.xlane.f32.xlu0 %v6514
    %v6516 = vpop.xlane.xlu0 %6515
    %v6517 = vrcp.pop %v6516
    %v6518 = vmul.f32 %v6513, %v6517
    %6519 = vst [vmem:[#allocation15] sm:$0x3] %v6518
    // Predicated region
    $region62: #{tpu_custom_call.1} parent=1 // pred_check
      _
    $region63: #{tpu_custom_call.1} parent=1 // pred_check_branch
      %6521 = sbr.rel (0) target = $region65
    $region64: #{tpu_custom_call.1} parent=1 // pred_region
      %s6523 = ssub.s32 32, 32
      %6524 = vsyncadd [#allocation5], %s6523
      %s6526 = sshll.u32 [#allocation15], 4
      %s6527 = int_to_ptr.vmem [resolvable:$true] %s6526
      %6529 = dma.vmem_to_hbm [thread:$0]  %s6527, 32, %s8, [#allocation5]
    $region65: #{tpu_custom_call.1} parent=1 // pred_fallthru
      _
    // Predicated region
    $region66: #{tpu_custom_call.1} parent=1 // pred_check
      _
    $region67: #{tpu_custom_call.1} parent=1 // pred_check_branch
      %6531 = sbr.rel (0) target = $region69
    $region68: #{tpu_custom_call.1} parent=1 // pred_region
      %6532 = dma.done [#allocation5], 32
    $region69: #{tpu_custom_call.1} parent=1 // pred_fallthru
      _
    %6533 = vsyncpa [#allocation4], 1
    %6534 = vsyncpa [#allocation7], 1
    %6535 = vsyncpa [#allocation10], 1
    %6536 = vsyncpa [#allocation13], 1
    %6537 = vsyncpa [#allocation5], 1

</llo_original>
